<compile_context>
chip_gen: v5e
topology: v5e:2x2
jax: 0.10.0
libtpu: 0.0.40
codegen_flags: <defaults>
</compile_context>

<pallas_src>
import functools

import jax
import jax.numpy as jnp
from jax import lax
from jax.experimental import pallas as pl
from jax.experimental.pallas import tpu as pltpu


K = 4
PAD = 1
NEG_SLOPE = 0.2
EPS = 1e-5

# (cin, cout, stride, use_instance_norm, use_leaky_relu)
LAYER_CFG = [
    (1, 64, 2, False, True),
    (64, 128, 2, True, True),
    (128, 256, 2, True, True),
    (256, 512, 1, True, True),
    (512, 1, 1, False, False),
]


def _round_up(x, m):
    return ((x + m - 1) // m) * m


def _pick_tile(dim, cap):
    """Largest tile <= cap that divides dim (dim is a multiple of 128)."""
    t = min(dim, cap)
    while dim % t:
        t //= 2
    return t


# ----------------------------------------------------------------------------
# Pallas kernel: tiled matmul + bias + (InstanceNorm) + (LeakyReLU), fused.
# ----------------------------------------------------------------------------
def _conv_fused_kernel(p_ref, w_ref, b_ref, o_ref, acc_ref, *,
                       apply_norm, apply_lrelu):
    # Grid: (n, j, k) = (image, Cout tile, K tile); k is the reduction axis.
    k = pl.program_id(2)

    @pl.when(k == 0)
    def _():
        acc_ref[...] = jnp.zeros_like(acc_ref)

    # (HW, TK) bf16 @ (TK, TN) bf16 -> f32 accumulator on the MXU.
    acc_ref[...] += jnp.dot(p_ref[0], w_ref[...],
                            preferred_element_type=jnp.float32)

    @pl.when(k == pl.num_programs(2) - 1)
    def _():
        y = acc_ref[...] + b_ref[...]          # (HW, TN) + (1, TN), f32
        if apply_norm:
            # InstanceNorm2d: per (image, channel) stats over HW (biased var).
            mean = jnp.mean(y, axis=0, keepdims=True)
            var = jnp.mean((y - mean) ** 2, axis=0, keepdims=True)
            y = (y - mean) * lax.rsqrt(var + EPS)
        if apply_lrelu:
            y = jnp.where(y >= 0, y, NEG_SLOPE * y)
        o_ref[0] = y.astype(o_ref.dtype)


def fused_conv_layer(patches, w_pad, b_pad, *, apply_norm, apply_lrelu,
                     out_dtype):
    """patches (N, HW, Kp) bf16 @ w_pad (Kp, Coutp) bf16 -> (N, HW, Coutp)."""
    N, HW, Kp = patches.shape
    Kp_w, Coutp = w_pad.shape
    assert Kp == Kp_w

    # Big blocks: fewer grid steps (overhead-dominated at PatchGAN sizes),
    # deeper contraction chunks for the MXU, still well under the VMEM limit
    # (worst case ~4 MiB with double buffering on the largest layer).
    TN = _pick_tile(Coutp, 512)
    TK = _pick_tile(Kp, 2048)

    grid = (N, Coutp // TN, Kp // TK)
    kernel = functools.partial(_conv_fused_kernel,
                               apply_norm=apply_norm,
                               apply_lrelu=apply_lrelu)

    flops = 2 * N * HW * Kp * Coutp
    bytes_accessed = int(
        patches.size * patches.dtype.itemsize * (Coutp // TN)
        + w_pad.size * w_pad.dtype.itemsize * N
        + N * HW * Coutp * jnp.dtype(out_dtype).itemsize
        + b_pad.size * 4)

    return pl.pallas_call(
        kernel,
        out_shape=jax.ShapeDtypeStruct((N, HW, Coutp), out_dtype),
        grid_spec=pltpu.PrefetchScalarGridSpec(
            num_scalar_prefetch=0,
            grid=grid,
            in_specs=[
                pl.BlockSpec((1, HW, TK), lambda n, j, k: (n, 0, k)),
                pl.BlockSpec((TK, TN), lambda n, j, k: (k, j)),
                pl.BlockSpec((1, TN), lambda n, j, k: (0, j)),
            ],
            out_specs=pl.BlockSpec((1, HW, TN), lambda n, j, k: (n, 0, j)),
            scratch_shapes=[pltpu.VMEM((HW, TN), jnp.float32)],
        ),
        compiler_params=pltpu.CompilerParams(
            dimension_semantics=("parallel", "parallel", "arbitrary"),
            vmem_limit_bytes=32 * 1024 * 1024,
        ),
        cost_estimate=pl.CostEstimate(flops=flops, transcendentals=0,
                                      bytes_accessed=bytes_accessed),
    )(patches, w_pad, b_pad.reshape(1, Coutp))


# ----------------------------------------------------------------------------
# Plain-JAX glue (data layout only, no conv math)
# ----------------------------------------------------------------------------
def im2col_nhwc(x, k, stride, pad):
    """x: (N, H, W, C) -> patches (N, Ho*Wo, C*k*k), flat index = c*k*k + kh*k + kw."""
    N, H, W, C = x.shape
    xp = jnp.pad(x, ((0, 0), (pad, pad), (pad, pad), (0, 0)))
    Ho = (H + 2 * pad - k) // stride + 1
    Wo = (W + 2 * pad - k) // stride + 1
    cols = []
    for i in range(k):
        for j in range(k):
            sl = xp[:, i: i + stride * (Ho - 1) + 1: stride,
                       j: j + stride * (Wo - 1) + 1: stride, :]
            cols.append(sl)                              # (N, Ho, Wo, C)
    patches = jnp.stack(cols, axis=-1)                   # (N, Ho, Wo, C, k*k)
    patches = patches.reshape(N, Ho * Wo, C * k * k)
    return patches, Ho, Wo


def prep_kernel_weights(w_oihw, b):
    """OIHW f32 -> padded (Kp, Coutp) bf16 matmul weight + padded f32 bias."""
    cout, cin, kh, kw = w_oihw.shape
    kdim = cin * kh * kw
    kp = _round_up(kdim, 128)
    coutp = _round_up(cout, 128)
    w_mat = w_oihw.reshape(cout, kdim).T                 # (Kdim, Cout)
    w_mat = jnp.pad(w_mat, ((0, kp - kdim), (0, coutp - cout)))
    b_pad = jnp.pad(b, (0, coutp - cout)).astype(jnp.float32)
    return w_mat.astype(jnp.bfloat16), b_pad, kp, coutp


def init_params(key):
    params = []
    for (cin, cout, _stride, _n, _a) in LAYER_CFG:
        key, kw, kb = jax.random.split(key, 3)
        # nn.init.normal_(weight, 0.0, 0.02) — OIHW like PyTorch
        w_oihw = 0.02 * jax.random.normal(kw, (cout, cin, K, K),
                                          dtype=jnp.float32)
        fan_in = cin * K * K
        bound = 1.0 / (fan_in ** 0.5)
        b = jax.random.uniform(kb, (cout,), minval=-bound, maxval=bound,
                               dtype=jnp.float32)
        params.append({"w_oihw": w_oihw, "b": b})
    return params


def discriminator_forward(x_nchw, params):
    x = jnp.transpose(x_nchw, (0, 2, 3, 1)).astype(jnp.bfloat16)   # NHWC bf16
    N = x.shape[0]
    n_layers = len(LAYER_CFG)
    for li, (cfg, p) in enumerate(zip(LAYER_CFG, params)):
        cin, cout, stride, use_norm, use_lrelu = cfg
        # TODO(synk): im2col stays as plain-JAX layout glue; a future version
        # could stream shifted NHWC windows directly from HBM inside the kernel.
        patches, Ho, Wo = im2col_nhwc(x, K, stride, PAD)   # (N, HW, cin*16)
        kdim = patches.shape[-1]
        w_pad, b_pad, kp, coutp = prep_kernel_weights(p["w_oihw"], p["b"])
        if kp > kdim:
            patches = jnp.pad(patches, ((0, 0), (0, 0), (0, kp - kdim)))
        patches = patches.astype(jnp.bfloat16)

        last = li == n_layers - 1
        out_dtype = jnp.float32 if last else jnp.bfloat16
        y = fused_conv_layer(patches, w_pad, b_pad,
                             apply_norm=use_norm, apply_lrelu=use_lrelu,
                             out_dtype=out_dtype)          # (N, HW, Coutp)
        y = y[:, :, :cout]                                 # drop lane padding
        x = y.reshape(N, Ho, Wo, cout)
    return jnp.transpose(x, (0, 3, 1, 2)).astype(jnp.float32)      # NCHW


# ----------------------------------------------------------------------------
# Pure-JAX reference (mirrors the bf16-operand / f32-accumulate data path)
# ----------------------------------------------------------------------------
def reference_forward(x_nchw, params):
    x = x_nchw.astype(jnp.bfloat16)
    n_layers = len(LAYER_CFG)
    for li, (cfg, p) in enumerate(zip(LAYER_CFG, params)):
        cin, cout, stride, use_norm, use_lrelu = cfg
        y = lax.conv_general_dilated(
            x.astype(jnp.bfloat16), p["w_oihw"].astype(jnp.bfloat16),
            window_strides=(stride, stride),
            padding=[(PAD, PAD), (PAD, PAD)],
            dimension_numbers=("NCHW", "OIHW", "NCHW"),
            preferred_element_type=jnp.float32,
        ) + p["b"].reshape(1, -1, 1, 1)
        if use_norm:
            m = jnp.mean(y, axis=(2, 3), keepdims=True)
            v = jnp.mean((y - m) ** 2, axis=(2, 3), keepdims=True)
            y = (y - m) * lax.rsqrt(v + EPS)
        if use_lrelu:
            y = jnp.where(y >= 0, y, NEG_SLOPE * y)
        x = y if li == n_layers - 1 else y.astype(jnp.bfloat16)
    return x.astype(jnp.float32)


if __name__ == "__main__":
    key = jax.random.PRNGKey(0)
    key, kx = jax.random.split(key)
    # Input matches nn.Conv2d(1, ...): single-channel image, NCHW.
    x = jax.random.normal(kx, (2, 1, 32, 32), dtype=jnp.float32)

    params = init_params(key)

    fwd = jax.jit(discriminator_forward)
    ref_fwd = jax.jit(reference_forward)

    out = jax.block_until_ready(fwd(x, params))
    ref = jax.block_until_ready(ref_fwd(x, params))

    assert out.shape == (2, 1, 2, 2), out.shape
    max_err = float(jnp.max(jnp.abs(out - ref)))
    assert jnp.allclose(out, ref, rtol=2e-2, atol=2e-2), max_err

    print("KERNEL_OK")
</pallas_src>

<mosaic_0001>
module attributes {stable_mosaic.version = 11 : i64} {
  func.func @_conv_fused_kernel(%arg0: i32, %arg1: i32, %arg2: i32, %arg3: memref<1x256x128xbf16, #tpu.memory_space<vmem>>, %arg4: memref<128x128xbf16, #tpu.memory_space<vmem>>, %arg5: memref<1x128xf32, #tpu.memory_space<vmem>>, %arg6: memref<1x256x128xbf16, #tpu.memory_space<vmem>>, %arg7: memref<256x128xf32, #tpu.memory_space<vmem>>) attributes {dimension_semantics = [#tpu.dimension_semantics<parallel>, #tpu.dimension_semantics<parallel>, #tpu.dimension_semantics<arbitrary>], iteration_bounds = array<i64: 2, 1, 1>, scalar_prefetch = 0 : i64, scratch_operands = 1 : i64, tpu.core_type = #tpu.core_type<tc>, window_params = [{transform_indices = @transform_0, window_bounds = array<i64: 1, 256, 128>}, {transform_indices = @transform_1, window_bounds = array<i64: 128, 128>}, {transform_indices = @transform_2, window_bounds = array<i64: 1, 128>}, {transform_indices = @transform_3, window_bounds = array<i64: 1, 256, 128>}]} {
    %c0_i32 = arith.constant 0 : i32
    %0 = arith.cmpi eq, %arg2, %c0_i32 : i32
    %1 = arith.extui %0 : i1 to i32
    %c0_i32_0 = arith.constant 0 : i32
    %2 = arith.cmpi ne, %1, %c0_i32_0 : i32
    scf.if %2 {
      %cst_11 = arith.constant 0.000000e+00 : f32
      %13 = vector.broadcast %cst_11 : f32 to vector<256x128xf32>
      %c0_12 = arith.constant 0 : index
      %c0_13 = arith.constant 0 : index
      %14 = vector.load %arg7[%c0_12, %c0_13] : memref<256x128xf32, #tpu.memory_space<vmem>>, vector<256x128xf32>
      tpu.vector_store %arg7[%c0_12, %c0_13], %13 {strides = array<i32>} : memref<256x128xf32, #tpu.memory_space<vmem>>, vector<256x128xf32>,
    } else {
    }
    %c0 = arith.constant 0 : index
    %c0_1 = arith.constant 0 : index
    %3 = vector.load %arg7[%c0, %c0_1] : memref<256x128xf32, #tpu.memory_space<vmem>>, vector<256x128xf32>
    %c0_2 = arith.constant 0 : index
    %c0_3 = arith.constant 0 : index
    %c0_4 = arith.constant 0 : index
    %4 = vector.load %arg3[%c0_2, %c0_3, %c0_4] : memref<1x256x128xbf16, #tpu.memory_space<vmem>>, vector<1x256x128xbf16>
    %5 = vector.shape_cast %4 : vector<1x256x128xbf16> to vector<256x128xbf16>
    %c0_5 = arith.constant 0 : index
    %c0_6 = arith.constant 0 : index
    %6 = vector.load %arg4[%c0_5, %c0_6] : memref<128x128xbf16, #tpu.memory_space<vmem>>, vector<128x128xbf16>
    %cst = arith.constant dense<0.000000e+00> : vector<256x128xf32>
    %7 = tpu.matmul %5, %6, %cst {dimension_numbers = #tpu.dot_dimension_numbers<[1], [0], [0], [1], [0, 0, 1, 1], [], []>} : vector<256x128xbf16>, vector<128x128xbf16>, vector<256x128xf32> -> vector<256x128xf32>
    %8 = arith.addf %3, %7 : vector<256x128xf32>
    %c0_7 = arith.constant 0 : index
    %c0_8 = arith.constant 0 : index
    %9 = vector.load %arg7[%c0_7, %c0_8] : memref<256x128xf32, #tpu.memory_space<vmem>>, vector<256x128xf32>
    tpu.vector_store %arg7[%c0_7, %c0_8], %8 {strides = array<i32>} : memref<256x128xf32, #tpu.memory_space<vmem>>, vector<256x128xf32>,
    %c0_i32_9 = arith.constant 0 : i32
    %10 = arith.cmpi eq, %arg2, %c0_i32_9 : i32
    %11 = arith.extui %10 : i1 to i32
    %c0_i32_10 = arith.constant 0 : i32
    %12 = arith.cmpi ne, %11, %c0_i32_10 : i32
    scf.if %12 {
      %c0_11 = arith.constant 0 : index
      %c0_12 = arith.constant 0 : index
      %13 = vector.load %arg7[%c0_11, %c0_12] : memref<256x128xf32, #tpu.memory_space<vmem>>, vector<256x128xf32>
      %c0_13 = arith.constant 0 : index
      %c0_14 = arith.constant 0 : index
      %14 = vector.load %arg5[%c0_13, %c0_14] : memref<1x128xf32, #tpu.memory_space<vmem>>, vector<1x128xf32>
      %15 = vector.broadcast %14 : vector<1x128xf32> to vector<256x128xf32>
      %16 = arith.addf %13, %15 : vector<256x128xf32>
      %cst_15 = arith.constant 0.000000e+00 : f32
      %17 = vector.broadcast %cst_15 : f32 to vector<256x128xf32>
      %18 = arith.cmpf oge, %16, %17 : vector<256x128xf32>
      %cst_16 = arith.constant 2.000000e-01 : f32
      %19 = vector.broadcast %cst_16 : f32 to vector<256x128xf32>
      %20 = arith.mulf %19, %16 : vector<256x128xf32>
      %21 = arith.select %18, %16, %20 : vector<256x128xi1>, vector<256x128xf32>
      %22 = arith.truncf %21 : vector<256x128xf32> to vector<256x128xbf16>
      %c0_17 = arith.constant 0 : index
      %c0_18 = arith.constant 0 : index
      %c0_19 = arith.constant 0 : index
      %23 = vector.load %arg6[%c0_17, %c0_18, %c0_19] : memref<1x256x128xbf16, #tpu.memory_space<vmem>>, vector<1x256x128xbf16>
      %24 = vector.shape_cast %23 : vector<1x256x128xbf16> to vector<256x128xbf16>
      %25 = vector.shape_cast %22 : vector<256x128xbf16> to vector<1x256x128xbf16>
      tpu.vector_store %arg6[%c0_17, %c0_18, %c0_19], %25 {strides = array<i32>} : memref<1x256x128xbf16, #tpu.memory_space<vmem>>, vector<1x256x128xbf16>,
    } else {
    }
    return
  }
  func.func @transform_0(%arg0: i32, %arg1: i32, %arg2: i32) -> (i32, i32, i32) {
    %c0_i32 = arith.constant 0 : i32
    %c0_i32_0 = arith.constant 0 : i32
    return %arg0, %c0_i32, %arg2 : i32, i32, i32
  }
  func.func @transform_1(%arg0: i32, %arg1: i32, %arg2: i32) -> (i32, i32) {
    %c0_i32 = arith.constant 0 : i32
    return %arg2, %arg1 : i32, i32
  }
  func.func @transform_2(%arg0: i32, %arg1: i32, %arg2: i32) -> (i32, i32) {
    %c0_i32 = arith.constant 0 : i32
    %c0_i32_0 = arith.constant 0 : i32
    return %c0_i32, %arg1 : i32, i32
  }
  func.func @transform_3(%arg0: i32, %arg1: i32, %arg2: i32) -> (i32, i32, i32) {
    %c0_i32 = arith.constant 0 : i32
    %c0_i32_0 = arith.constant 0 : i32
    return %arg0, %c0_i32, %arg1 : i32, i32, i32
  }
}

module attributes {stable_mosaic.version = 11 : i64} {
  func.func @_conv_fused_kernel(%arg0: i32, %arg1: i32, %arg2: i32, %arg3: memref<1x64x1024xbf16, #tpu.memory_space<vmem>>, %arg4: memref<1024x128xbf16, #tpu.memory_space<vmem>>, %arg5: memref<1x128xf32, #tpu.memory_space<vmem>>, %arg6: memref<1x64x128xbf16, #tpu.memory_space<vmem>>, %arg7: memref<64x128xf32, #tpu.memory_space<vmem>>) attributes {dimension_semantics = [#tpu.dimension_semantics<parallel>, #tpu.dimension_semantics<parallel>, #tpu.dimension_semantics<arbitrary>], iteration_bounds = array<i64: 2, 1, 1>, scalar_prefetch = 0 : i64, scratch_operands = 1 : i64, tpu.core_type = #tpu.core_type<tc>, window_params = [{transform_indices = @transform_0, window_bounds = array<i64: 1, 64, 1024>}, {transform_indices = @transform_1, window_bounds = array<i64: 1024, 128>}, {transform_indices = @transform_2, window_bounds = array<i64: 1, 128>}, {transform_indices = @transform_3, window_bounds = array<i64: 1, 64, 128>}]} {
    %c0_i32 = arith.constant 0 : i32
    %0 = arith.cmpi eq, %arg2, %c0_i32 : i32
    %1 = arith.extui %0 : i1 to i32
    %c0_i32_0 = arith.constant 0 : i32
    %2 = arith.cmpi ne, %1, %c0_i32_0 : i32
    scf.if %2 {
      %cst_11 = arith.constant 0.000000e+00 : f32
      %13 = vector.broadcast %cst_11 : f32 to vector<64x128xf32>
      %c0_12 = arith.constant 0 : index
      %c0_13 = arith.constant 0 : index
      %14 = vector.load %arg7[%c0_12, %c0_13] : memref<64x128xf32, #tpu.memory_space<vmem>>, vector<64x128xf32>
      tpu.vector_store %arg7[%c0_12, %c0_13], %13 {strides = array<i32>} : memref<64x128xf32, #tpu.memory_space<vmem>>, vector<64x128xf32>,
    } else {
    }
    %c0 = arith.constant 0 : index
    %c0_1 = arith.constant 0 : index
    %3 = vector.load %arg7[%c0, %c0_1] : memref<64x128xf32, #tpu.memory_space<vmem>>, vector<64x128xf32>
    %c0_2 = arith.constant 0 : index
    %c0_3 = arith.constant 0 : index
    %c0_4 = arith.constant 0 : index
    %4 = vector.load %arg3[%c0_2, %c0_3, %c0_4] : memref<1x64x1024xbf16, #tpu.memory_space<vmem>>, vector<1x64x1024xbf16>
    %5 = vector.shape_cast %4 : vector<1x64x1024xbf16> to vector<64x1024xbf16>
    %c0_5 = arith.constant 0 : index
    %c0_6 = arith.constant 0 : index
    %6 = vector.load %arg4[%c0_5, %c0_6] : memref<1024x128xbf16, #tpu.memory_space<vmem>>, vector<1024x128xbf16>
    %cst = arith.constant dense<0.000000e+00> : vector<64x128xf32>
    %7 = tpu.matmul %5, %6, %cst {dimension_numbers = #tpu.dot_dimension_numbers<[1], [0], [0], [1], [0, 0, 1, 1], [], []>} : vector<64x1024xbf16>, vector<1024x128xbf16>, vector<64x128xf32> -> vector<64x128xf32>
    %8 = arith.addf %3, %7 : vector<64x128xf32>
    %c0_7 = arith.constant 0 : index
    %c0_8 = arith.constant 0 : index
    %9 = vector.load %arg7[%c0_7, %c0_8] : memref<64x128xf32, #tpu.memory_space<vmem>>, vector<64x128xf32>
    tpu.vector_store %arg7[%c0_7, %c0_8], %8 {strides = array<i32>} : memref<64x128xf32, #tpu.memory_space<vmem>>, vector<64x128xf32>,
    %c0_i32_9 = arith.constant 0 : i32
    %10 = arith.cmpi eq, %arg2, %c0_i32_9 : i32
    %11 = arith.extui %10 : i1 to i32
    %c0_i32_10 = arith.constant 0 : i32
    %12 = arith.cmpi ne, %11, %c0_i32_10 : i32
    scf.if %12 {
      %c0_11 = arith.constant 0 : index
      %c0_12 = arith.constant 0 : index
      %13 = vector.load %arg7[%c0_11, %c0_12] : memref<64x128xf32, #tpu.memory_space<vmem>>, vector<64x128xf32>
      %c0_13 = arith.constant 0 : index
      %c0_14 = arith.constant 0 : index
      %14 = vector.load %arg5[%c0_13, %c0_14] : memref<1x128xf32, #tpu.memory_space<vmem>>, vector<1x128xf32>
      %15 = vector.broadcast %14 : vector<1x128xf32> to vector<64x128xf32>
      %16 = arith.addf %13, %15 : vector<64x128xf32>
      %cst_15 = arith.constant dense<0.000000e+00> : vector<128xf32>
      %17 = vector.multi_reduction <add>, %16, %cst_15 [0] : vector<64x128xf32> to vector<128xf32>
      %18 = vector.shape_cast %17 : vector<128xf32> to vector<1x128xf32>
      %cst_16 = arith.constant 6.400000e+01 : f32
      %19 = vector.broadcast %cst_16 : f32 to vector<1x128xf32>
      %20 = arith.divf %18, %19 : vector<1x128xf32>
      %21 = vector.broadcast %20 : vector<1x128xf32> to vector<64x128xf32>
      %22 = arith.subf %16, %21 : vector<64x128xf32>
      %23 = arith.mulf %22, %22 : vector<64x128xf32>
      %cst_17 = arith.constant dense<0.000000e+00> : vector<128xf32>
      %24 = vector.multi_reduction <add>, %23, %cst_17 [0] : vector<64x128xf32> to vector<128xf32>
      %25 = vector.shape_cast %24 : vector<128xf32> to vector<1x128xf32>
      %cst_18 = arith.constant 6.400000e+01 : f32
      %26 = vector.broadcast %cst_18 : f32 to vector<1x128xf32>
      %27 = arith.divf %25, %26 : vector<1x128xf32>
      %28 = vector.broadcast %20 : vector<1x128xf32> to vector<64x128xf32>
      %29 = arith.subf %16, %28 : vector<64x128xf32>
      %cst_19 = arith.constant 9.99999974E-6 : f32
      %30 = vector.broadcast %cst_19 : f32 to vector<1x128xf32>
      %31 = arith.addf %27, %30 : vector<1x128xf32>
      %32 = math.rsqrt %31 : vector<1x128xf32>
      %33 = vector.broadcast %32 : vector<1x128xf32> to vector<64x128xf32>
      %34 = arith.mulf %29, %33 : vector<64x128xf32>
      %cst_20 = arith.constant 0.000000e+00 : f32
      %35 = vector.broadcast %cst_20 : f32 to vector<64x128xf32>
      %36 = arith.cmpf oge, %34, %35 : vector<64x128xf32>
      %cst_21 = arith.constant 2.000000e-01 : f32
      %37 = vector.broadcast %cst_21 : f32 to vector<64x128xf32>
      %38 = arith.mulf %37, %34 : vector<64x128xf32>
      %39 = arith.select %36, %34, %38 : vector<64x128xi1>, vector<64x128xf32>
      %40 = arith.truncf %39 : vector<64x128xf32> to vector<64x128xbf16>
      %c0_22 = arith.constant 0 : index
      %c0_23 = arith.constant 0 : index
      %c0_24 = arith.constant 0 : index
      %41 = vector.load %arg6[%c0_22, %c0_23, %c0_24] : memref<1x64x128xbf16, #tpu.memory_space<vmem>>, vector<1x64x128xbf16>
      %42 = vector.shape_cast %41 : vector<1x64x128xbf16> to vector<64x128xbf16>
      %43 = vector.shape_cast %40 : vector<64x128xbf16> to vector<1x64x128xbf16>
      tpu.vector_store %arg6[%c0_22, %c0_23, %c0_24], %43 {strides = array<i32>} : memref<1x64x128xbf16, #tpu.memory_space<vmem>>, vector<1x64x128xbf16>,
    } else {
    }
    return
  }
  func.func @transform_0(%arg0: i32, %arg1: i32, %arg2: i32) -> (i32, i32, i32) {
    %c0_i32 = arith.constant 0 : i32
    %c0_i32_0 = arith.constant 0 : i32
    return %arg0, %c0_i32, %arg2 : i32, i32, i32
  }
  func.func @transform_1(%arg0: i32, %arg1: i32, %arg2: i32) -> (i32, i32) {
    %c0_i32 = arith.constant 0 : i32
    return %arg2, %arg1 : i32, i32
  }
  func.func @transform_2(%arg0: i32, %arg1: i32, %arg2: i32) -> (i32, i32) {
    %c0_i32 = arith.constant 0 : i32
    %c0_i32_0 = arith.constant 0 : i32
    return %c0_i32, %arg1 : i32, i32
  }
  func.func @transform_3(%arg0: i32, %arg1: i32, %arg2: i32) -> (i32, i32, i32) {
    %c0_i32 = arith.constant 0 : i32
    %c0_i32_0 = arith.constant 0 : i32
    return %arg0, %c0_i32, %arg1 : i32, i32, i32
  }
}

module attributes {stable_mosaic.version = 11 : i64} {
  func.func @_conv_fused_kernel(%arg0: i32, %arg1: i32, %arg2: i32, %arg3: memref<1x16x2048xbf16, #tpu.memory_space<vmem>>, %arg4: memref<2048x256xbf16, #tpu.memory_space<vmem>>, %arg5: memref<1x256xf32, #tpu.memory_space<vmem>>, %arg6: memref<1x16x256xbf16, #tpu.memory_space<vmem>>, %arg7: memref<16x256xf32, #tpu.memory_space<vmem>>) attributes {dimension_semantics = [#tpu.dimension_semantics<parallel>, #tpu.dimension_semantics<parallel>, #tpu.dimension_semantics<arbitrary>], iteration_bounds = array<i64: 2, 1, 1>, scalar_prefetch = 0 : i64, scratch_operands = 1 : i64, tpu.core_type = #tpu.core_type<tc>, window_params = [{transform_indices = @transform_0, window_bounds = array<i64: 1, 16, 2048>}, {transform_indices = @transform_1, window_bounds = array<i64: 2048, 256>}, {transform_indices = @transform_2, window_bounds = array<i64: 1, 256>}, {transform_indices = @transform_3, window_bounds = array<i64: 1, 16, 256>}]} {
    %c0_i32 = arith.constant 0 : i32
    %0 = arith.cmpi eq, %arg2, %c0_i32 : i32
    %1 = arith.extui %0 : i1 to i32
    %c0_i32_0 = arith.constant 0 : i32
    %2 = arith.cmpi ne, %1, %c0_i32_0 : i32
    scf.if %2 {
      %cst_11 = arith.constant 0.000000e+00 : f32
      %13 = vector.broadcast %cst_11 : f32 to vector<16x256xf32>
      %c0_12 = arith.constant 0 : index
      %c0_13 = arith.constant 0 : index
      %14 = vector.load %arg7[%c0_12, %c0_13] : memref<16x256xf32, #tpu.memory_space<vmem>>, vector<16x256xf32>
      tpu.vector_store %arg7[%c0_12, %c0_13], %13 {strides = array<i32>} : memref<16x256xf32, #tpu.memory_space<vmem>>, vector<16x256xf32>,
    } else {
    }
    %c0 = arith.constant 0 : index
    %c0_1 = arith.constant 0 : index
    %3 = vector.load %arg7[%c0, %c0_1] : memref<16x256xf32, #tpu.memory_space<vmem>>, vector<16x256xf32>
    %c0_2 = arith.constant 0 : index
    %c0_3 = arith.constant 0 : index
    %c0_4 = arith.constant 0 : index
    %4 = vector.load %arg3[%c0_2, %c0_3, %c0_4] : memref<1x16x2048xbf16, #tpu.memory_space<vmem>>, vector<1x16x2048xbf16>
    %5 = vector.shape_cast %4 : vector<1x16x2048xbf16> to vector<16x2048xbf16>
    %c0_5 = arith.constant 0 : index
    %c0_6 = arith.constant 0 : index
    %6 = vector.load %arg4[%c0_5, %c0_6] : memref<2048x256xbf16, #tpu.memory_space<vmem>>, vector<2048x256xbf16>
    %cst = arith.constant dense<0.000000e+00> : vector<16x256xf32>
    %7 = tpu.matmul %5, %6, %cst {dimension_numbers = #tpu.dot_dimension_numbers<[1], [0], [0], [1], [0, 0, 1, 1], [], []>} : vector<16x2048xbf16>, vector<2048x256xbf16>, vector<16x256xf32> -> vector<16x256xf32>
    %8 = arith.addf %3, %7 : vector<16x256xf32>
    %c0_7 = arith.constant 0 : index
    %c0_8 = arith.constant 0 : index
    %9 = vector.load %arg7[%c0_7, %c0_8] : memref<16x256xf32, #tpu.memory_space<vmem>>, vector<16x256xf32>
    tpu.vector_store %arg7[%c0_7, %c0_8], %8 {strides = array<i32>} : memref<16x256xf32, #tpu.memory_space<vmem>>, vector<16x256xf32>,
    %c0_i32_9 = arith.constant 0 : i32
    %10 = arith.cmpi eq, %arg2, %c0_i32_9 : i32
    %11 = arith.extui %10 : i1 to i32
    %c0_i32_10 = arith.constant 0 : i32
    %12 = arith.cmpi ne, %11, %c0_i32_10 : i32
    scf.if %12 {
      %c0_11 = arith.constant 0 : index
      %c0_12 = arith.constant 0 : index
      %13 = vector.load %arg7[%c0_11, %c0_12] : memref<16x256xf32, #tpu.memory_space<vmem>>, vector<16x256xf32>
      %c0_13 = arith.constant 0 : index
      %c0_14 = arith.constant 0 : index
      %14 = vector.load %arg5[%c0_13, %c0_14] : memref<1x256xf32, #tpu.memory_space<vmem>>, vector<1x256xf32>
      %15 = vector.broadcast %14 : vector<1x256xf32> to vector<16x256xf32>
      %16 = arith.addf %13, %15 : vector<16x256xf32>
      %cst_15 = arith.constant dense<0.000000e+00> : vector<256xf32>
      %17 = vector.multi_reduction <add>, %16, %cst_15 [0] : vector<16x256xf32> to vector<256xf32>
      %18 = vector.shape_cast %17 : vector<256xf32> to vector<1x256xf32>
      %cst_16 = arith.constant 1.600000e+01 : f32
      %19 = vector.broadcast %cst_16 : f32 to vector<1x256xf32>
      %20 = arith.divf %18, %19 : vector<1x256xf32>
      %21 = vector.broadcast %20 : vector<1x256xf32> to vector<16x256xf32>
      %22 = arith.subf %16, %21 : vector<16x256xf32>
      %23 = arith.mulf %22, %22 : vector<16x256xf32>
      %cst_17 = arith.constant dense<0.000000e+00> : vector<256xf32>
      %24 = vector.multi_reduction <add>, %23, %cst_17 [0] : vector<16x256xf32> to vector<256xf32>
      %25 = vector.shape_cast %24 : vector<256xf32> to vector<1x256xf32>
      %cst_18 = arith.constant 1.600000e+01 : f32
      %26 = vector.broadcast %cst_18 : f32 to vector<1x256xf32>
      %27 = arith.divf %25, %26 : vector<1x256xf32>
      %28 = vector.broadcast %20 : vector<1x256xf32> to vector<16x256xf32>
      %29 = arith.subf %16, %28 : vector<16x256xf32>
      %cst_19 = arith.constant 9.99999974E-6 : f32
      %30 = vector.broadcast %cst_19 : f32 to vector<1x256xf32>
      %31 = arith.addf %27, %30 : vector<1x256xf32>
      %32 = math.rsqrt %31 : vector<1x256xf32>
      %33 = vector.broadcast %32 : vector<1x256xf32> to vector<16x256xf32>
      %34 = arith.mulf %29, %33 : vector<16x256xf32>
      %cst_20 = arith.constant 0.000000e+00 : f32
      %35 = vector.broadcast %cst_20 : f32 to vector<16x256xf32>
      %36 = arith.cmpf oge, %34, %35 : vector<16x256xf32>
      %cst_21 = arith.constant 2.000000e-01 : f32
      %37 = vector.broadcast %cst_21 : f32 to vector<16x256xf32>
      %38 = arith.mulf %37, %34 : vector<16x256xf32>
      %39 = arith.select %36, %34, %38 : vector<16x256xi1>, vector<16x256xf32>
      %40 = arith.truncf %39 : vector<16x256xf32> to vector<16x256xbf16>
      %c0_22 = arith.constant 0 : index
      %c0_23 = arith.constant 0 : index
      %c0_24 = arith.constant 0 : index
      %41 = vector.load %arg6[%c0_22, %c0_23, %c0_24] : memref<1x16x256xbf16, #tpu.memory_space<vmem>>, vector<1x16x256xbf16>
      %42 = vector.shape_cast %41 : vector<1x16x256xbf16> to vector<16x256xbf16>
      %43 = vector.shape_cast %40 : vector<16x256xbf16> to vector<1x16x256xbf16>
      tpu.vector_store %arg6[%c0_22, %c0_23, %c0_24], %43 {strides = array<i32>} : memref<1x16x256xbf16, #tpu.memory_space<vmem>>, vector<1x16x256xbf16>,
    } else {
    }
    return
  }
  func.func @transform_0(%arg0: i32, %arg1: i32, %arg2: i32) -> (i32, i32, i32) {
    %c0_i32 = arith.constant 0 : i32
    %c0_i32_0 = arith.constant 0 : i32
    return %arg0, %c0_i32, %arg2 : i32, i32, i32
  }
  func.func @transform_1(%arg0: i32, %arg1: i32, %arg2: i32) -> (i32, i32) {
    %c0_i32 = arith.constant 0 : i32
    return %arg2, %arg1 : i32, i32
  }
  func.func @transform_2(%arg0: i32, %arg1: i32, %arg2: i32) -> (i32, i32) {
    %c0_i32 = arith.constant 0 : i32
    %c0_i32_0 = arith.constant 0 : i32
    return %c0_i32, %arg1 : i32, i32
  }
  func.func @transform_3(%arg0: i32, %arg1: i32, %arg2: i32) -> (i32, i32, i32) {
    %c0_i32 = arith.constant 0 : i32
    %c0_i32_0 = arith.constant 0 : i32
    return %arg0, %c0_i32, %arg1 : i32, i32, i32
  }
}

module attributes {stable_mosaic.version = 11 : i64} {
  func.func @_conv_fused_kernel(%arg0: i32, %arg1: i32, %arg2: i32, %arg3: memref<1x9x2048xbf16, #tpu.memory_space<vmem>>, %arg4: memref<2048x512xbf16, #tpu.memory_space<vmem>>, %arg5: memref<1x512xf32, #tpu.memory_space<vmem>>, %arg6: memref<1x9x512xbf16, #tpu.memory_space<vmem>>, %arg7: memref<9x512xf32, #tpu.memory_space<vmem>>) attributes {dimension_semantics = [#tpu.dimension_semantics<parallel>, #tpu.dimension_semantics<parallel>, #tpu.dimension_semantics<arbitrary>], iteration_bounds = array<i64: 2, 1, 2>, scalar_prefetch = 0 : i64, scratch_operands = 1 : i64, tpu.core_type = #tpu.core_type<tc>, window_params = [{transform_indices = @transform_0, window_bounds = array<i64: 1, 9, 2048>}, {transform_indices = @transform_1, window_bounds = array<i64: 2048, 512>}, {transform_indices = @transform_2, window_bounds = array<i64: 1, 512>}, {transform_indices = @transform_3, window_bounds = array<i64: 1, 9, 512>}]} {
    %c0_i32 = arith.constant 0 : i32
    %0 = arith.cmpi eq, %arg2, %c0_i32 : i32
    %1 = arith.extui %0 : i1 to i32
    %c0_i32_0 = arith.constant 0 : i32
    %2 = arith.cmpi ne, %1, %c0_i32_0 : i32
    scf.if %2 {
      %cst_10 = arith.constant 0.000000e+00 : f32
      %13 = vector.broadcast %cst_10 : f32 to vector<9x512xf32>
      %c0_11 = arith.constant 0 : index
      %c0_12 = arith.constant 0 : index
      %14 = vector.load %arg7[%c0_11, %c0_12] : memref<9x512xf32, #tpu.memory_space<vmem>>, vector<9x512xf32>
      tpu.vector_store %arg7[%c0_11, %c0_12], %13 {strides = array<i32>} : memref<9x512xf32, #tpu.memory_space<vmem>>, vector<9x512xf32>,
    } else {
    }
    %c0 = arith.constant 0 : index
    %c0_1 = arith.constant 0 : index
    %3 = vector.load %arg7[%c0, %c0_1] : memref<9x512xf32, #tpu.memory_space<vmem>>, vector<9x512xf32>
    %c0_2 = arith.constant 0 : index
    %c0_3 = arith.constant 0 : index
    %c0_4 = arith.constant 0 : index
    %4 = vector.load %arg3[%c0_2, %c0_3, %c0_4] : memref<1x9x2048xbf16, #tpu.memory_space<vmem>>, vector<1x9x2048xbf16>
    %5 = vector.shape_cast %4 : vector<1x9x2048xbf16> to vector<9x2048xbf16>
    %c0_5 = arith.constant 0 : index
    %c0_6 = arith.constant 0 : index
    %6 = vector.load %arg4[%c0_5, %c0_6] : memref<2048x512xbf16, #tpu.memory_space<vmem>>, vector<2048x512xbf16>
    %cst = arith.constant dense<0.000000e+00> : vector<9x512xf32>
    %7 = tpu.matmul %5, %6, %cst {dimension_numbers = #tpu.dot_dimension_numbers<[1], [0], [0], [1], [0, 0, 1, 1], [], []>} : vector<9x2048xbf16>, vector<2048x512xbf16>, vector<9x512xf32> -> vector<9x512xf32>
    %8 = arith.addf %3, %7 : vector<9x512xf32>
    %c0_7 = arith.constant 0 : index
    %c0_8 = arith.constant 0 : index
    %9 = vector.load %arg7[%c0_7, %c0_8] : memref<9x512xf32, #tpu.memory_space<vmem>>, vector<9x512xf32>
    tpu.vector_store %arg7[%c0_7, %c0_8], %8 {strides = array<i32>} : memref<9x512xf32, #tpu.memory_space<vmem>>, vector<9x512xf32>,
    %c1_i32 = arith.constant 1 : i32
    %10 = arith.cmpi eq, %arg2, %c1_i32 : i32
    %11 = arith.extui %10 : i1 to i32
    %c0_i32_9 = arith.constant 0 : i32
    %12 = arith.cmpi ne, %11, %c0_i32_9 : i32
    scf.if %12 {
      %c0_10 = arith.constant 0 : index
      %c0_11 = arith.constant 0 : index
      %13 = vector.load %arg7[%c0_10, %c0_11] : memref<9x512xf32, #tpu.memory_space<vmem>>, vector<9x512xf32>
      %c0_12 = arith.constant 0 : index
      %c0_13 = arith.constant 0 : index
      %14 = vector.load %arg5[%c0_12, %c0_13] : memref<1x512xf32, #tpu.memory_space<vmem>>, vector<1x512xf32>
      %15 = vector.broadcast %14 : vector<1x512xf32> to vector<9x512xf32>
      %16 = arith.addf %13, %15 : vector<9x512xf32>
      %cst_14 = arith.constant dense<0.000000e+00> : vector<512xf32>
      %17 = vector.multi_reduction <add>, %16, %cst_14 [0] : vector<9x512xf32> to vector<512xf32>
      %18 = vector.shape_cast %17 : vector<512xf32> to vector<1x512xf32>
      %cst_15 = arith.constant 9.000000e+00 : f32
      %19 = vector.broadcast %cst_15 : f32 to vector<1x512xf32>
      %20 = arith.divf %18, %19 : vector<1x512xf32>
      %21 = vector.broadcast %20 : vector<1x512xf32> to vector<9x512xf32>
      %22 = arith.subf %16, %21 : vector<9x512xf32>
      %23 = arith.mulf %22, %22 : vector<9x512xf32>
      %cst_16 = arith.constant dense<0.000000e+00> : vector<512xf32>
      %24 = vector.multi_reduction <add>, %23, %cst_16 [0] : vector<9x512xf32> to vector<512xf32>
      %25 = vector.shape_cast %24 : vector<512xf32> to vector<1x512xf32>
      %cst_17 = arith.constant 9.000000e+00 : f32
      %26 = vector.broadcast %cst_17 : f32 to vector<1x512xf32>
      %27 = arith.divf %25, %26 : vector<1x512xf32>
      %28 = vector.broadcast %20 : vector<1x512xf32> to vector<9x512xf32>
      %29 = arith.subf %16, %28 : vector<9x512xf32>
      %cst_18 = arith.constant 9.99999974E-6 : f32
      %30 = vector.broadcast %cst_18 : f32 to vector<1x512xf32>
      %31 = arith.addf %27, %30 : vector<1x512xf32>
      %32 = math.rsqrt %31 : vector<1x512xf32>
      %33 = vector.broadcast %32 : vector<1x512xf32> to vector<9x512xf32>
      %34 = arith.mulf %29, %33 : vector<9x512xf32>
      %cst_19 = arith.constant 0.000000e+00 : f32
      %35 = vector.broadcast %cst_19 : f32 to vector<9x512xf32>
      %36 = arith.cmpf oge, %34, %35 : vector<9x512xf32>
      %cst_20 = arith.constant 2.000000e-01 : f32
      %37 = vector.broadcast %cst_20 : f32 to vector<9x512xf32>
      %38 = arith.mulf %37, %34 : vector<9x512xf32>
      %39 = arith.select %36, %34, %38 : vector<9x512xi1>, vector<9x512xf32>
      %40 = arith.truncf %39 : vector<9x512xf32> to vector<9x512xbf16>
      %c0_21 = arith.constant 0 : index
      %c0_22 = arith.constant 0 : index
      %c0_23 = arith.constant 0 : index
      %41 = vector.load %arg6[%c0_21, %c0_22, %c0_23] : memref<1x9x512xbf16, #tpu.memory_space<vmem>>, vector<1x9x512xbf16>
      %42 = vector.shape_cast %41 : vector<1x9x512xbf16> to vector<9x512xbf16>
      %43 = vector.shape_cast %40 : vector<9x512xbf16> to vector<1x9x512xbf16>
      tpu.vector_store %arg6[%c0_21, %c0_22, %c0_23], %43 {strides = array<i32>} : memref<1x9x512xbf16, #tpu.memory_space<vmem>>, vector<1x9x512xbf16>,
    } else {
    }
    return
  }
  func.func @transform_0(%arg0: i32, %arg1: i32, %arg2: i32) -> (i32, i32, i32) {
    %c0_i32 = arith.constant 0 : i32
    %c0_i32_0 = arith.constant 0 : i32
    return %arg0, %c0_i32, %arg2 : i32, i32, i32
  }
  func.func @transform_1(%arg0: i32, %arg1: i32, %arg2: i32) -> (i32, i32) {
    %c0_i32 = arith.constant 0 : i32
    return %arg2, %arg1 : i32, i32
  }
  func.func @transform_2(%arg0: i32, %arg1: i32, %arg2: i32) -> (i32, i32) {
    %c0_i32 = arith.constant 0 : i32
    %c0_i32_0 = arith.constant 0 : i32
    return %c0_i32, %arg1 : i32, i32
  }
  func.func @transform_3(%arg0: i32, %arg1: i32, %arg2: i32) -> (i32, i32, i32) {
    %c0_i32 = arith.constant 0 : i32
    %c0_i32_0 = arith.constant 0 : i32
    return %arg0, %c0_i32, %arg1 : i32, i32, i32
  }
}

module attributes {stable_mosaic.version = 11 : i64} {
  func.func @_conv_fused_kernel(%arg0: i32, %arg1: i32, %arg2: i32, %arg3: memref<1x4x2048xbf16, #tpu.memory_space<vmem>>, %arg4: memref<2048x128xbf16, #tpu.memory_space<vmem>>, %arg5: memref<1x128xf32, #tpu.memory_space<vmem>>, %arg6: memref<1x4x128xf32, #tpu.memory_space<vmem>>, %arg7: memref<4x128xf32, #tpu.memory_space<vmem>>) attributes {dimension_semantics = [#tpu.dimension_semantics<parallel>, #tpu.dimension_semantics<parallel>, #tpu.dimension_semantics<arbitrary>], iteration_bounds = array<i64: 2, 1, 4>, scalar_prefetch = 0 : i64, scratch_operands = 1 : i64, tpu.core_type = #tpu.core_type<tc>, window_params = [{transform_indices = @transform_0, window_bounds = array<i64: 1, 4, 2048>}, {transform_indices = @transform_1, window_bounds = array<i64: 2048, 128>}, {transform_indices = @transform_2, window_bounds = array<i64: 1, 128>}, {transform_indices = @transform_3, window_bounds = array<i64: 1, 4, 128>}]} {
    %c0_i32 = arith.constant 0 : i32
    %0 = arith.cmpi eq, %arg2, %c0_i32 : i32
    %1 = arith.extui %0 : i1 to i32
    %c0_i32_0 = arith.constant 0 : i32
    %2 = arith.cmpi ne, %1, %c0_i32_0 : i32
    scf.if %2 {
      %cst_10 = arith.constant 0.000000e+00 : f32
      %13 = vector.broadcast %cst_10 : f32 to vector<4x128xf32>
      %c0_11 = arith.constant 0 : index
      %c0_12 = arith.constant 0 : index
      %14 = vector.load %arg7[%c0_11, %c0_12] : memref<4x128xf32, #tpu.memory_space<vmem>>, vector<4x128xf32>
      tpu.vector_store %arg7[%c0_11, %c0_12], %13 {strides = array<i32>} : memref<4x128xf32, #tpu.memory_space<vmem>>, vector<4x128xf32>,
    } else {
    }
    %c0 = arith.constant 0 : index
    %c0_1 = arith.constant 0 : index
    %3 = vector.load %arg7[%c0, %c0_1] : memref<4x128xf32, #tpu.memory_space<vmem>>, vector<4x128xf32>
    %c0_2 = arith.constant 0 : index
    %c0_3 = arith.constant 0 : index
    %c0_4 = arith.constant 0 : index
    %4 = vector.load %arg3[%c0_2, %c0_3, %c0_4] : memref<1x4x2048xbf16, #tpu.memory_space<vmem>>, vector<1x4x2048xbf16>
    %5 = vector.shape_cast %4 : vector<1x4x2048xbf16> to vector<4x2048xbf16>
    %c0_5 = arith.constant 0 : index
    %c0_6 = arith.constant 0 : index
    %6 = vector.load %arg4[%c0_5, %c0_6] : memref<2048x128xbf16, #tpu.memory_space<vmem>>, vector<2048x128xbf16>
    %cst = arith.constant dense<0.000000e+00> : vector<4x128xf32>
    %7 = tpu.matmul %5, %6, %cst {dimension_numbers = #tpu.dot_dimension_numbers<[1], [0], [0], [1], [0, 0, 1, 1], [], []>} : vector<4x2048xbf16>, vector<2048x128xbf16>, vector<4x128xf32> -> vector<4x128xf32>
    %8 = arith.addf %3, %7 : vector<4x128xf32>
    %c0_7 = arith.constant 0 : index
    %c0_8 = arith.constant 0 : index
    %9 = vector.load %arg7[%c0_7, %c0_8] : memref<4x128xf32, #tpu.memory_space<vmem>>, vector<4x128xf32>
    tpu.vector_store %arg7[%c0_7, %c0_8], %8 {strides = array<i32>} : memref<4x128xf32, #tpu.memory_space<vmem>>, vector<4x128xf32>,
    %c3_i32 = arith.constant 3 : i32
    %10 = arith.cmpi eq, %arg2, %c3_i32 : i32
    %11 = arith.extui %10 : i1 to i32
    %c0_i32_9 = arith.constant 0 : i32
    %12 = arith.cmpi ne, %11, %c0_i32_9 : i32
    scf.if %12 {
      %c0_10 = arith.constant 0 : index
      %c0_11 = arith.constant 0 : index
      %13 = vector.load %arg7[%c0_10, %c0_11] : memref<4x128xf32, #tpu.memory_space<vmem>>, vector<4x128xf32>
      %c0_12 = arith.constant 0 : index
      %c0_13 = arith.constant 0 : index
      %14 = vector.load %arg5[%c0_12, %c0_13] : memref<1x128xf32, #tpu.memory_space<vmem>>, vector<1x128xf32>
      %15 = vector.broadcast %14 : vector<1x128xf32> to vector<4x128xf32>
      %16 = arith.addf %13, %15 : vector<4x128xf32>
      %c0_14 = arith.constant 0 : index
      %c0_15 = arith.constant 0 : index
      %c0_16 = arith.constant 0 : index
      %17 = vector.load %arg6[%c0_14, %c0_15, %c0_16] : memref<1x4x128xf32, #tpu.memory_space<vmem>>, vector<1x4x128xf32>
      %18 = vector.shape_cast %17 : vector<1x4x128xf32> to vector<4x128xf32>
      %19 = vector.shape_cast %16 : vector<4x128xf32> to vector<1x4x128xf32>
      tpu.vector_store %arg6[%c0_14, %c0_15, %c0_16], %19 {strides = array<i32>} : memref<1x4x128xf32, #tpu.memory_space<vmem>>, vector<1x4x128xf32>,
    } else {
    }
    return
  }
  func.func @transform_0(%arg0: i32, %arg1: i32, %arg2: i32) -> (i32, i32, i32) {
    %c0_i32 = arith.constant 0 : i32
    %c0_i32_0 = arith.constant 0 : i32
    return %arg0, %c0_i32, %arg2 : i32, i32, i32
  }
  func.func @transform_1(%arg0: i32, %arg1: i32, %arg2: i32) -> (i32, i32) {
    %c0_i32 = arith.constant 0 : i32
    return %arg2, %arg1 : i32, i32
  }
  func.func @transform_2(%arg0: i32, %arg1: i32, %arg2: i32) -> (i32, i32) {
    %c0_i32 = arith.constant 0 : i32
    %c0_i32_0 = arith.constant 0 : i32
    return %c0_i32, %arg1 : i32, i32
  }
  func.func @transform_3(%arg0: i32, %arg1: i32, %arg2: i32) -> (i32, i32, i32) {
    %c0_i32 = arith.constant 0 : i32
    %c0_i32_0 = arith.constant 0 : i32
    return %arg0, %c0_i32, %arg1 : i32, i32, i32
  }
}

</mosaic_0001>

<llo_original>
// kernel: discriminator_forward.5
$region0: #{discriminator_forward.5}
  #allocation0 [shape = 'u32[]', space=smem, size = 0x4, offset = 0x4, fixed_abs, tag = 'smem constant byte address 0x4 - core index']
  #allocation1 [shape = 'u32[72,128]{1,0:T(1,128)}', space=vmem, size = 0x9000, scoped, tag = 'internal scratch']
  #allocation2 [shape = 'f32[256,128]{1,0:T(8,128)}', space=vmem, size = 0x20000, scoped, tag = 'scratch operand']
  %s0 = inlined_call_operand.vmem [shape: bf16[2,256,128], index: 0, kind: input, shape index: {}]
  %s1 = inlined_call_operand.vmem [shape: bf16[128,128], index: 1, kind: input, shape index: {}]
  %s2 = inlined_call_operand.vmem [shape: f32[1,128], index: 2, kind: input, shape index: {}]
  %s3 = inlined_call_operand.vmem [shape: bf16[2,256,128], index: 3, kind: output, shape index: {}]
  %s4 = sld [smem:[#allocation0]]
  $region53: #{discriminator_forward.5} parent=0
    _
  %s6 = ssub.s32 1, %s4
  %s7 = scalar_select 0, %s6, %s4
  loop: start=0, step=1, limit=4
  $region2: #{discriminator_forward.5} parent=0 // loop_pre_header
    _
  $region3: #{discriminator_forward.5} parent=0 // loop_header
    %s9 = sphi 0, %s13
    %p10 = scmp.ge.s32.totalorder %s9, 4
    %s16 = sphi 0, %s35
    %s17 = sphi 0, %s31
    %s18 = sphi 0, %s27
    %s19 = sphi 0, %s16
    %s20 = sphi 0, %s17
    %s21 = sphi 0, %s18
    %s22 = sphi 0, %s19
    %s23 = sphi 0, %s20
    %s24 = sphi 0, %s21
    %s40 = sphi 0, %s42
    %s43 = sphi 0, %s40
    %s44 = sphi 0, %s43
    %s60 = sphi 0, %s44
    %s68 = sphi 0, %s70
    %s71 = sphi 0, %s68
    %s72 = sphi 0, %s71
    %s88 = sphi 0, %s72
    %s94 = sphi 0, %s96
    %s97 = sphi 0, %s94
    %s98 = sphi 0, %s97
    %s114 = sphi 0, %s98
    %s122 = sphi 0, %s124
    %s125 = sphi 0, %s122
    %s126 = sphi 0, %s125
    %s142 = sphi 0, %s126
  $region4: #{discriminator_forward.5} parent=0 // loop_header_branch
    %12 = sbr.rel (%p10) target = $region8
  $region5: #{discriminator_forward.5} parent=0 // loop_body
    %s14 = ssub.s32 %s9, 1
    %s15 = ssub.s32 %s9, 2
    %s25 = sadd.s32 1, %s18
    %p26 = scmp.ge.s32.totalorder %s25, 1
    %s27 = scalar_select %p26, 0, %s25
    %s28 = sadd.s32 1, %s17
    %s29 = scalar_select %p26, %s28, %s17
    %p30 = scmp.ge.s32.totalorder %s29, 1
    %s31 = scalar_select %p30, 0, %s29
    %s32 = sadd.s32 1, %s16
    %s33 = scalar_select %p30, %s32, %s16
    %p34 = scmp.ge.s32.totalorder %s33, 2
    %s35 = scalar_select %p34, 0, %s33
    %s36 = ssub.s32 %s16, %s35
    %s37 = ssub.s32 %s18, %s27
    %s38 = sor.u32 %s36, %s37
    %p39 = scmp.eq.s32.totalorder %s38, 0
    %s41 = sadd.s32 %s40, 1
    %s42 = scalar_select %p39, %s40, %s41
    %p45 = pneg %p39
    %p46 = scmp.eq.s32.totalorder %s9, 1
    %p47 = por %p45, %p46
    %p48 = scmp.ne.s32.totalorder %s40, %s43
    %p49 = scmp.eq.s32.totalorder %s9, 0
    %p50 = por %p48, %p49
    %p51 = scmp.ne.s32.totalorder %s40, %s43
    %p52 = scmp.eq.s32.totalorder %s14, 1
    %p53 = por %p51, %p52
    %p54 = scmp.ne.s32.totalorder %s43, %s44
    %p55 = scmp.eq.s32.totalorder %s14, 0
    %p56 = por %p54, %p55
    %p57 = scmp.ne.s32.totalorder %s43, %s44
    %p58 = scmp.eq.s32.totalorder %s15, 1
    %p59 = por %p57, %p58
    %p61 = scmp.ne.s32.totalorder %s44, %s60
    %p62 = scmp.eq.s32.totalorder %s15, 0
    %p63 = por %p61, %p62
    %s64 = ssub.s32 %s18, %s27
    %s65 = ssub.s32 %s17, %s31
    %s66 = sor.u32 %s64, %s65
    %p67 = scmp.eq.s32.totalorder %s66, 0
    %s69 = sadd.s32 %s68, 1
    %s70 = scalar_select %p67, %s68, %s69
    %p73 = pneg %p67
    %p74 = scmp.eq.s32.totalorder %s9, 1
    %p75 = por %p73, %p74
    %p76 = scmp.ne.s32.totalorder %s68, %s71
    %p77 = scmp.eq.s32.totalorder %s9, 0
    %p78 = por %p76, %p77
    %p79 = scmp.ne.s32.totalorder %s68, %s71
    %p80 = scmp.eq.s32.totalorder %s14, 1
    %p81 = por %p79, %p80
    %p82 = scmp.ne.s32.totalorder %s71, %s72
    %p83 = scmp.eq.s32.totalorder %s14, 0
    %p84 = por %p82, %p83
    %p85 = scmp.ne.s32.totalorder %s71, %s72
    %p86 = scmp.eq.s32.totalorder %s15, 1
    %p87 = por %p85, %p86
    %p89 = scmp.ne.s32.totalorder %s72, %s88
    %p90 = scmp.eq.s32.totalorder %s15, 0
    %p91 = por %p89, %p90
    %s92 = ssub.s32 %s17, %s31
    %p93 = scmp.eq.s32.totalorder %s92, 0
    %s95 = sadd.s32 %s94, 1
    %s96 = scalar_select %p93, %s94, %s95
    %p99 = pneg %p93
    %p100 = scmp.eq.s32.totalorder %s9, 1
    %p101 = por %p99, %p100
    %p102 = scmp.ne.s32.totalorder %s94, %s97
    %p103 = scmp.eq.s32.totalorder %s9, 0
    %p104 = por %p102, %p103
    %p105 = scmp.ne.s32.totalorder %s94, %s97
    %p106 = scmp.eq.s32.totalorder %s14, 1
    %p107 = por %p105, %p106
    %p108 = scmp.ne.s32.totalorder %s97, %s98
    %p109 = scmp.eq.s32.totalorder %s14, 0
    %p110 = por %p108, %p109
    %p111 = scmp.ne.s32.totalorder %s97, %s98
    %p112 = scmp.eq.s32.totalorder %s15, 1
    %p113 = por %p111, %p112
    %p115 = scmp.ne.s32.totalorder %s98, %s114
    %p116 = scmp.eq.s32.totalorder %s15, 0
    %p117 = por %p115, %p116
    %s118 = ssub.s32 %s16, %s35
    %s119 = ssub.s32 %s17, %s31
    %s120 = sor.u32 %s118, %s119
    %p121 = scmp.eq.s32.totalorder %s120, 0
    %s123 = sadd.s32 %s122, 1
    %s124 = scalar_select %p121, %s122, %s123
    %p127 = pneg %p121
    %p128 = scmp.eq.s32.totalorder %s9, 1
    %p129 = por %p127, %p128
    %p130 = scmp.ne.s32.totalorder %s122, %s125
    %p131 = scmp.eq.s32.totalorder %s9, 0
    %p132 = por %p130, %p131
    %p133 = scmp.ne.s32.totalorder %s122, %s125
    %p134 = scmp.eq.s32.totalorder %s14, 1
    %p135 = por %p133, %p134
    %p136 = scmp.ne.s32.totalorder %s125, %s126
    %p137 = scmp.eq.s32.totalorder %s14, 0
    %p138 = por %p136, %p137
    %p139 = scmp.ne.s32.totalorder %s125, %s126
    %p140 = scmp.eq.s32.totalorder %s15, 1
    %p141 = por %p139, %p140
    %p143 = scmp.ne.s32.totalorder %s126, %s142
    %p144 = scmp.eq.s32.totalorder %s15, 0
    %p145 = por %p143, %p144
    %p146 = scmp.le.s32.totalorder 1, %s9
    %p147 = scmp.lt.s32.totalorder %s9, 3
    %p148 = pnand %p146, %p147
    %p149 = pneg %p148
    // Predicated region
    $region9: #{discriminator_forward.5} parent=5 // pred_check
      _
    $region10: #{discriminator_forward.5} parent=5 // pred_check_branch
      %151 = sbr.rel (%p148) target = $region12
    $region11: #{discriminator_forward.5} parent=5 // pred_region
      %s152 = ssub.s32 %s9, 1
      // Predicated region
      $region13: #{discriminator_forward.5} parent=11 // pred_check
        %p153 = pneg %p84
      $region14: #{discriminator_forward.5} parent=11 // pred_check_branch
        %155 = sbr.rel (%p153) target = $region16
      $region15: #{discriminator_forward.5} parent=11 // pred_region
        %s156 = smul.u32 16, %s21
        %p157 = scmp.lt.s32.totalorder %s156, 15
        %s158 = scalar_select %p157, %s156, 15
        %p159 = scmp.lt.s32.totalorder %s20, 0
        %s160 = scalar_select %p159, %s20, 0
        %s161 = sadd.s32 %s160, %s158
        %s162 = smul.addr %s161, 4
        %s163 = scalar_lea.vmem %s1, %s162
        %s164 = smul.u32 16, %s21
      $region16: #{discriminator_forward.5} parent=11 // pred_fallthru
        _
      // Predicated region
      $region17: #{discriminator_forward.5} parent=11 // pred_check
        %p165 = pneg %p110
      $region18: #{discriminator_forward.5} parent=11 // pred_check_branch
        %167 = sbr.rel (%p165) target = $region20
      $region19: #{discriminator_forward.5} parent=11 // pred_region
        %p168 = scmp.lt.s32.totalorder %s20, 0
        %s169 = scalar_select %p168, %s20, 0
        %s170 = scalar_lea.vmem %s2, %s169
      $region20: #{discriminator_forward.5} parent=11 // pred_fallthru
        _
    $region12: #{discriminator_forward.5} parent=5 // pred_fallthru
      _
    %p171 = scmp.lt.s32.totalorder %s9, 2
    // Predicated region
    $region21: #{discriminator_forward.5} parent=5 // pred_check
      %p172 = pneg %p171
    $region22: #{discriminator_forward.5} parent=5 // pred_check_branch
      %174 = sbr.rel (%p172) target = $region24
    $region23: #{discriminator_forward.5} parent=5 // pred_region
      // Predicated region
      $region25: #{discriminator_forward.5} parent=23 // pred_check
        %p175 = pneg %p50
      $region26: #{discriminator_forward.5} parent=23 // pred_check_branch
        %177 = sbr.rel (%p175) target = $region28
      $region27: #{discriminator_forward.5} parent=23 // pred_region
        %p178 = scmp.lt.s32.totalorder %s16, 1
        %s179 = scalar_select %p178, %s16, 1
        %p180 = scmp.lt.s32.totalorder %s18, 0
        %s181 = scalar_select %p180, %s18, 0
        %s182 = smul.addr %s179, 32
        %s183 = sadd.s32 %s181, %s182
        %s184 = smul.addr %s183, 4
        %s185 = scalar_lea.vmem %s0, %s184
      $region28: #{discriminator_forward.5} parent=23 // pred_fallthru
        _
    $region24: #{discriminator_forward.5} parent=5 // pred_fallthru
      _
    %p186 = scmp.le.s32.totalorder 1, %s9
    %p187 = scmp.lt.s32.totalorder %s9, 3
    %p188 = pnand %p186, %p187
    %p189 = pneg %p188
    // Predicated region
    $region29: #{discriminator_forward.5} parent=5 // pred_check
      _
    $region30: #{discriminator_forward.5} parent=5 // pred_check_branch
      %191 = sbr.rel (%p188) target = $region32
    $region31: #{discriminator_forward.5} parent=5 // pred_region
      %s192 = ssub.s32 %s9, 1
      %p193 = scmp.lt.s32.totalorder %s19, 1
      %s194 = scalar_select %p193, %s19, 1
      %p195 = scmp.lt.s32.totalorder %s21, 0
      %s196 = scalar_select %p195, %s21, 0
      %s197 = smul.addr %s194, 32
      %s198 = sadd.s32 %s196, %s197
      %s199 = smul.addr %s198, 4
      %s200 = scalar_lea.vmem %s0, %s199
      %p201 = pneg %p56
      %p202 = pneg %p53
      %s203 = smul.u32 16, %s21
      %p204 = scmp.lt.s32.totalorder %s203, 15
      %s205 = scalar_select %p204, %s203, 15
      %p206 = scmp.lt.s32.totalorder %s20, 0
      %s207 = scalar_select %p206, %s20, 0
      %s208 = sadd.s32 %s207, %s205
      %s209 = smul.addr %s208, 4
      %s210 = scalar_lea.vmem %s1, %s209
      %p211 = pneg %p84
      %p212 = pneg %p81
      %p213 = scmp.lt.s32.totalorder %s20, 0
      %s214 = scalar_select %p213, %s20, 0
      %s215 = scalar_lea.vmem %s2, %s214
      %p216 = pneg %p110
      %p217 = pneg %p107
      %p218 = pneg %p138
      %p219 = pneg %p135
      %p220 = scmp.lt.s32.totalorder %s19, 1
      %s221 = scalar_select %p220, %s19, 1
      %p222 = scmp.lt.s32.totalorder %s20, 0
      %s223 = scalar_select %p222, %s20, 0
      %s224 = smul.addr %s221, 32
      %s225 = sadd.s32 %s223, %s224
      %s226 = smul.addr %s225, 4
      %s227 = scalar_lea.vmem %s3, %s226
      %p228 = scmp.lt.s32.totalorder %s19, 1
      %s229 = scalar_select %p228, %s19, 1
      %p230 = scmp.lt.s32.totalorder %s21, 0
      %s231 = scalar_select %p230, %s21, 0
      %s232 = smul.addr %s229, 32
      %s233 = sadd.s32 %s231, %s232
      %s234 = smul.addr %s233, 4
      %s235 = scalar_lea.vmem %s0, %s234
      %s236 = smul.u32 16, %s21
      %p237 = scmp.lt.s32.totalorder %s236, 15
      %s238 = scalar_select %p237, %s236, 15
      %p239 = scmp.lt.s32.totalorder %s20, 0
      %s240 = scalar_select %p239, %s20, 0
      %s241 = sadd.s32 %s240, %s238
      %s242 = smul.addr %s241, 4
      %s243 = scalar_lea.vmem %s1, %s242
      %s244 = smul.u32 16, %s21
      %p245 = scmp.lt.s32.totalorder %s20, 0
      %s246 = scalar_select %p245, %s20, 0
      %s247 = scalar_lea.vmem %s2, %s246
      %p248 = scmp.lt.s32.totalorder %s19, 1
      %s249 = scalar_select %p248, %s19, 1
      %p250 = scmp.lt.s32.totalorder %s20, 0
      %s251 = scalar_select %p250, %s20, 0
      %s252 = smul.addr %s249, 32
      %s253 = sadd.s32 %s251, %s252
      %s254 = smul.addr %s253, 4
      %s255 = scalar_lea.vmem %s3, %s254
      %p256 = scmp.eq.s32.totalorder %s21, 0
      // Predicated region
      $region33: #{discriminator_forward.5} parent=31 // pred_check
        %p257 = pneg %p256
      $region34: #{discriminator_forward.5} parent=31 // pred_check_branch
        %259 = sbr.rel (%p257) target = $region36
      $region35: #{discriminator_forward.5} parent=31 // pred_region
        %260 = vst [vmem:[#allocation2] sm:$0xff] 0.0
        %261 = vst [vmem:[#allocation2 + $0x8] sm:$0xff] 0.0
        %262 = vst [vmem:[#allocation2 + $0x10] sm:$0xff] 0.0
        %263 = vst [vmem:[#allocation2 + $0x18] sm:$0xff] 0.0
        %264 = vst [vmem:[#allocation2 + $0x20] sm:$0xff] 0.0
        %265 = vst [vmem:[#allocation2 + $0x28] sm:$0xff] 0.0
        %266 = vst [vmem:[#allocation2 + $0x30] sm:$0xff] 0.0
        %267 = vst [vmem:[#allocation2 + $0x38] sm:$0xff] 0.0
        %268 = vst [vmem:[#allocation2 + $0x40] sm:$0xff] 0.0
        %269 = vst [vmem:[#allocation2 + $0x48] sm:$0xff] 0.0
        %270 = vst [vmem:[#allocation2 + $0x50] sm:$0xff] 0.0
        %271 = vst [vmem:[#allocation2 + $0x58] sm:$0xff] 0.0
        %272 = vst [vmem:[#allocation2 + $0x60] sm:$0xff] 0.0
        %273 = vst [vmem:[#allocation2 + $0x68] sm:$0xff] 0.0
        %274 = vst [vmem:[#allocation2 + $0x70] sm:$0xff] 0.0
        %275 = vst [vmem:[#allocation2 + $0x78] sm:$0xff] 0.0
        %276 = vst [vmem:[#allocation2 + $0x80] sm:$0xff] 0.0
        %277 = vst [vmem:[#allocation2 + $0x88] sm:$0xff] 0.0
        %278 = vst [vmem:[#allocation2 + $0x90] sm:$0xff] 0.0
        %279 = vst [vmem:[#allocation2 + $0x98] sm:$0xff] 0.0
        %280 = vst [vmem:[#allocation2 + $0xa0] sm:$0xff] 0.0
        %281 = vst [vmem:[#allocation2 + $0xa8] sm:$0xff] 0.0
        %282 = vst [vmem:[#allocation2 + $0xb0] sm:$0xff] 0.0
        %283 = vst [vmem:[#allocation2 + $0xb8] sm:$0xff] 0.0
        %284 = vst [vmem:[#allocation2 + $0xc0] sm:$0xff] 0.0
        %285 = vst [vmem:[#allocation2 + $0xc8] sm:$0xff] 0.0
        %286 = vst [vmem:[#allocation2 + $0xd0] sm:$0xff] 0.0
        %287 = vst [vmem:[#allocation2 + $0xd8] sm:$0xff] 0.0
        %288 = vst [vmem:[#allocation2 + $0xe0] sm:$0xff] 0.0
        %289 = vst [vmem:[#allocation2 + $0xe8] sm:$0xff] 0.0
        %290 = vst [vmem:[#allocation2 + $0xf0] sm:$0xff] 0.0
        %291 = vst [vmem:[#allocation2 + $0xf8] sm:$0xff] 0.0
      $region36: #{discriminator_forward.5} parent=31 // pred_fallthru
        _
      %v292 = vld [vmem:[#allocation2] sm:$0xff]
      %v293 = vld [vmem:[#allocation2 + $0x8] sm:$0xff]
      %v294 = vld [vmem:[#allocation2 + $0x10] sm:$0xff]
      %v295 = vld [vmem:[#allocation2 + $0x18] sm:$0xff]
      %v296 = vld [vmem:[#allocation2 + $0x20] sm:$0xff]
      %v297 = vld [vmem:[#allocation2 + $0x28] sm:$0xff]
      %v298 = vld [vmem:[#allocation2 + $0x30] sm:$0xff]
      %v299 = vld [vmem:[#allocation2 + $0x38] sm:$0xff]
      %v300 = vld [vmem:[#allocation2 + $0x40] sm:$0xff]
      %v301 = vld [vmem:[#allocation2 + $0x48] sm:$0xff]
      %v302 = vld [vmem:[#allocation2 + $0x50] sm:$0xff]
      %v303 = vld [vmem:[#allocation2 + $0x58] sm:$0xff]
      %v304 = vld [vmem:[#allocation2 + $0x60] sm:$0xff]
      %v305 = vld [vmem:[#allocation2 + $0x68] sm:$0xff]
      %v306 = vld [vmem:[#allocation2 + $0x70] sm:$0xff]
      %v307 = vld [vmem:[#allocation2 + $0x78] sm:$0xff]
      %v308 = vld [vmem:[#allocation2 + $0x80] sm:$0xff]
      %v309 = vld [vmem:[#allocation2 + $0x88] sm:$0xff]
      %v310 = vld [vmem:[#allocation2 + $0x90] sm:$0xff]
      %v311 = vld [vmem:[#allocation2 + $0x98] sm:$0xff]
      %v312 = vld [vmem:[#allocation2 + $0xa0] sm:$0xff]
      %v313 = vld [vmem:[#allocation2 + $0xa8] sm:$0xff]
      %v314 = vld [vmem:[#allocation2 + $0xb0] sm:$0xff]
      %v315 = vld [vmem:[#allocation2 + $0xb8] sm:$0xff]
      %v316 = vld [vmem:[#allocation2 + $0xc0] sm:$0xff]
      %v317 = vld [vmem:[#allocation2 + $0xc8] sm:$0xff]
      %v318 = vld [vmem:[#allocation2 + $0xd0] sm:$0xff]
      %v319 = vld [vmem:[#allocation2 + $0xd8] sm:$0xff]
      %v320 = vld [vmem:[#allocation2 + $0xe0] sm:$0xff]
      %v321 = vld [vmem:[#allocation2 + $0xe8] sm:$0xff]
      %v322 = vld [vmem:[#allocation2 + $0xf0] sm:$0xff]
      %v323 = vld [vmem:[#allocation2 + $0xf8] sm:$0xff]
      %v324 = vld [vmem:[%s235] sm:$0xf]
      %v325 = vld [vmem:[%s235 + $0x4] sm:$0xf]
      %v326 = vld [vmem:[%s235 + $0x8] sm:$0xf]
      %v327 = vld [vmem:[%s235 + $0xc] sm:$0xf]
      %v328 = vld [vmem:[%s235 + $0x10] sm:$0xf]
      %v329 = vld [vmem:[%s235 + $0x14] sm:$0xf]
      %v330 = vld [vmem:[%s235 + $0x18] sm:$0xf]
      %v331 = vld [vmem:[%s235 + $0x1c] sm:$0xf]
      %v332 = vld [vmem:[%s235 + $0x20] sm:$0xf]
      %v333 = vld [vmem:[%s235 + $0x24] sm:$0xf]
      %v334 = vld [vmem:[%s235 + $0x28] sm:$0xf]
      %v335 = vld [vmem:[%s235 + $0x2c] sm:$0xf]
      %v336 = vld [vmem:[%s235 + $0x30] sm:$0xf]
      %v337 = vld [vmem:[%s235 + $0x34] sm:$0xf]
      %v338 = vld [vmem:[%s235 + $0x38] sm:$0xf]
      %v339 = vld [vmem:[%s235 + $0x3c] sm:$0xf]
      %v340 = vld [vmem:[%s235 + $0x40] sm:$0xf]
      %v341 = vld [vmem:[%s235 + $0x44] sm:$0xf]
      %v342 = vld [vmem:[%s235 + $0x48] sm:$0xf]
      %v343 = vld [vmem:[%s235 + $0x4c] sm:$0xf]
      %v344 = vld [vmem:[%s235 + $0x50] sm:$0xf]
      %v345 = vld [vmem:[%s235 + $0x54] sm:$0xf]
      %v346 = vld [vmem:[%s235 + $0x58] sm:$0xf]
      %v347 = vld [vmem:[%s235 + $0x5c] sm:$0xf]
      %v348 = vld [vmem:[%s235 + $0x60] sm:$0xf]
      %v349 = vld [vmem:[%s235 + $0x64] sm:$0xf]
      %v350 = vld [vmem:[%s235 + $0x68] sm:$0xf]
      %v351 = vld [vmem:[%s235 + $0x6c] sm:$0xf]
      %v352 = vld [vmem:[%s235 + $0x70] sm:$0xf]
      %v353 = vld [vmem:[%s235 + $0x74] sm:$0xf]
      %v354 = vld [vmem:[%s235 + $0x78] sm:$0xf]
      %v355 = vld [vmem:[%s235 + $0x7c] sm:$0xf]
      %v356 = vld [vmem:[%s243] sm:$0xf]
      %v357 = vld [vmem:[%s243 + $0x4] sm:$0xf]
      %v358 = vld [vmem:[%s243 + $0x8] sm:$0xf]
      %v359 = vld [vmem:[%s243 + $0xc] sm:$0xf]
      %v360 = vld [vmem:[%s243 + $0x10] sm:$0xf]
      %v361 = vld [vmem:[%s243 + $0x14] sm:$0xf]
      %v362 = vld [vmem:[%s243 + $0x18] sm:$0xf]
      %v363 = vld [vmem:[%s243 + $0x1c] sm:$0xf]
      %v364 = vld [vmem:[%s243 + $0x20] sm:$0xf]
      %v365 = vld [vmem:[%s243 + $0x24] sm:$0xf]
      %v366 = vld [vmem:[%s243 + $0x28] sm:$0xf]
      %v367 = vld [vmem:[%s243 + $0x2c] sm:$0xf]
      %v368 = vld [vmem:[%s243 + $0x30] sm:$0xf]
      %v369 = vld [vmem:[%s243 + $0x34] sm:$0xf]
      %v370 = vld [vmem:[%s243 + $0x38] sm:$0xf]
      %v371 = vld [vmem:[%s243 + $0x3c] sm:$0xf]
      %v404 = vunpack.c.l.b16 %v324
      %v405 = vunpack.c.l.b16 %v325
      %v406 = vunpack.c.l.b16 %v326
      %v407 = vunpack.c.l.b16 %v327
      %v408 = vunpack.c.l.b16 %v328
      %v409 = vunpack.c.l.b16 %v329
      %v410 = vunpack.c.l.b16 %v330
      %v411 = vunpack.c.l.b16 %v331
      %v412 = vunpack.c.l.b16 %v332
      %v413 = vunpack.c.l.b16 %v333
      %v414 = vunpack.c.l.b16 %v334
      %v415 = vunpack.c.l.b16 %v335
      %v416 = vunpack.c.l.b16 %v336
      %v417 = vunpack.c.l.b16 %v337
      %v418 = vunpack.c.l.b16 %v338
      %v419 = vunpack.c.l.b16 %v339
      %v420 = vunpack.c.l.b16 %v340
      %v421 = vunpack.c.l.b16 %v341
      %v422 = vunpack.c.l.b16 %v342
      %v423 = vunpack.c.l.b16 %v343
      %v424 = vunpack.c.l.b16 %v344
      %v425 = vunpack.c.l.b16 %v345
      %v426 = vunpack.c.l.b16 %v346
      %v427 = vunpack.c.l.b16 %v347
      %v428 = vunpack.c.l.b16 %v348
      %v429 = vunpack.c.l.b16 %v349
      %v430 = vunpack.c.l.b16 %v350
      %v431 = vunpack.c.l.b16 %v351
      %v432 = vunpack.c.l.b16 %v352
      %v433 = vunpack.c.l.b16 %v353
      %v434 = vunpack.c.l.b16 %v354
      %v435 = vunpack.c.l.b16 %v355
      %v436 = vpack.c.b16 %v405, %v404
      %v437 = vpack.c.b16 %v407, %v406
      %v438 = vpack.c.b16 %v409, %v408
      %v439 = vpack.c.b16 %v411, %v410
      %v440 = vpack.c.b16 %v413, %v412
      %v441 = vpack.c.b16 %v415, %v414
      %v442 = vpack.c.b16 %v417, %v416
      %v443 = vpack.c.b16 %v419, %v418
      %v444 = vpack.c.b16 %v421, %v420
      %v445 = vpack.c.b16 %v423, %v422
      %v446 = vpack.c.b16 %v425, %v424
      %v447 = vpack.c.b16 %v427, %v426
      %v448 = vpack.c.b16 %v429, %v428
      %v449 = vpack.c.b16 %v431, %v430
      %v450 = vpack.c.b16 %v433, %v432
      %v451 = vpack.c.b16 %v435, %v434
      %v484 = vunpack.c.l.b16 %v356
      %v485 = vunpack.c.l.b16 %v357
      %v486 = vunpack.c.l.b16 %v358
      %v487 = vunpack.c.l.b16 %v359
      %v488 = vunpack.c.l.b16 %v360
      %v489 = vunpack.c.l.b16 %v361
      %v490 = vunpack.c.l.b16 %v362
      %v491 = vunpack.c.l.b16 %v363
      %v492 = vunpack.c.l.b16 %v364
      %v493 = vunpack.c.l.b16 %v365
      %v494 = vunpack.c.l.b16 %v366
      %v495 = vunpack.c.l.b16 %v367
      %v496 = vunpack.c.l.b16 %v368
      %v497 = vunpack.c.l.b16 %v369
      %v498 = vunpack.c.l.b16 %v370
      %v499 = vunpack.c.l.b16 %v371
      %v500 = vpack.c.b16 %v485, %v484
      %v501 = vpack.c.b16 %v487, %v486
      %v502 = vpack.c.b16 %v489, %v488
      %v503 = vpack.c.b16 %v491, %v490
      %v504 = vpack.c.b16 %v493, %v492
      %v505 = vpack.c.b16 %v495, %v494
      %v506 = vpack.c.b16 %v497, %v496
      %v507 = vpack.c.b16 %v499, %v498
      %516 = vmatpush.bf16.msra.mxu0 %v507
      %517 = vmatpush.bf16.msra.mxu0 %v506
      %518 = vmatpush.bf16.msra.mxu0 %v505
      %519 = vmatpush.bf16.msra.mxu0 %v504
      %520 = vmatpush.bf16.msra.mxu0 %v503
      %521 = vmatpush.bf16.msra.mxu0 %v502
      %522 = vmatpush.bf16.msra.mxu0 %v501
      %523 = vmatpush.bf16.msra.mxu0 %v500
      %524 = vmatmul.bf16.gmra.mxu0 %v436
      %v525 = vpop.f32.mrf.mxu0
      %v526 = vadd.f32 0.0, %v525
      %v527 = vpop.f32.mrf.mxu0
      %v528 = vadd.f32 0.0, %v527
      %529 = vmatmul.bf16.gmra.mxu0 %v437
      %v530 = vpop.f32.mrf.mxu0
      %v531 = vadd.f32 0.0, %v530
      %v532 = vpop.f32.mrf.mxu0
      %v533 = vadd.f32 0.0, %v532
      %534 = vmatmul.bf16.gmra.mxu0 %v438
      %v535 = vpop.f32.mrf.mxu0
      %v536 = vadd.f32 0.0, %v535
      %v537 = vpop.f32.mrf.mxu0
      %v538 = vadd.f32 0.0, %v537
      %539 = vmatmul.bf16.gmra.mxu0 %v439
      %v540 = vpop.f32.mrf.mxu0
      %v541 = vadd.f32 0.0, %v540
      %v542 = vpop.f32.mrf.mxu0
      %v543 = vadd.f32 0.0, %v542
      %544 = vmatmul.bf16.gmra.mxu0 %v440
      %v545 = vpop.f32.mrf.mxu0
      %v546 = vadd.f32 0.0, %v545
      %v547 = vpop.f32.mrf.mxu0
      %v548 = vadd.f32 0.0, %v547
      %549 = vmatmul.bf16.gmra.mxu0 %v441
      %v550 = vpop.f32.mrf.mxu0
      %v551 = vadd.f32 0.0, %v550
      %v552 = vpop.f32.mrf.mxu0
      %v553 = vadd.f32 0.0, %v552
      %554 = vmatmul.bf16.gmra.mxu0 %v442
      %v555 = vpop.f32.mrf.mxu0
      %v556 = vadd.f32 0.0, %v555
      %v557 = vpop.f32.mrf.mxu0
      %v558 = vadd.f32 0.0, %v557
      %559 = vmatmul.bf16.gmra.mxu0 %v443
      %v560 = vpop.f32.mrf.mxu0
      %v561 = vadd.f32 0.0, %v560
      %v562 = vpop.f32.mrf.mxu0
      %v563 = vadd.f32 0.0, %v562
      %564 = vmatmul.bf16.gmra.mxu0 %v444
      %v565 = vpop.f32.mrf.mxu0
      %v566 = vadd.f32 0.0, %v565
      %v567 = vpop.f32.mrf.mxu0
      %v568 = vadd.f32 0.0, %v567
      %569 = vmatmul.bf16.gmra.mxu0 %v445
      %v570 = vpop.f32.mrf.mxu0
      %v571 = vadd.f32 0.0, %v570
      %v572 = vpop.f32.mrf.mxu0
      %v573 = vadd.f32 0.0, %v572
      %574 = vmatmul.bf16.gmra.mxu0 %v446
      %v575 = vpop.f32.mrf.mxu0
      %v576 = vadd.f32 0.0, %v575
      %v577 = vpop.f32.mrf.mxu0
      %v578 = vadd.f32 0.0, %v577
      %579 = vmatmul.bf16.gmra.mxu0 %v447
      %v580 = vpop.f32.mrf.mxu0
      %v581 = vadd.f32 0.0, %v580
      %v582 = vpop.f32.mrf.mxu0
      %v583 = vadd.f32 0.0, %v582
      %584 = vmatmul.bf16.gmra.mxu0 %v448
      %v585 = vpop.f32.mrf.mxu0
      %v586 = vadd.f32 0.0, %v585
      %v587 = vpop.f32.mrf.mxu0
      %v588 = vadd.f32 0.0, %v587
      %589 = vmatmul.bf16.gmra.mxu0 %v449
      %v590 = vpop.f32.mrf.mxu0
      %v591 = vadd.f32 0.0, %v590
      %v592 = vpop.f32.mrf.mxu0
      %v593 = vadd.f32 0.0, %v592
      %594 = vmatmul.bf16.gmra.mxu0 %v450
      %v595 = vpop.f32.mrf.mxu0
      %v596 = vadd.f32 0.0, %v595
      %v597 = vpop.f32.mrf.mxu0
      %v598 = vadd.f32 0.0, %v597
      %599 = vmatmul.bf16.gmra.mxu0 %v451
      %v600 = vpop.f32.mrf.mxu0
      %v601 = vadd.f32 0.0, %v600
      %v602 = vpop.f32.mrf.mxu0
      %v603 = vadd.f32 0.0, %v602
      %604 = vdwg.mxu0
      %v605 = vadd.f32 %v292, %v526
      %v606 = vadd.f32 %v293, %v528
      %v607 = vadd.f32 %v294, %v531
      %v608 = vadd.f32 %v295, %v533
      %v609 = vadd.f32 %v296, %v536
      %v610 = vadd.f32 %v297, %v538
      %v611 = vadd.f32 %v298, %v541
      %v612 = vadd.f32 %v299, %v543
      %v613 = vadd.f32 %v300, %v546
      %v614 = vadd.f32 %v301, %v548
      %v615 = vadd.f32 %v302, %v551
      %v616 = vadd.f32 %v303, %v553
      %v617 = vadd.f32 %v304, %v556
      %v618 = vadd.f32 %v305, %v558
      %v619 = vadd.f32 %v306, %v561
      %v620 = vadd.f32 %v307, %v563
      %v621 = vadd.f32 %v308, %v566
      %v622 = vadd.f32 %v309, %v568
      %v623 = vadd.f32 %v310, %v571
      %v624 = vadd.f32 %v311, %v573
      %v625 = vadd.f32 %v312, %v576
      %v626 = vadd.f32 %v313, %v578
      %v627 = vadd.f32 %v314, %v581
      %v628 = vadd.f32 %v315, %v583
      %v629 = vadd.f32 %v316, %v586
      %v630 = vadd.f32 %v317, %v588
      %v631 = vadd.f32 %v318, %v591
      %v632 = vadd.f32 %v319, %v593
      %v633 = vadd.f32 %v320, %v596
      %v634 = vadd.f32 %v321, %v598
      %v635 = vadd.f32 %v322, %v601
      %v636 = vadd.f32 %v323, %v603
      %637 = vst [vmem:[#allocation2] sm:$0xff] %v605
      %638 = vst [vmem:[#allocation2 + $0x8] sm:$0xff] %v606
      %639 = vst [vmem:[#allocation2 + $0x10] sm:$0xff] %v607
      %640 = vst [vmem:[#allocation2 + $0x18] sm:$0xff] %v608
      %641 = vst [vmem:[#allocation2 + $0x20] sm:$0xff] %v609
      %642 = vst [vmem:[#allocation2 + $0x28] sm:$0xff] %v610
      %643 = vst [vmem:[#allocation2 + $0x30] sm:$0xff] %v611
      %644 = vst [vmem:[#allocation2 + $0x38] sm:$0xff] %v612
      %645 = vst [vmem:[#allocation2 + $0x40] sm:$0xff] %v613
      %646 = vst [vmem:[#allocation2 + $0x48] sm:$0xff] %v614
      %647 = vst [vmem:[#allocation2 + $0x50] sm:$0xff] %v615
      %648 = vst [vmem:[#allocation2 + $0x58] sm:$0xff] %v616
      %649 = vst [vmem:[#allocation2 + $0x60] sm:$0xff] %v617
      %650 = vst [vmem:[#allocation2 + $0x68] sm:$0xff] %v618
      %651 = vst [vmem:[#allocation2 + $0x70] sm:$0xff] %v619
      %652 = vst [vmem:[#allocation2 + $0x78] sm:$0xff] %v620
      %653 = vst [vmem:[#allocation2 + $0x80] sm:$0xff] %v621
      %654 = vst [vmem:[#allocation2 + $0x88] sm:$0xff] %v622
      %655 = vst [vmem:[#allocation2 + $0x90] sm:$0xff] %v623
      %656 = vst [vmem:[#allocation2 + $0x98] sm:$0xff] %v624
      %657 = vst [vmem:[#allocation2 + $0xa0] sm:$0xff] %v625
      %658 = vst [vmem:[#allocation2 + $0xa8] sm:$0xff] %v626
      %659 = vst [vmem:[#allocation2 + $0xb0] sm:$0xff] %v627
      %660 = vst [vmem:[#allocation2 + $0xb8] sm:$0xff] %v628
      %661 = vst [vmem:[#allocation2 + $0xc0] sm:$0xff] %v629
      %662 = vst [vmem:[#allocation2 + $0xc8] sm:$0xff] %v630
      %663 = vst [vmem:[#allocation2 + $0xd0] sm:$0xff] %v631
      %664 = vst [vmem:[#allocation2 + $0xd8] sm:$0xff] %v632
      %665 = vst [vmem:[#allocation2 + $0xe0] sm:$0xff] %v633
      %666 = vst [vmem:[#allocation2 + $0xe8] sm:$0xff] %v634
      %667 = vst [vmem:[#allocation2 + $0xf0] sm:$0xff] %v635
      %668 = vst [vmem:[#allocation2 + $0xf8] sm:$0xff] %v636
      // Predicated region
      $region37: #{discriminator_forward.5} parent=31 // pred_check
        %p669 = pneg %p256
      $region38: #{discriminator_forward.5} parent=31 // pred_check_branch
        %671 = sbr.rel (%p669) target = $region40
      $region39: #{discriminator_forward.5} parent=31 // pred_region
        %v672 = vld [vmem:[#allocation2] sm:$0xff]
        %v673 = vld [vmem:[#allocation2 + $0x8] sm:$0xff]
        %v674 = vld [vmem:[#allocation2 + $0x10] sm:$0xff]
        %v675 = vld [vmem:[#allocation2 + $0x18] sm:$0xff]
        %v676 = vld [vmem:[#allocation2 + $0x20] sm:$0xff]
        %v677 = vld [vmem:[#allocation2 + $0x28] sm:$0xff]
        %v678 = vld [vmem:[#allocation2 + $0x30] sm:$0xff]
        %v679 = vld [vmem:[#allocation2 + $0x38] sm:$0xff]
        %v680 = vld [vmem:[#allocation2 + $0x40] sm:$0xff]
        %v681 = vld [vmem:[#allocation2 + $0x48] sm:$0xff]
        %v682 = vld [vmem:[#allocation2 + $0x50] sm:$0xff]
        %v683 = vld [vmem:[#allocation2 + $0x58] sm:$0xff]
        %v684 = vld [vmem:[#allocation2 + $0x60] sm:$0xff]
        %v685 = vld [vmem:[#allocation2 + $0x68] sm:$0xff]
        %v686 = vld [vmem:[#allocation2 + $0x70] sm:$0xff]
        %v687 = vld [vmem:[#allocation2 + $0x78] sm:$0xff]
        %v688 = vld [vmem:[#allocation2 + $0x80] sm:$0xff]
        %v689 = vld [vmem:[#allocation2 + $0x88] sm:$0xff]
        %v690 = vld [vmem:[#allocation2 + $0x90] sm:$0xff]
        %v691 = vld [vmem:[#allocation2 + $0x98] sm:$0xff]
        %v692 = vld [vmem:[#allocation2 + $0xa0] sm:$0xff]
        %v693 = vld [vmem:[#allocation2 + $0xa8] sm:$0xff]
        %v694 = vld [vmem:[#allocation2 + $0xb0] sm:$0xff]
        %v695 = vld [vmem:[#allocation2 + $0xb8] sm:$0xff]
        %v696 = vld [vmem:[#allocation2 + $0xc0] sm:$0xff]
        %v697 = vld [vmem:[#allocation2 + $0xc8] sm:$0xff]
        %v698 = vld [vmem:[#allocation2 + $0xd0] sm:$0xff]
        %v699 = vld [vmem:[#allocation2 + $0xd8] sm:$0xff]
        %v700 = vld [vmem:[#allocation2 + $0xe0] sm:$0xff]
        %v701 = vld [vmem:[#allocation2 + $0xe8] sm:$0xff]
        %v702 = vld [vmem:[#allocation2 + $0xf0] sm:$0xff]
        %v703 = vld [vmem:[#allocation2 + $0xf8] sm:$0xff]
        %v704 = vld [vmem:[%s247] sm:$0x1]
        %v706 = vperm.slane %v704, 0
        %v708 = vadd.f32 %v672, %v706
        %v709 = vadd.f32 %v673, %v706
        %v710 = vadd.f32 %v674, %v706
        %v711 = vadd.f32 %v675, %v706
        %v712 = vadd.f32 %v676, %v706
        %v713 = vadd.f32 %v677, %v706
        %v714 = vadd.f32 %v678, %v706
        %v715 = vadd.f32 %v679, %v706
        %v716 = vadd.f32 %v680, %v706
        %v717 = vadd.f32 %v681, %v706
        %v718 = vadd.f32 %v682, %v706
        %v719 = vadd.f32 %v683, %v706
        %v720 = vadd.f32 %v684, %v706
        %v721 = vadd.f32 %v685, %v706
        %v722 = vadd.f32 %v686, %v706
        %v723 = vadd.f32 %v687, %v706
        %v724 = vadd.f32 %v688, %v706
        %v725 = vadd.f32 %v689, %v706
        %v726 = vadd.f32 %v690, %v706
        %v727 = vadd.f32 %v691, %v706
        %v728 = vadd.f32 %v692, %v706
        %v729 = vadd.f32 %v693, %v706
        %v730 = vadd.f32 %v694, %v706
        %v731 = vadd.f32 %v695, %v706
        %v732 = vadd.f32 %v696, %v706
        %v733 = vadd.f32 %v697, %v706
        %v734 = vadd.f32 %v698, %v706
        %v735 = vadd.f32 %v699, %v706
        %v736 = vadd.f32 %v700, %v706
        %v737 = vadd.f32 %v701, %v706
        %v738 = vadd.f32 %v702, %v706
        %v739 = vadd.f32 %v703, %v706
        %vm740 = vcmp.ge.f32.partialorder %v708, 0.0
        %vm741 = vcmp.ge.f32.partialorder %v709, 0.0
        %vm742 = vcmp.ge.f32.partialorder %v710, 0.0
        %vm743 = vcmp.ge.f32.partialorder %v711, 0.0
        %vm744 = vcmp.ge.f32.partialorder %v712, 0.0
        %vm745 = vcmp.ge.f32.partialorder %v713, 0.0
        %vm746 = vcmp.ge.f32.partialorder %v714, 0.0
        %vm747 = vcmp.ge.f32.partialorder %v715, 0.0
        %vm748 = vcmp.ge.f32.partialorder %v716, 0.0
        %vm749 = vcmp.ge.f32.partialorder %v717, 0.0
        %vm750 = vcmp.ge.f32.partialorder %v718, 0.0
        %vm751 = vcmp.ge.f32.partialorder %v719, 0.0
        %vm752 = vcmp.ge.f32.partialorder %v720, 0.0
        %vm753 = vcmp.ge.f32.partialorder %v721, 0.0
        %vm754 = vcmp.ge.f32.partialorder %v722, 0.0
        %vm755 = vcmp.ge.f32.partialorder %v723, 0.0
        %vm756 = vcmp.ge.f32.partialorder %v724, 0.0
        %vm757 = vcmp.ge.f32.partialorder %v725, 0.0
        %vm758 = vcmp.ge.f32.partialorder %v726, 0.0
        %vm759 = vcmp.ge.f32.partialorder %v727, 0.0
        %vm760 = vcmp.ge.f32.partialorder %v728, 0.0
        %vm761 = vcmp.ge.f32.partialorder %v729, 0.0
        %vm762 = vcmp.ge.f32.partialorder %v730, 0.0
        %vm763 = vcmp.ge.f32.partialorder %v731, 0.0
        %vm764 = vcmp.ge.f32.partialorder %v732, 0.0
        %vm765 = vcmp.ge.f32.partialorder %v733, 0.0
        %vm766 = vcmp.ge.f32.partialorder %v734, 0.0
        %vm767 = vcmp.ge.f32.partialorder %v735, 0.0
        %vm768 = vcmp.ge.f32.partialorder %v736, 0.0
        %vm769 = vcmp.ge.f32.partialorder %v737, 0.0
        %vm770 = vcmp.ge.f32.partialorder %v738, 0.0
        %vm771 = vcmp.ge.f32.partialorder %v739, 0.0
        %v772 = vmul.f32 %v708, 0.2
        %v773 = vmul.f32 %v709, 0.2
        %v774 = vmul.f32 %v710, 0.2
        %v775 = vmul.f32 %v711, 0.2
        %v776 = vmul.f32 %v712, 0.2
        %v777 = vmul.f32 %v713, 0.2
        %v778 = vmul.f32 %v714, 0.2
        %v779 = vmul.f32 %v715, 0.2
        %v780 = vmul.f32 %v716, 0.2
        %v781 = vmul.f32 %v717, 0.2
        %v782 = vmul.f32 %v718, 0.2
        %v783 = vmul.f32 %v719, 0.2
        %v784 = vmul.f32 %v720, 0.2
        %v785 = vmul.f32 %v721, 0.2
        %v786 = vmul.f32 %v722, 0.2
        %v787 = vmul.f32 %v723, 0.2
        %v788 = vmul.f32 %v724, 0.2
        %v789 = vmul.f32 %v725, 0.2
        %v790 = vmul.f32 %v726, 0.2
        %v791 = vmul.f32 %v727, 0.2
        %v792 = vmul.f32 %v728, 0.2
        %v793 = vmul.f32 %v729, 0.2
        %v794 = vmul.f32 %v730, 0.2
        %v795 = vmul.f32 %v731, 0.2
        %v796 = vmul.f32 %v732, 0.2
        %v797 = vmul.f32 %v733, 0.2
        %v798 = vmul.f32 %v734, 0.2
        %v799 = vmul.f32 %v735, 0.2
        %v800 = vmul.f32 %v736, 0.2
        %v801 = vmul.f32 %v737, 0.2
        %v802 = vmul.f32 %v738, 0.2
        %v803 = vmul.f32 %v739, 0.2
        %v804 = vsel %vm740, %v708, %v772
        %v805 = vsel %vm741, %v709, %v773
        %v806 = vsel %vm742, %v710, %v774
        %v807 = vsel %vm743, %v711, %v775
        %v808 = vsel %vm744, %v712, %v776
        %v809 = vsel %vm745, %v713, %v777
        %v810 = vsel %vm746, %v714, %v778
        %v811 = vsel %vm747, %v715, %v779
        %v812 = vsel %vm748, %v716, %v780
        %v813 = vsel %vm749, %v717, %v781
        %v814 = vsel %vm750, %v718, %v782
        %v815 = vsel %vm751, %v719, %v783
        %v816 = vsel %vm752, %v720, %v784
        %v817 = vsel %vm753, %v721, %v785
        %v818 = vsel %vm754, %v722, %v786
        %v819 = vsel %vm755, %v723, %v787
        %v820 = vsel %vm756, %v724, %v788
        %v821 = vsel %vm757, %v725, %v789
        %v822 = vsel %vm758, %v726, %v790
        %v823 = vsel %vm759, %v727, %v791
        %v824 = vsel %vm760, %v728, %v792
        %v825 = vsel %vm761, %v729, %v793
        %v826 = vsel %vm762, %v730, %v794
        %v827 = vsel %vm763, %v731, %v795
        %v828 = vsel %vm764, %v732, %v796
        %v829 = vsel %vm765, %v733, %v797
        %v830 = vsel %vm766, %v734, %v798
        %v831 = vsel %vm767, %v735, %v799
        %v832 = vsel %vm768, %v736, %v800
        %v833 = vsel %vm769, %v737, %v801
        %v834 = vsel %vm770, %v738, %v802
        %v835 = vsel %vm771, %v739, %v803
        %v836 = vpack.c.bf16 %v804, %v804
        %v837 = vpack.c.bf16 %v805, %v805
        %v838 = vpack.c.bf16 %v806, %v806
        %v839 = vpack.c.bf16 %v807, %v807
        %v840 = vpack.c.bf16 %v808, %v808
        %v841 = vpack.c.bf16 %v809, %v809
        %v842 = vpack.c.bf16 %v810, %v810
        %v843 = vpack.c.bf16 %v811, %v811
        %v844 = vpack.c.bf16 %v812, %v812
        %v845 = vpack.c.bf16 %v813, %v813
        %v846 = vpack.c.bf16 %v814, %v814
        %v847 = vpack.c.bf16 %v815, %v815
        %v848 = vpack.c.bf16 %v816, %v816
        %v849 = vpack.c.bf16 %v817, %v817
        %v850 = vpack.c.bf16 %v818, %v818
        %v851 = vpack.c.bf16 %v819, %v819
        %v852 = vpack.c.bf16 %v820, %v820
        %v853 = vpack.c.bf16 %v821, %v821
        %v854 = vpack.c.bf16 %v822, %v822
        %v855 = vpack.c.bf16 %v823, %v823
        %v856 = vpack.c.bf16 %v824, %v824
        %v857 = vpack.c.bf16 %v825, %v825
        %v858 = vpack.c.bf16 %v826, %v826
        %v859 = vpack.c.bf16 %v827, %v827
        %v860 = vpack.c.bf16 %v828, %v828
        %v861 = vpack.c.bf16 %v829, %v829
        %v862 = vpack.c.bf16 %v830, %v830
        %v863 = vpack.c.bf16 %v831, %v831
        %v864 = vpack.c.bf16 %v832, %v832
        %v865 = vpack.c.bf16 %v833, %v833
        %v866 = vpack.c.bf16 %v834, %v834
        %v867 = vpack.c.bf16 %v835, %v835
        %868 = vst [vmem:[%s255] sm:$0xf] %v836
        %869 = vst [vmem:[%s255 + $0x4] sm:$0xf] %v837
        %870 = vst [vmem:[%s255 + $0x8] sm:$0xf] %v838
        %871 = vst [vmem:[%s255 + $0xc] sm:$0xf] %v839
        %872 = vst [vmem:[%s255 + $0x10] sm:$0xf] %v840
        %873 = vst [vmem:[%s255 + $0x14] sm:$0xf] %v841
        %874 = vst [vmem:[%s255 + $0x18] sm:$0xf] %v842
        %875 = vst [vmem:[%s255 + $0x1c] sm:$0xf] %v843
        %876 = vst [vmem:[%s255 + $0x20] sm:$0xf] %v844
        %877 = vst [vmem:[%s255 + $0x24] sm:$0xf] %v845
        %878 = vst [vmem:[%s255 + $0x28] sm:$0xf] %v846
        %879 = vst [vmem:[%s255 + $0x2c] sm:$0xf] %v847
        %880 = vst [vmem:[%s255 + $0x30] sm:$0xf] %v848
        %881 = vst [vmem:[%s255 + $0x34] sm:$0xf] %v849
        %882 = vst [vmem:[%s255 + $0x38] sm:$0xf] %v850
        %883 = vst [vmem:[%s255 + $0x3c] sm:$0xf] %v851
        %884 = vst [vmem:[%s255 + $0x40] sm:$0xf] %v852
        %885 = vst [vmem:[%s255 + $0x44] sm:$0xf] %v853
        %886 = vst [vmem:[%s255 + $0x48] sm:$0xf] %v854
        %887 = vst [vmem:[%s255 + $0x4c] sm:$0xf] %v855
        %888 = vst [vmem:[%s255 + $0x50] sm:$0xf] %v856
        %889 = vst [vmem:[%s255 + $0x54] sm:$0xf] %v857
        %890 = vst [vmem:[%s255 + $0x58] sm:$0xf] %v858
        %891 = vst [vmem:[%s255 + $0x5c] sm:$0xf] %v859
        %892 = vst [vmem:[%s255 + $0x60] sm:$0xf] %v860
        %893 = vst [vmem:[%s255 + $0x64] sm:$0xf] %v861
        %894 = vst [vmem:[%s255 + $0x68] sm:$0xf] %v862
        %895 = vst [vmem:[%s255 + $0x6c] sm:$0xf] %v863
        %896 = vst [vmem:[%s255 + $0x70] sm:$0xf] %v864
        %897 = vst [vmem:[%s255 + $0x74] sm:$0xf] %v865
        %898 = vst [vmem:[%s255 + $0x78] sm:$0xf] %v866
        %899 = vst [vmem:[%s255 + $0x7c] sm:$0xf] %v867
      $region40: #{discriminator_forward.5} parent=31 // pred_fallthru
        _
      %p900 = scmp.lt.s32.totalorder %s19, 1
      %s901 = scalar_select %p900, %s19, 1
      %p902 = scmp.lt.s32.totalorder %s20, 0
      %s903 = scalar_select %p902, %s20, 0
      %s904 = smul.addr %s901, 32
      %s905 = sadd.s32 %s903, %s904
      %s906 = smul.addr %s905, 4
      %s907 = scalar_lea.vmem %s3, %s906
      // Predicated region
      $region41: #{discriminator_forward.5} parent=31 // pred_check
        %p908 = pneg %p135
      $region42: #{discriminator_forward.5} parent=31 // pred_check_branch
        %910 = sbr.rel (%p908) target = $region44
      $region43: #{discriminator_forward.5} parent=31 // pred_region
        _
      $region44: #{discriminator_forward.5} parent=31 // pred_fallthru
        _
    $region32: #{discriminator_forward.5} parent=5 // pred_fallthru
      _
    %p911 = scmp.le.s32.totalorder 2, %s9
    // Predicated region
    $region45: #{discriminator_forward.5} parent=5 // pred_check
      %p912 = pneg %p911
    $region46: #{discriminator_forward.5} parent=5 // pred_check_branch
      %914 = sbr.rel (%p912) target = $region48
    $region47: #{discriminator_forward.5} parent=5 // pred_region
      %s915 = ssub.s32 %s9, 2
      // Predicated region
      $region49: #{discriminator_forward.5} parent=47 // pred_check
        %p916 = pneg %p141
      $region50: #{discriminator_forward.5} parent=47 // pred_check_branch
        %918 = sbr.rel (%p916) target = $region52
      $region51: #{discriminator_forward.5} parent=47 // pred_region
        %p919 = scmp.lt.s32.totalorder %s22, 1
        %s920 = scalar_select %p919, %s22, 1
        %p921 = scmp.lt.s32.totalorder %s23, 0
        %s922 = scalar_select %p921, %s23, 0
        %s923 = smul.addr %s920, 32
        %s924 = sadd.s32 %s922, %s923
        %s925 = smul.addr %s924, 4
        %s926 = scalar_lea.vmem %s3, %s925
      $region52: #{discriminator_forward.5} parent=47 // pred_fallthru
        _
    $region48: #{discriminator_forward.5} parent=5 // pred_fallthru
      _
  $region6: #{discriminator_forward.5} parent=0 // loop_footer
    %s13 = sadd.s32 1, %s9
  $region7: #{discriminator_forward.5} parent=0 // loop_footer_branch
    %8 = sbr.rel target = $region3
  $region8: #{discriminator_forward.5} parent=0 // loop_exit
    _

// kernel: discriminator_forward.6
$region0: #{discriminator_forward.6}
  #allocation0 [shape = 'u32[]', space=smem, size = 0x4, offset = 0x4, fixed_abs, tag = 'smem constant byte address 0x4 - core index']
  #allocation1 [shape = 'u32[72,128]{1,0:T(1,128)}', space=vmem, size = 0x9000, scoped, tag = 'internal scratch']
  #allocation2 [shape = 'f32[64,128]{1,0:T(8,128)}', space=vmem, size = 0x8000, scoped, tag = 'scratch operand']
  %s0 = inlined_call_operand.vmem [shape: bf16[2,64,1024], index: 0, kind: input, shape index: {}]
  %s1 = inlined_call_operand.vmem [shape: bf16[1024,128], index: 1, kind: input, shape index: {}]
  %s2 = inlined_call_operand.vmem [shape: f32[1,128], index: 2, kind: input, shape index: {}]
  %s3 = inlined_call_operand.vmem [shape: bf16[2,64,128], index: 3, kind: output, shape index: {}]
  %s4 = sld [smem:[#allocation0]]
  $region53: #{discriminator_forward.6} parent=0
    _
  %s6 = ssub.s32 1, %s4
  %s7 = scalar_select 0, %s6, %s4
  loop: start=0, step=1, limit=4
  $region2: #{discriminator_forward.6} parent=0 // loop_pre_header
    _
  $region3: #{discriminator_forward.6} parent=0 // loop_header
    %s9 = sphi 0, %s13
    %p10 = scmp.ge.s32.totalorder %s9, 4
    %s16 = sphi 0, %s35
    %s17 = sphi 0, %s31
    %s18 = sphi 0, %s27
    %s19 = sphi 0, %s16
    %s20 = sphi 0, %s17
    %s21 = sphi 0, %s18
    %s22 = sphi 0, %s19
    %s23 = sphi 0, %s20
    %s24 = sphi 0, %s21
    %s40 = sphi 0, %s42
    %s43 = sphi 0, %s40
    %s44 = sphi 0, %s43
    %s60 = sphi 0, %s44
    %s68 = sphi 0, %s70
    %s71 = sphi 0, %s68
    %s72 = sphi 0, %s71
    %s88 = sphi 0, %s72
    %s94 = sphi 0, %s96
    %s97 = sphi 0, %s94
    %s98 = sphi 0, %s97
    %s114 = sphi 0, %s98
    %s122 = sphi 0, %s124
    %s125 = sphi 0, %s122
    %s126 = sphi 0, %s125
    %s142 = sphi 0, %s126
  $region4: #{discriminator_forward.6} parent=0 // loop_header_branch
    %12 = sbr.rel (%p10) target = $region8
  $region5: #{discriminator_forward.6} parent=0 // loop_body
    %s14 = ssub.s32 %s9, 1
    %s15 = ssub.s32 %s9, 2
    %s25 = sadd.s32 1, %s18
    %p26 = scmp.ge.s32.totalorder %s25, 1
    %s27 = scalar_select %p26, 0, %s25
    %s28 = sadd.s32 1, %s17
    %s29 = scalar_select %p26, %s28, %s17
    %p30 = scmp.ge.s32.totalorder %s29, 1
    %s31 = scalar_select %p30, 0, %s29
    %s32 = sadd.s32 1, %s16
    %s33 = scalar_select %p30, %s32, %s16
    %p34 = scmp.ge.s32.totalorder %s33, 2
    %s35 = scalar_select %p34, 0, %s33
    %s36 = ssub.s32 %s16, %s35
    %s37 = ssub.s32 %s18, %s27
    %s38 = sor.u32 %s36, %s37
    %p39 = scmp.eq.s32.totalorder %s38, 0
    %s41 = sadd.s32 %s40, 1
    %s42 = scalar_select %p39, %s40, %s41
    %p45 = pneg %p39
    %p46 = scmp.eq.s32.totalorder %s9, 1
    %p47 = por %p45, %p46
    %p48 = scmp.ne.s32.totalorder %s40, %s43
    %p49 = scmp.eq.s32.totalorder %s9, 0
    %p50 = por %p48, %p49
    %p51 = scmp.ne.s32.totalorder %s40, %s43
    %p52 = scmp.eq.s32.totalorder %s14, 1
    %p53 = por %p51, %p52
    %p54 = scmp.ne.s32.totalorder %s43, %s44
    %p55 = scmp.eq.s32.totalorder %s14, 0
    %p56 = por %p54, %p55
    %p57 = scmp.ne.s32.totalorder %s43, %s44
    %p58 = scmp.eq.s32.totalorder %s15, 1
    %p59 = por %p57, %p58
    %p61 = scmp.ne.s32.totalorder %s44, %s60
    %p62 = scmp.eq.s32.totalorder %s15, 0
    %p63 = por %p61, %p62
    %s64 = ssub.s32 %s18, %s27
    %s65 = ssub.s32 %s17, %s31
    %s66 = sor.u32 %s64, %s65
    %p67 = scmp.eq.s32.totalorder %s66, 0
    %s69 = sadd.s32 %s68, 1
    %s70 = scalar_select %p67, %s68, %s69
    %p73 = pneg %p67
    %p74 = scmp.eq.s32.totalorder %s9, 1
    %p75 = por %p73, %p74
    %p76 = scmp.ne.s32.totalorder %s68, %s71
    %p77 = scmp.eq.s32.totalorder %s9, 0
    %p78 = por %p76, %p77
    %p79 = scmp.ne.s32.totalorder %s68, %s71
    %p80 = scmp.eq.s32.totalorder %s14, 1
    %p81 = por %p79, %p80
    %p82 = scmp.ne.s32.totalorder %s71, %s72
    %p83 = scmp.eq.s32.totalorder %s14, 0
    %p84 = por %p82, %p83
    %p85 = scmp.ne.s32.totalorder %s71, %s72
    %p86 = scmp.eq.s32.totalorder %s15, 1
    %p87 = por %p85, %p86
    %p89 = scmp.ne.s32.totalorder %s72, %s88
    %p90 = scmp.eq.s32.totalorder %s15, 0
    %p91 = por %p89, %p90
    %s92 = ssub.s32 %s17, %s31
    %p93 = scmp.eq.s32.totalorder %s92, 0
    %s95 = sadd.s32 %s94, 1
    %s96 = scalar_select %p93, %s94, %s95
    %p99 = pneg %p93
    %p100 = scmp.eq.s32.totalorder %s9, 1
    %p101 = por %p99, %p100
    %p102 = scmp.ne.s32.totalorder %s94, %s97
    %p103 = scmp.eq.s32.totalorder %s9, 0
    %p104 = por %p102, %p103
    %p105 = scmp.ne.s32.totalorder %s94, %s97
    %p106 = scmp.eq.s32.totalorder %s14, 1
    %p107 = por %p105, %p106
    %p108 = scmp.ne.s32.totalorder %s97, %s98
    %p109 = scmp.eq.s32.totalorder %s14, 0
    %p110 = por %p108, %p109
    %p111 = scmp.ne.s32.totalorder %s97, %s98
    %p112 = scmp.eq.s32.totalorder %s15, 1
    %p113 = por %p111, %p112
    %p115 = scmp.ne.s32.totalorder %s98, %s114
    %p116 = scmp.eq.s32.totalorder %s15, 0
    %p117 = por %p115, %p116
    %s118 = ssub.s32 %s16, %s35
    %s119 = ssub.s32 %s17, %s31
    %s120 = sor.u32 %s118, %s119
    %p121 = scmp.eq.s32.totalorder %s120, 0
    %s123 = sadd.s32 %s122, 1
    %s124 = scalar_select %p121, %s122, %s123
    %p127 = pneg %p121
    %p128 = scmp.eq.s32.totalorder %s9, 1
    %p129 = por %p127, %p128
    %p130 = scmp.ne.s32.totalorder %s122, %s125
    %p131 = scmp.eq.s32.totalorder %s9, 0
    %p132 = por %p130, %p131
    %p133 = scmp.ne.s32.totalorder %s122, %s125
    %p134 = scmp.eq.s32.totalorder %s14, 1
    %p135 = por %p133, %p134
    %p136 = scmp.ne.s32.totalorder %s125, %s126
    %p137 = scmp.eq.s32.totalorder %s14, 0
    %p138 = por %p136, %p137
    %p139 = scmp.ne.s32.totalorder %s125, %s126
    %p140 = scmp.eq.s32.totalorder %s15, 1
    %p141 = por %p139, %p140
    %p143 = scmp.ne.s32.totalorder %s126, %s142
    %p144 = scmp.eq.s32.totalorder %s15, 0
    %p145 = por %p143, %p144
    %p146 = scmp.le.s32.totalorder 1, %s9
    %p147 = scmp.lt.s32.totalorder %s9, 3
    %p148 = pnand %p146, %p147
    %p149 = pneg %p148
    // Predicated region
    $region9: #{discriminator_forward.6} parent=5 // pred_check
      _
    $region10: #{discriminator_forward.6} parent=5 // pred_check_branch
      %151 = sbr.rel (%p148) target = $region12
    $region11: #{discriminator_forward.6} parent=5 // pred_region
      %s152 = ssub.s32 %s9, 1
      // Predicated region
      $region13: #{discriminator_forward.6} parent=11 // pred_check
        %p153 = pneg %p84
      $region14: #{discriminator_forward.6} parent=11 // pred_check_branch
        %155 = sbr.rel (%p153) target = $region16
      $region15: #{discriminator_forward.6} parent=11 // pred_region
        %s156 = smul.u32 128, %s21
        %p157 = scmp.lt.s32.totalorder %s156, 127
        %s158 = scalar_select %p157, %s156, 127
        %p159 = scmp.lt.s32.totalorder %s20, 0
        %s160 = scalar_select %p159, %s20, 0
        %s161 = sadd.s32 %s160, %s158
        %s162 = smul.addr %s161, 4
        %s163 = scalar_lea.vmem %s1, %s162
        %s164 = smul.u32 128, %s21
      $region16: #{discriminator_forward.6} parent=11 // pred_fallthru
        _
      // Predicated region
      $region17: #{discriminator_forward.6} parent=11 // pred_check
        %p165 = pneg %p110
      $region18: #{discriminator_forward.6} parent=11 // pred_check_branch
        %167 = sbr.rel (%p165) target = $region20
      $region19: #{discriminator_forward.6} parent=11 // pred_region
        %p168 = scmp.lt.s32.totalorder %s20, 0
        %s169 = scalar_select %p168, %s20, 0
        %s170 = scalar_lea.vmem %s2, %s169
      $region20: #{discriminator_forward.6} parent=11 // pred_fallthru
        _
    $region12: #{discriminator_forward.6} parent=5 // pred_fallthru
      _
    %p171 = scmp.lt.s32.totalorder %s9, 2
    // Predicated region
    $region21: #{discriminator_forward.6} parent=5 // pred_check
      %p172 = pneg %p171
    $region22: #{discriminator_forward.6} parent=5 // pred_check_branch
      %174 = sbr.rel (%p172) target = $region24
    $region23: #{discriminator_forward.6} parent=5 // pred_region
      // Predicated region
      $region25: #{discriminator_forward.6} parent=23 // pred_check
        %p175 = pneg %p50
      $region26: #{discriminator_forward.6} parent=23 // pred_check_branch
        %177 = sbr.rel (%p175) target = $region28
      $region27: #{discriminator_forward.6} parent=23 // pred_region
        %s178 = smul.u32 8, %s18
        %p179 = scmp.lt.s32.totalorder %s16, 1
        %s180 = scalar_select %p179, %s16, 1
        %p181 = scmp.lt.s32.totalorder %s178, 7
        %s182 = scalar_select %p181, %s178, 7
        %s183 = smul.addr %s180, 64
        %s184 = sadd.s32 %s182, %s183
        %s185 = smul.addr %s184, 4
        %s186 = scalar_lea.vmem %s0, %s185
        %s187 = smul.u32 8, %s18
      $region28: #{discriminator_forward.6} parent=23 // pred_fallthru
        _
    $region24: #{discriminator_forward.6} parent=5 // pred_fallthru
      _
    %p188 = scmp.le.s32.totalorder 1, %s9
    %p189 = scmp.lt.s32.totalorder %s9, 3
    %p190 = pnand %p188, %p189
    %p191 = pneg %p190
    // Predicated region
    $region29: #{discriminator_forward.6} parent=5 // pred_check
      _
    $region30: #{discriminator_forward.6} parent=5 // pred_check_branch
      %193 = sbr.rel (%p190) target = $region32
    $region31: #{discriminator_forward.6} parent=5 // pred_region
      %s194 = ssub.s32 %s9, 1
      %s195 = smul.u32 8, %s21
      %p196 = scmp.lt.s32.totalorder %s19, 1
      %s197 = scalar_select %p196, %s19, 1
      %p198 = scmp.lt.s32.totalorder %s195, 7
      %s199 = scalar_select %p198, %s195, 7
      %s200 = smul.addr %s197, 64
      %s201 = sadd.s32 %s199, %s200
      %s202 = smul.addr %s201, 4
      %s203 = scalar_lea.vmem %s0, %s202
      %p204 = pneg %p56
      %p205 = pneg %p53
      %s206 = smul.u32 128, %s21
      %p207 = scmp.lt.s32.totalorder %s206, 127
      %s208 = scalar_select %p207, %s206, 127
      %p209 = scmp.lt.s32.totalorder %s20, 0
      %s210 = scalar_select %p209, %s20, 0
      %s211 = sadd.s32 %s210, %s208
      %s212 = smul.addr %s211, 4
      %s213 = scalar_lea.vmem %s1, %s212
      %p214 = pneg %p84
      %p215 = pneg %p81
      %p216 = scmp.lt.s32.totalorder %s20, 0
      %s217 = scalar_select %p216, %s20, 0
      %s218 = scalar_lea.vmem %s2, %s217
      %p219 = pneg %p110
      %p220 = pneg %p107
      %p221 = pneg %p138
      %p222 = pneg %p135
      %p223 = scmp.lt.s32.totalorder %s19, 1
      %s224 = scalar_select %p223, %s19, 1
      %p225 = scmp.lt.s32.totalorder %s20, 0
      %s226 = scalar_select %p225, %s20, 0
      %s227 = smul.addr %s224, 8
      %s228 = sadd.s32 %s226, %s227
      %s229 = smul.addr %s228, 4
      %s230 = scalar_lea.vmem %s3, %s229
      %s231 = smul.u32 8, %s21
      %p232 = scmp.lt.s32.totalorder %s19, 1
      %s233 = scalar_select %p232, %s19, 1
      %p234 = scmp.lt.s32.totalorder %s231, 7
      %s235 = scalar_select %p234, %s231, 7
      %s236 = smul.addr %s233, 64
      %s237 = sadd.s32 %s235, %s236
      %s238 = smul.addr %s237, 4
      %s239 = scalar_lea.vmem %s0, %s238
      %s240 = smul.u32 8, %s21
      %s241 = smul.u32 128, %s21
      %p242 = scmp.lt.s32.totalorder %s241, 127
      %s243 = scalar_select %p242, %s241, 127
      %p244 = scmp.lt.s32.totalorder %s20, 0
      %s245 = scalar_select %p244, %s20, 0
      %s246 = sadd.s32 %s245, %s243
      %s247 = smul.addr %s246, 4
      %s248 = scalar_lea.vmem %s1, %s247
      %s249 = smul.u32 128, %s21
      %p250 = scmp.lt.s32.totalorder %s20, 0
      %s251 = scalar_select %p250, %s20, 0
      %s252 = scalar_lea.vmem %s2, %s251
      %p253 = scmp.lt.s32.totalorder %s19, 1
      %s254 = scalar_select %p253, %s19, 1
      %p255 = scmp.lt.s32.totalorder %s20, 0
      %s256 = scalar_select %p255, %s20, 0
      %s257 = smul.addr %s254, 8
      %s258 = sadd.s32 %s256, %s257
      %s259 = smul.addr %s258, 4
      %s260 = scalar_lea.vmem %s3, %s259
      %p261 = scmp.eq.s32.totalorder %s21, 0
      // Predicated region
      $region33: #{discriminator_forward.6} parent=31 // pred_check
        %p262 = pneg %p261
      $region34: #{discriminator_forward.6} parent=31 // pred_check_branch
        %264 = sbr.rel (%p262) target = $region36
      $region35: #{discriminator_forward.6} parent=31 // pred_region
        %265 = vst [vmem:[#allocation2] sm:$0xff] 0.0
        %266 = vst [vmem:[#allocation2 + $0x8] sm:$0xff] 0.0
        %267 = vst [vmem:[#allocation2 + $0x10] sm:$0xff] 0.0
        %268 = vst [vmem:[#allocation2 + $0x18] sm:$0xff] 0.0
        %269 = vst [vmem:[#allocation2 + $0x20] sm:$0xff] 0.0
        %270 = vst [vmem:[#allocation2 + $0x28] sm:$0xff] 0.0
        %271 = vst [vmem:[#allocation2 + $0x30] sm:$0xff] 0.0
        %272 = vst [vmem:[#allocation2 + $0x38] sm:$0xff] 0.0
      $region36: #{discriminator_forward.6} parent=31 // pred_fallthru
        _
      %v273 = vld [vmem:[#allocation2] sm:$0xff]
      %v274 = vld [vmem:[#allocation2 + $0x8] sm:$0xff]
      %v275 = vld [vmem:[#allocation2 + $0x10] sm:$0xff]
      %v276 = vld [vmem:[#allocation2 + $0x18] sm:$0xff]
      %v277 = vld [vmem:[#allocation2 + $0x20] sm:$0xff]
      %v278 = vld [vmem:[#allocation2 + $0x28] sm:$0xff]
      %v279 = vld [vmem:[#allocation2 + $0x30] sm:$0xff]
      %v280 = vld [vmem:[#allocation2 + $0x38] sm:$0xff]
      %v281 = vld [vmem:[%s239] sm:$0xff]
      %v282 = vld [vmem:[%s239 + $0x8] sm:$0xff]
      %v283 = vld [vmem:[%s239 + $0x10] sm:$0xff]
      %v284 = vld [vmem:[%s239 + $0x18] sm:$0xff]
      %v285 = vld [vmem:[%s239 + $0x20] sm:$0xff]
      %v286 = vld [vmem:[%s239 + $0x28] sm:$0xff]
      %v287 = vld [vmem:[%s239 + $0x30] sm:$0xff]
      %v288 = vld [vmem:[%s239 + $0x38] sm:$0xff]
      %v289 = vld [vmem:[%s239 + $0x40] sm:$0xff]
      %v290 = vld [vmem:[%s239 + $0x48] sm:$0xff]
      %v291 = vld [vmem:[%s239 + $0x50] sm:$0xff]
      %v292 = vld [vmem:[%s239 + $0x58] sm:$0xff]
      %v293 = vld [vmem:[%s239 + $0x60] sm:$0xff]
      %v294 = vld [vmem:[%s239 + $0x68] sm:$0xff]
      %v295 = vld [vmem:[%s239 + $0x70] sm:$0xff]
      %v296 = vld [vmem:[%s239 + $0x78] sm:$0xff]
      %v297 = vld [vmem:[%s239 + $0x80] sm:$0xff]
      %v298 = vld [vmem:[%s239 + $0x88] sm:$0xff]
      %v299 = vld [vmem:[%s239 + $0x90] sm:$0xff]
      %v300 = vld [vmem:[%s239 + $0x98] sm:$0xff]
      %v301 = vld [vmem:[%s239 + $0xa0] sm:$0xff]
      %v302 = vld [vmem:[%s239 + $0xa8] sm:$0xff]
      %v303 = vld [vmem:[%s239 + $0xb0] sm:$0xff]
      %v304 = vld [vmem:[%s239 + $0xb8] sm:$0xff]
      %v305 = vld [vmem:[%s239 + $0xc0] sm:$0xff]
      %v306 = vld [vmem:[%s239 + $0xc8] sm:$0xff]
      %v307 = vld [vmem:[%s239 + $0xd0] sm:$0xff]
      %v308 = vld [vmem:[%s239 + $0xd8] sm:$0xff]
      %v309 = vld [vmem:[%s239 + $0xe0] sm:$0xff]
      %v310 = vld [vmem:[%s239 + $0xe8] sm:$0xff]
      %v311 = vld [vmem:[%s239 + $0xf0] sm:$0xff]
      %v312 = vld [vmem:[%s239 + $0xf8] sm:$0xff]
      %v313 = vld [vmem:[%s248] sm:$0xf]
      %v314 = vld [vmem:[%s248 + $0x4] sm:$0xf]
      %v315 = vld [vmem:[%s248 + $0x8] sm:$0xf]
      %v316 = vld [vmem:[%s248 + $0xc] sm:$0xf]
      %v317 = vld [vmem:[%s248 + $0x10] sm:$0xf]
      %v318 = vld [vmem:[%s248 + $0x14] sm:$0xf]
      %v319 = vld [vmem:[%s248 + $0x18] sm:$0xf]
      %v320 = vld [vmem:[%s248 + $0x1c] sm:$0xf]
      %v321 = vld [vmem:[%s248 + $0x20] sm:$0xf]
      %v322 = vld [vmem:[%s248 + $0x24] sm:$0xf]
      %v323 = vld [vmem:[%s248 + $0x28] sm:$0xf]
      %v324 = vld [vmem:[%s248 + $0x2c] sm:$0xf]
      %v325 = vld [vmem:[%s248 + $0x30] sm:$0xf]
      %v326 = vld [vmem:[%s248 + $0x34] sm:$0xf]
      %v327 = vld [vmem:[%s248 + $0x38] sm:$0xf]
      %v328 = vld [vmem:[%s248 + $0x3c] sm:$0xf]
      %v329 = vld [vmem:[%s248 + $0x40] sm:$0xf]
      %v330 = vld [vmem:[%s248 + $0x44] sm:$0xf]
      %v331 = vld [vmem:[%s248 + $0x48] sm:$0xf]
      %v332 = vld [vmem:[%s248 + $0x4c] sm:$0xf]
      %v333 = vld [vmem:[%s248 + $0x50] sm:$0xf]
      %v334 = vld [vmem:[%s248 + $0x54] sm:$0xf]
      %v335 = vld [vmem:[%s248 + $0x58] sm:$0xf]
      %v336 = vld [vmem:[%s248 + $0x5c] sm:$0xf]
      %v337 = vld [vmem:[%s248 + $0x60] sm:$0xf]
      %v338 = vld [vmem:[%s248 + $0x64] sm:$0xf]
      %v339 = vld [vmem:[%s248 + $0x68] sm:$0xf]
      %v340 = vld [vmem:[%s248 + $0x6c] sm:$0xf]
      %v341 = vld [vmem:[%s248 + $0x70] sm:$0xf]
      %v342 = vld [vmem:[%s248 + $0x74] sm:$0xf]
      %v343 = vld [vmem:[%s248 + $0x78] sm:$0xf]
      %v344 = vld [vmem:[%s248 + $0x7c] sm:$0xf]
      %v345 = vld [vmem:[%s248 + $0x80] sm:$0xf]
      %v346 = vld [vmem:[%s248 + $0x84] sm:$0xf]
      %v347 = vld [vmem:[%s248 + $0x88] sm:$0xf]
      %v348 = vld [vmem:[%s248 + $0x8c] sm:$0xf]
      %v349 = vld [vmem:[%s248 + $0x90] sm:$0xf]
      %v350 = vld [vmem:[%s248 + $0x94] sm:$0xf]
      %v351 = vld [vmem:[%s248 + $0x98] sm:$0xf]
      %v352 = vld [vmem:[%s248 + $0x9c] sm:$0xf]
      %v353 = vld [vmem:[%s248 + $0xa0] sm:$0xf]
      %v354 = vld [vmem:[%s248 + $0xa4] sm:$0xf]
      %v355 = vld [vmem:[%s248 + $0xa8] sm:$0xf]
      %v356 = vld [vmem:[%s248 + $0xac] sm:$0xf]
      %v357 = vld [vmem:[%s248 + $0xb0] sm:$0xf]
      %v358 = vld [vmem:[%s248 + $0xb4] sm:$0xf]
      %v359 = vld [vmem:[%s248 + $0xb8] sm:$0xf]
      %v360 = vld [vmem:[%s248 + $0xbc] sm:$0xf]
      %v361 = vld [vmem:[%s248 + $0xc0] sm:$0xf]
      %v362 = vld [vmem:[%s248 + $0xc4] sm:$0xf]
      %v363 = vld [vmem:[%s248 + $0xc8] sm:$0xf]
      %v364 = vld [vmem:[%s248 + $0xcc] sm:$0xf]
      %v365 = vld [vmem:[%s248 + $0xd0] sm:$0xf]
      %v366 = vld [vmem:[%s248 + $0xd4] sm:$0xf]
      %v367 = vld [vmem:[%s248 + $0xd8] sm:$0xf]
      %v368 = vld [vmem:[%s248 + $0xdc] sm:$0xf]
      %v369 = vld [vmem:[%s248 + $0xe0] sm:$0xf]
      %v370 = vld [vmem:[%s248 + $0xe4] sm:$0xf]
      %v371 = vld [vmem:[%s248 + $0xe8] sm:$0xf]
      %v372 = vld [vmem:[%s248 + $0xec] sm:$0xf]
      %v373 = vld [vmem:[%s248 + $0xf0] sm:$0xf]
      %v374 = vld [vmem:[%s248 + $0xf4] sm:$0xf]
      %v375 = vld [vmem:[%s248 + $0xf8] sm:$0xf]
      %v376 = vld [vmem:[%s248 + $0xfc] sm:$0xf]
      %v377 = vld [vmem:[%s248 + $0x100] sm:$0xf]
      %v378 = vld [vmem:[%s248 + $0x104] sm:$0xf]
      %v379 = vld [vmem:[%s248 + $0x108] sm:$0xf]
      %v380 = vld [vmem:[%s248 + $0x10c] sm:$0xf]
      %v381 = vld [vmem:[%s248 + $0x110] sm:$0xf]
      %v382 = vld [vmem:[%s248 + $0x114] sm:$0xf]
      %v383 = vld [vmem:[%s248 + $0x118] sm:$0xf]
      %v384 = vld [vmem:[%s248 + $0x11c] sm:$0xf]
      %v385 = vld [vmem:[%s248 + $0x120] sm:$0xf]
      %v386 = vld [vmem:[%s248 + $0x124] sm:$0xf]
      %v387 = vld [vmem:[%s248 + $0x128] sm:$0xf]
      %v388 = vld [vmem:[%s248 + $0x12c] sm:$0xf]
      %v389 = vld [vmem:[%s248 + $0x130] sm:$0xf]
      %v390 = vld [vmem:[%s248 + $0x134] sm:$0xf]
      %v391 = vld [vmem:[%s248 + $0x138] sm:$0xf]
      %v392 = vld [vmem:[%s248 + $0x13c] sm:$0xf]
      %v393 = vld [vmem:[%s248 + $0x140] sm:$0xf]
      %v394 = vld [vmem:[%s248 + $0x144] sm:$0xf]
      %v395 = vld [vmem:[%s248 + $0x148] sm:$0xf]
      %v396 = vld [vmem:[%s248 + $0x14c] sm:$0xf]
      %v397 = vld [vmem:[%s248 + $0x150] sm:$0xf]
      %v398 = vld [vmem:[%s248 + $0x154] sm:$0xf]
      %v399 = vld [vmem:[%s248 + $0x158] sm:$0xf]
      %v400 = vld [vmem:[%s248 + $0x15c] sm:$0xf]
      %v401 = vld [vmem:[%s248 + $0x160] sm:$0xf]
      %v402 = vld [vmem:[%s248 + $0x164] sm:$0xf]
      %v403 = vld [vmem:[%s248 + $0x168] sm:$0xf]
      %v404 = vld [vmem:[%s248 + $0x16c] sm:$0xf]
      %v405 = vld [vmem:[%s248 + $0x170] sm:$0xf]
      %v406 = vld [vmem:[%s248 + $0x174] sm:$0xf]
      %v407 = vld [vmem:[%s248 + $0x178] sm:$0xf]
      %v408 = vld [vmem:[%s248 + $0x17c] sm:$0xf]
      %v409 = vld [vmem:[%s248 + $0x180] sm:$0xf]
      %v410 = vld [vmem:[%s248 + $0x184] sm:$0xf]
      %v411 = vld [vmem:[%s248 + $0x188] sm:$0xf]
      %v412 = vld [vmem:[%s248 + $0x18c] sm:$0xf]
      %v413 = vld [vmem:[%s248 + $0x190] sm:$0xf]
      %v414 = vld [vmem:[%s248 + $0x194] sm:$0xf]
      %v415 = vld [vmem:[%s248 + $0x198] sm:$0xf]
      %v416 = vld [vmem:[%s248 + $0x19c] sm:$0xf]
      %v417 = vld [vmem:[%s248 + $0x1a0] sm:$0xf]
      %v418 = vld [vmem:[%s248 + $0x1a4] sm:$0xf]
      %v419 = vld [vmem:[%s248 + $0x1a8] sm:$0xf]
      %v420 = vld [vmem:[%s248 + $0x1ac] sm:$0xf]
      %v421 = vld [vmem:[%s248 + $0x1b0] sm:$0xf]
      %v422 = vld [vmem:[%s248 + $0x1b4] sm:$0xf]
      %v423 = vld [vmem:[%s248 + $0x1b8] sm:$0xf]
      %v424 = vld [vmem:[%s248 + $0x1bc] sm:$0xf]
      %v425 = vld [vmem:[%s248 + $0x1c0] sm:$0xf]
      %v426 = vld [vmem:[%s248 + $0x1c4] sm:$0xf]
      %v427 = vld [vmem:[%s248 + $0x1c8] sm:$0xf]
      %v428 = vld [vmem:[%s248 + $0x1cc] sm:$0xf]
      %v429 = vld [vmem:[%s248 + $0x1d0] sm:$0xf]
      %v430 = vld [vmem:[%s248 + $0x1d4] sm:$0xf]
      %v431 = vld [vmem:[%s248 + $0x1d8] sm:$0xf]
      %v432 = vld [vmem:[%s248 + $0x1dc] sm:$0xf]
      %v433 = vld [vmem:[%s248 + $0x1e0] sm:$0xf]
      %v434 = vld [vmem:[%s248 + $0x1e4] sm:$0xf]
      %v435 = vld [vmem:[%s248 + $0x1e8] sm:$0xf]
      %v436 = vld [vmem:[%s248 + $0x1ec] sm:$0xf]
      %v437 = vld [vmem:[%s248 + $0x1f0] sm:$0xf]
      %v438 = vld [vmem:[%s248 + $0x1f4] sm:$0xf]
      %v439 = vld [vmem:[%s248 + $0x1f8] sm:$0xf]
      %v440 = vld [vmem:[%s248 + $0x1fc] sm:$0xf]
      %v473 = vunpack.c.l.b16 %v281
      %v474 = vunpack.c.h.b16 %v281
      %v475 = vunpack.c.l.b16 %v282
      %v476 = vunpack.c.h.b16 %v282
      %v477 = vunpack.c.l.b16 %v283
      %v478 = vunpack.c.h.b16 %v283
      %v479 = vunpack.c.l.b16 %v284
      %v480 = vunpack.c.h.b16 %v284
      %v481 = vunpack.c.l.b16 %v285
      %v482 = vunpack.c.h.b16 %v285
      %v483 = vunpack.c.l.b16 %v286
      %v484 = vunpack.c.h.b16 %v286
      %v485 = vunpack.c.l.b16 %v287
      %v486 = vunpack.c.h.b16 %v287
      %v487 = vunpack.c.l.b16 %v288
      %v488 = vunpack.c.h.b16 %v288
      %v489 = vunpack.c.l.b16 %v289
      %v490 = vunpack.c.h.b16 %v289
      %v491 = vunpack.c.l.b16 %v290
      %v492 = vunpack.c.h.b16 %v290
      %v493 = vunpack.c.l.b16 %v291
      %v494 = vunpack.c.h.b16 %v291
      %v495 = vunpack.c.l.b16 %v292
      %v496 = vunpack.c.h.b16 %v292
      %v497 = vunpack.c.l.b16 %v293
      %v498 = vunpack.c.h.b16 %v293
      %v499 = vunpack.c.l.b16 %v294
      %v500 = vunpack.c.h.b16 %v294
      %v501 = vunpack.c.l.b16 %v295
      %v502 = vunpack.c.h.b16 %v295
      %v503 = vunpack.c.l.b16 %v296
      %v504 = vunpack.c.h.b16 %v296
      %v505 = vunpack.c.l.b16 %v297
      %v506 = vunpack.c.h.b16 %v297
      %v507 = vunpack.c.l.b16 %v298
      %v508 = vunpack.c.h.b16 %v298
      %v509 = vunpack.c.l.b16 %v299
      %v510 = vunpack.c.h.b16 %v299
      %v511 = vunpack.c.l.b16 %v300
      %v512 = vunpack.c.h.b16 %v300
      %v513 = vunpack.c.l.b16 %v301
      %v514 = vunpack.c.h.b16 %v301
      %v515 = vunpack.c.l.b16 %v302
      %v516 = vunpack.c.h.b16 %v302
      %v517 = vunpack.c.l.b16 %v303
      %v518 = vunpack.c.h.b16 %v303
      %v519 = vunpack.c.l.b16 %v304
      %v520 = vunpack.c.h.b16 %v304
      %v521 = vunpack.c.l.b16 %v305
      %v522 = vunpack.c.h.b16 %v305
      %v523 = vunpack.c.l.b16 %v306
      %v524 = vunpack.c.h.b16 %v306
      %v525 = vunpack.c.l.b16 %v307
      %v526 = vunpack.c.h.b16 %v307
      %v527 = vunpack.c.l.b16 %v308
      %v528 = vunpack.c.h.b16 %v308
      %v529 = vunpack.c.l.b16 %v309
      %v530 = vunpack.c.h.b16 %v309
      %v531 = vunpack.c.l.b16 %v310
      %v532 = vunpack.c.h.b16 %v310
      %v533 = vunpack.c.l.b16 %v311
      %v534 = vunpack.c.h.b16 %v311
      %v535 = vunpack.c.l.b16 %v312
      %v536 = vunpack.c.h.b16 %v312
      %v537 = vpack.c.b16 %v481, %v473
      %v538 = vpack.c.b16 %v482, %v474
      %v539 = vpack.c.b16 %v483, %v475
      %v540 = vpack.c.b16 %v484, %v476
      %v541 = vpack.c.b16 %v485, %v477
      %v542 = vpack.c.b16 %v486, %v478
      %v543 = vpack.c.b16 %v487, %v479
      %v544 = vpack.c.b16 %v488, %v480
      %v545 = vpack.c.b16 %v497, %v489
      %v546 = vpack.c.b16 %v498, %v490
      %v547 = vpack.c.b16 %v499, %v491
      %v548 = vpack.c.b16 %v500, %v492
      %v549 = vpack.c.b16 %v501, %v493
      %v550 = vpack.c.b16 %v502, %v494
      %v551 = vpack.c.b16 %v503, %v495
      %v552 = vpack.c.b16 %v504, %v496
      %v553 = vpack.c.b16 %v513, %v505
      %v554 = vpack.c.b16 %v514, %v506
      %v555 = vpack.c.b16 %v515, %v507
      %v556 = vpack.c.b16 %v516, %v508
      %v557 = vpack.c.b16 %v517, %v509
      %v558 = vpack.c.b16 %v518, %v510
      %v559 = vpack.c.b16 %v519, %v511
      %v560 = vpack.c.b16 %v520, %v512
      %v561 = vpack.c.b16 %v529, %v521
      %v562 = vpack.c.b16 %v530, %v522
      %v563 = vpack.c.b16 %v531, %v523
      %v564 = vpack.c.b16 %v532, %v524
      %v565 = vpack.c.b16 %v533, %v525
      %v566 = vpack.c.b16 %v534, %v526
      %v567 = vpack.c.b16 %v535, %v527
      %v568 = vpack.c.b16 %v536, %v528
      %v729 = vunpack.c.l.b16 %v313
      %v730 = vunpack.c.l.b16 %v314
      %v731 = vunpack.c.l.b16 %v315
      %v732 = vunpack.c.l.b16 %v316
      %v733 = vunpack.c.l.b16 %v317
      %v734 = vunpack.c.l.b16 %v318
      %v735 = vunpack.c.l.b16 %v319
      %v736 = vunpack.c.l.b16 %v320
      %v737 = vunpack.c.l.b16 %v321
      %v738 = vunpack.c.l.b16 %v322
      %v739 = vunpack.c.l.b16 %v323
      %v740 = vunpack.c.l.b16 %v324
      %v741 = vunpack.c.l.b16 %v325
      %v742 = vunpack.c.l.b16 %v326
      %v743 = vunpack.c.l.b16 %v327
      %v744 = vunpack.c.l.b16 %v328
      %v745 = vunpack.c.l.b16 %v329
      %v746 = vunpack.c.l.b16 %v330
      %v747 = vunpack.c.l.b16 %v331
      %v748 = vunpack.c.l.b16 %v332
      %v749 = vunpack.c.l.b16 %v333
      %v750 = vunpack.c.l.b16 %v334
      %v751 = vunpack.c.l.b16 %v335
      %v752 = vunpack.c.l.b16 %v336
      %v753 = vunpack.c.l.b16 %v337
      %v754 = vunpack.c.l.b16 %v338
      %v755 = vunpack.c.l.b16 %v339
      %v756 = vunpack.c.l.b16 %v340
      %v757 = vunpack.c.l.b16 %v341
      %v758 = vunpack.c.l.b16 %v342
      %v759 = vunpack.c.l.b16 %v343
      %v760 = vunpack.c.l.b16 %v344
      %v761 = vunpack.c.l.b16 %v345
      %v762 = vunpack.c.l.b16 %v346
      %v763 = vunpack.c.l.b16 %v347
      %v764 = vunpack.c.l.b16 %v348
      %v765 = vunpack.c.l.b16 %v349
      %v766 = vunpack.c.l.b16 %v350
      %v767 = vunpack.c.l.b16 %v351
      %v768 = vunpack.c.l.b16 %v352
      %v769 = vunpack.c.l.b16 %v353
      %v770 = vunpack.c.l.b16 %v354
      %v771 = vunpack.c.l.b16 %v355
      %v772 = vunpack.c.l.b16 %v356
      %v773 = vunpack.c.l.b16 %v357
      %v774 = vunpack.c.l.b16 %v358
      %v775 = vunpack.c.l.b16 %v359
      %v776 = vunpack.c.l.b16 %v360
      %v777 = vunpack.c.l.b16 %v361
      %v778 = vunpack.c.l.b16 %v362
      %v779 = vunpack.c.l.b16 %v363
      %v780 = vunpack.c.l.b16 %v364
      %v781 = vunpack.c.l.b16 %v365
      %v782 = vunpack.c.l.b16 %v366
      %v783 = vunpack.c.l.b16 %v367
      %v784 = vunpack.c.l.b16 %v368
      %v785 = vunpack.c.l.b16 %v369
      %v786 = vunpack.c.l.b16 %v370
      %v787 = vunpack.c.l.b16 %v371
      %v788 = vunpack.c.l.b16 %v372
      %v789 = vunpack.c.l.b16 %v373
      %v790 = vunpack.c.l.b16 %v374
      %v791 = vunpack.c.l.b16 %v375
      %v792 = vunpack.c.l.b16 %v376
      %v793 = vunpack.c.l.b16 %v377
      %v794 = vunpack.c.l.b16 %v378
      %v795 = vunpack.c.l.b16 %v379
      %v796 = vunpack.c.l.b16 %v380
      %v797 = vunpack.c.l.b16 %v381
      %v798 = vunpack.c.l.b16 %v382
      %v799 = vunpack.c.l.b16 %v383
      %v800 = vunpack.c.l.b16 %v384
      %v801 = vunpack.c.l.b16 %v385
      %v802 = vunpack.c.l.b16 %v386
      %v803 = vunpack.c.l.b16 %v387
      %v804 = vunpack.c.l.b16 %v388
      %v805 = vunpack.c.l.b16 %v389
      %v806 = vunpack.c.l.b16 %v390
      %v807 = vunpack.c.l.b16 %v391
      %v808 = vunpack.c.l.b16 %v392
      %v809 = vunpack.c.l.b16 %v393
      %v810 = vunpack.c.l.b16 %v394
      %v811 = vunpack.c.l.b16 %v395
      %v812 = vunpack.c.l.b16 %v396
      %v813 = vunpack.c.l.b16 %v397
      %v814 = vunpack.c.l.b16 %v398
      %v815 = vunpack.c.l.b16 %v399
      %v816 = vunpack.c.l.b16 %v400
      %v817 = vunpack.c.l.b16 %v401
      %v818 = vunpack.c.l.b16 %v402
      %v819 = vunpack.c.l.b16 %v403
      %v820 = vunpack.c.l.b16 %v404
      %v821 = vunpack.c.l.b16 %v405
      %v822 = vunpack.c.l.b16 %v406
      %v823 = vunpack.c.l.b16 %v407
      %v824 = vunpack.c.l.b16 %v408
      %v825 = vunpack.c.l.b16 %v409
      %v826 = vunpack.c.l.b16 %v410
      %v827 = vunpack.c.l.b16 %v411
      %v828 = vunpack.c.l.b16 %v412
      %v829 = vunpack.c.l.b16 %v413
      %v830 = vunpack.c.l.b16 %v414
      %v831 = vunpack.c.l.b16 %v415
      %v832 = vunpack.c.l.b16 %v416
      %v833 = vunpack.c.l.b16 %v417
      %v834 = vunpack.c.l.b16 %v418
      %v835 = vunpack.c.l.b16 %v419
      %v836 = vunpack.c.l.b16 %v420
      %v837 = vunpack.c.l.b16 %v421
      %v838 = vunpack.c.l.b16 %v422
      %v839 = vunpack.c.l.b16 %v423
      %v840 = vunpack.c.l.b16 %v424
      %v841 = vunpack.c.l.b16 %v425
      %v842 = vunpack.c.l.b16 %v426
      %v843 = vunpack.c.l.b16 %v427
      %v844 = vunpack.c.l.b16 %v428
      %v845 = vunpack.c.l.b16 %v429
      %v846 = vunpack.c.l.b16 %v430
      %v847 = vunpack.c.l.b16 %v431
      %v848 = vunpack.c.l.b16 %v432
      %v849 = vunpack.c.l.b16 %v433
      %v850 = vunpack.c.l.b16 %v434
      %v851 = vunpack.c.l.b16 %v435
      %v852 = vunpack.c.l.b16 %v436
      %v853 = vunpack.c.l.b16 %v437
      %v854 = vunpack.c.l.b16 %v438
      %v855 = vunpack.c.l.b16 %v439
      %v856 = vunpack.c.l.b16 %v440
      %v857 = vpack.c.b16 %v730, %v729
      %v858 = vpack.c.b16 %v732, %v731
      %v859 = vpack.c.b16 %v734, %v733
      %v860 = vpack.c.b16 %v736, %v735
      %v861 = vpack.c.b16 %v738, %v737
      %v862 = vpack.c.b16 %v740, %v739
      %v863 = vpack.c.b16 %v742, %v741
      %v864 = vpack.c.b16 %v744, %v743
      %v865 = vpack.c.b16 %v746, %v745
      %v866 = vpack.c.b16 %v748, %v747
      %v867 = vpack.c.b16 %v750, %v749
      %v868 = vpack.c.b16 %v752, %v751
      %v869 = vpack.c.b16 %v754, %v753
      %v870 = vpack.c.b16 %v756, %v755
      %v871 = vpack.c.b16 %v758, %v757
      %v872 = vpack.c.b16 %v760, %v759
      %v873 = vpack.c.b16 %v762, %v761
      %v874 = vpack.c.b16 %v764, %v763
      %v875 = vpack.c.b16 %v766, %v765
      %v876 = vpack.c.b16 %v768, %v767
      %v877 = vpack.c.b16 %v770, %v769
      %v878 = vpack.c.b16 %v772, %v771
      %v879 = vpack.c.b16 %v774, %v773
      %v880 = vpack.c.b16 %v776, %v775
      %v881 = vpack.c.b16 %v778, %v777
      %v882 = vpack.c.b16 %v780, %v779
      %v883 = vpack.c.b16 %v782, %v781
      %v884 = vpack.c.b16 %v784, %v783
      %v885 = vpack.c.b16 %v786, %v785
      %v886 = vpack.c.b16 %v788, %v787
      %v887 = vpack.c.b16 %v790, %v789
      %v888 = vpack.c.b16 %v792, %v791
      %v889 = vpack.c.b16 %v794, %v793
      %v890 = vpack.c.b16 %v796, %v795
      %v891 = vpack.c.b16 %v798, %v797
      %v892 = vpack.c.b16 %v800, %v799
      %v893 = vpack.c.b16 %v802, %v801
      %v894 = vpack.c.b16 %v804, %v803
      %v895 = vpack.c.b16 %v806, %v805
      %v896 = vpack.c.b16 %v808, %v807
      %v897 = vpack.c.b16 %v810, %v809
      %v898 = vpack.c.b16 %v812, %v811
      %v899 = vpack.c.b16 %v814, %v813
      %v900 = vpack.c.b16 %v816, %v815
      %v901 = vpack.c.b16 %v818, %v817
      %v902 = vpack.c.b16 %v820, %v819
      %v903 = vpack.c.b16 %v822, %v821
      %v904 = vpack.c.b16 %v824, %v823
      %v905 = vpack.c.b16 %v826, %v825
      %v906 = vpack.c.b16 %v828, %v827
      %v907 = vpack.c.b16 %v830, %v829
      %v908 = vpack.c.b16 %v832, %v831
      %v909 = vpack.c.b16 %v834, %v833
      %v910 = vpack.c.b16 %v836, %v835
      %v911 = vpack.c.b16 %v838, %v837
      %v912 = vpack.c.b16 %v840, %v839
      %v913 = vpack.c.b16 %v842, %v841
      %v914 = vpack.c.b16 %v844, %v843
      %v915 = vpack.c.b16 %v846, %v845
      %v916 = vpack.c.b16 %v848, %v847
      %v917 = vpack.c.b16 %v850, %v849
      %v918 = vpack.c.b16 %v852, %v851
      %v919 = vpack.c.b16 %v854, %v853
      %v920 = vpack.c.b16 %v856, %v855
      %985 = vmatpush.bf16.msra.mxu0 %v864
      %986 = vmatpush.bf16.msra.mxu0 %v863
      %987 = vmatpush.bf16.msra.mxu0 %v862
      %988 = vmatpush.bf16.msra.mxu0 %v861
      %989 = vmatpush.bf16.msra.mxu0 %v860
      %990 = vmatpush.bf16.msra.mxu0 %v859
      %991 = vmatpush.bf16.msra.mxu0 %v858
      %992 = vmatpush.bf16.msra.mxu0 %v857
      %993 = vmatmul.bf16.gmra.mxu0 %v537
      %v994 = vpop.f32.mrf.mxu0
      %v995 = vadd.f32 0.0, %v994
      %v996 = vpop.f32.mrf.mxu0
      %v997 = vadd.f32 0.0, %v996
      %998 = vmatmul.bf16.gmra.mxu0 %v545
      %v999 = vpop.f32.mrf.mxu0
      %v1000 = vadd.f32 0.0, %v999
      %v1001 = vpop.f32.mrf.mxu0
      %v1002 = vadd.f32 0.0, %v1001
      %1003 = vmatmul.bf16.gmra.mxu0 %v553
      %v1004 = vpop.f32.mrf.mxu0
      %v1005 = vadd.f32 0.0, %v1004
      %v1006 = vpop.f32.mrf.mxu0
      %v1007 = vadd.f32 0.0, %v1006
      %1008 = vmatmul.bf16.gmra.mxu0 %v561
      %v1009 = vpop.f32.mrf.mxu0
      %v1010 = vadd.f32 0.0, %v1009
      %v1011 = vpop.f32.mrf.mxu0
      %v1012 = vadd.f32 0.0, %v1011
      %1013 = vdwg.mxu0
      %1014 = vmatpush.bf16.msra.mxu0 %v872
      %1015 = vmatpush.bf16.msra.mxu0 %v871
      %1016 = vmatpush.bf16.msra.mxu0 %v870
      %1017 = vmatpush.bf16.msra.mxu0 %v869
      %1018 = vmatpush.bf16.msra.mxu0 %v868
      %1019 = vmatpush.bf16.msra.mxu0 %v867
      %1020 = vmatpush.bf16.msra.mxu0 %v866
      %1021 = vmatpush.bf16.msra.mxu0 %v865
      %1022 = vmatmul.bf16.gmra.mxu0 %v538
      %v1023 = vpop.f32.mrf.mxu0
      %v1024 = vadd.f32 %v995, %v1023
      %v1025 = vpop.f32.mrf.mxu0
      %v1026 = vadd.f32 %v997, %v1025
      %1027 = vmatmul.bf16.gmra.mxu0 %v546
      %v1028 = vpop.f32.mrf.mxu0
      %v1029 = vadd.f32 %v1000, %v1028
      %v1030 = vpop.f32.mrf.mxu0
      %v1031 = vadd.f32 %v1002, %v1030
      %1032 = vmatmul.bf16.gmra.mxu0 %v554
      %v1033 = vpop.f32.mrf.mxu0
      %v1034 = vadd.f32 %v1005, %v1033
      %v1035 = vpop.f32.mrf.mxu0
      %v1036 = vadd.f32 %v1007, %v1035
      %1037 = vmatmul.bf16.gmra.mxu0 %v562
      %v1038 = vpop.f32.mrf.mxu0
      %v1039 = vadd.f32 %v1010, %v1038
      %v1040 = vpop.f32.mrf.mxu0
      %v1041 = vadd.f32 %v1012, %v1040
      %1042 = vdwg.mxu0
      %1043 = vmatpush.bf16.msra.mxu0 %v880
      %1044 = vmatpush.bf16.msra.mxu0 %v879
      %1045 = vmatpush.bf16.msra.mxu0 %v878
      %1046 = vmatpush.bf16.msra.mxu0 %v877
      %1047 = vmatpush.bf16.msra.mxu0 %v876
      %1048 = vmatpush.bf16.msra.mxu0 %v875
      %1049 = vmatpush.bf16.msra.mxu0 %v874
      %1050 = vmatpush.bf16.msra.mxu0 %v873
      %1051 = vmatmul.bf16.gmra.mxu0 %v539
      %v1052 = vpop.f32.mrf.mxu0
      %v1053 = vadd.f32 %v1024, %v1052
      %v1054 = vpop.f32.mrf.mxu0
      %v1055 = vadd.f32 %v1026, %v1054
      %1056 = vmatmul.bf16.gmra.mxu0 %v547
      %v1057 = vpop.f32.mrf.mxu0
      %v1058 = vadd.f32 %v1029, %v1057
      %v1059 = vpop.f32.mrf.mxu0
      %v1060 = vadd.f32 %v1031, %v1059
      %1061 = vmatmul.bf16.gmra.mxu0 %v555
      %v1062 = vpop.f32.mrf.mxu0
      %v1063 = vadd.f32 %v1034, %v1062
      %v1064 = vpop.f32.mrf.mxu0
      %v1065 = vadd.f32 %v1036, %v1064
      %1066 = vmatmul.bf16.gmra.mxu0 %v563
      %v1067 = vpop.f32.mrf.mxu0
      %v1068 = vadd.f32 %v1039, %v1067
      %v1069 = vpop.f32.mrf.mxu0
      %v1070 = vadd.f32 %v1041, %v1069
      %1071 = vdwg.mxu0
      %1072 = vmatpush.bf16.msra.mxu0 %v888
      %1073 = vmatpush.bf16.msra.mxu0 %v887
      %1074 = vmatpush.bf16.msra.mxu0 %v886
      %1075 = vmatpush.bf16.msra.mxu0 %v885
      %1076 = vmatpush.bf16.msra.mxu0 %v884
      %1077 = vmatpush.bf16.msra.mxu0 %v883
      %1078 = vmatpush.bf16.msra.mxu0 %v882
      %1079 = vmatpush.bf16.msra.mxu0 %v881
      %1080 = vmatmul.bf16.gmra.mxu0 %v540
      %v1081 = vpop.f32.mrf.mxu0
      %v1082 = vadd.f32 %v1053, %v1081
      %v1083 = vpop.f32.mrf.mxu0
      %v1084 = vadd.f32 %v1055, %v1083
      %1085 = vmatmul.bf16.gmra.mxu0 %v548
      %v1086 = vpop.f32.mrf.mxu0
      %v1087 = vadd.f32 %v1058, %v1086
      %v1088 = vpop.f32.mrf.mxu0
      %v1089 = vadd.f32 %v1060, %v1088
      %1090 = vmatmul.bf16.gmra.mxu0 %v556
      %v1091 = vpop.f32.mrf.mxu0
      %v1092 = vadd.f32 %v1063, %v1091
      %v1093 = vpop.f32.mrf.mxu0
      %v1094 = vadd.f32 %v1065, %v1093
      %1095 = vmatmul.bf16.gmra.mxu0 %v564
      %v1096 = vpop.f32.mrf.mxu0
      %v1097 = vadd.f32 %v1068, %v1096
      %v1098 = vpop.f32.mrf.mxu0
      %v1099 = vadd.f32 %v1070, %v1098
      %1100 = vdwg.mxu0
      %1101 = vmatpush.bf16.msra.mxu0 %v896
      %1102 = vmatpush.bf16.msra.mxu0 %v895
      %1103 = vmatpush.bf16.msra.mxu0 %v894
      %1104 = vmatpush.bf16.msra.mxu0 %v893
      %1105 = vmatpush.bf16.msra.mxu0 %v892
      %1106 = vmatpush.bf16.msra.mxu0 %v891
      %1107 = vmatpush.bf16.msra.mxu0 %v890
      %1108 = vmatpush.bf16.msra.mxu0 %v889
      %1109 = vmatmul.bf16.gmra.mxu0 %v541
      %v1110 = vpop.f32.mrf.mxu0
      %v1111 = vadd.f32 %v1082, %v1110
      %v1112 = vpop.f32.mrf.mxu0
      %v1113 = vadd.f32 %v1084, %v1112
      %1114 = vmatmul.bf16.gmra.mxu0 %v549
      %v1115 = vpop.f32.mrf.mxu0
      %v1116 = vadd.f32 %v1087, %v1115
      %v1117 = vpop.f32.mrf.mxu0
      %v1118 = vadd.f32 %v1089, %v1117
      %1119 = vmatmul.bf16.gmra.mxu0 %v557
      %v1120 = vpop.f32.mrf.mxu0
      %v1121 = vadd.f32 %v1092, %v1120
      %v1122 = vpop.f32.mrf.mxu0
      %v1123 = vadd.f32 %v1094, %v1122
      %1124 = vmatmul.bf16.gmra.mxu0 %v565
      %v1125 = vpop.f32.mrf.mxu0
      %v1126 = vadd.f32 %v1097, %v1125
      %v1127 = vpop.f32.mrf.mxu0
      %v1128 = vadd.f32 %v1099, %v1127
      %1129 = vdwg.mxu0
      %1130 = vmatpush.bf16.msra.mxu0 %v904
      %1131 = vmatpush.bf16.msra.mxu0 %v903
      %1132 = vmatpush.bf16.msra.mxu0 %v902
      %1133 = vmatpush.bf16.msra.mxu0 %v901
      %1134 = vmatpush.bf16.msra.mxu0 %v900
      %1135 = vmatpush.bf16.msra.mxu0 %v899
      %1136 = vmatpush.bf16.msra.mxu0 %v898
      %1137 = vmatpush.bf16.msra.mxu0 %v897
      %1138 = vmatmul.bf16.gmra.mxu0 %v542
      %v1139 = vpop.f32.mrf.mxu0
      %v1140 = vadd.f32 %v1111, %v1139
      %v1141 = vpop.f32.mrf.mxu0
      %v1142 = vadd.f32 %v1113, %v1141
      %1143 = vmatmul.bf16.gmra.mxu0 %v550
      %v1144 = vpop.f32.mrf.mxu0
      %v1145 = vadd.f32 %v1116, %v1144
      %v1146 = vpop.f32.mrf.mxu0
      %v1147 = vadd.f32 %v1118, %v1146
      %1148 = vmatmul.bf16.gmra.mxu0 %v558
      %v1149 = vpop.f32.mrf.mxu0
      %v1150 = vadd.f32 %v1121, %v1149
      %v1151 = vpop.f32.mrf.mxu0
      %v1152 = vadd.f32 %v1123, %v1151
      %1153 = vmatmul.bf16.gmra.mxu0 %v566
      %v1154 = vpop.f32.mrf.mxu0
      %v1155 = vadd.f32 %v1126, %v1154
      %v1156 = vpop.f32.mrf.mxu0
      %v1157 = vadd.f32 %v1128, %v1156
      %1158 = vdwg.mxu0
      %1159 = vmatpush.bf16.msra.mxu0 %v912
      %1160 = vmatpush.bf16.msra.mxu0 %v911
      %1161 = vmatpush.bf16.msra.mxu0 %v910
      %1162 = vmatpush.bf16.msra.mxu0 %v909
      %1163 = vmatpush.bf16.msra.mxu0 %v908
      %1164 = vmatpush.bf16.msra.mxu0 %v907
      %1165 = vmatpush.bf16.msra.mxu0 %v906
      %1166 = vmatpush.bf16.msra.mxu0 %v905
      %1167 = vmatmul.bf16.gmra.mxu0 %v543
      %v1168 = vpop.f32.mrf.mxu0
      %v1169 = vadd.f32 %v1140, %v1168
      %v1170 = vpop.f32.mrf.mxu0
      %v1171 = vadd.f32 %v1142, %v1170
      %1172 = vmatmul.bf16.gmra.mxu0 %v551
      %v1173 = vpop.f32.mrf.mxu0
      %v1174 = vadd.f32 %v1145, %v1173
      %v1175 = vpop.f32.mrf.mxu0
      %v1176 = vadd.f32 %v1147, %v1175
      %1177 = vmatmul.bf16.gmra.mxu0 %v559
      %v1178 = vpop.f32.mrf.mxu0
      %v1179 = vadd.f32 %v1150, %v1178
      %v1180 = vpop.f32.mrf.mxu0
      %v1181 = vadd.f32 %v1152, %v1180
      %1182 = vmatmul.bf16.gmra.mxu0 %v567
      %v1183 = vpop.f32.mrf.mxu0
      %v1184 = vadd.f32 %v1155, %v1183
      %v1185 = vpop.f32.mrf.mxu0
      %v1186 = vadd.f32 %v1157, %v1185
      %1187 = vdwg.mxu0
      %1188 = vmatpush.bf16.msra.mxu0 %v920
      %1189 = vmatpush.bf16.msra.mxu0 %v919
      %1190 = vmatpush.bf16.msra.mxu0 %v918
      %1191 = vmatpush.bf16.msra.mxu0 %v917
      %1192 = vmatpush.bf16.msra.mxu0 %v916
      %1193 = vmatpush.bf16.msra.mxu0 %v915
      %1194 = vmatpush.bf16.msra.mxu0 %v914
      %1195 = vmatpush.bf16.msra.mxu0 %v913
      %1196 = vmatmul.bf16.gmra.mxu0 %v544
      %v1197 = vpop.f32.mrf.mxu0
      %v1198 = vadd.f32 %v1169, %v1197
      %v1199 = vpop.f32.mrf.mxu0
      %v1200 = vadd.f32 %v1171, %v1199
      %1201 = vmatmul.bf16.gmra.mxu0 %v552
      %v1202 = vpop.f32.mrf.mxu0
      %v1203 = vadd.f32 %v1174, %v1202
      %v1204 = vpop.f32.mrf.mxu0
      %v1205 = vadd.f32 %v1176, %v1204
      %1206 = vmatmul.bf16.gmra.mxu0 %v560
      %v1207 = vpop.f32.mrf.mxu0
      %v1208 = vadd.f32 %v1179, %v1207
      %v1209 = vpop.f32.mrf.mxu0
      %v1210 = vadd.f32 %v1181, %v1209
      %1211 = vmatmul.bf16.gmra.mxu0 %v568
      %v1212 = vpop.f32.mrf.mxu0
      %v1213 = vadd.f32 %v1184, %v1212
      %v1214 = vpop.f32.mrf.mxu0
      %v1215 = vadd.f32 %v1186, %v1214
      %1216 = vdwg.mxu0
      %v1217 = vadd.f32 %v273, %v1198
      %v1218 = vadd.f32 %v274, %v1200
      %v1219 = vadd.f32 %v275, %v1203
      %v1220 = vadd.f32 %v276, %v1205
      %v1221 = vadd.f32 %v277, %v1208
      %v1222 = vadd.f32 %v278, %v1210
      %v1223 = vadd.f32 %v279, %v1213
      %v1224 = vadd.f32 %v280, %v1215
      %1225 = vst [vmem:[#allocation2] sm:$0xff] %v1217
      %1226 = vst [vmem:[#allocation2 + $0x8] sm:$0xff] %v1218
      %1227 = vst [vmem:[#allocation2 + $0x10] sm:$0xff] %v1219
      %1228 = vst [vmem:[#allocation2 + $0x18] sm:$0xff] %v1220
      %1229 = vst [vmem:[#allocation2 + $0x20] sm:$0xff] %v1221
      %1230 = vst [vmem:[#allocation2 + $0x28] sm:$0xff] %v1222
      %1231 = vst [vmem:[#allocation2 + $0x30] sm:$0xff] %v1223
      %1232 = vst [vmem:[#allocation2 + $0x38] sm:$0xff] %v1224
      // Predicated region
      $region37: #{discriminator_forward.6} parent=31 // pred_check
        %p1233 = pneg %p261
      $region38: #{discriminator_forward.6} parent=31 // pred_check_branch
        %1235 = sbr.rel (%p1233) target = $region40
      $region39: #{discriminator_forward.6} parent=31 // pred_region
        %v1236 = vld [vmem:[#allocation2] sm:$0xff]
        %v1237 = vld [vmem:[#allocation2 + $0x8] sm:$0xff]
        %v1238 = vld [vmem:[#allocation2 + $0x10] sm:$0xff]
        %v1239 = vld [vmem:[#allocation2 + $0x18] sm:$0xff]
        %v1240 = vld [vmem:[#allocation2 + $0x20] sm:$0xff]
        %v1241 = vld [vmem:[#allocation2 + $0x28] sm:$0xff]
        %v1242 = vld [vmem:[#allocation2 + $0x30] sm:$0xff]
        %v1243 = vld [vmem:[#allocation2 + $0x38] sm:$0xff]
        %v1244 = vld [vmem:[%s252] sm:$0x1]
        %v1246 = vperm.slane %v1244, 0
        %v1248 = vadd.f32 %v1236, %v1246
        %v1249 = vadd.f32 %v1237, %v1246
        %v1250 = vadd.f32 %v1238, %v1246
        %v1251 = vadd.f32 %v1239, %v1246
        %v1252 = vadd.f32 %v1240, %v1246
        %v1253 = vadd.f32 %v1241, %v1246
        %v1254 = vadd.f32 %v1242, %v1246
        %v1255 = vadd.f32 %v1243, %v1246
        %v1256 = vadd.f32 %v1248, %v1249
        %v1257 = vadd.f32 %v1256, %v1250
        %v1258 = vadd.f32 %v1257, %v1251
        %v1259 = vadd.f32 %v1258, %v1252
        %v1260 = vadd.f32 %v1259, %v1253
        %v1261 = vadd.f32 %v1260, %v1254
        %v1262 = vadd.f32 %v1261, %v1255
        %v1263 = vrot.slane %v1262, 4
        %v1264 = vadd.f32 %v1262, %v1263
        %v1265 = vrot.slane %v1264, 2
        %v1266 = vadd.f32 %v1264, %v1265
        %v1267 = vrot.slane %v1266, 1
        %v1268 = vadd.f32 %v1266, %v1267
        %v1269 = vrcp.pop 64.0
        %v1270 = vmul.f32 64.0, %v1269
        %v1271 = vsub.f32 1.0, %v1270
        %v1272 = vmul.f32 %v1269, %v1271
        %v1273 = vadd.f32 %v1269, %v1272
        %vm1274 = vweird.f32 %v1269
        %v1275 = vsel %vm1274, %v1269, %v1273
        %v1276 = vmul.f32 %v1268, %v1275
        %v1277 = vsub.f32 %v1248, %v1276
        %v1278 = vsub.f32 %v1249, %v1276
        %v1279 = vsub.f32 %v1250, %v1276
        %v1280 = vsub.f32 %v1251, %v1276
        %v1281 = vsub.f32 %v1252, %v1276
        %v1282 = vsub.f32 %v1253, %v1276
        %v1283 = vsub.f32 %v1254, %v1276
        %v1284 = vsub.f32 %v1255, %v1276
        %v1285 = vmul.f32 %v1277, %v1277
        %v1286 = vmul.f32 %v1278, %v1278
        %v1287 = vmul.f32 %v1279, %v1279
        %v1288 = vmul.f32 %v1280, %v1280
        %v1289 = vmul.f32 %v1281, %v1281
        %v1290 = vmul.f32 %v1282, %v1282
        %v1291 = vmul.f32 %v1283, %v1283
        %v1292 = vmul.f32 %v1284, %v1284
        %v1293 = vadd.f32 %v1285, %v1286
        %v1294 = vadd.f32 %v1293, %v1287
        %v1295 = vadd.f32 %v1294, %v1288
        %v1296 = vadd.f32 %v1295, %v1289
        %v1297 = vadd.f32 %v1296, %v1290
        %v1298 = vadd.f32 %v1297, %v1291
        %v1299 = vadd.f32 %v1298, %v1292
        %v1300 = vrot.slane %v1299, 4
        %v1301 = vadd.f32 %v1299, %v1300
        %v1302 = vrot.slane %v1301, 2
        %v1303 = vadd.f32 %v1301, %v1302
        %v1304 = vrot.slane %v1303, 1
        %v1305 = vadd.f32 %v1303, %v1304
        %v1306 = vmul.f32 %v1305, %v1275
        %v1307 = vadd.f32 %v1306, 1e-05
        %v1308 = vrsqrt.pop %v1307
        %v1309 = vmul.f32 %v1308, %v1307
        %v1310 = vmul.f32 %v1309, %v1308
        %v1311 = vmul.f32 0.5, %v1310
        %v1312 = vsub.f32 1.5, %v1311
        %v1313 = vmul.f32 %v1308, %v1312
        %vm1314 = vweird.f32 %v1307
        %vm1315 = vweird.f32 %v1308
        %vm1316 = vmor %vm1314, %vm1315
        %v1317 = vsel %vm1316, %v1308, %v1313
        %v1318 = vmul.f32 %v1277, %v1317
        %v1319 = vmul.f32 %v1278, %v1317
        %v1320 = vmul.f32 %v1279, %v1317
        %v1321 = vmul.f32 %v1280, %v1317
        %v1322 = vmul.f32 %v1281, %v1317
        %v1323 = vmul.f32 %v1282, %v1317
        %v1324 = vmul.f32 %v1283, %v1317
        %v1325 = vmul.f32 %v1284, %v1317
        %vm1326 = vcmp.ge.f32.partialorder %v1318, 0.0
        %vm1327 = vcmp.ge.f32.partialorder %v1319, 0.0
        %vm1328 = vcmp.ge.f32.partialorder %v1320, 0.0
        %vm1329 = vcmp.ge.f32.partialorder %v1321, 0.0
        %vm1330 = vcmp.ge.f32.partialorder %v1322, 0.0
        %vm1331 = vcmp.ge.f32.partialorder %v1323, 0.0
        %vm1332 = vcmp.ge.f32.partialorder %v1324, 0.0
        %vm1333 = vcmp.ge.f32.partialorder %v1325, 0.0
        %v1334 = vmul.f32 %v1318, 0.2
        %v1335 = vmul.f32 %v1319, 0.2
        %v1336 = vmul.f32 %v1320, 0.2
        %v1337 = vmul.f32 %v1321, 0.2
        %v1338 = vmul.f32 %v1322, 0.2
        %v1339 = vmul.f32 %v1323, 0.2
        %v1340 = vmul.f32 %v1324, 0.2
        %v1341 = vmul.f32 %v1325, 0.2
        %v1342 = vsel %vm1326, %v1318, %v1334
        %v1343 = vsel %vm1327, %v1319, %v1335
        %v1344 = vsel %vm1328, %v1320, %v1336
        %v1345 = vsel %vm1329, %v1321, %v1337
        %v1346 = vsel %vm1330, %v1322, %v1338
        %v1347 = vsel %vm1331, %v1323, %v1339
        %v1348 = vsel %vm1332, %v1324, %v1340
        %v1349 = vsel %vm1333, %v1325, %v1341
        %v1350 = vpack.c.bf16 %v1342, %v1342
        %v1351 = vpack.c.bf16 %v1343, %v1343
        %v1352 = vpack.c.bf16 %v1344, %v1344
        %v1353 = vpack.c.bf16 %v1345, %v1345
        %v1354 = vpack.c.bf16 %v1346, %v1346
        %v1355 = vpack.c.bf16 %v1347, %v1347
        %v1356 = vpack.c.bf16 %v1348, %v1348
        %v1357 = vpack.c.bf16 %v1349, %v1349
        %1358 = vst [vmem:[%s260] sm:$0xf] %v1350
        %1359 = vst [vmem:[%s260 + $0x4] sm:$0xf] %v1351
        %1360 = vst [vmem:[%s260 + $0x8] sm:$0xf] %v1352
        %1361 = vst [vmem:[%s260 + $0xc] sm:$0xf] %v1353
        %1362 = vst [vmem:[%s260 + $0x10] sm:$0xf] %v1354
        %1363 = vst [vmem:[%s260 + $0x14] sm:$0xf] %v1355
        %1364 = vst [vmem:[%s260 + $0x18] sm:$0xf] %v1356
        %1365 = vst [vmem:[%s260 + $0x1c] sm:$0xf] %v1357
      $region40: #{discriminator_forward.6} parent=31 // pred_fallthru
        _
      %p1366 = scmp.lt.s32.totalorder %s19, 1
      %s1367 = scalar_select %p1366, %s19, 1
      %p1368 = scmp.lt.s32.totalorder %s20, 0
      %s1369 = scalar_select %p1368, %s20, 0
      %s1370 = smul.addr %s1367, 8
      %s1371 = sadd.s32 %s1369, %s1370
      %s1372 = smul.addr %s1371, 4
      %s1373 = scalar_lea.vmem %s3, %s1372
      // Predicated region
      $region41: #{discriminator_forward.6} parent=31 // pred_check
        %p1374 = pneg %p135
      $region42: #{discriminator_forward.6} parent=31 // pred_check_branch
        %1376 = sbr.rel (%p1374) target = $region44
      $region43: #{discriminator_forward.6} parent=31 // pred_region
        _
      $region44: #{discriminator_forward.6} parent=31 // pred_fallthru
        _
    $region32: #{discriminator_forward.6} parent=5 // pred_fallthru
      _
    %p1377 = scmp.le.s32.totalorder 2, %s9
    // Predicated region
    $region45: #{discriminator_forward.6} parent=5 // pred_check
      %p1378 = pneg %p1377
    $region46: #{discriminator_forward.6} parent=5 // pred_check_branch
      %1380 = sbr.rel (%p1378) target = $region48
    $region47: #{discriminator_forward.6} parent=5 // pred_region
      %s1381 = ssub.s32 %s9, 2
      // Predicated region
      $region49: #{discriminator_forward.6} parent=47 // pred_check
        %p1382 = pneg %p141
      $region50: #{discriminator_forward.6} parent=47 // pred_check_branch
        %1384 = sbr.rel (%p1382) target = $region52
      $region51: #{discriminator_forward.6} parent=47 // pred_region
        %p1385 = scmp.lt.s32.totalorder %s22, 1
        %s1386 = scalar_select %p1385, %s22, 1
        %p1387 = scmp.lt.s32.totalorder %s23, 0
        %s1388 = scalar_select %p1387, %s23, 0
        %s1389 = smul.addr %s1386, 8
        %s1390 = sadd.s32 %s1388, %s1389
        %s1391 = smul.addr %s1390, 4
        %s1392 = scalar_lea.vmem %s3, %s1391
      $region52: #{discriminator_forward.6} parent=47 // pred_fallthru
        _
    $region48: #{discriminator_forward.6} parent=5 // pred_fallthru
      _
  $region6: #{discriminator_forward.6} parent=0 // loop_footer
    %s13 = sadd.s32 1, %s9
  $region7: #{discriminator_forward.6} parent=0 // loop_footer_branch
    %8 = sbr.rel target = $region3
  $region8: #{discriminator_forward.6} parent=0 // loop_exit
    _

// kernel: discriminator_forward.7
$region0: #{discriminator_forward.7}
  #allocation0 [shape = 'u32[]', space=smem, size = 0x4, offset = 0x4, fixed_abs, tag = 'smem constant byte address 0x4 - core index']
  #allocation1 [shape = 'u32[72,128]{1,0:T(1,128)}', space=vmem, size = 0x9000, scoped, tag = 'internal scratch']
  #allocation2 [shape = 'f32[16,256]{1,0:T(8,128)}', space=vmem, size = 0x4000, scoped, tag = 'scratch operand']
  %s0 = inlined_call_operand.vmem [shape: bf16[2,16,2048], index: 0, kind: input, shape index: {}]
  %s1 = inlined_call_operand.vmem [shape: bf16[2048,256], index: 1, kind: input, shape index: {}]
  %s2 = inlined_call_operand.vmem [shape: f32[1,256], index: 2, kind: input, shape index: {}]
  %s3 = inlined_call_operand.vmem [shape: bf16[2,16,256], index: 3, kind: output, shape index: {}]
  %s4 = sld [smem:[#allocation0]]
  $region53: #{discriminator_forward.7} parent=0
    _
  %s6 = ssub.s32 1, %s4
  %s7 = scalar_select 0, %s6, %s4
  loop: start=0, step=1, limit=4
  $region2: #{discriminator_forward.7} parent=0 // loop_pre_header
    _
  $region3: #{discriminator_forward.7} parent=0 // loop_header
    %s9 = sphi 0, %s13
    %p10 = scmp.ge.s32.totalorder %s9, 4
    %s16 = sphi 0, %s35
    %s17 = sphi 0, %s31
    %s18 = sphi 0, %s27
    %s19 = sphi 0, %s16
    %s20 = sphi 0, %s17
    %s21 = sphi 0, %s18
    %s22 = sphi 0, %s19
    %s23 = sphi 0, %s20
    %s24 = sphi 0, %s21
    %s40 = sphi 0, %s42
    %s43 = sphi 0, %s40
    %s44 = sphi 0, %s43
    %s60 = sphi 0, %s44
    %s68 = sphi 0, %s70
    %s71 = sphi 0, %s68
    %s72 = sphi 0, %s71
    %s88 = sphi 0, %s72
    %s94 = sphi 0, %s96
    %s97 = sphi 0, %s94
    %s98 = sphi 0, %s97
    %s114 = sphi 0, %s98
    %s122 = sphi 0, %s124
    %s125 = sphi 0, %s122
    %s126 = sphi 0, %s125
    %s142 = sphi 0, %s126
  $region4: #{discriminator_forward.7} parent=0 // loop_header_branch
    %12 = sbr.rel (%p10) target = $region8
  $region5: #{discriminator_forward.7} parent=0 // loop_body
    %s14 = ssub.s32 %s9, 1
    %s15 = ssub.s32 %s9, 2
    %s25 = sadd.s32 1, %s18
    %p26 = scmp.ge.s32.totalorder %s25, 1
    %s27 = scalar_select %p26, 0, %s25
    %s28 = sadd.s32 1, %s17
    %s29 = scalar_select %p26, %s28, %s17
    %p30 = scmp.ge.s32.totalorder %s29, 1
    %s31 = scalar_select %p30, 0, %s29
    %s32 = sadd.s32 1, %s16
    %s33 = scalar_select %p30, %s32, %s16
    %p34 = scmp.ge.s32.totalorder %s33, 2
    %s35 = scalar_select %p34, 0, %s33
    %s36 = ssub.s32 %s16, %s35
    %s37 = ssub.s32 %s18, %s27
    %s38 = sor.u32 %s36, %s37
    %p39 = scmp.eq.s32.totalorder %s38, 0
    %s41 = sadd.s32 %s40, 1
    %s42 = scalar_select %p39, %s40, %s41
    %p45 = pneg %p39
    %p46 = scmp.eq.s32.totalorder %s9, 1
    %p47 = por %p45, %p46
    %p48 = scmp.ne.s32.totalorder %s40, %s43
    %p49 = scmp.eq.s32.totalorder %s9, 0
    %p50 = por %p48, %p49
    %p51 = scmp.ne.s32.totalorder %s40, %s43
    %p52 = scmp.eq.s32.totalorder %s14, 1
    %p53 = por %p51, %p52
    %p54 = scmp.ne.s32.totalorder %s43, %s44
    %p55 = scmp.eq.s32.totalorder %s14, 0
    %p56 = por %p54, %p55
    %p57 = scmp.ne.s32.totalorder %s43, %s44
    %p58 = scmp.eq.s32.totalorder %s15, 1
    %p59 = por %p57, %p58
    %p61 = scmp.ne.s32.totalorder %s44, %s60
    %p62 = scmp.eq.s32.totalorder %s15, 0
    %p63 = por %p61, %p62
    %s64 = ssub.s32 %s18, %s27
    %s65 = ssub.s32 %s17, %s31
    %s66 = sor.u32 %s64, %s65
    %p67 = scmp.eq.s32.totalorder %s66, 0
    %s69 = sadd.s32 %s68, 1
    %s70 = scalar_select %p67, %s68, %s69
    %p73 = pneg %p67
    %p74 = scmp.eq.s32.totalorder %s9, 1
    %p75 = por %p73, %p74
    %p76 = scmp.ne.s32.totalorder %s68, %s71
    %p77 = scmp.eq.s32.totalorder %s9, 0
    %p78 = por %p76, %p77
    %p79 = scmp.ne.s32.totalorder %s68, %s71
    %p80 = scmp.eq.s32.totalorder %s14, 1
    %p81 = por %p79, %p80
    %p82 = scmp.ne.s32.totalorder %s71, %s72
    %p83 = scmp.eq.s32.totalorder %s14, 0
    %p84 = por %p82, %p83
    %p85 = scmp.ne.s32.totalorder %s71, %s72
    %p86 = scmp.eq.s32.totalorder %s15, 1
    %p87 = por %p85, %p86
    %p89 = scmp.ne.s32.totalorder %s72, %s88
    %p90 = scmp.eq.s32.totalorder %s15, 0
    %p91 = por %p89, %p90
    %s92 = ssub.s32 %s17, %s31
    %p93 = scmp.eq.s32.totalorder %s92, 0
    %s95 = sadd.s32 %s94, 1
    %s96 = scalar_select %p93, %s94, %s95
    %p99 = pneg %p93
    %p100 = scmp.eq.s32.totalorder %s9, 1
    %p101 = por %p99, %p100
    %p102 = scmp.ne.s32.totalorder %s94, %s97
    %p103 = scmp.eq.s32.totalorder %s9, 0
    %p104 = por %p102, %p103
    %p105 = scmp.ne.s32.totalorder %s94, %s97
    %p106 = scmp.eq.s32.totalorder %s14, 1
    %p107 = por %p105, %p106
    %p108 = scmp.ne.s32.totalorder %s97, %s98
    %p109 = scmp.eq.s32.totalorder %s14, 0
    %p110 = por %p108, %p109
    %p111 = scmp.ne.s32.totalorder %s97, %s98
    %p112 = scmp.eq.s32.totalorder %s15, 1
    %p113 = por %p111, %p112
    %p115 = scmp.ne.s32.totalorder %s98, %s114
    %p116 = scmp.eq.s32.totalorder %s15, 0
    %p117 = por %p115, %p116
    %s118 = ssub.s32 %s16, %s35
    %s119 = ssub.s32 %s17, %s31
    %s120 = sor.u32 %s118, %s119
    %p121 = scmp.eq.s32.totalorder %s120, 0
    %s123 = sadd.s32 %s122, 1
    %s124 = scalar_select %p121, %s122, %s123
    %p127 = pneg %p121
    %p128 = scmp.eq.s32.totalorder %s9, 1
    %p129 = por %p127, %p128
    %p130 = scmp.ne.s32.totalorder %s122, %s125
    %p131 = scmp.eq.s32.totalorder %s9, 0
    %p132 = por %p130, %p131
    %p133 = scmp.ne.s32.totalorder %s122, %s125
    %p134 = scmp.eq.s32.totalorder %s14, 1
    %p135 = por %p133, %p134
    %p136 = scmp.ne.s32.totalorder %s125, %s126
    %p137 = scmp.eq.s32.totalorder %s14, 0
    %p138 = por %p136, %p137
    %p139 = scmp.ne.s32.totalorder %s125, %s126
    %p140 = scmp.eq.s32.totalorder %s15, 1
    %p141 = por %p139, %p140
    %p143 = scmp.ne.s32.totalorder %s126, %s142
    %p144 = scmp.eq.s32.totalorder %s15, 0
    %p145 = por %p143, %p144
    %p146 = scmp.le.s32.totalorder 1, %s9
    %p147 = scmp.lt.s32.totalorder %s9, 3
    %p148 = pnand %p146, %p147
    %p149 = pneg %p148
    // Predicated region
    $region9: #{discriminator_forward.7} parent=5 // pred_check
      _
    $region10: #{discriminator_forward.7} parent=5 // pred_check_branch
      %151 = sbr.rel (%p148) target = $region12
    $region11: #{discriminator_forward.7} parent=5 // pred_region
      %s152 = ssub.s32 %s9, 1
      // Predicated region
      $region13: #{discriminator_forward.7} parent=11 // pred_check
        %p153 = pneg %p84
      $region14: #{discriminator_forward.7} parent=11 // pred_check_branch
        %155 = sbr.rel (%p153) target = $region16
      $region15: #{discriminator_forward.7} parent=11 // pred_region
        %s156 = smul.u32 256, %s21
        %s157 = smul.u32 2, %s20
        %p158 = scmp.lt.s32.totalorder %s156, 255
        %s159 = scalar_select %p158, %s156, 255
        %p160 = scmp.lt.s32.totalorder %s157, 1
        %s161 = scalar_select %p160, %s157, 1
        %s162 = smul.addr %s159, 2
        %s163 = sadd.s32 %s161, %s162
        %s164 = smul.addr %s163, 4
        %s165 = scalar_lea.vmem %s1, %s164
        %s166 = smul.u32 256, %s21
        %s167 = smul.u32 2, %s20
      $region16: #{discriminator_forward.7} parent=11 // pred_fallthru
        _
      // Predicated region
      $region17: #{discriminator_forward.7} parent=11 // pred_check
        %p168 = pneg %p110
      $region18: #{discriminator_forward.7} parent=11 // pred_check_branch
        %170 = sbr.rel (%p168) target = $region20
      $region19: #{discriminator_forward.7} parent=11 // pred_region
        %s171 = smul.u32 2, %s20
        %p172 = scmp.lt.s32.totalorder %s171, 1
        %s173 = scalar_select %p172, %s171, 1
        %s174 = scalar_lea.vmem %s2, %s173
        %s175 = smul.u32 2, %s20
      $region20: #{discriminator_forward.7} parent=11 // pred_fallthru
        _
    $region12: #{discriminator_forward.7} parent=5 // pred_fallthru
      _
    %p176 = scmp.lt.s32.totalorder %s9, 2
    // Predicated region
    $region21: #{discriminator_forward.7} parent=5 // pred_check
      %p177 = pneg %p176
    $region22: #{discriminator_forward.7} parent=5 // pred_check_branch
      %179 = sbr.rel (%p177) target = $region24
    $region23: #{discriminator_forward.7} parent=5 // pred_region
      // Predicated region
      $region25: #{discriminator_forward.7} parent=23 // pred_check
        %p180 = pneg %p50
      $region26: #{discriminator_forward.7} parent=23 // pred_check_branch
        %182 = sbr.rel (%p180) target = $region28
      $region27: #{discriminator_forward.7} parent=23 // pred_region
        %s183 = smul.u32 16, %s18
        %p184 = scmp.lt.s32.totalorder %s16, 1
        %s185 = scalar_select %p184, %s16, 1
        %p186 = scmp.lt.s32.totalorder %s183, 15
        %s187 = scalar_select %p186, %s183, 15
        %s188 = smul.addr %s185, 32
        %s189 = sadd.s32 %s187, %s188
        %s190 = smul.addr %s189, 4
        %s191 = scalar_lea.vmem %s0, %s190
        %s192 = smul.u32 16, %s18
      $region28: #{discriminator_forward.7} parent=23 // pred_fallthru
        _
    $region24: #{discriminator_forward.7} parent=5 // pred_fallthru
      _
    %p193 = scmp.le.s32.totalorder 1, %s9
    %p194 = scmp.lt.s32.totalorder %s9, 3
    %p195 = pnand %p193, %p194
    %p196 = pneg %p195
    // Predicated region
    $region29: #{discriminator_forward.7} parent=5 // pred_check
      _
    $region30: #{discriminator_forward.7} parent=5 // pred_check_branch
      %198 = sbr.rel (%p195) target = $region32
    $region31: #{discriminator_forward.7} parent=5 // pred_region
      %s199 = ssub.s32 %s9, 1
      %s200 = smul.u32 16, %s21
      %p201 = scmp.lt.s32.totalorder %s19, 1
      %s202 = scalar_select %p201, %s19, 1
      %p203 = scmp.lt.s32.totalorder %s200, 15
      %s204 = scalar_select %p203, %s200, 15
      %s205 = smul.addr %s202, 32
      %s206 = sadd.s32 %s204, %s205
      %s207 = smul.addr %s206, 4
      %s208 = scalar_lea.vmem %s0, %s207
      %p209 = pneg %p56
      %p210 = pneg %p53
      %s211 = smul.u32 256, %s21
      %s212 = smul.u32 2, %s20
      %p213 = scmp.lt.s32.totalorder %s211, 255
      %s214 = scalar_select %p213, %s211, 255
      %p215 = scmp.lt.s32.totalorder %s212, 1
      %s216 = scalar_select %p215, %s212, 1
      %s217 = smul.addr %s214, 2
      %s218 = sadd.s32 %s216, %s217
      %s219 = smul.addr %s218, 4
      %s220 = scalar_lea.vmem %s1, %s219
      %p221 = pneg %p84
      %p222 = pneg %p81
      %s223 = smul.u32 2, %s20
      %p224 = scmp.lt.s32.totalorder %s223, 1
      %s225 = scalar_select %p224, %s223, 1
      %s226 = scalar_lea.vmem %s2, %s225
      %p227 = pneg %p110
      %p228 = pneg %p107
      %p229 = pneg %p138
      %p230 = pneg %p135
      %s231 = smul.u32 2, %s20
      %p232 = scmp.lt.s32.totalorder %s19, 1
      %s233 = scalar_select %p232, %s19, 1
      %p234 = scmp.lt.s32.totalorder %s231, 1
      %s235 = scalar_select %p234, %s231, 1
      %s236 = smul.addr %s233, 4
      %s237 = sadd.s32 %s235, %s236
      %s238 = smul.addr %s237, 4
      %s239 = scalar_lea.vmem %s3, %s238
      %s240 = smul.u32 16, %s21
      %p241 = scmp.lt.s32.totalorder %s19, 1
      %s242 = scalar_select %p241, %s19, 1
      %p243 = scmp.lt.s32.totalorder %s240, 15
      %s244 = scalar_select %p243, %s240, 15
      %s245 = smul.addr %s242, 32
      %s246 = sadd.s32 %s244, %s245
      %s247 = smul.addr %s246, 4
      %s248 = scalar_lea.vmem %s0, %s247
      %s249 = smul.u32 16, %s21
      %s250 = smul.u32 256, %s21
      %s251 = smul.u32 2, %s20
      %p252 = scmp.lt.s32.totalorder %s250, 255
      %s253 = scalar_select %p252, %s250, 255
      %p254 = scmp.lt.s32.totalorder %s251, 1
      %s255 = scalar_select %p254, %s251, 1
      %s256 = smul.addr %s253, 2
      %s257 = sadd.s32 %s255, %s256
      %s258 = smul.addr %s257, 4
      %s259 = scalar_lea.vmem %s1, %s258
      %s260 = smul.u32 256, %s21
      %s261 = smul.u32 2, %s20
      %s262 = smul.u32 2, %s20
      %p263 = scmp.lt.s32.totalorder %s262, 1
      %s264 = scalar_select %p263, %s262, 1
      %s265 = scalar_lea.vmem %s2, %s264
      %s266 = smul.u32 2, %s20
      %s267 = smul.u32 2, %s20
      %p268 = scmp.lt.s32.totalorder %s19, 1
      %s269 = scalar_select %p268, %s19, 1
      %p270 = scmp.lt.s32.totalorder %s267, 1
      %s271 = scalar_select %p270, %s267, 1
      %s272 = smul.addr %s269, 4
      %s273 = sadd.s32 %s271, %s272
      %s274 = smul.addr %s273, 4
      %s275 = scalar_lea.vmem %s3, %s274
      %s276 = smul.u32 2, %s20
      %p277 = scmp.eq.s32.totalorder %s21, 0
      // Predicated region
      $region33: #{discriminator_forward.7} parent=31 // pred_check
        %p278 = pneg %p277
      $region34: #{discriminator_forward.7} parent=31 // pred_check_branch
        %280 = sbr.rel (%p278) target = $region36
      $region35: #{discriminator_forward.7} parent=31 // pred_region
        %281 = vst [vmem:[#allocation2] sm:$0xff] 0.0
        %282 = vst [vmem:[#allocation2 + $0x8] sm:$0xff] 0.0
        %283 = vst [vmem:[#allocation2 + $0x10] sm:$0xff] 0.0
        %284 = vst [vmem:[#allocation2 + $0x18] sm:$0xff] 0.0
      $region36: #{discriminator_forward.7} parent=31 // pred_fallthru
        _
      %v285 = vld [vmem:[#allocation2] sm:$0xff]
      %v286 = vld [vmem:[#allocation2 + $0x8] sm:$0xff]
      %v287 = vld [vmem:[#allocation2 + $0x10] sm:$0xff]
      %v288 = vld [vmem:[#allocation2 + $0x18] sm:$0xff]
      %v289 = vld [vmem:[%s248] sm:$0xff]
      %v290 = vld [vmem:[%s248 + $0x8] sm:$0xff]
      %v291 = vld [vmem:[%s248 + $0x10] sm:$0xff]
      %v292 = vld [vmem:[%s248 + $0x18] sm:$0xff]
      %v293 = vld [vmem:[%s248 + $0x20] sm:$0xff]
      %v294 = vld [vmem:[%s248 + $0x28] sm:$0xff]
      %v295 = vld [vmem:[%s248 + $0x30] sm:$0xff]
      %v296 = vld [vmem:[%s248 + $0x38] sm:$0xff]
      %v297 = vld [vmem:[%s248 + $0x40] sm:$0xff]
      %v298 = vld [vmem:[%s248 + $0x48] sm:$0xff]
      %v299 = vld [vmem:[%s248 + $0x50] sm:$0xff]
      %v300 = vld [vmem:[%s248 + $0x58] sm:$0xff]
      %v301 = vld [vmem:[%s248 + $0x60] sm:$0xff]
      %v302 = vld [vmem:[%s248 + $0x68] sm:$0xff]
      %v303 = vld [vmem:[%s248 + $0x70] sm:$0xff]
      %v304 = vld [vmem:[%s248 + $0x78] sm:$0xff]
      %v305 = vld [vmem:[%s259] sm:$0xff]
      %v306 = vld [vmem:[%s259 + $0x8] sm:$0xff]
      %v307 = vld [vmem:[%s259 + $0x10] sm:$0xff]
      %v308 = vld [vmem:[%s259 + $0x18] sm:$0xff]
      %v309 = vld [vmem:[%s259 + $0x20] sm:$0xff]
      %v310 = vld [vmem:[%s259 + $0x28] sm:$0xff]
      %v311 = vld [vmem:[%s259 + $0x30] sm:$0xff]
      %v312 = vld [vmem:[%s259 + $0x38] sm:$0xff]
      %v313 = vld [vmem:[%s259 + $0x40] sm:$0xff]
      %v314 = vld [vmem:[%s259 + $0x48] sm:$0xff]
      %v315 = vld [vmem:[%s259 + $0x50] sm:$0xff]
      %v316 = vld [vmem:[%s259 + $0x58] sm:$0xff]
      %v317 = vld [vmem:[%s259 + $0x60] sm:$0xff]
      %v318 = vld [vmem:[%s259 + $0x68] sm:$0xff]
      %v319 = vld [vmem:[%s259 + $0x70] sm:$0xff]
      %v320 = vld [vmem:[%s259 + $0x78] sm:$0xff]
      %v321 = vld [vmem:[%s259 + $0x80] sm:$0xff]
      %v322 = vld [vmem:[%s259 + $0x88] sm:$0xff]
      %v323 = vld [vmem:[%s259 + $0x90] sm:$0xff]
      %v324 = vld [vmem:[%s259 + $0x98] sm:$0xff]
      %v325 = vld [vmem:[%s259 + $0xa0] sm:$0xff]
      %v326 = vld [vmem:[%s259 + $0xa8] sm:$0xff]
      %v327 = vld [vmem:[%s259 + $0xb0] sm:$0xff]
      %v328 = vld [vmem:[%s259 + $0xb8] sm:$0xff]
      %v329 = vld [vmem:[%s259 + $0xc0] sm:$0xff]
      %v330 = vld [vmem:[%s259 + $0xc8] sm:$0xff]
      %v331 = vld [vmem:[%s259 + $0xd0] sm:$0xff]
      %v332 = vld [vmem:[%s259 + $0xd8] sm:$0xff]
      %v333 = vld [vmem:[%s259 + $0xe0] sm:$0xff]
      %v334 = vld [vmem:[%s259 + $0xe8] sm:$0xff]
      %v335 = vld [vmem:[%s259 + $0xf0] sm:$0xff]
      %v336 = vld [vmem:[%s259 + $0xf8] sm:$0xff]
      %v337 = vld [vmem:[%s259 + $0x100] sm:$0xff]
      %v338 = vld [vmem:[%s259 + $0x108] sm:$0xff]
      %v339 = vld [vmem:[%s259 + $0x110] sm:$0xff]
      %v340 = vld [vmem:[%s259 + $0x118] sm:$0xff]
      %v341 = vld [vmem:[%s259 + $0x120] sm:$0xff]
      %v342 = vld [vmem:[%s259 + $0x128] sm:$0xff]
      %v343 = vld [vmem:[%s259 + $0x130] sm:$0xff]
      %v344 = vld [vmem:[%s259 + $0x138] sm:$0xff]
      %v345 = vld [vmem:[%s259 + $0x140] sm:$0xff]
      %v346 = vld [vmem:[%s259 + $0x148] sm:$0xff]
      %v347 = vld [vmem:[%s259 + $0x150] sm:$0xff]
      %v348 = vld [vmem:[%s259 + $0x158] sm:$0xff]
      %v349 = vld [vmem:[%s259 + $0x160] sm:$0xff]
      %v350 = vld [vmem:[%s259 + $0x168] sm:$0xff]
      %v351 = vld [vmem:[%s259 + $0x170] sm:$0xff]
      %v352 = vld [vmem:[%s259 + $0x178] sm:$0xff]
      %v353 = vld [vmem:[%s259 + $0x180] sm:$0xff]
      %v354 = vld [vmem:[%s259 + $0x188] sm:$0xff]
      %v355 = vld [vmem:[%s259 + $0x190] sm:$0xff]
      %v356 = vld [vmem:[%s259 + $0x198] sm:$0xff]
      %v357 = vld [vmem:[%s259 + $0x1a0] sm:$0xff]
      %v358 = vld [vmem:[%s259 + $0x1a8] sm:$0xff]
      %v359 = vld [vmem:[%s259 + $0x1b0] sm:$0xff]
      %v360 = vld [vmem:[%s259 + $0x1b8] sm:$0xff]
      %v361 = vld [vmem:[%s259 + $0x1c0] sm:$0xff]
      %v362 = vld [vmem:[%s259 + $0x1c8] sm:$0xff]
      %v363 = vld [vmem:[%s259 + $0x1d0] sm:$0xff]
      %v364 = vld [vmem:[%s259 + $0x1d8] sm:$0xff]
      %v365 = vld [vmem:[%s259 + $0x1e0] sm:$0xff]
      %v366 = vld [vmem:[%s259 + $0x1e8] sm:$0xff]
      %v367 = vld [vmem:[%s259 + $0x1f0] sm:$0xff]
      %v368 = vld [vmem:[%s259 + $0x1f8] sm:$0xff]
      %v369 = vld [vmem:[%s259 + $0x200] sm:$0xff]
      %v370 = vld [vmem:[%s259 + $0x208] sm:$0xff]
      %v371 = vld [vmem:[%s259 + $0x210] sm:$0xff]
      %v372 = vld [vmem:[%s259 + $0x218] sm:$0xff]
      %v373 = vld [vmem:[%s259 + $0x220] sm:$0xff]
      %v374 = vld [vmem:[%s259 + $0x228] sm:$0xff]
      %v375 = vld [vmem:[%s259 + $0x230] sm:$0xff]
      %v376 = vld [vmem:[%s259 + $0x238] sm:$0xff]
      %v377 = vld [vmem:[%s259 + $0x240] sm:$0xff]
      %v378 = vld [vmem:[%s259 + $0x248] sm:$0xff]
      %v379 = vld [vmem:[%s259 + $0x250] sm:$0xff]
      %v380 = vld [vmem:[%s259 + $0x258] sm:$0xff]
      %v381 = vld [vmem:[%s259 + $0x260] sm:$0xff]
      %v382 = vld [vmem:[%s259 + $0x268] sm:$0xff]
      %v383 = vld [vmem:[%s259 + $0x270] sm:$0xff]
      %v384 = vld [vmem:[%s259 + $0x278] sm:$0xff]
      %v385 = vld [vmem:[%s259 + $0x280] sm:$0xff]
      %v386 = vld [vmem:[%s259 + $0x288] sm:$0xff]
      %v387 = vld [vmem:[%s259 + $0x290] sm:$0xff]
      %v388 = vld [vmem:[%s259 + $0x298] sm:$0xff]
      %v389 = vld [vmem:[%s259 + $0x2a0] sm:$0xff]
      %v390 = vld [vmem:[%s259 + $0x2a8] sm:$0xff]
      %v391 = vld [vmem:[%s259 + $0x2b0] sm:$0xff]
      %v392 = vld [vmem:[%s259 + $0x2b8] sm:$0xff]
      %v393 = vld [vmem:[%s259 + $0x2c0] sm:$0xff]
      %v394 = vld [vmem:[%s259 + $0x2c8] sm:$0xff]
      %v395 = vld [vmem:[%s259 + $0x2d0] sm:$0xff]
      %v396 = vld [vmem:[%s259 + $0x2d8] sm:$0xff]
      %v397 = vld [vmem:[%s259 + $0x2e0] sm:$0xff]
      %v398 = vld [vmem:[%s259 + $0x2e8] sm:$0xff]
      %v399 = vld [vmem:[%s259 + $0x2f0] sm:$0xff]
      %v400 = vld [vmem:[%s259 + $0x2f8] sm:$0xff]
      %v401 = vld [vmem:[%s259 + $0x300] sm:$0xff]
      %v402 = vld [vmem:[%s259 + $0x308] sm:$0xff]
      %v403 = vld [vmem:[%s259 + $0x310] sm:$0xff]
      %v404 = vld [vmem:[%s259 + $0x318] sm:$0xff]
      %v405 = vld [vmem:[%s259 + $0x320] sm:$0xff]
      %v406 = vld [vmem:[%s259 + $0x328] sm:$0xff]
      %v407 = vld [vmem:[%s259 + $0x330] sm:$0xff]
      %v408 = vld [vmem:[%s259 + $0x338] sm:$0xff]
      %v409 = vld [vmem:[%s259 + $0x340] sm:$0xff]
      %v410 = vld [vmem:[%s259 + $0x348] sm:$0xff]
      %v411 = vld [vmem:[%s259 + $0x350] sm:$0xff]
      %v412 = vld [vmem:[%s259 + $0x358] sm:$0xff]
      %v413 = vld [vmem:[%s259 + $0x360] sm:$0xff]
      %v414 = vld [vmem:[%s259 + $0x368] sm:$0xff]
      %v415 = vld [vmem:[%s259 + $0x370] sm:$0xff]
      %v416 = vld [vmem:[%s259 + $0x378] sm:$0xff]
      %v417 = vld [vmem:[%s259 + $0x380] sm:$0xff]
      %v418 = vld [vmem:[%s259 + $0x388] sm:$0xff]
      %v419 = vld [vmem:[%s259 + $0x390] sm:$0xff]
      %v420 = vld [vmem:[%s259 + $0x398] sm:$0xff]
      %v421 = vld [vmem:[%s259 + $0x3a0] sm:$0xff]
      %v422 = vld [vmem:[%s259 + $0x3a8] sm:$0xff]
      %v423 = vld [vmem:[%s259 + $0x3b0] sm:$0xff]
      %v424 = vld [vmem:[%s259 + $0x3b8] sm:$0xff]
      %v425 = vld [vmem:[%s259 + $0x3c0] sm:$0xff]
      %v426 = vld [vmem:[%s259 + $0x3c8] sm:$0xff]
      %v427 = vld [vmem:[%s259 + $0x3d0] sm:$0xff]
      %v428 = vld [vmem:[%s259 + $0x3d8] sm:$0xff]
      %v429 = vld [vmem:[%s259 + $0x3e0] sm:$0xff]
      %v430 = vld [vmem:[%s259 + $0x3e8] sm:$0xff]
      %v431 = vld [vmem:[%s259 + $0x3f0] sm:$0xff]
      %v432 = vld [vmem:[%s259 + $0x3f8] sm:$0xff]
      %v433 = vld [vmem:[%s259 + $0x400] sm:$0xff]
      %v434 = vld [vmem:[%s259 + $0x408] sm:$0xff]
      %v435 = vld [vmem:[%s259 + $0x410] sm:$0xff]
      %v436 = vld [vmem:[%s259 + $0x418] sm:$0xff]
      %v437 = vld [vmem:[%s259 + $0x420] sm:$0xff]
      %v438 = vld [vmem:[%s259 + $0x428] sm:$0xff]
      %v439 = vld [vmem:[%s259 + $0x430] sm:$0xff]
      %v440 = vld [vmem:[%s259 + $0x438] sm:$0xff]
      %v441 = vld [vmem:[%s259 + $0x440] sm:$0xff]
      %v442 = vld [vmem:[%s259 + $0x448] sm:$0xff]
      %v443 = vld [vmem:[%s259 + $0x450] sm:$0xff]
      %v444 = vld [vmem:[%s259 + $0x458] sm:$0xff]
      %v445 = vld [vmem:[%s259 + $0x460] sm:$0xff]
      %v446 = vld [vmem:[%s259 + $0x468] sm:$0xff]
      %v447 = vld [vmem:[%s259 + $0x470] sm:$0xff]
      %v448 = vld [vmem:[%s259 + $0x478] sm:$0xff]
      %v449 = vld [vmem:[%s259 + $0x480] sm:$0xff]
      %v450 = vld [vmem:[%s259 + $0x488] sm:$0xff]
      %v451 = vld [vmem:[%s259 + $0x490] sm:$0xff]
      %v452 = vld [vmem:[%s259 + $0x498] sm:$0xff]
      %v453 = vld [vmem:[%s259 + $0x4a0] sm:$0xff]
      %v454 = vld [vmem:[%s259 + $0x4a8] sm:$0xff]
      %v455 = vld [vmem:[%s259 + $0x4b0] sm:$0xff]
      %v456 = vld [vmem:[%s259 + $0x4b8] sm:$0xff]
      %v457 = vld [vmem:[%s259 + $0x4c0] sm:$0xff]
      %v458 = vld [vmem:[%s259 + $0x4c8] sm:$0xff]
      %v459 = vld [vmem:[%s259 + $0x4d0] sm:$0xff]
      %v460 = vld [vmem:[%s259 + $0x4d8] sm:$0xff]
      %v461 = vld [vmem:[%s259 + $0x4e0] sm:$0xff]
      %v462 = vld [vmem:[%s259 + $0x4e8] sm:$0xff]
      %v463 = vld [vmem:[%s259 + $0x4f0] sm:$0xff]
      %v464 = vld [vmem:[%s259 + $0x4f8] sm:$0xff]
      %v465 = vld [vmem:[%s259 + $0x500] sm:$0xff]
      %v466 = vld [vmem:[%s259 + $0x508] sm:$0xff]
      %v467 = vld [vmem:[%s259 + $0x510] sm:$0xff]
      %v468 = vld [vmem:[%s259 + $0x518] sm:$0xff]
      %v469 = vld [vmem:[%s259 + $0x520] sm:$0xff]
      %v470 = vld [vmem:[%s259 + $0x528] sm:$0xff]
      %v471 = vld [vmem:[%s259 + $0x530] sm:$0xff]
      %v472 = vld [vmem:[%s259 + $0x538] sm:$0xff]
      %v473 = vld [vmem:[%s259 + $0x540] sm:$0xff]
      %v474 = vld [vmem:[%s259 + $0x548] sm:$0xff]
      %v475 = vld [vmem:[%s259 + $0x550] sm:$0xff]
      %v476 = vld [vmem:[%s259 + $0x558] sm:$0xff]
      %v477 = vld [vmem:[%s259 + $0x560] sm:$0xff]
      %v478 = vld [vmem:[%s259 + $0x568] sm:$0xff]
      %v479 = vld [vmem:[%s259 + $0x570] sm:$0xff]
      %v480 = vld [vmem:[%s259 + $0x578] sm:$0xff]
      %v481 = vld [vmem:[%s259 + $0x580] sm:$0xff]
      %v482 = vld [vmem:[%s259 + $0x588] sm:$0xff]
      %v483 = vld [vmem:[%s259 + $0x590] sm:$0xff]
      %v484 = vld [vmem:[%s259 + $0x598] sm:$0xff]
      %v485 = vld [vmem:[%s259 + $0x5a0] sm:$0xff]
      %v486 = vld [vmem:[%s259 + $0x5a8] sm:$0xff]
      %v487 = vld [vmem:[%s259 + $0x5b0] sm:$0xff]
      %v488 = vld [vmem:[%s259 + $0x5b8] sm:$0xff]
      %v489 = vld [vmem:[%s259 + $0x5c0] sm:$0xff]
      %v490 = vld [vmem:[%s259 + $0x5c8] sm:$0xff]
      %v491 = vld [vmem:[%s259 + $0x5d0] sm:$0xff]
      %v492 = vld [vmem:[%s259 + $0x5d8] sm:$0xff]
      %v493 = vld [vmem:[%s259 + $0x5e0] sm:$0xff]
      %v494 = vld [vmem:[%s259 + $0x5e8] sm:$0xff]
      %v495 = vld [vmem:[%s259 + $0x5f0] sm:$0xff]
      %v496 = vld [vmem:[%s259 + $0x5f8] sm:$0xff]
      %v497 = vld [vmem:[%s259 + $0x600] sm:$0xff]
      %v498 = vld [vmem:[%s259 + $0x608] sm:$0xff]
      %v499 = vld [vmem:[%s259 + $0x610] sm:$0xff]
      %v500 = vld [vmem:[%s259 + $0x618] sm:$0xff]
      %v501 = vld [vmem:[%s259 + $0x620] sm:$0xff]
      %v502 = vld [vmem:[%s259 + $0x628] sm:$0xff]
      %v503 = vld [vmem:[%s259 + $0x630] sm:$0xff]
      %v504 = vld [vmem:[%s259 + $0x638] sm:$0xff]
      %v505 = vld [vmem:[%s259 + $0x640] sm:$0xff]
      %v506 = vld [vmem:[%s259 + $0x648] sm:$0xff]
      %v507 = vld [vmem:[%s259 + $0x650] sm:$0xff]
      %v508 = vld [vmem:[%s259 + $0x658] sm:$0xff]
      %v509 = vld [vmem:[%s259 + $0x660] sm:$0xff]
      %v510 = vld [vmem:[%s259 + $0x668] sm:$0xff]
      %v511 = vld [vmem:[%s259 + $0x670] sm:$0xff]
      %v512 = vld [vmem:[%s259 + $0x678] sm:$0xff]
      %v513 = vld [vmem:[%s259 + $0x680] sm:$0xff]
      %v514 = vld [vmem:[%s259 + $0x688] sm:$0xff]
      %v515 = vld [vmem:[%s259 + $0x690] sm:$0xff]
      %v516 = vld [vmem:[%s259 + $0x698] sm:$0xff]
      %v517 = vld [vmem:[%s259 + $0x6a0] sm:$0xff]
      %v518 = vld [vmem:[%s259 + $0x6a8] sm:$0xff]
      %v519 = vld [vmem:[%s259 + $0x6b0] sm:$0xff]
      %v520 = vld [vmem:[%s259 + $0x6b8] sm:$0xff]
      %v521 = vld [vmem:[%s259 + $0x6c0] sm:$0xff]
      %v522 = vld [vmem:[%s259 + $0x6c8] sm:$0xff]
      %v523 = vld [vmem:[%s259 + $0x6d0] sm:$0xff]
      %v524 = vld [vmem:[%s259 + $0x6d8] sm:$0xff]
      %v525 = vld [vmem:[%s259 + $0x6e0] sm:$0xff]
      %v526 = vld [vmem:[%s259 + $0x6e8] sm:$0xff]
      %v527 = vld [vmem:[%s259 + $0x6f0] sm:$0xff]
      %v528 = vld [vmem:[%s259 + $0x6f8] sm:$0xff]
      %v529 = vld [vmem:[%s259 + $0x700] sm:$0xff]
      %v530 = vld [vmem:[%s259 + $0x708] sm:$0xff]
      %v531 = vld [vmem:[%s259 + $0x710] sm:$0xff]
      %v532 = vld [vmem:[%s259 + $0x718] sm:$0xff]
      %v533 = vld [vmem:[%s259 + $0x720] sm:$0xff]
      %v534 = vld [vmem:[%s259 + $0x728] sm:$0xff]
      %v535 = vld [vmem:[%s259 + $0x730] sm:$0xff]
      %v536 = vld [vmem:[%s259 + $0x738] sm:$0xff]
      %v537 = vld [vmem:[%s259 + $0x740] sm:$0xff]
      %v538 = vld [vmem:[%s259 + $0x748] sm:$0xff]
      %v539 = vld [vmem:[%s259 + $0x750] sm:$0xff]
      %v540 = vld [vmem:[%s259 + $0x758] sm:$0xff]
      %v541 = vld [vmem:[%s259 + $0x760] sm:$0xff]
      %v542 = vld [vmem:[%s259 + $0x768] sm:$0xff]
      %v543 = vld [vmem:[%s259 + $0x770] sm:$0xff]
      %v544 = vld [vmem:[%s259 + $0x778] sm:$0xff]
      %v545 = vld [vmem:[%s259 + $0x780] sm:$0xff]
      %v546 = vld [vmem:[%s259 + $0x788] sm:$0xff]
      %v547 = vld [vmem:[%s259 + $0x790] sm:$0xff]
      %v548 = vld [vmem:[%s259 + $0x798] sm:$0xff]
      %v549 = vld [vmem:[%s259 + $0x7a0] sm:$0xff]
      %v550 = vld [vmem:[%s259 + $0x7a8] sm:$0xff]
      %v551 = vld [vmem:[%s259 + $0x7b0] sm:$0xff]
      %v552 = vld [vmem:[%s259 + $0x7b8] sm:$0xff]
      %v553 = vld [vmem:[%s259 + $0x7c0] sm:$0xff]
      %v554 = vld [vmem:[%s259 + $0x7c8] sm:$0xff]
      %v555 = vld [vmem:[%s259 + $0x7d0] sm:$0xff]
      %v556 = vld [vmem:[%s259 + $0x7d8] sm:$0xff]
      %v557 = vld [vmem:[%s259 + $0x7e0] sm:$0xff]
      %v558 = vld [vmem:[%s259 + $0x7e8] sm:$0xff]
      %v559 = vld [vmem:[%s259 + $0x7f0] sm:$0xff]
      %v560 = vld [vmem:[%s259 + $0x7f8] sm:$0xff]
      %v577 = vunpack.c.l.b16 %v289
      %v578 = vunpack.c.h.b16 %v289
      %v579 = vunpack.c.l.b16 %v290
      %v580 = vunpack.c.h.b16 %v290
      %v581 = vunpack.c.l.b16 %v291
      %v582 = vunpack.c.h.b16 %v291
      %v583 = vunpack.c.l.b16 %v292
      %v584 = vunpack.c.h.b16 %v292
      %v585 = vunpack.c.l.b16 %v293
      %v586 = vunpack.c.h.b16 %v293
      %v587 = vunpack.c.l.b16 %v294
      %v588 = vunpack.c.h.b16 %v294
      %v589 = vunpack.c.l.b16 %v295
      %v590 = vunpack.c.h.b16 %v295
      %v591 = vunpack.c.l.b16 %v296
      %v592 = vunpack.c.h.b16 %v296
      %v593 = vunpack.c.l.b16 %v297
      %v594 = vunpack.c.h.b16 %v297
      %v595 = vunpack.c.l.b16 %v298
      %v596 = vunpack.c.h.b16 %v298
      %v597 = vunpack.c.l.b16 %v299
      %v598 = vunpack.c.h.b16 %v299
      %v599 = vunpack.c.l.b16 %v300
      %v600 = vunpack.c.h.b16 %v300
      %v601 = vunpack.c.l.b16 %v301
      %v602 = vunpack.c.h.b16 %v301
      %v603 = vunpack.c.l.b16 %v302
      %v604 = vunpack.c.h.b16 %v302
      %v605 = vunpack.c.l.b16 %v303
      %v606 = vunpack.c.h.b16 %v303
      %v607 = vunpack.c.l.b16 %v304
      %v608 = vunpack.c.h.b16 %v304
      %v609 = vpack.c.b16 %v593, %v577
      %v610 = vpack.c.b16 %v594, %v578
      %v611 = vpack.c.b16 %v595, %v579
      %v612 = vpack.c.b16 %v596, %v580
      %v613 = vpack.c.b16 %v597, %v581
      %v614 = vpack.c.b16 %v598, %v582
      %v615 = vpack.c.b16 %v599, %v583
      %v616 = vpack.c.b16 %v600, %v584
      %v617 = vpack.c.b16 %v601, %v585
      %v618 = vpack.c.b16 %v602, %v586
      %v619 = vpack.c.b16 %v603, %v587
      %v620 = vpack.c.b16 %v604, %v588
      %v621 = vpack.c.b16 %v605, %v589
      %v622 = vpack.c.b16 %v606, %v590
      %v623 = vpack.c.b16 %v607, %v591
      %v624 = vpack.c.b16 %v608, %v592
      %v897 = vunpack.c.l.b16 %v305
      %v898 = vunpack.c.h.b16 %v305
      %v899 = vunpack.c.l.b16 %v306
      %v900 = vunpack.c.h.b16 %v306
      %v901 = vunpack.c.l.b16 %v307
      %v902 = vunpack.c.h.b16 %v307
      %v903 = vunpack.c.l.b16 %v308
      %v904 = vunpack.c.h.b16 %v308
      %v905 = vunpack.c.l.b16 %v309
      %v906 = vunpack.c.h.b16 %v309
      %v907 = vunpack.c.l.b16 %v310
      %v908 = vunpack.c.h.b16 %v310
      %v909 = vunpack.c.l.b16 %v311
      %v910 = vunpack.c.h.b16 %v311
      %v911 = vunpack.c.l.b16 %v312
      %v912 = vunpack.c.h.b16 %v312
      %v913 = vunpack.c.l.b16 %v313
      %v914 = vunpack.c.h.b16 %v313
      %v915 = vunpack.c.l.b16 %v314
      %v916 = vunpack.c.h.b16 %v314
      %v917 = vunpack.c.l.b16 %v315
      %v918 = vunpack.c.h.b16 %v315
      %v919 = vunpack.c.l.b16 %v316
      %v920 = vunpack.c.h.b16 %v316
      %v921 = vunpack.c.l.b16 %v317
      %v922 = vunpack.c.h.b16 %v317
      %v923 = vunpack.c.l.b16 %v318
      %v924 = vunpack.c.h.b16 %v318
      %v925 = vunpack.c.l.b16 %v319
      %v926 = vunpack.c.h.b16 %v319
      %v927 = vunpack.c.l.b16 %v320
      %v928 = vunpack.c.h.b16 %v320
      %v929 = vunpack.c.l.b16 %v321
      %v930 = vunpack.c.h.b16 %v321
      %v931 = vunpack.c.l.b16 %v322
      %v932 = vunpack.c.h.b16 %v322
      %v933 = vunpack.c.l.b16 %v323
      %v934 = vunpack.c.h.b16 %v323
      %v935 = vunpack.c.l.b16 %v324
      %v936 = vunpack.c.h.b16 %v324
      %v937 = vunpack.c.l.b16 %v325
      %v938 = vunpack.c.h.b16 %v325
      %v939 = vunpack.c.l.b16 %v326
      %v940 = vunpack.c.h.b16 %v326
      %v941 = vunpack.c.l.b16 %v327
      %v942 = vunpack.c.h.b16 %v327
      %v943 = vunpack.c.l.b16 %v328
      %v944 = vunpack.c.h.b16 %v328
      %v945 = vunpack.c.l.b16 %v329
      %v946 = vunpack.c.h.b16 %v329
      %v947 = vunpack.c.l.b16 %v330
      %v948 = vunpack.c.h.b16 %v330
      %v949 = vunpack.c.l.b16 %v331
      %v950 = vunpack.c.h.b16 %v331
      %v951 = vunpack.c.l.b16 %v332
      %v952 = vunpack.c.h.b16 %v332
      %v953 = vunpack.c.l.b16 %v333
      %v954 = vunpack.c.h.b16 %v333
      %v955 = vunpack.c.l.b16 %v334
      %v956 = vunpack.c.h.b16 %v334
      %v957 = vunpack.c.l.b16 %v335
      %v958 = vunpack.c.h.b16 %v335
      %v959 = vunpack.c.l.b16 %v336
      %v960 = vunpack.c.h.b16 %v336
      %v961 = vunpack.c.l.b16 %v337
      %v962 = vunpack.c.h.b16 %v337
      %v963 = vunpack.c.l.b16 %v338
      %v964 = vunpack.c.h.b16 %v338
      %v965 = vunpack.c.l.b16 %v339
      %v966 = vunpack.c.h.b16 %v339
      %v967 = vunpack.c.l.b16 %v340
      %v968 = vunpack.c.h.b16 %v340
      %v969 = vunpack.c.l.b16 %v341
      %v970 = vunpack.c.h.b16 %v341
      %v971 = vunpack.c.l.b16 %v342
      %v972 = vunpack.c.h.b16 %v342
      %v973 = vunpack.c.l.b16 %v343
      %v974 = vunpack.c.h.b16 %v343
      %v975 = vunpack.c.l.b16 %v344
      %v976 = vunpack.c.h.b16 %v344
      %v977 = vunpack.c.l.b16 %v345
      %v978 = vunpack.c.h.b16 %v345
      %v979 = vunpack.c.l.b16 %v346
      %v980 = vunpack.c.h.b16 %v346
      %v981 = vunpack.c.l.b16 %v347
      %v982 = vunpack.c.h.b16 %v347
      %v983 = vunpack.c.l.b16 %v348
      %v984 = vunpack.c.h.b16 %v348
      %v985 = vunpack.c.l.b16 %v349
      %v986 = vunpack.c.h.b16 %v349
      %v987 = vunpack.c.l.b16 %v350
      %v988 = vunpack.c.h.b16 %v350
      %v989 = vunpack.c.l.b16 %v351
      %v990 = vunpack.c.h.b16 %v351
      %v991 = vunpack.c.l.b16 %v352
      %v992 = vunpack.c.h.b16 %v352
      %v993 = vunpack.c.l.b16 %v353
      %v994 = vunpack.c.h.b16 %v353
      %v995 = vunpack.c.l.b16 %v354
      %v996 = vunpack.c.h.b16 %v354
      %v997 = vunpack.c.l.b16 %v355
      %v998 = vunpack.c.h.b16 %v355
      %v999 = vunpack.c.l.b16 %v356
      %v1000 = vunpack.c.h.b16 %v356
      %v1001 = vunpack.c.l.b16 %v357
      %v1002 = vunpack.c.h.b16 %v357
      %v1003 = vunpack.c.l.b16 %v358
      %v1004 = vunpack.c.h.b16 %v358
      %v1005 = vunpack.c.l.b16 %v359
      %v1006 = vunpack.c.h.b16 %v359
      %v1007 = vunpack.c.l.b16 %v360
      %v1008 = vunpack.c.h.b16 %v360
      %v1009 = vunpack.c.l.b16 %v361
      %v1010 = vunpack.c.h.b16 %v361
      %v1011 = vunpack.c.l.b16 %v362
      %v1012 = vunpack.c.h.b16 %v362
      %v1013 = vunpack.c.l.b16 %v363
      %v1014 = vunpack.c.h.b16 %v363
      %v1015 = vunpack.c.l.b16 %v364
      %v1016 = vunpack.c.h.b16 %v364
      %v1017 = vunpack.c.l.b16 %v365
      %v1018 = vunpack.c.h.b16 %v365
      %v1019 = vunpack.c.l.b16 %v366
      %v1020 = vunpack.c.h.b16 %v366
      %v1021 = vunpack.c.l.b16 %v367
      %v1022 = vunpack.c.h.b16 %v367
      %v1023 = vunpack.c.l.b16 %v368
      %v1024 = vunpack.c.h.b16 %v368
      %v1025 = vunpack.c.l.b16 %v369
      %v1026 = vunpack.c.h.b16 %v369
      %v1027 = vunpack.c.l.b16 %v370
      %v1028 = vunpack.c.h.b16 %v370
      %v1029 = vunpack.c.l.b16 %v371
      %v1030 = vunpack.c.h.b16 %v371
      %v1031 = vunpack.c.l.b16 %v372
      %v1032 = vunpack.c.h.b16 %v372
      %v1033 = vunpack.c.l.b16 %v373
      %v1034 = vunpack.c.h.b16 %v373
      %v1035 = vunpack.c.l.b16 %v374
      %v1036 = vunpack.c.h.b16 %v374
      %v1037 = vunpack.c.l.b16 %v375
      %v1038 = vunpack.c.h.b16 %v375
      %v1039 = vunpack.c.l.b16 %v376
      %v1040 = vunpack.c.h.b16 %v376
      %v1041 = vunpack.c.l.b16 %v377
      %v1042 = vunpack.c.h.b16 %v377
      %v1043 = vunpack.c.l.b16 %v378
      %v1044 = vunpack.c.h.b16 %v378
      %v1045 = vunpack.c.l.b16 %v379
      %v1046 = vunpack.c.h.b16 %v379
      %v1047 = vunpack.c.l.b16 %v380
      %v1048 = vunpack.c.h.b16 %v380
      %v1049 = vunpack.c.l.b16 %v381
      %v1050 = vunpack.c.h.b16 %v381
      %v1051 = vunpack.c.l.b16 %v382
      %v1052 = vunpack.c.h.b16 %v382
      %v1053 = vunpack.c.l.b16 %v383
      %v1054 = vunpack.c.h.b16 %v383
      %v1055 = vunpack.c.l.b16 %v384
      %v1056 = vunpack.c.h.b16 %v384
      %v1057 = vunpack.c.l.b16 %v385
      %v1058 = vunpack.c.h.b16 %v385
      %v1059 = vunpack.c.l.b16 %v386
      %v1060 = vunpack.c.h.b16 %v386
      %v1061 = vunpack.c.l.b16 %v387
      %v1062 = vunpack.c.h.b16 %v387
      %v1063 = vunpack.c.l.b16 %v388
      %v1064 = vunpack.c.h.b16 %v388
      %v1065 = vunpack.c.l.b16 %v389
      %v1066 = vunpack.c.h.b16 %v389
      %v1067 = vunpack.c.l.b16 %v390
      %v1068 = vunpack.c.h.b16 %v390
      %v1069 = vunpack.c.l.b16 %v391
      %v1070 = vunpack.c.h.b16 %v391
      %v1071 = vunpack.c.l.b16 %v392
      %v1072 = vunpack.c.h.b16 %v392
      %v1073 = vunpack.c.l.b16 %v393
      %v1074 = vunpack.c.h.b16 %v393
      %v1075 = vunpack.c.l.b16 %v394
      %v1076 = vunpack.c.h.b16 %v394
      %v1077 = vunpack.c.l.b16 %v395
      %v1078 = vunpack.c.h.b16 %v395
      %v1079 = vunpack.c.l.b16 %v396
      %v1080 = vunpack.c.h.b16 %v396
      %v1081 = vunpack.c.l.b16 %v397
      %v1082 = vunpack.c.h.b16 %v397
      %v1083 = vunpack.c.l.b16 %v398
      %v1084 = vunpack.c.h.b16 %v398
      %v1085 = vunpack.c.l.b16 %v399
      %v1086 = vunpack.c.h.b16 %v399
      %v1087 = vunpack.c.l.b16 %v400
      %v1088 = vunpack.c.h.b16 %v400
      %v1089 = vunpack.c.l.b16 %v401
      %v1090 = vunpack.c.h.b16 %v401
      %v1091 = vunpack.c.l.b16 %v402
      %v1092 = vunpack.c.h.b16 %v402
      %v1093 = vunpack.c.l.b16 %v403
      %v1094 = vunpack.c.h.b16 %v403
      %v1095 = vunpack.c.l.b16 %v404
      %v1096 = vunpack.c.h.b16 %v404
      %v1097 = vunpack.c.l.b16 %v405
      %v1098 = vunpack.c.h.b16 %v405
      %v1099 = vunpack.c.l.b16 %v406
      %v1100 = vunpack.c.h.b16 %v406
      %v1101 = vunpack.c.l.b16 %v407
      %v1102 = vunpack.c.h.b16 %v407
      %v1103 = vunpack.c.l.b16 %v408
      %v1104 = vunpack.c.h.b16 %v408
      %v1105 = vunpack.c.l.b16 %v409
      %v1106 = vunpack.c.h.b16 %v409
      %v1107 = vunpack.c.l.b16 %v410
      %v1108 = vunpack.c.h.b16 %v410
      %v1109 = vunpack.c.l.b16 %v411
      %v1110 = vunpack.c.h.b16 %v411
      %v1111 = vunpack.c.l.b16 %v412
      %v1112 = vunpack.c.h.b16 %v412
      %v1113 = vunpack.c.l.b16 %v413
      %v1114 = vunpack.c.h.b16 %v413
      %v1115 = vunpack.c.l.b16 %v414
      %v1116 = vunpack.c.h.b16 %v414
      %v1117 = vunpack.c.l.b16 %v415
      %v1118 = vunpack.c.h.b16 %v415
      %v1119 = vunpack.c.l.b16 %v416
      %v1120 = vunpack.c.h.b16 %v416
      %v1121 = vunpack.c.l.b16 %v417
      %v1122 = vunpack.c.h.b16 %v417
      %v1123 = vunpack.c.l.b16 %v418
      %v1124 = vunpack.c.h.b16 %v418
      %v1125 = vunpack.c.l.b16 %v419
      %v1126 = vunpack.c.h.b16 %v419
      %v1127 = vunpack.c.l.b16 %v420
      %v1128 = vunpack.c.h.b16 %v420
      %v1129 = vunpack.c.l.b16 %v421
      %v1130 = vunpack.c.h.b16 %v421
      %v1131 = vunpack.c.l.b16 %v422
      %v1132 = vunpack.c.h.b16 %v422
      %v1133 = vunpack.c.l.b16 %v423
      %v1134 = vunpack.c.h.b16 %v423
      %v1135 = vunpack.c.l.b16 %v424
      %v1136 = vunpack.c.h.b16 %v424
      %v1137 = vunpack.c.l.b16 %v425
      %v1138 = vunpack.c.h.b16 %v425
      %v1139 = vunpack.c.l.b16 %v426
      %v1140 = vunpack.c.h.b16 %v426
      %v1141 = vunpack.c.l.b16 %v427
      %v1142 = vunpack.c.h.b16 %v427
      %v1143 = vunpack.c.l.b16 %v428
      %v1144 = vunpack.c.h.b16 %v428
      %v1145 = vunpack.c.l.b16 %v429
      %v1146 = vunpack.c.h.b16 %v429
      %v1147 = vunpack.c.l.b16 %v430
      %v1148 = vunpack.c.h.b16 %v430
      %v1149 = vunpack.c.l.b16 %v431
      %v1150 = vunpack.c.h.b16 %v431
      %v1151 = vunpack.c.l.b16 %v432
      %v1152 = vunpack.c.h.b16 %v432
      %v1153 = vunpack.c.l.b16 %v433
      %v1154 = vunpack.c.h.b16 %v433
      %v1155 = vunpack.c.l.b16 %v434
      %v1156 = vunpack.c.h.b16 %v434
      %v1157 = vunpack.c.l.b16 %v435
      %v1158 = vunpack.c.h.b16 %v435
      %v1159 = vunpack.c.l.b16 %v436
      %v1160 = vunpack.c.h.b16 %v436
      %v1161 = vunpack.c.l.b16 %v437
      %v1162 = vunpack.c.h.b16 %v437
      %v1163 = vunpack.c.l.b16 %v438
      %v1164 = vunpack.c.h.b16 %v438
      %v1165 = vunpack.c.l.b16 %v439
      %v1166 = vunpack.c.h.b16 %v439
      %v1167 = vunpack.c.l.b16 %v440
      %v1168 = vunpack.c.h.b16 %v440
      %v1169 = vunpack.c.l.b16 %v441
      %v1170 = vunpack.c.h.b16 %v441
      %v1171 = vunpack.c.l.b16 %v442
      %v1172 = vunpack.c.h.b16 %v442
      %v1173 = vunpack.c.l.b16 %v443
      %v1174 = vunpack.c.h.b16 %v443
      %v1175 = vunpack.c.l.b16 %v444
      %v1176 = vunpack.c.h.b16 %v444
      %v1177 = vunpack.c.l.b16 %v445
      %v1178 = vunpack.c.h.b16 %v445
      %v1179 = vunpack.c.l.b16 %v446
      %v1180 = vunpack.c.h.b16 %v446
      %v1181 = vunpack.c.l.b16 %v447
      %v1182 = vunpack.c.h.b16 %v447
      %v1183 = vunpack.c.l.b16 %v448
      %v1184 = vunpack.c.h.b16 %v448
      %v1185 = vunpack.c.l.b16 %v449
      %v1186 = vunpack.c.h.b16 %v449
      %v1187 = vunpack.c.l.b16 %v450
      %v1188 = vunpack.c.h.b16 %v450
      %v1189 = vunpack.c.l.b16 %v451
      %v1190 = vunpack.c.h.b16 %v451
      %v1191 = vunpack.c.l.b16 %v452
      %v1192 = vunpack.c.h.b16 %v452
      %v1193 = vunpack.c.l.b16 %v453
      %v1194 = vunpack.c.h.b16 %v453
      %v1195 = vunpack.c.l.b16 %v454
      %v1196 = vunpack.c.h.b16 %v454
      %v1197 = vunpack.c.l.b16 %v455
      %v1198 = vunpack.c.h.b16 %v455
      %v1199 = vunpack.c.l.b16 %v456
      %v1200 = vunpack.c.h.b16 %v456
      %v1201 = vunpack.c.l.b16 %v457
      %v1202 = vunpack.c.h.b16 %v457
      %v1203 = vunpack.c.l.b16 %v458
      %v1204 = vunpack.c.h.b16 %v458
      %v1205 = vunpack.c.l.b16 %v459
      %v1206 = vunpack.c.h.b16 %v459
      %v1207 = vunpack.c.l.b16 %v460
      %v1208 = vunpack.c.h.b16 %v460
      %v1209 = vunpack.c.l.b16 %v461
      %v1210 = vunpack.c.h.b16 %v461
      %v1211 = vunpack.c.l.b16 %v462
      %v1212 = vunpack.c.h.b16 %v462
      %v1213 = vunpack.c.l.b16 %v463
      %v1214 = vunpack.c.h.b16 %v463
      %v1215 = vunpack.c.l.b16 %v464
      %v1216 = vunpack.c.h.b16 %v464
      %v1217 = vunpack.c.l.b16 %v465
      %v1218 = vunpack.c.h.b16 %v465
      %v1219 = vunpack.c.l.b16 %v466
      %v1220 = vunpack.c.h.b16 %v466
      %v1221 = vunpack.c.l.b16 %v467
      %v1222 = vunpack.c.h.b16 %v467
      %v1223 = vunpack.c.l.b16 %v468
      %v1224 = vunpack.c.h.b16 %v468
      %v1225 = vunpack.c.l.b16 %v469
      %v1226 = vunpack.c.h.b16 %v469
      %v1227 = vunpack.c.l.b16 %v470
      %v1228 = vunpack.c.h.b16 %v470
      %v1229 = vunpack.c.l.b16 %v471
      %v1230 = vunpack.c.h.b16 %v471
      %v1231 = vunpack.c.l.b16 %v472
      %v1232 = vunpack.c.h.b16 %v472
      %v1233 = vunpack.c.l.b16 %v473
      %v1234 = vunpack.c.h.b16 %v473
      %v1235 = vunpack.c.l.b16 %v474
      %v1236 = vunpack.c.h.b16 %v474
      %v1237 = vunpack.c.l.b16 %v475
      %v1238 = vunpack.c.h.b16 %v475
      %v1239 = vunpack.c.l.b16 %v476
      %v1240 = vunpack.c.h.b16 %v476
      %v1241 = vunpack.c.l.b16 %v477
      %v1242 = vunpack.c.h.b16 %v477
      %v1243 = vunpack.c.l.b16 %v478
      %v1244 = vunpack.c.h.b16 %v478
      %v1245 = vunpack.c.l.b16 %v479
      %v1246 = vunpack.c.h.b16 %v479
      %v1247 = vunpack.c.l.b16 %v480
      %v1248 = vunpack.c.h.b16 %v480
      %v1249 = vunpack.c.l.b16 %v481
      %v1250 = vunpack.c.h.b16 %v481
      %v1251 = vunpack.c.l.b16 %v482
      %v1252 = vunpack.c.h.b16 %v482
      %v1253 = vunpack.c.l.b16 %v483
      %v1254 = vunpack.c.h.b16 %v483
      %v1255 = vunpack.c.l.b16 %v484
      %v1256 = vunpack.c.h.b16 %v484
      %v1257 = vunpack.c.l.b16 %v485
      %v1258 = vunpack.c.h.b16 %v485
      %v1259 = vunpack.c.l.b16 %v486
      %v1260 = vunpack.c.h.b16 %v486
      %v1261 = vunpack.c.l.b16 %v487
      %v1262 = vunpack.c.h.b16 %v487
      %v1263 = vunpack.c.l.b16 %v488
      %v1264 = vunpack.c.h.b16 %v488
      %v1265 = vunpack.c.l.b16 %v489
      %v1266 = vunpack.c.h.b16 %v489
      %v1267 = vunpack.c.l.b16 %v490
      %v1268 = vunpack.c.h.b16 %v490
      %v1269 = vunpack.c.l.b16 %v491
      %v1270 = vunpack.c.h.b16 %v491
      %v1271 = vunpack.c.l.b16 %v492
      %v1272 = vunpack.c.h.b16 %v492
      %v1273 = vunpack.c.l.b16 %v493
      %v1274 = vunpack.c.h.b16 %v493
      %v1275 = vunpack.c.l.b16 %v494
      %v1276 = vunpack.c.h.b16 %v494
      %v1277 = vunpack.c.l.b16 %v495
      %v1278 = vunpack.c.h.b16 %v495
      %v1279 = vunpack.c.l.b16 %v496
      %v1280 = vunpack.c.h.b16 %v496
      %v1281 = vunpack.c.l.b16 %v497
      %v1282 = vunpack.c.h.b16 %v497
      %v1283 = vunpack.c.l.b16 %v498
      %v1284 = vunpack.c.h.b16 %v498
      %v1285 = vunpack.c.l.b16 %v499
      %v1286 = vunpack.c.h.b16 %v499
      %v1287 = vunpack.c.l.b16 %v500
      %v1288 = vunpack.c.h.b16 %v500
      %v1289 = vunpack.c.l.b16 %v501
      %v1290 = vunpack.c.h.b16 %v501
      %v1291 = vunpack.c.l.b16 %v502
      %v1292 = vunpack.c.h.b16 %v502
      %v1293 = vunpack.c.l.b16 %v503
      %v1294 = vunpack.c.h.b16 %v503
      %v1295 = vunpack.c.l.b16 %v504
      %v1296 = vunpack.c.h.b16 %v504
      %v1297 = vunpack.c.l.b16 %v505
      %v1298 = vunpack.c.h.b16 %v505
      %v1299 = vunpack.c.l.b16 %v506
      %v1300 = vunpack.c.h.b16 %v506
      %v1301 = vunpack.c.l.b16 %v507
      %v1302 = vunpack.c.h.b16 %v507
      %v1303 = vunpack.c.l.b16 %v508
      %v1304 = vunpack.c.h.b16 %v508
      %v1305 = vunpack.c.l.b16 %v509
      %v1306 = vunpack.c.h.b16 %v509
      %v1307 = vunpack.c.l.b16 %v510
      %v1308 = vunpack.c.h.b16 %v510
      %v1309 = vunpack.c.l.b16 %v511
      %v1310 = vunpack.c.h.b16 %v511
      %v1311 = vunpack.c.l.b16 %v512
      %v1312 = vunpack.c.h.b16 %v512
      %v1313 = vunpack.c.l.b16 %v513
      %v1314 = vunpack.c.h.b16 %v513
      %v1315 = vunpack.c.l.b16 %v514
      %v1316 = vunpack.c.h.b16 %v514
      %v1317 = vunpack.c.l.b16 %v515
      %v1318 = vunpack.c.h.b16 %v515
      %v1319 = vunpack.c.l.b16 %v516
      %v1320 = vunpack.c.h.b16 %v516
      %v1321 = vunpack.c.l.b16 %v517
      %v1322 = vunpack.c.h.b16 %v517
      %v1323 = vunpack.c.l.b16 %v518
      %v1324 = vunpack.c.h.b16 %v518
      %v1325 = vunpack.c.l.b16 %v519
      %v1326 = vunpack.c.h.b16 %v519
      %v1327 = vunpack.c.l.b16 %v520
      %v1328 = vunpack.c.h.b16 %v520
      %v1329 = vunpack.c.l.b16 %v521
      %v1330 = vunpack.c.h.b16 %v521
      %v1331 = vunpack.c.l.b16 %v522
      %v1332 = vunpack.c.h.b16 %v522
      %v1333 = vunpack.c.l.b16 %v523
      %v1334 = vunpack.c.h.b16 %v523
      %v1335 = vunpack.c.l.b16 %v524
      %v1336 = vunpack.c.h.b16 %v524
      %v1337 = vunpack.c.l.b16 %v525
      %v1338 = vunpack.c.h.b16 %v525
      %v1339 = vunpack.c.l.b16 %v526
      %v1340 = vunpack.c.h.b16 %v526
      %v1341 = vunpack.c.l.b16 %v527
      %v1342 = vunpack.c.h.b16 %v527
      %v1343 = vunpack.c.l.b16 %v528
      %v1344 = vunpack.c.h.b16 %v528
      %v1345 = vunpack.c.l.b16 %v529
      %v1346 = vunpack.c.h.b16 %v529
      %v1347 = vunpack.c.l.b16 %v530
      %v1348 = vunpack.c.h.b16 %v530
      %v1349 = vunpack.c.l.b16 %v531
      %v1350 = vunpack.c.h.b16 %v531
      %v1351 = vunpack.c.l.b16 %v532
      %v1352 = vunpack.c.h.b16 %v532
      %v1353 = vunpack.c.l.b16 %v533
      %v1354 = vunpack.c.h.b16 %v533
      %v1355 = vunpack.c.l.b16 %v534
      %v1356 = vunpack.c.h.b16 %v534
      %v1357 = vunpack.c.l.b16 %v535
      %v1358 = vunpack.c.h.b16 %v535
      %v1359 = vunpack.c.l.b16 %v536
      %v1360 = vunpack.c.h.b16 %v536
      %v1361 = vunpack.c.l.b16 %v537
      %v1362 = vunpack.c.h.b16 %v537
      %v1363 = vunpack.c.l.b16 %v538
      %v1364 = vunpack.c.h.b16 %v538
      %v1365 = vunpack.c.l.b16 %v539
      %v1366 = vunpack.c.h.b16 %v539
      %v1367 = vunpack.c.l.b16 %v540
      %v1368 = vunpack.c.h.b16 %v540
      %v1369 = vunpack.c.l.b16 %v541
      %v1370 = vunpack.c.h.b16 %v541
      %v1371 = vunpack.c.l.b16 %v542
      %v1372 = vunpack.c.h.b16 %v542
      %v1373 = vunpack.c.l.b16 %v543
      %v1374 = vunpack.c.h.b16 %v543
      %v1375 = vunpack.c.l.b16 %v544
      %v1376 = vunpack.c.h.b16 %v544
      %v1377 = vunpack.c.l.b16 %v545
      %v1378 = vunpack.c.h.b16 %v545
      %v1379 = vunpack.c.l.b16 %v546
      %v1380 = vunpack.c.h.b16 %v546
      %v1381 = vunpack.c.l.b16 %v547
      %v1382 = vunpack.c.h.b16 %v547
      %v1383 = vunpack.c.l.b16 %v548
      %v1384 = vunpack.c.h.b16 %v548
      %v1385 = vunpack.c.l.b16 %v549
      %v1386 = vunpack.c.h.b16 %v549
      %v1387 = vunpack.c.l.b16 %v550
      %v1388 = vunpack.c.h.b16 %v550
      %v1389 = vunpack.c.l.b16 %v551
      %v1390 = vunpack.c.h.b16 %v551
      %v1391 = vunpack.c.l.b16 %v552
      %v1392 = vunpack.c.h.b16 %v552
      %v1393 = vunpack.c.l.b16 %v553
      %v1394 = vunpack.c.h.b16 %v553
      %v1395 = vunpack.c.l.b16 %v554
      %v1396 = vunpack.c.h.b16 %v554
      %v1397 = vunpack.c.l.b16 %v555
      %v1398 = vunpack.c.h.b16 %v555
      %v1399 = vunpack.c.l.b16 %v556
      %v1400 = vunpack.c.h.b16 %v556
      %v1401 = vunpack.c.l.b16 %v557
      %v1402 = vunpack.c.h.b16 %v557
      %v1403 = vunpack.c.l.b16 %v558
      %v1404 = vunpack.c.h.b16 %v558
      %v1405 = vunpack.c.l.b16 %v559
      %v1406 = vunpack.c.h.b16 %v559
      %v1407 = vunpack.c.l.b16 %v560
      %v1408 = vunpack.c.h.b16 %v560
      %v1409 = vpack.c.b16 %v899, %v897
      %v1410 = vpack.c.b16 %v900, %v898
      %v1411 = vpack.c.b16 %v903, %v901
      %v1412 = vpack.c.b16 %v904, %v902
      %v1413 = vpack.c.b16 %v907, %v905
      %v1414 = vpack.c.b16 %v908, %v906
      %v1415 = vpack.c.b16 %v911, %v909
      %v1416 = vpack.c.b16 %v912, %v910
      %v1417 = vpack.c.b16 %v915, %v913
      %v1418 = vpack.c.b16 %v916, %v914
      %v1419 = vpack.c.b16 %v919, %v917
      %v1420 = vpack.c.b16 %v920, %v918
      %v1421 = vpack.c.b16 %v923, %v921
      %v1422 = vpack.c.b16 %v924, %v922
      %v1423 = vpack.c.b16 %v927, %v925
      %v1424 = vpack.c.b16 %v928, %v926
      %v1425 = vpack.c.b16 %v931, %v929
      %v1426 = vpack.c.b16 %v932, %v930
      %v1427 = vpack.c.b16 %v935, %v933
      %v1428 = vpack.c.b16 %v936, %v934
      %v1429 = vpack.c.b16 %v939, %v937
      %v1430 = vpack.c.b16 %v940, %v938
      %v1431 = vpack.c.b16 %v943, %v941
      %v1432 = vpack.c.b16 %v944, %v942
      %v1433 = vpack.c.b16 %v947, %v945
      %v1434 = vpack.c.b16 %v948, %v946
      %v1435 = vpack.c.b16 %v951, %v949
      %v1436 = vpack.c.b16 %v952, %v950
      %v1437 = vpack.c.b16 %v955, %v953
      %v1438 = vpack.c.b16 %v956, %v954
      %v1439 = vpack.c.b16 %v959, %v957
      %v1440 = vpack.c.b16 %v960, %v958
      %v1441 = vpack.c.b16 %v963, %v961
      %v1442 = vpack.c.b16 %v964, %v962
      %v1443 = vpack.c.b16 %v967, %v965
      %v1444 = vpack.c.b16 %v968, %v966
      %v1445 = vpack.c.b16 %v971, %v969
      %v1446 = vpack.c.b16 %v972, %v970
      %v1447 = vpack.c.b16 %v975, %v973
      %v1448 = vpack.c.b16 %v976, %v974
      %v1449 = vpack.c.b16 %v979, %v977
      %v1450 = vpack.c.b16 %v980, %v978
      %v1451 = vpack.c.b16 %v983, %v981
      %v1452 = vpack.c.b16 %v984, %v982
      %v1453 = vpack.c.b16 %v987, %v985
      %v1454 = vpack.c.b16 %v988, %v986
      %v1455 = vpack.c.b16 %v991, %v989
      %v1456 = vpack.c.b16 %v992, %v990
      %v1457 = vpack.c.b16 %v995, %v993
      %v1458 = vpack.c.b16 %v996, %v994
      %v1459 = vpack.c.b16 %v999, %v997
      %v1460 = vpack.c.b16 %v1000, %v998
      %v1461 = vpack.c.b16 %v1003, %v1001
      %v1462 = vpack.c.b16 %v1004, %v1002
      %v1463 = vpack.c.b16 %v1007, %v1005
      %v1464 = vpack.c.b16 %v1008, %v1006
      %v1465 = vpack.c.b16 %v1011, %v1009
      %v1466 = vpack.c.b16 %v1012, %v1010
      %v1467 = vpack.c.b16 %v1015, %v1013
      %v1468 = vpack.c.b16 %v1016, %v1014
      %v1469 = vpack.c.b16 %v1019, %v1017
      %v1470 = vpack.c.b16 %v1020, %v1018
      %v1471 = vpack.c.b16 %v1023, %v1021
      %v1472 = vpack.c.b16 %v1024, %v1022
      %v1473 = vpack.c.b16 %v1027, %v1025
      %v1474 = vpack.c.b16 %v1028, %v1026
      %v1475 = vpack.c.b16 %v1031, %v1029
      %v1476 = vpack.c.b16 %v1032, %v1030
      %v1477 = vpack.c.b16 %v1035, %v1033
      %v1478 = vpack.c.b16 %v1036, %v1034
      %v1479 = vpack.c.b16 %v1039, %v1037
      %v1480 = vpack.c.b16 %v1040, %v1038
      %v1481 = vpack.c.b16 %v1043, %v1041
      %v1482 = vpack.c.b16 %v1044, %v1042
      %v1483 = vpack.c.b16 %v1047, %v1045
      %v1484 = vpack.c.b16 %v1048, %v1046
      %v1485 = vpack.c.b16 %v1051, %v1049
      %v1486 = vpack.c.b16 %v1052, %v1050
      %v1487 = vpack.c.b16 %v1055, %v1053
      %v1488 = vpack.c.b16 %v1056, %v1054
      %v1489 = vpack.c.b16 %v1059, %v1057
      %v1490 = vpack.c.b16 %v1060, %v1058
      %v1491 = vpack.c.b16 %v1063, %v1061
      %v1492 = vpack.c.b16 %v1064, %v1062
      %v1493 = vpack.c.b16 %v1067, %v1065
      %v1494 = vpack.c.b16 %v1068, %v1066
      %v1495 = vpack.c.b16 %v1071, %v1069
      %v1496 = vpack.c.b16 %v1072, %v1070
      %v1497 = vpack.c.b16 %v1075, %v1073
      %v1498 = vpack.c.b16 %v1076, %v1074
      %v1499 = vpack.c.b16 %v1079, %v1077
      %v1500 = vpack.c.b16 %v1080, %v1078
      %v1501 = vpack.c.b16 %v1083, %v1081
      %v1502 = vpack.c.b16 %v1084, %v1082
      %v1503 = vpack.c.b16 %v1087, %v1085
      %v1504 = vpack.c.b16 %v1088, %v1086
      %v1505 = vpack.c.b16 %v1091, %v1089
      %v1506 = vpack.c.b16 %v1092, %v1090
      %v1507 = vpack.c.b16 %v1095, %v1093
      %v1508 = vpack.c.b16 %v1096, %v1094
      %v1509 = vpack.c.b16 %v1099, %v1097
      %v1510 = vpack.c.b16 %v1100, %v1098
      %v1511 = vpack.c.b16 %v1103, %v1101
      %v1512 = vpack.c.b16 %v1104, %v1102
      %v1513 = vpack.c.b16 %v1107, %v1105
      %v1514 = vpack.c.b16 %v1108, %v1106
      %v1515 = vpack.c.b16 %v1111, %v1109
      %v1516 = vpack.c.b16 %v1112, %v1110
      %v1517 = vpack.c.b16 %v1115, %v1113
      %v1518 = vpack.c.b16 %v1116, %v1114
      %v1519 = vpack.c.b16 %v1119, %v1117
      %v1520 = vpack.c.b16 %v1120, %v1118
      %v1521 = vpack.c.b16 %v1123, %v1121
      %v1522 = vpack.c.b16 %v1124, %v1122
      %v1523 = vpack.c.b16 %v1127, %v1125
      %v1524 = vpack.c.b16 %v1128, %v1126
      %v1525 = vpack.c.b16 %v1131, %v1129
      %v1526 = vpack.c.b16 %v1132, %v1130
      %v1527 = vpack.c.b16 %v1135, %v1133
      %v1528 = vpack.c.b16 %v1136, %v1134
      %v1529 = vpack.c.b16 %v1139, %v1137
      %v1530 = vpack.c.b16 %v1140, %v1138
      %v1531 = vpack.c.b16 %v1143, %v1141
      %v1532 = vpack.c.b16 %v1144, %v1142
      %v1533 = vpack.c.b16 %v1147, %v1145
      %v1534 = vpack.c.b16 %v1148, %v1146
      %v1535 = vpack.c.b16 %v1151, %v1149
      %v1536 = vpack.c.b16 %v1152, %v1150
      %v1537 = vpack.c.b16 %v1155, %v1153
      %v1538 = vpack.c.b16 %v1156, %v1154
      %v1539 = vpack.c.b16 %v1159, %v1157
      %v1540 = vpack.c.b16 %v1160, %v1158
      %v1541 = vpack.c.b16 %v1163, %v1161
      %v1542 = vpack.c.b16 %v1164, %v1162
      %v1543 = vpack.c.b16 %v1167, %v1165
      %v1544 = vpack.c.b16 %v1168, %v1166
      %v1545 = vpack.c.b16 %v1171, %v1169
      %v1546 = vpack.c.b16 %v1172, %v1170
      %v1547 = vpack.c.b16 %v1175, %v1173
      %v1548 = vpack.c.b16 %v1176, %v1174
      %v1549 = vpack.c.b16 %v1179, %v1177
      %v1550 = vpack.c.b16 %v1180, %v1178
      %v1551 = vpack.c.b16 %v1183, %v1181
      %v1552 = vpack.c.b16 %v1184, %v1182
      %v1553 = vpack.c.b16 %v1187, %v1185
      %v1554 = vpack.c.b16 %v1188, %v1186
      %v1555 = vpack.c.b16 %v1191, %v1189
      %v1556 = vpack.c.b16 %v1192, %v1190
      %v1557 = vpack.c.b16 %v1195, %v1193
      %v1558 = vpack.c.b16 %v1196, %v1194
      %v1559 = vpack.c.b16 %v1199, %v1197
      %v1560 = vpack.c.b16 %v1200, %v1198
      %v1561 = vpack.c.b16 %v1203, %v1201
      %v1562 = vpack.c.b16 %v1204, %v1202
      %v1563 = vpack.c.b16 %v1207, %v1205
      %v1564 = vpack.c.b16 %v1208, %v1206
      %v1565 = vpack.c.b16 %v1211, %v1209
      %v1566 = vpack.c.b16 %v1212, %v1210
      %v1567 = vpack.c.b16 %v1215, %v1213
      %v1568 = vpack.c.b16 %v1216, %v1214
      %v1569 = vpack.c.b16 %v1219, %v1217
      %v1570 = vpack.c.b16 %v1220, %v1218
      %v1571 = vpack.c.b16 %v1223, %v1221
      %v1572 = vpack.c.b16 %v1224, %v1222
      %v1573 = vpack.c.b16 %v1227, %v1225
      %v1574 = vpack.c.b16 %v1228, %v1226
      %v1575 = vpack.c.b16 %v1231, %v1229
      %v1576 = vpack.c.b16 %v1232, %v1230
      %v1577 = vpack.c.b16 %v1235, %v1233
      %v1578 = vpack.c.b16 %v1236, %v1234
      %v1579 = vpack.c.b16 %v1239, %v1237
      %v1580 = vpack.c.b16 %v1240, %v1238
      %v1581 = vpack.c.b16 %v1243, %v1241
      %v1582 = vpack.c.b16 %v1244, %v1242
      %v1583 = vpack.c.b16 %v1247, %v1245
      %v1584 = vpack.c.b16 %v1248, %v1246
      %v1585 = vpack.c.b16 %v1251, %v1249
      %v1586 = vpack.c.b16 %v1252, %v1250
      %v1587 = vpack.c.b16 %v1255, %v1253
      %v1588 = vpack.c.b16 %v1256, %v1254
      %v1589 = vpack.c.b16 %v1259, %v1257
      %v1590 = vpack.c.b16 %v1260, %v1258
      %v1591 = vpack.c.b16 %v1263, %v1261
      %v1592 = vpack.c.b16 %v1264, %v1262
      %v1593 = vpack.c.b16 %v1267, %v1265
      %v1594 = vpack.c.b16 %v1268, %v1266
      %v1595 = vpack.c.b16 %v1271, %v1269
      %v1596 = vpack.c.b16 %v1272, %v1270
      %v1597 = vpack.c.b16 %v1275, %v1273
      %v1598 = vpack.c.b16 %v1276, %v1274
      %v1599 = vpack.c.b16 %v1279, %v1277
      %v1600 = vpack.c.b16 %v1280, %v1278
      %v1601 = vpack.c.b16 %v1283, %v1281
      %v1602 = vpack.c.b16 %v1284, %v1282
      %v1603 = vpack.c.b16 %v1287, %v1285
      %v1604 = vpack.c.b16 %v1288, %v1286
      %v1605 = vpack.c.b16 %v1291, %v1289
      %v1606 = vpack.c.b16 %v1292, %v1290
      %v1607 = vpack.c.b16 %v1295, %v1293
      %v1608 = vpack.c.b16 %v1296, %v1294
      %v1609 = vpack.c.b16 %v1299, %v1297
      %v1610 = vpack.c.b16 %v1300, %v1298
      %v1611 = vpack.c.b16 %v1303, %v1301
      %v1612 = vpack.c.b16 %v1304, %v1302
      %v1613 = vpack.c.b16 %v1307, %v1305
      %v1614 = vpack.c.b16 %v1308, %v1306
      %v1615 = vpack.c.b16 %v1311, %v1309
      %v1616 = vpack.c.b16 %v1312, %v1310
      %v1617 = vpack.c.b16 %v1315, %v1313
      %v1618 = vpack.c.b16 %v1316, %v1314
      %v1619 = vpack.c.b16 %v1319, %v1317
      %v1620 = vpack.c.b16 %v1320, %v1318
      %v1621 = vpack.c.b16 %v1323, %v1321
      %v1622 = vpack.c.b16 %v1324, %v1322
      %v1623 = vpack.c.b16 %v1327, %v1325
      %v1624 = vpack.c.b16 %v1328, %v1326
      %v1625 = vpack.c.b16 %v1331, %v1329
      %v1626 = vpack.c.b16 %v1332, %v1330
      %v1627 = vpack.c.b16 %v1335, %v1333
      %v1628 = vpack.c.b16 %v1336, %v1334
      %v1629 = vpack.c.b16 %v1339, %v1337
      %v1630 = vpack.c.b16 %v1340, %v1338
      %v1631 = vpack.c.b16 %v1343, %v1341
      %v1632 = vpack.c.b16 %v1344, %v1342
      %v1633 = vpack.c.b16 %v1347, %v1345
      %v1634 = vpack.c.b16 %v1348, %v1346
      %v1635 = vpack.c.b16 %v1351, %v1349
      %v1636 = vpack.c.b16 %v1352, %v1350
      %v1637 = vpack.c.b16 %v1355, %v1353
      %v1638 = vpack.c.b16 %v1356, %v1354
      %v1639 = vpack.c.b16 %v1359, %v1357
      %v1640 = vpack.c.b16 %v1360, %v1358
      %v1641 = vpack.c.b16 %v1363, %v1361
      %v1642 = vpack.c.b16 %v1364, %v1362
      %v1643 = vpack.c.b16 %v1367, %v1365
      %v1644 = vpack.c.b16 %v1368, %v1366
      %v1645 = vpack.c.b16 %v1371, %v1369
      %v1646 = vpack.c.b16 %v1372, %v1370
      %v1647 = vpack.c.b16 %v1375, %v1373
      %v1648 = vpack.c.b16 %v1376, %v1374
      %v1649 = vpack.c.b16 %v1379, %v1377
      %v1650 = vpack.c.b16 %v1380, %v1378
      %v1651 = vpack.c.b16 %v1383, %v1381
      %v1652 = vpack.c.b16 %v1384, %v1382
      %v1653 = vpack.c.b16 %v1387, %v1385
      %v1654 = vpack.c.b16 %v1388, %v1386
      %v1655 = vpack.c.b16 %v1391, %v1389
      %v1656 = vpack.c.b16 %v1392, %v1390
      %v1657 = vpack.c.b16 %v1395, %v1393
      %v1658 = vpack.c.b16 %v1396, %v1394
      %v1659 = vpack.c.b16 %v1399, %v1397
      %v1660 = vpack.c.b16 %v1400, %v1398
      %v1661 = vpack.c.b16 %v1403, %v1401
      %v1662 = vpack.c.b16 %v1404, %v1402
      %v1663 = vpack.c.b16 %v1407, %v1405
      %v1664 = vpack.c.b16 %v1408, %v1406
      %1921 = vmatpush.bf16.msra.mxu0 %v1423
      %1922 = vmatpush.bf16.msra.mxu0 %v1421
      %1923 = vmatpush.bf16.msra.mxu0 %v1419
      %1924 = vmatpush.bf16.msra.mxu0 %v1417
      %1925 = vmatpush.bf16.msra.mxu0 %v1415
      %1926 = vmatpush.bf16.msra.mxu0 %v1413
      %1927 = vmatpush.bf16.msra.mxu0 %v1411
      %1928 = vmatpush.bf16.msra.mxu0 %v1409
      %1929 = vmatmul.bf16.gmra.mxu0 %v609
      %v1930 = vpop.f32.mrf.mxu0
      %v1931 = vadd.f32 0.0, %v1930
      %v1932 = vpop.f32.mrf.mxu0
      %v1933 = vadd.f32 0.0, %v1932
      %1934 = vdwg.mxu0
      %1935 = vmatpush.bf16.msra.mxu0 %v1439
      %1936 = vmatpush.bf16.msra.mxu0 %v1437
      %1937 = vmatpush.bf16.msra.mxu0 %v1435
      %1938 = vmatpush.bf16.msra.mxu0 %v1433
      %1939 = vmatpush.bf16.msra.mxu0 %v1431
      %1940 = vmatpush.bf16.msra.mxu0 %v1429
      %1941 = vmatpush.bf16.msra.mxu0 %v1427
      %1942 = vmatpush.bf16.msra.mxu0 %v1425
      %1943 = vmatmul.bf16.gmra.mxu0 %v610
      %v1944 = vpop.f32.mrf.mxu0
      %v1945 = vadd.f32 %v1931, %v1944
      %v1946 = vpop.f32.mrf.mxu0
      %v1947 = vadd.f32 %v1933, %v1946
      %1948 = vdwg.mxu0
      %1949 = vmatpush.bf16.msra.mxu0 %v1455
      %1950 = vmatpush.bf16.msra.mxu0 %v1453
      %1951 = vmatpush.bf16.msra.mxu0 %v1451
      %1952 = vmatpush.bf16.msra.mxu0 %v1449
      %1953 = vmatpush.bf16.msra.mxu0 %v1447
      %1954 = vmatpush.bf16.msra.mxu0 %v1445
      %1955 = vmatpush.bf16.msra.mxu0 %v1443
      %1956 = vmatpush.bf16.msra.mxu0 %v1441
      %1957 = vmatmul.bf16.gmra.mxu0 %v611
      %v1958 = vpop.f32.mrf.mxu0
      %v1959 = vadd.f32 %v1945, %v1958
      %v1960 = vpop.f32.mrf.mxu0
      %v1961 = vadd.f32 %v1947, %v1960
      %1962 = vdwg.mxu0
      %1963 = vmatpush.bf16.msra.mxu0 %v1471
      %1964 = vmatpush.bf16.msra.mxu0 %v1469
      %1965 = vmatpush.bf16.msra.mxu0 %v1467
      %1966 = vmatpush.bf16.msra.mxu0 %v1465
      %1967 = vmatpush.bf16.msra.mxu0 %v1463
      %1968 = vmatpush.bf16.msra.mxu0 %v1461
      %1969 = vmatpush.bf16.msra.mxu0 %v1459
      %1970 = vmatpush.bf16.msra.mxu0 %v1457
      %1971 = vmatmul.bf16.gmra.mxu0 %v612
      %v1972 = vpop.f32.mrf.mxu0
      %v1973 = vadd.f32 %v1959, %v1972
      %v1974 = vpop.f32.mrf.mxu0
      %v1975 = vadd.f32 %v1961, %v1974
      %1976 = vdwg.mxu0
      %1977 = vmatpush.bf16.msra.mxu0 %v1487
      %1978 = vmatpush.bf16.msra.mxu0 %v1485
      %1979 = vmatpush.bf16.msra.mxu0 %v1483
      %1980 = vmatpush.bf16.msra.mxu0 %v1481
      %1981 = vmatpush.bf16.msra.mxu0 %v1479
      %1982 = vmatpush.bf16.msra.mxu0 %v1477
      %1983 = vmatpush.bf16.msra.mxu0 %v1475
      %1984 = vmatpush.bf16.msra.mxu0 %v1473
      %1985 = vmatmul.bf16.gmra.mxu0 %v613
      %v1986 = vpop.f32.mrf.mxu0
      %v1987 = vadd.f32 %v1973, %v1986
      %v1988 = vpop.f32.mrf.mxu0
      %v1989 = vadd.f32 %v1975, %v1988
      %1990 = vdwg.mxu0
      %1991 = vmatpush.bf16.msra.mxu0 %v1503
      %1992 = vmatpush.bf16.msra.mxu0 %v1501
      %1993 = vmatpush.bf16.msra.mxu0 %v1499
      %1994 = vmatpush.bf16.msra.mxu0 %v1497
      %1995 = vmatpush.bf16.msra.mxu0 %v1495
      %1996 = vmatpush.bf16.msra.mxu0 %v1493
      %1997 = vmatpush.bf16.msra.mxu0 %v1491
      %1998 = vmatpush.bf16.msra.mxu0 %v1489
      %1999 = vmatmul.bf16.gmra.mxu0 %v614
      %v2000 = vpop.f32.mrf.mxu0
      %v2001 = vadd.f32 %v1987, %v2000
      %v2002 = vpop.f32.mrf.mxu0
      %v2003 = vadd.f32 %v1989, %v2002
      %2004 = vdwg.mxu0
      %2005 = vmatpush.bf16.msra.mxu0 %v1519
      %2006 = vmatpush.bf16.msra.mxu0 %v1517
      %2007 = vmatpush.bf16.msra.mxu0 %v1515
      %2008 = vmatpush.bf16.msra.mxu0 %v1513
      %2009 = vmatpush.bf16.msra.mxu0 %v1511
      %2010 = vmatpush.bf16.msra.mxu0 %v1509
      %2011 = vmatpush.bf16.msra.mxu0 %v1507
      %2012 = vmatpush.bf16.msra.mxu0 %v1505
      %2013 = vmatmul.bf16.gmra.mxu0 %v615
      %v2014 = vpop.f32.mrf.mxu0
      %v2015 = vadd.f32 %v2001, %v2014
      %v2016 = vpop.f32.mrf.mxu0
      %v2017 = vadd.f32 %v2003, %v2016
      %2018 = vdwg.mxu0
      %2019 = vmatpush.bf16.msra.mxu0 %v1535
      %2020 = vmatpush.bf16.msra.mxu0 %v1533
      %2021 = vmatpush.bf16.msra.mxu0 %v1531
      %2022 = vmatpush.bf16.msra.mxu0 %v1529
      %2023 = vmatpush.bf16.msra.mxu0 %v1527
      %2024 = vmatpush.bf16.msra.mxu0 %v1525
      %2025 = vmatpush.bf16.msra.mxu0 %v1523
      %2026 = vmatpush.bf16.msra.mxu0 %v1521
      %2027 = vmatmul.bf16.gmra.mxu0 %v616
      %v2028 = vpop.f32.mrf.mxu0
      %v2029 = vadd.f32 %v2015, %v2028
      %v2030 = vpop.f32.mrf.mxu0
      %v2031 = vadd.f32 %v2017, %v2030
      %2032 = vdwg.mxu0
      %2033 = vmatpush.bf16.msra.mxu0 %v1551
      %2034 = vmatpush.bf16.msra.mxu0 %v1549
      %2035 = vmatpush.bf16.msra.mxu0 %v1547
      %2036 = vmatpush.bf16.msra.mxu0 %v1545
      %2037 = vmatpush.bf16.msra.mxu0 %v1543
      %2038 = vmatpush.bf16.msra.mxu0 %v1541
      %2039 = vmatpush.bf16.msra.mxu0 %v1539
      %2040 = vmatpush.bf16.msra.mxu0 %v1537
      %2041 = vmatmul.bf16.gmra.mxu0 %v617
      %v2042 = vpop.f32.mrf.mxu0
      %v2043 = vadd.f32 %v2029, %v2042
      %v2044 = vpop.f32.mrf.mxu0
      %v2045 = vadd.f32 %v2031, %v2044
      %2046 = vdwg.mxu0
      %2047 = vmatpush.bf16.msra.mxu0 %v1567
      %2048 = vmatpush.bf16.msra.mxu0 %v1565
      %2049 = vmatpush.bf16.msra.mxu0 %v1563
      %2050 = vmatpush.bf16.msra.mxu0 %v1561
      %2051 = vmatpush.bf16.msra.mxu0 %v1559
      %2052 = vmatpush.bf16.msra.mxu0 %v1557
      %2053 = vmatpush.bf16.msra.mxu0 %v1555
      %2054 = vmatpush.bf16.msra.mxu0 %v1553
      %2055 = vmatmul.bf16.gmra.mxu0 %v618
      %v2056 = vpop.f32.mrf.mxu0
      %v2057 = vadd.f32 %v2043, %v2056
      %v2058 = vpop.f32.mrf.mxu0
      %v2059 = vadd.f32 %v2045, %v2058
      %2060 = vdwg.mxu0
      %2061 = vmatpush.bf16.msra.mxu0 %v1583
      %2062 = vmatpush.bf16.msra.mxu0 %v1581
      %2063 = vmatpush.bf16.msra.mxu0 %v1579
      %2064 = vmatpush.bf16.msra.mxu0 %v1577
      %2065 = vmatpush.bf16.msra.mxu0 %v1575
      %2066 = vmatpush.bf16.msra.mxu0 %v1573
      %2067 = vmatpush.bf16.msra.mxu0 %v1571
      %2068 = vmatpush.bf16.msra.mxu0 %v1569
      %2069 = vmatmul.bf16.gmra.mxu0 %v619
      %v2070 = vpop.f32.mrf.mxu0
      %v2071 = vadd.f32 %v2057, %v2070
      %v2072 = vpop.f32.mrf.mxu0
      %v2073 = vadd.f32 %v2059, %v2072
      %2074 = vdwg.mxu0
      %2075 = vmatpush.bf16.msra.mxu0 %v1599
      %2076 = vmatpush.bf16.msra.mxu0 %v1597
      %2077 = vmatpush.bf16.msra.mxu0 %v1595
      %2078 = vmatpush.bf16.msra.mxu0 %v1593
      %2079 = vmatpush.bf16.msra.mxu0 %v1591
      %2080 = vmatpush.bf16.msra.mxu0 %v1589
      %2081 = vmatpush.bf16.msra.mxu0 %v1587
      %2082 = vmatpush.bf16.msra.mxu0 %v1585
      %2083 = vmatmul.bf16.gmra.mxu0 %v620
      %v2084 = vpop.f32.mrf.mxu0
      %v2085 = vadd.f32 %v2071, %v2084
      %v2086 = vpop.f32.mrf.mxu0
      %v2087 = vadd.f32 %v2073, %v2086
      %2088 = vdwg.mxu0
      %2089 = vmatpush.bf16.msra.mxu0 %v1615
      %2090 = vmatpush.bf16.msra.mxu0 %v1613
      %2091 = vmatpush.bf16.msra.mxu0 %v1611
      %2092 = vmatpush.bf16.msra.mxu0 %v1609
      %2093 = vmatpush.bf16.msra.mxu0 %v1607
      %2094 = vmatpush.bf16.msra.mxu0 %v1605
      %2095 = vmatpush.bf16.msra.mxu0 %v1603
      %2096 = vmatpush.bf16.msra.mxu0 %v1601
      %2097 = vmatmul.bf16.gmra.mxu0 %v621
      %v2098 = vpop.f32.mrf.mxu0
      %v2099 = vadd.f32 %v2085, %v2098
      %v2100 = vpop.f32.mrf.mxu0
      %v2101 = vadd.f32 %v2087, %v2100
      %2102 = vdwg.mxu0
      %2103 = vmatpush.bf16.msra.mxu0 %v1631
      %2104 = vmatpush.bf16.msra.mxu0 %v1629
      %2105 = vmatpush.bf16.msra.mxu0 %v1627
      %2106 = vmatpush.bf16.msra.mxu0 %v1625
      %2107 = vmatpush.bf16.msra.mxu0 %v1623
      %2108 = vmatpush.bf16.msra.mxu0 %v1621
      %2109 = vmatpush.bf16.msra.mxu0 %v1619
      %2110 = vmatpush.bf16.msra.mxu0 %v1617
      %2111 = vmatmul.bf16.gmra.mxu0 %v622
      %v2112 = vpop.f32.mrf.mxu0
      %v2113 = vadd.f32 %v2099, %v2112
      %v2114 = vpop.f32.mrf.mxu0
      %v2115 = vadd.f32 %v2101, %v2114
      %2116 = vdwg.mxu0
      %2117 = vmatpush.bf16.msra.mxu0 %v1647
      %2118 = vmatpush.bf16.msra.mxu0 %v1645
      %2119 = vmatpush.bf16.msra.mxu0 %v1643
      %2120 = vmatpush.bf16.msra.mxu0 %v1641
      %2121 = vmatpush.bf16.msra.mxu0 %v1639
      %2122 = vmatpush.bf16.msra.mxu0 %v1637
      %2123 = vmatpush.bf16.msra.mxu0 %v1635
      %2124 = vmatpush.bf16.msra.mxu0 %v1633
      %2125 = vmatmul.bf16.gmra.mxu0 %v623
      %v2126 = vpop.f32.mrf.mxu0
      %v2127 = vadd.f32 %v2113, %v2126
      %v2128 = vpop.f32.mrf.mxu0
      %v2129 = vadd.f32 %v2115, %v2128
      %2130 = vdwg.mxu0
      %2131 = vmatpush.bf16.msra.mxu0 %v1663
      %2132 = vmatpush.bf16.msra.mxu0 %v1661
      %2133 = vmatpush.bf16.msra.mxu0 %v1659
      %2134 = vmatpush.bf16.msra.mxu0 %v1657
      %2135 = vmatpush.bf16.msra.mxu0 %v1655
      %2136 = vmatpush.bf16.msra.mxu0 %v1653
      %2137 = vmatpush.bf16.msra.mxu0 %v1651
      %2138 = vmatpush.bf16.msra.mxu0 %v1649
      %2139 = vmatmul.bf16.gmra.mxu0 %v624
      %v2140 = vpop.f32.mrf.mxu0
      %v2141 = vadd.f32 %v2127, %v2140
      %v2142 = vpop.f32.mrf.mxu0
      %v2143 = vadd.f32 %v2129, %v2142
      %2144 = vdwg.mxu0
      %2145 = vmatpush.bf16.msra.mxu0 %v1424
      %2146 = vmatpush.bf16.msra.mxu0 %v1422
      %2147 = vmatpush.bf16.msra.mxu0 %v1420
      %2148 = vmatpush.bf16.msra.mxu0 %v1418
      %2149 = vmatpush.bf16.msra.mxu0 %v1416
      %2150 = vmatpush.bf16.msra.mxu0 %v1414
      %2151 = vmatpush.bf16.msra.mxu0 %v1412
      %2152 = vmatpush.bf16.msra.mxu0 %v1410
      %2153 = vmatmul.bf16.gmra.mxu0 %v609
      %v2154 = vpop.f32.mrf.mxu0
      %v2155 = vadd.f32 0.0, %v2154
      %v2156 = vpop.f32.mrf.mxu0
      %v2157 = vadd.f32 0.0, %v2156
      %2158 = vdwg.mxu0
      %2159 = vmatpush.bf16.msra.mxu0 %v1440
      %2160 = vmatpush.bf16.msra.mxu0 %v1438
      %2161 = vmatpush.bf16.msra.mxu0 %v1436
      %2162 = vmatpush.bf16.msra.mxu0 %v1434
      %2163 = vmatpush.bf16.msra.mxu0 %v1432
      %2164 = vmatpush.bf16.msra.mxu0 %v1430
      %2165 = vmatpush.bf16.msra.mxu0 %v1428
      %2166 = vmatpush.bf16.msra.mxu0 %v1426
      %2167 = vmatmul.bf16.gmra.mxu0 %v610
      %v2168 = vpop.f32.mrf.mxu0
      %v2169 = vadd.f32 %v2155, %v2168
      %v2170 = vpop.f32.mrf.mxu0
      %v2171 = vadd.f32 %v2157, %v2170
      %2172 = vdwg.mxu0
      %2173 = vmatpush.bf16.msra.mxu0 %v1456
      %2174 = vmatpush.bf16.msra.mxu0 %v1454
      %2175 = vmatpush.bf16.msra.mxu0 %v1452
      %2176 = vmatpush.bf16.msra.mxu0 %v1450
      %2177 = vmatpush.bf16.msra.mxu0 %v1448
      %2178 = vmatpush.bf16.msra.mxu0 %v1446
      %2179 = vmatpush.bf16.msra.mxu0 %v1444
      %2180 = vmatpush.bf16.msra.mxu0 %v1442
      %2181 = vmatmul.bf16.gmra.mxu0 %v611
      %v2182 = vpop.f32.mrf.mxu0
      %v2183 = vadd.f32 %v2169, %v2182
      %v2184 = vpop.f32.mrf.mxu0
      %v2185 = vadd.f32 %v2171, %v2184
      %2186 = vdwg.mxu0
      %2187 = vmatpush.bf16.msra.mxu0 %v1472
      %2188 = vmatpush.bf16.msra.mxu0 %v1470
      %2189 = vmatpush.bf16.msra.mxu0 %v1468
      %2190 = vmatpush.bf16.msra.mxu0 %v1466
      %2191 = vmatpush.bf16.msra.mxu0 %v1464
      %2192 = vmatpush.bf16.msra.mxu0 %v1462
      %2193 = vmatpush.bf16.msra.mxu0 %v1460
      %2194 = vmatpush.bf16.msra.mxu0 %v1458
      %2195 = vmatmul.bf16.gmra.mxu0 %v612
      %v2196 = vpop.f32.mrf.mxu0
      %v2197 = vadd.f32 %v2183, %v2196
      %v2198 = vpop.f32.mrf.mxu0
      %v2199 = vadd.f32 %v2185, %v2198
      %2200 = vdwg.mxu0
      %2201 = vmatpush.bf16.msra.mxu0 %v1488
      %2202 = vmatpush.bf16.msra.mxu0 %v1486
      %2203 = vmatpush.bf16.msra.mxu0 %v1484
      %2204 = vmatpush.bf16.msra.mxu0 %v1482
      %2205 = vmatpush.bf16.msra.mxu0 %v1480
      %2206 = vmatpush.bf16.msra.mxu0 %v1478
      %2207 = vmatpush.bf16.msra.mxu0 %v1476
      %2208 = vmatpush.bf16.msra.mxu0 %v1474
      %2209 = vmatmul.bf16.gmra.mxu0 %v613
      %v2210 = vpop.f32.mrf.mxu0
      %v2211 = vadd.f32 %v2197, %v2210
      %v2212 = vpop.f32.mrf.mxu0
      %v2213 = vadd.f32 %v2199, %v2212
      %2214 = vdwg.mxu0
      %2215 = vmatpush.bf16.msra.mxu0 %v1504
      %2216 = vmatpush.bf16.msra.mxu0 %v1502
      %2217 = vmatpush.bf16.msra.mxu0 %v1500
      %2218 = vmatpush.bf16.msra.mxu0 %v1498
      %2219 = vmatpush.bf16.msra.mxu0 %v1496
      %2220 = vmatpush.bf16.msra.mxu0 %v1494
      %2221 = vmatpush.bf16.msra.mxu0 %v1492
      %2222 = vmatpush.bf16.msra.mxu0 %v1490
      %2223 = vmatmul.bf16.gmra.mxu0 %v614
      %v2224 = vpop.f32.mrf.mxu0
      %v2225 = vadd.f32 %v2211, %v2224
      %v2226 = vpop.f32.mrf.mxu0
      %v2227 = vadd.f32 %v2213, %v2226
      %2228 = vdwg.mxu0
      %2229 = vmatpush.bf16.msra.mxu0 %v1520
      %2230 = vmatpush.bf16.msra.mxu0 %v1518
      %2231 = vmatpush.bf16.msra.mxu0 %v1516
      %2232 = vmatpush.bf16.msra.mxu0 %v1514
      %2233 = vmatpush.bf16.msra.mxu0 %v1512
      %2234 = vmatpush.bf16.msra.mxu0 %v1510
      %2235 = vmatpush.bf16.msra.mxu0 %v1508
      %2236 = vmatpush.bf16.msra.mxu0 %v1506
      %2237 = vmatmul.bf16.gmra.mxu0 %v615
      %v2238 = vpop.f32.mrf.mxu0
      %v2239 = vadd.f32 %v2225, %v2238
      %v2240 = vpop.f32.mrf.mxu0
      %v2241 = vadd.f32 %v2227, %v2240
      %2242 = vdwg.mxu0
      %2243 = vmatpush.bf16.msra.mxu0 %v1536
      %2244 = vmatpush.bf16.msra.mxu0 %v1534
      %2245 = vmatpush.bf16.msra.mxu0 %v1532
      %2246 = vmatpush.bf16.msra.mxu0 %v1530
      %2247 = vmatpush.bf16.msra.mxu0 %v1528
      %2248 = vmatpush.bf16.msra.mxu0 %v1526
      %2249 = vmatpush.bf16.msra.mxu0 %v1524
      %2250 = vmatpush.bf16.msra.mxu0 %v1522
      %2251 = vmatmul.bf16.gmra.mxu0 %v616
      %v2252 = vpop.f32.mrf.mxu0
      %v2253 = vadd.f32 %v2239, %v2252
      %v2254 = vpop.f32.mrf.mxu0
      %v2255 = vadd.f32 %v2241, %v2254
      %2256 = vdwg.mxu0
      %2257 = vmatpush.bf16.msra.mxu0 %v1552
      %2258 = vmatpush.bf16.msra.mxu0 %v1550
      %2259 = vmatpush.bf16.msra.mxu0 %v1548
      %2260 = vmatpush.bf16.msra.mxu0 %v1546
      %2261 = vmatpush.bf16.msra.mxu0 %v1544
      %2262 = vmatpush.bf16.msra.mxu0 %v1542
      %2263 = vmatpush.bf16.msra.mxu0 %v1540
      %2264 = vmatpush.bf16.msra.mxu0 %v1538
      %2265 = vmatmul.bf16.gmra.mxu0 %v617
      %v2266 = vpop.f32.mrf.mxu0
      %v2267 = vadd.f32 %v2253, %v2266
      %v2268 = vpop.f32.mrf.mxu0
      %v2269 = vadd.f32 %v2255, %v2268
      %2270 = vdwg.mxu0
      %2271 = vmatpush.bf16.msra.mxu0 %v1568
      %2272 = vmatpush.bf16.msra.mxu0 %v1566
      %2273 = vmatpush.bf16.msra.mxu0 %v1564
      %2274 = vmatpush.bf16.msra.mxu0 %v1562
      %2275 = vmatpush.bf16.msra.mxu0 %v1560
      %2276 = vmatpush.bf16.msra.mxu0 %v1558
      %2277 = vmatpush.bf16.msra.mxu0 %v1556
      %2278 = vmatpush.bf16.msra.mxu0 %v1554
      %2279 = vmatmul.bf16.gmra.mxu0 %v618
      %v2280 = vpop.f32.mrf.mxu0
      %v2281 = vadd.f32 %v2267, %v2280
      %v2282 = vpop.f32.mrf.mxu0
      %v2283 = vadd.f32 %v2269, %v2282
      %2284 = vdwg.mxu0
      %2285 = vmatpush.bf16.msra.mxu0 %v1584
      %2286 = vmatpush.bf16.msra.mxu0 %v1582
      %2287 = vmatpush.bf16.msra.mxu0 %v1580
      %2288 = vmatpush.bf16.msra.mxu0 %v1578
      %2289 = vmatpush.bf16.msra.mxu0 %v1576
      %2290 = vmatpush.bf16.msra.mxu0 %v1574
      %2291 = vmatpush.bf16.msra.mxu0 %v1572
      %2292 = vmatpush.bf16.msra.mxu0 %v1570
      %2293 = vmatmul.bf16.gmra.mxu0 %v619
      %v2294 = vpop.f32.mrf.mxu0
      %v2295 = vadd.f32 %v2281, %v2294
      %v2296 = vpop.f32.mrf.mxu0
      %v2297 = vadd.f32 %v2283, %v2296
      %2298 = vdwg.mxu0
      %2299 = vmatpush.bf16.msra.mxu0 %v1600
      %2300 = vmatpush.bf16.msra.mxu0 %v1598
      %2301 = vmatpush.bf16.msra.mxu0 %v1596
      %2302 = vmatpush.bf16.msra.mxu0 %v1594
      %2303 = vmatpush.bf16.msra.mxu0 %v1592
      %2304 = vmatpush.bf16.msra.mxu0 %v1590
      %2305 = vmatpush.bf16.msra.mxu0 %v1588
      %2306 = vmatpush.bf16.msra.mxu0 %v1586
      %2307 = vmatmul.bf16.gmra.mxu0 %v620
      %v2308 = vpop.f32.mrf.mxu0
      %v2309 = vadd.f32 %v2295, %v2308
      %v2310 = vpop.f32.mrf.mxu0
      %v2311 = vadd.f32 %v2297, %v2310
      %2312 = vdwg.mxu0
      %2313 = vmatpush.bf16.msra.mxu0 %v1616
      %2314 = vmatpush.bf16.msra.mxu0 %v1614
      %2315 = vmatpush.bf16.msra.mxu0 %v1612
      %2316 = vmatpush.bf16.msra.mxu0 %v1610
      %2317 = vmatpush.bf16.msra.mxu0 %v1608
      %2318 = vmatpush.bf16.msra.mxu0 %v1606
      %2319 = vmatpush.bf16.msra.mxu0 %v1604
      %2320 = vmatpush.bf16.msra.mxu0 %v1602
      %2321 = vmatmul.bf16.gmra.mxu0 %v621
      %v2322 = vpop.f32.mrf.mxu0
      %v2323 = vadd.f32 %v2309, %v2322
      %v2324 = vpop.f32.mrf.mxu0
      %v2325 = vadd.f32 %v2311, %v2324
      %2326 = vdwg.mxu0
      %2327 = vmatpush.bf16.msra.mxu0 %v1632
      %2328 = vmatpush.bf16.msra.mxu0 %v1630
      %2329 = vmatpush.bf16.msra.mxu0 %v1628
      %2330 = vmatpush.bf16.msra.mxu0 %v1626
      %2331 = vmatpush.bf16.msra.mxu0 %v1624
      %2332 = vmatpush.bf16.msra.mxu0 %v1622
      %2333 = vmatpush.bf16.msra.mxu0 %v1620
      %2334 = vmatpush.bf16.msra.mxu0 %v1618
      %2335 = vmatmul.bf16.gmra.mxu0 %v622
      %v2336 = vpop.f32.mrf.mxu0
      %v2337 = vadd.f32 %v2323, %v2336
      %v2338 = vpop.f32.mrf.mxu0
      %v2339 = vadd.f32 %v2325, %v2338
      %2340 = vdwg.mxu0
      %2341 = vmatpush.bf16.msra.mxu0 %v1648
      %2342 = vmatpush.bf16.msra.mxu0 %v1646
      %2343 = vmatpush.bf16.msra.mxu0 %v1644
      %2344 = vmatpush.bf16.msra.mxu0 %v1642
      %2345 = vmatpush.bf16.msra.mxu0 %v1640
      %2346 = vmatpush.bf16.msra.mxu0 %v1638
      %2347 = vmatpush.bf16.msra.mxu0 %v1636
      %2348 = vmatpush.bf16.msra.mxu0 %v1634
      %2349 = vmatmul.bf16.gmra.mxu0 %v623
      %v2350 = vpop.f32.mrf.mxu0
      %v2351 = vadd.f32 %v2337, %v2350
      %v2352 = vpop.f32.mrf.mxu0
      %v2353 = vadd.f32 %v2339, %v2352
      %2354 = vdwg.mxu0
      %2355 = vmatpush.bf16.msra.mxu0 %v1664
      %2356 = vmatpush.bf16.msra.mxu0 %v1662
      %2357 = vmatpush.bf16.msra.mxu0 %v1660
      %2358 = vmatpush.bf16.msra.mxu0 %v1658
      %2359 = vmatpush.bf16.msra.mxu0 %v1656
      %2360 = vmatpush.bf16.msra.mxu0 %v1654
      %2361 = vmatpush.bf16.msra.mxu0 %v1652
      %2362 = vmatpush.bf16.msra.mxu0 %v1650
      %2363 = vmatmul.bf16.gmra.mxu0 %v624
      %v2364 = vpop.f32.mrf.mxu0
      %v2365 = vadd.f32 %v2351, %v2364
      %v2366 = vpop.f32.mrf.mxu0
      %v2367 = vadd.f32 %v2353, %v2366
      %2368 = vdwg.mxu0
      %v2369 = vadd.f32 %v285, %v2141
      %v2370 = vadd.f32 %v286, %v2365
      %v2371 = vadd.f32 %v287, %v2143
      %v2372 = vadd.f32 %v288, %v2367
      %2373 = vst [vmem:[#allocation2] sm:$0xff] %v2369
      %2374 = vst [vmem:[#allocation2 + $0x8] sm:$0xff] %v2370
      %2375 = vst [vmem:[#allocation2 + $0x10] sm:$0xff] %v2371
      %2376 = vst [vmem:[#allocation2 + $0x18] sm:$0xff] %v2372
      // Predicated region
      $region37: #{discriminator_forward.7} parent=31 // pred_check
        %p2377 = pneg %p277
      $region38: #{discriminator_forward.7} parent=31 // pred_check_branch
        %2379 = sbr.rel (%p2377) target = $region40
      $region39: #{discriminator_forward.7} parent=31 // pred_region
        %v2380 = vld [vmem:[#allocation2] sm:$0xff]
        %v2381 = vld [vmem:[#allocation2 + $0x8] sm:$0xff]
        %v2382 = vld [vmem:[#allocation2 + $0x10] sm:$0xff]
        %v2383 = vld [vmem:[#allocation2 + $0x18] sm:$0xff]
        %v2384 = vld [vmem:[%s265] sm:$0x3]
        %v2386 = vperm.slane %v2384, 0
        %v2387 = vperm.slane %v2384, 1
        %v2390 = vadd.f32 %v2380, %v2386
        %v2391 = vadd.f32 %v2381, %v2387
        %v2392 = vadd.f32 %v2382, %v2386
        %v2393 = vadd.f32 %v2383, %v2387
        %v2394 = vadd.f32 %v2390, %v2392
        %v2395 = vrot.slane %v2394, 4
        %v2396 = vadd.f32 %v2394, %v2395
        %v2397 = vrot.slane %v2396, 2
        %v2398 = vadd.f32 %v2396, %v2397
        %v2399 = vrot.slane %v2398, 1
        %v2400 = vadd.f32 %v2398, %v2399
        %v2401 = vadd.f32 %v2391, %v2393
        %v2402 = vrot.slane %v2401, 4
        %v2403 = vadd.f32 %v2401, %v2402
        %v2404 = vrot.slane %v2403, 2
        %v2405 = vadd.f32 %v2403, %v2404
        %v2406 = vrot.slane %v2405, 1
        %v2407 = vadd.f32 %v2405, %v2406
        %v2408 = vrcp.pop 16.0
        %v2409 = vmul.f32 16.0, %v2408
        %v2410 = vsub.f32 1.0, %v2409
        %v2411 = vmul.f32 %v2408, %v2410
        %v2412 = vadd.f32 %v2408, %v2411
        %vm2413 = vweird.f32 %v2408
        %v2414 = vsel %vm2413, %v2408, %v2412
        %v2415 = vmul.f32 %v2400, %v2414
        %v2416 = vmul.f32 %v2407, %v2414
        %v2417 = vsub.f32 %v2390, %v2415
        %v2418 = vsub.f32 %v2391, %v2416
        %v2419 = vsub.f32 %v2392, %v2415
        %v2420 = vsub.f32 %v2393, %v2416
        %v2421 = vmul.f32 %v2417, %v2417
        %v2422 = vmul.f32 %v2418, %v2418
        %v2423 = vmul.f32 %v2419, %v2419
        %v2424 = vmul.f32 %v2420, %v2420
        %v2425 = vadd.f32 %v2421, %v2423
        %v2426 = vrot.slane %v2425, 4
        %v2427 = vadd.f32 %v2425, %v2426
        %v2428 = vrot.slane %v2427, 2
        %v2429 = vadd.f32 %v2427, %v2428
        %v2430 = vrot.slane %v2429, 1
        %v2431 = vadd.f32 %v2429, %v2430
        %v2432 = vadd.f32 %v2422, %v2424
        %v2433 = vrot.slane %v2432, 4
        %v2434 = vadd.f32 %v2432, %v2433
        %v2435 = vrot.slane %v2434, 2
        %v2436 = vadd.f32 %v2434, %v2435
        %v2437 = vrot.slane %v2436, 1
        %v2438 = vadd.f32 %v2436, %v2437
        %v2439 = vmul.f32 %v2431, %v2414
        %v2440 = vmul.f32 %v2438, %v2414
        %v2441 = vadd.f32 %v2439, 1e-05
        %v2442 = vadd.f32 %v2440, 1e-05
        %v2443 = vrsqrt.pop %v2441
        %v2444 = vmul.f32 %v2443, %v2441
        %v2445 = vmul.f32 %v2444, %v2443
        %v2446 = vmul.f32 0.5, %v2445
        %v2447 = vsub.f32 1.5, %v2446
        %v2448 = vmul.f32 %v2443, %v2447
        %vm2449 = vweird.f32 %v2441
        %vm2450 = vweird.f32 %v2443
        %vm2451 = vmor %vm2449, %vm2450
        %v2452 = vsel %vm2451, %v2443, %v2448
        %v2453 = vrsqrt.pop %v2442
        %v2454 = vmul.f32 %v2453, %v2442
        %v2455 = vmul.f32 %v2454, %v2453
        %v2456 = vmul.f32 0.5, %v2455
        %v2457 = vsub.f32 1.5, %v2456
        %v2458 = vmul.f32 %v2453, %v2457
        %vm2459 = vweird.f32 %v2442
        %vm2460 = vweird.f32 %v2453
        %vm2461 = vmor %vm2459, %vm2460
        %v2462 = vsel %vm2461, %v2453, %v2458
        %v2463 = vmul.f32 %v2417, %v2452
        %v2464 = vmul.f32 %v2418, %v2462
        %v2465 = vmul.f32 %v2419, %v2452
        %v2466 = vmul.f32 %v2420, %v2462
        %vm2467 = vcmp.ge.f32.partialorder %v2463, 0.0
        %vm2468 = vcmp.ge.f32.partialorder %v2464, 0.0
        %vm2469 = vcmp.ge.f32.partialorder %v2465, 0.0
        %vm2470 = vcmp.ge.f32.partialorder %v2466, 0.0
        %v2471 = vmul.f32 %v2463, 0.2
        %v2472 = vmul.f32 %v2464, 0.2
        %v2473 = vmul.f32 %v2465, 0.2
        %v2474 = vmul.f32 %v2466, 0.2
        %v2475 = vsel %vm2467, %v2463, %v2471
        %v2476 = vsel %vm2468, %v2464, %v2472
        %v2477 = vsel %vm2469, %v2465, %v2473
        %v2478 = vsel %vm2470, %v2466, %v2474
        %v2479 = vpack.c.bf16 %v2476, %v2475
        %v2480 = vpack.c.bf16 %v2478, %v2477
        %2481 = vst [vmem:[%s275] sm:$0xff] %v2479
        %2482 = vst [vmem:[%s275 + $0x8] sm:$0xff] %v2480
      $region40: #{discriminator_forward.7} parent=31 // pred_fallthru
        _
      %s2483 = smul.u32 2, %s20
      %p2484 = scmp.lt.s32.totalorder %s19, 1
      %s2485 = scalar_select %p2484, %s19, 1
      %p2486 = scmp.lt.s32.totalorder %s2483, 1
      %s2487 = scalar_select %p2486, %s2483, 1
      %s2488 = smul.addr %s2485, 4
      %s2489 = sadd.s32 %s2487, %s2488
      %s2490 = smul.addr %s2489, 4
      %s2491 = scalar_lea.vmem %s3, %s2490
      // Predicated region
      $region41: #{discriminator_forward.7} parent=31 // pred_check
        %p2492 = pneg %p135
      $region42: #{discriminator_forward.7} parent=31 // pred_check_branch
        %2494 = sbr.rel (%p2492) target = $region44
      $region43: #{discriminator_forward.7} parent=31 // pred_region
        %s2495 = smul.u32 2, %s20
      $region44: #{discriminator_forward.7} parent=31 // pred_fallthru
        _
    $region32: #{discriminator_forward.7} parent=5 // pred_fallthru
      _
    %p2496 = scmp.le.s32.totalorder 2, %s9
    // Predicated region
    $region45: #{discriminator_forward.7} parent=5 // pred_check
      %p2497 = pneg %p2496
    $region46: #{discriminator_forward.7} parent=5 // pred_check_branch
      %2499 = sbr.rel (%p2497) target = $region48
    $region47: #{discriminator_forward.7} parent=5 // pred_region
      %s2500 = ssub.s32 %s9, 2
      // Predicated region
      $region49: #{discriminator_forward.7} parent=47 // pred_check
        %p2501 = pneg %p141
      $region50: #{discriminator_forward.7} parent=47 // pred_check_branch
        %2503 = sbr.rel (%p2501) target = $region52
      $region51: #{discriminator_forward.7} parent=47 // pred_region
        %s2504 = smul.u32 2, %s23
        %p2505 = scmp.lt.s32.totalorder %s22, 1
        %s2506 = scalar_select %p2505, %s22, 1
        %p2507 = scmp.lt.s32.totalorder %s2504, 1
        %s2508 = scalar_select %p2507, %s2504, 1
        %s2509 = smul.addr %s2506, 4
        %s2510 = sadd.s32 %s2508, %s2509
        %s2511 = smul.addr %s2510, 4
        %s2512 = scalar_lea.vmem %s3, %s2511
      $region52: #{discriminator_forward.7} parent=47 // pred_fallthru
        _
    $region48: #{discriminator_forward.7} parent=5 // pred_fallthru
      _
  $region6: #{discriminator_forward.7} parent=0 // loop_footer
    %s13 = sadd.s32 1, %s9
  $region7: #{discriminator_forward.7} parent=0 // loop_footer_branch
    %8 = sbr.rel target = $region3
  $region8: #{discriminator_forward.7} parent=0 // loop_exit
    _

// kernel: discriminator_forward.8
$region0: #{discriminator_forward.8}
  #allocation0 [shape = 'u32[]', space=smem, size = 0x4, offset = 0x4, fixed_abs, tag = 'smem constant byte address 0x4 - core index']
  #allocation1 [shape = 'u32[72,128]{1,0:T(1,128)}', space=vmem, size = 0x9000, scoped, tag = 'internal scratch']
  #allocation2 [shape = 'f32[9,512]{1,0:T(8,128)}', space=vmem, size = 0x8000, scoped, tag = 'scratch operand']
  %s0 = inlined_call_operand.vmem [shape: bf16[2,9,4096], index: 0, kind: input, shape index: {}]
  %s1 = inlined_call_operand.vmem [shape: bf16[4096,512], index: 1, kind: input, shape index: {}]
  %s2 = inlined_call_operand.vmem [shape: f32[1,512], index: 2, kind: input, shape index: {}]
  %s3 = inlined_call_operand.vmem [shape: bf16[2,9,512], index: 3, kind: output, shape index: {}]
  %s4 = sld [smem:[#allocation0]]
  $region76: #{discriminator_forward.8} parent=0
    _
  %s6 = ssub.s32 1, %s4
  %s7 = scalar_select 0, %s6, %s4
  $region1: #{discriminator_forward.8} parent=0
    #allocation3 [shape = 'u8[131072]{0}', space=vmem, size = 0x20000, scoped, tag = 'input window, operand 0']
    loop: start=0, step=1, limit=6
    $region2: #{discriminator_forward.8} parent=1 // loop_pre_header
      _
    $region3: #{discriminator_forward.8} parent=1 // loop_header
      %s9 = sphi 0, %s13
      %p10 = scmp.ge.s32.totalorder %s9, 6
      %s16 = sphi 0, %s35
      %s17 = sphi 0, %s31
      %s18 = sphi 0, %s27
      %s19 = sphi 0, %s16
      %s20 = sphi 0, %s17
      %s21 = sphi 0, %s18
      %s22 = sphi 0, %s19
      %s23 = sphi 0, %s20
      %s24 = sphi 0, %s21
      %s40 = sphi 0, %s42
      %s43 = sphi 0, %s40
      %s44 = sphi 0, %s43
      %s60 = sphi 0, %s44
      %s68 = sphi 0, %s70
      %s71 = sphi 0, %s68
      %s72 = sphi 0, %s71
      %s88 = sphi 0, %s72
      %s94 = sphi 0, %s96
      %s97 = sphi 0, %s94
      %s98 = sphi 0, %s97
      %s114 = sphi 0, %s98
      %s122 = sphi 0, %s124
      %s125 = sphi 0, %s122
      %s126 = sphi 0, %s125
      %s142 = sphi 0, %s126
    $region4: #{discriminator_forward.8} parent=1 // loop_header_branch
      %12 = sbr.rel (%p10) target = $region8
    $region5: #{discriminator_forward.8} parent=1 // loop_body
      %s14 = ssub.s32 %s9, 1
      %s15 = ssub.s32 %s9, 2
      %s25 = sadd.s32 1, %s18
      %p26 = scmp.ge.s32.totalorder %s25, 2
      %s27 = scalar_select %p26, 0, %s25
      %s28 = sadd.s32 1, %s17
      %s29 = scalar_select %p26, %s28, %s17
      %p30 = scmp.ge.s32.totalorder %s29, 1
      %s31 = scalar_select %p30, 0, %s29
      %s32 = sadd.s32 1, %s16
      %s33 = scalar_select %p30, %s32, %s16
      %p34 = scmp.ge.s32.totalorder %s33, 2
      %s35 = scalar_select %p34, 0, %s33
      %s36 = ssub.s32 %s16, %s35
      %s37 = ssub.s32 %s18, %s27
      %s38 = sor.u32 %s36, %s37
      %p39 = scmp.eq.s32.totalorder %s38, 0
      %s41 = sadd.s32 %s40, 1
      %s42 = scalar_select %p39, %s40, %s41
      %p45 = pneg %p39
      %p46 = scmp.eq.s32.totalorder %s9, 3
      %p47 = por %p45, %p46
      %p48 = scmp.ne.s32.totalorder %s40, %s43
      %p49 = scmp.eq.s32.totalorder %s9, 0
      %p50 = por %p48, %p49
      %p51 = scmp.ne.s32.totalorder %s40, %s43
      %p52 = scmp.eq.s32.totalorder %s14, 3
      %p53 = por %p51, %p52
      %p54 = scmp.ne.s32.totalorder %s43, %s44
      %p55 = scmp.eq.s32.totalorder %s14, 0
      %p56 = por %p54, %p55
      %p57 = scmp.ne.s32.totalorder %s43, %s44
      %p58 = scmp.eq.s32.totalorder %s15, 3
      %p59 = por %p57, %p58
      %p61 = scmp.ne.s32.totalorder %s44, %s60
      %p62 = scmp.eq.s32.totalorder %s15, 0
      %p63 = por %p61, %p62
      %s64 = ssub.s32 %s18, %s27
      %s65 = ssub.s32 %s17, %s31
      %s66 = sor.u32 %s64, %s65
      %p67 = scmp.eq.s32.totalorder %s66, 0
      %s69 = sadd.s32 %s68, 1
      %s70 = scalar_select %p67, %s68, %s69
      %p73 = pneg %p67
      %p74 = scmp.eq.s32.totalorder %s9, 3
      %p75 = por %p73, %p74
      %p76 = scmp.ne.s32.totalorder %s68, %s71
      %p77 = scmp.eq.s32.totalorder %s9, 0
      %p78 = por %p76, %p77
      %p79 = scmp.ne.s32.totalorder %s68, %s71
      %p80 = scmp.eq.s32.totalorder %s14, 3
      %p81 = por %p79, %p80
      %p82 = scmp.ne.s32.totalorder %s71, %s72
      %p83 = scmp.eq.s32.totalorder %s14, 0
      %p84 = por %p82, %p83
      %p85 = scmp.ne.s32.totalorder %s71, %s72
      %p86 = scmp.eq.s32.totalorder %s15, 3
      %p87 = por %p85, %p86
      %p89 = scmp.ne.s32.totalorder %s72, %s88
      %p90 = scmp.eq.s32.totalorder %s15, 0
      %p91 = por %p89, %p90
      %s92 = ssub.s32 %s17, %s31
      %p93 = scmp.eq.s32.totalorder %s92, 0
      %s95 = sadd.s32 %s94, 1
      %s96 = scalar_select %p93, %s94, %s95
      %p99 = pneg %p93
      %p100 = scmp.eq.s32.totalorder %s9, 3
      %p101 = por %p99, %p100
      %p102 = scmp.ne.s32.totalorder %s94, %s97
      %p103 = scmp.eq.s32.totalorder %s9, 0
      %p104 = por %p102, %p103
      %p105 = scmp.ne.s32.totalorder %s94, %s97
      %p106 = scmp.eq.s32.totalorder %s14, 3
      %p107 = por %p105, %p106
      %p108 = scmp.ne.s32.totalorder %s97, %s98
      %p109 = scmp.eq.s32.totalorder %s14, 0
      %p110 = por %p108, %p109
      %p111 = scmp.ne.s32.totalorder %s97, %s98
      %p112 = scmp.eq.s32.totalorder %s15, 3
      %p113 = por %p111, %p112
      %p115 = scmp.ne.s32.totalorder %s98, %s114
      %p116 = scmp.eq.s32.totalorder %s15, 0
      %p117 = por %p115, %p116
      %s118 = ssub.s32 %s16, %s35
      %s119 = ssub.s32 %s17, %s31
      %s120 = sor.u32 %s118, %s119
      %p121 = scmp.eq.s32.totalorder %s120, 0
      %s123 = sadd.s32 %s122, 1
      %s124 = scalar_select %p121, %s122, %s123
      %p127 = pneg %p121
      %p128 = scmp.eq.s32.totalorder %s9, 3
      %p129 = por %p127, %p128
      %p130 = scmp.ne.s32.totalorder %s122, %s125
      %p131 = scmp.eq.s32.totalorder %s9, 0
      %p132 = por %p130, %p131
      %p133 = scmp.ne.s32.totalorder %s122, %s125
      %p134 = scmp.eq.s32.totalorder %s14, 3
      %p135 = por %p133, %p134
      %p136 = scmp.ne.s32.totalorder %s125, %s126
      %p137 = scmp.eq.s32.totalorder %s14, 0
      %p138 = por %p136, %p137
      %p139 = scmp.ne.s32.totalorder %s125, %s126
      %p140 = scmp.eq.s32.totalorder %s15, 3
      %p141 = por %p139, %p140
      %p143 = scmp.ne.s32.totalorder %s126, %s142
      %p144 = scmp.eq.s32.totalorder %s15, 0
      %p145 = por %p143, %p144
      %p146 = scmp.le.s32.totalorder 1, %s9
      %p147 = scmp.lt.s32.totalorder %s9, 5
      %p148 = pnand %p146, %p147
      %p149 = pneg %p148
      // Predicated region
      $region9: #{discriminator_forward.8} parent=5 // pred_check
        _
      $region10: #{discriminator_forward.8} parent=5 // pred_check_branch
        %151 = sbr.rel (%p148) target = $region12
      $region11: #{discriminator_forward.8} parent=5 // pred_region
        %s152 = ssub.s32 %s9, 1
        // Predicated region
        $region13: #{discriminator_forward.8} parent=11 // pred_check
          %p153 = pneg %p110
        $region14: #{discriminator_forward.8} parent=11 // pred_check_branch
          %155 = sbr.rel (%p153) target = $region16
        $region15: #{discriminator_forward.8} parent=11 // pred_region
          %s156 = smul.u32 4, %s20
          %p157 = scmp.lt.s32.totalorder %s156, 3
          %s158 = scalar_select %p157, %s156, 3
          %s159 = scalar_lea.vmem %s2, %s158
          %s160 = smul.u32 4, %s20
        $region16: #{discriminator_forward.8} parent=11 // pred_fallthru
          _
      $region12: #{discriminator_forward.8} parent=5 // pred_fallthru
        _
      %p161 = scmp.lt.s32.totalorder %s9, 4
      // Predicated region
      $region17: #{discriminator_forward.8} parent=5 // pred_check
        %p162 = pneg %p161
      $region18: #{discriminator_forward.8} parent=5 // pred_check_branch
        %164 = sbr.rel (%p162) target = $region20
      $region19: #{discriminator_forward.8} parent=5 // pred_region
        // Predicated region
        $region21: #{discriminator_forward.8} parent=19 // pred_check
          %p165 = pneg %p50
        $region22: #{discriminator_forward.8} parent=19 // pred_check_branch
          %167 = sbr.rel (%p165) target = $region24
        $region23: #{discriminator_forward.8} parent=19 // pred_region
          %s168 = sand.u32 %s40, 1
          %s169 = sand.u32 %s40, 1
          %s170 = smul.addr %s169, 128
          %s171 = scalar_lea.vmem [#allocation3], %s170
          %s172 = smul.u32 16, %s18
          %s173 = smul.addr %s16, 64
          %s174 = sadd.s32 %s172, %s173
          %s175 = smul.addr %s174, 4
          %s176 = scalar_lea.vmem %s0, %s175
          // Predicated region
          $region25: #{discriminator_forward.8} parent=23 // pred_check
            _
          $region26: #{discriminator_forward.8} parent=23 // pred_check_branch
            %178 = sbr.rel (0) target = $region28
          $region27: #{discriminator_forward.8} parent=23 // pred_region
            // Predicated region
            $region29: #{discriminator_forward.8} parent=27 // pred_check
              _
            $region30: #{discriminator_forward.8} parent=27 // pred_check_branch
              %180 = sbr.rel (0) target = $region32
            $region31: #{discriminator_forward.8} parent=27 // pred_region
              loop: start=0, step=1, limit=1
              $region33: #{discriminator_forward.8} parent=31 // loop_pre_header
                _
              $region34: #{discriminator_forward.8} parent=31 // loop_header
                %s182 = sphi 0, %s186
                %p183 = scmp.ge.s32.totalorder %s182, 1
                %s187 = sphi %s176, %s176
                %s188 = sphi %s171, %s171
              $region35: #{discriminator_forward.8} parent=31 // loop_header_branch
                %185 = sbr.rel (%p183) target = $region39
              $region36: #{discriminator_forward.8} parent=31 // loop_body
                %v189 = vld [vmem:[%s187] sm:$0xff]
                %190 = vst [vmem:[%s188] sm:$0xff] %v189
                %v191 = vld [vmem:[%s187 + $0x8] sm:$0xff]
                %192 = vst [vmem:[%s188 + $0x8] sm:$0xff] %v191
                %v193 = vld [vmem:[%s187 + $0x10] sm:$0xff]
                %194 = vst [vmem:[%s188 + $0x10] sm:$0xff] %v193
                %v195 = vld [vmem:[%s187 + $0x18] sm:$0xff]
                %196 = vst [vmem:[%s188 + $0x18] sm:$0xff] %v195
                %v197 = vld [vmem:[%s187 + $0x20] sm:$0xff]
                %198 = vst [vmem:[%s188 + $0x20] sm:$0xff] %v197
                %v199 = vld [vmem:[%s187 + $0x28] sm:$0xff]
                %200 = vst [vmem:[%s188 + $0x28] sm:$0xff] %v199
                %v201 = vld [vmem:[%s187 + $0x30] sm:$0xff]
                %202 = vst [vmem:[%s188 + $0x30] sm:$0xff] %v201
                %v203 = vld [vmem:[%s187 + $0x38] sm:$0xff]
                %204 = vst [vmem:[%s188 + $0x38] sm:$0xff] %v203
                %v205 = vld [vmem:[%s187 + $0x80] sm:$0xff]
                %206 = vst [vmem:[%s188 + $0x40] sm:$0xff] %v205
                %v207 = vld [vmem:[%s187 + $0x88] sm:$0xff]
                %208 = vst [vmem:[%s188 + $0x48] sm:$0xff] %v207
                %v209 = vld [vmem:[%s187 + $0x90] sm:$0xff]
                %210 = vst [vmem:[%s188 + $0x50] sm:$0xff] %v209
                %v211 = vld [vmem:[%s187 + $0x98] sm:$0xff]
                %212 = vst [vmem:[%s188 + $0x58] sm:$0xff] %v211
                %v213 = vld [vmem:[%s187 + $0xa0] sm:$0xff]
                %214 = vst [vmem:[%s188 + $0x60] sm:$0xff] %v213
                %v215 = vld [vmem:[%s187 + $0xa8] sm:$0xff]
                %216 = vst [vmem:[%s188 + $0x68] sm:$0xff] %v215
                %v217 = vld [vmem:[%s187 + $0xb0] sm:$0xff]
                %218 = vst [vmem:[%s188 + $0x70] sm:$0xff] %v217
                %v219 = vld [vmem:[%s187 + $0xb8] sm:$0xff]
                %220 = vst [vmem:[%s188 + $0x78] sm:$0xff] %v219
              $region37: #{discriminator_forward.8} parent=31 // loop_footer
                %s186 = sadd.s32 1, %s182
              $region38: #{discriminator_forward.8} parent=31 // loop_footer_branch
                %181 = sbr.rel target = $region34
              $region39: #{discriminator_forward.8} parent=31 // loop_exit
                _
            $region32: #{discriminator_forward.8} parent=27 // pred_fallthru
              _
            // Predicated region
            $region40: #{discriminator_forward.8} parent=27 // pred_check
              _
            $region41: #{discriminator_forward.8} parent=27 // pred_check_branch
              %222 = sbr.rel target = $region43
            $region42: #{discriminator_forward.8} parent=27 // pred_region
              _
            $region43: #{discriminator_forward.8} parent=27 // pred_fallthru
              _
          $region28: #{discriminator_forward.8} parent=23 // pred_fallthru
            _
          %223 = vnop
        $region24: #{discriminator_forward.8} parent=19 // pred_fallthru
          _
        // Predicated region
        $region44: #{discriminator_forward.8} parent=19 // pred_check
          %p224 = pneg %p78
        $region45: #{discriminator_forward.8} parent=19 // pred_check_branch
          %226 = sbr.rel (%p224) target = $region47
        $region46: #{discriminator_forward.8} parent=19 // pred_region
          %s227 = smul.u32 256, %s18
          %s228 = smul.u32 4, %s17
          %p229 = scmp.lt.s32.totalorder %s227, 511
          %s230 = scalar_select %p229, %s227, 511
          %p231 = scmp.lt.s32.totalorder %s228, 3
          %s232 = scalar_select %p231, %s228, 3
          %s233 = smul.addr %s230, 4
          %s234 = sadd.s32 %s232, %s233
          %s235 = smul.addr %s234, 4
          %s236 = scalar_lea.vmem %s1, %s235
          %s237 = smul.u32 256, %s18
          %s238 = smul.u32 4, %s17
        $region47: #{discriminator_forward.8} parent=19 // pred_fallthru
          _
      $region20: #{discriminator_forward.8} parent=5 // pred_fallthru
        _
      %p239 = scmp.le.s32.totalorder 1, %s9
      %p240 = scmp.lt.s32.totalorder %s9, 5
      %p241 = pnand %p239, %p240
      %p242 = pneg %p241
      // Predicated region
      $region48: #{discriminator_forward.8} parent=5 // pred_check
        _
      $region49: #{discriminator_forward.8} parent=5 // pred_check_branch
        %244 = sbr.rel (%p241) target = $region51
      $region50: #{discriminator_forward.8} parent=5 // pred_region
        %s245 = ssub.s32 %s9, 1
        %s246 = sand.u32 %s43, 1
        %s247 = sand.u32 %s43, 1
        %s248 = smul.addr %s247, 128
        %s249 = scalar_lea.vmem [#allocation3], %s248
        // Predicated region
        $region52: #{discriminator_forward.8} parent=50 // pred_check
          %p250 = pneg %p56
        $region53: #{discriminator_forward.8} parent=50 // pred_check_branch
          %252 = sbr.rel (%p250) target = $region55
        $region54: #{discriminator_forward.8} parent=50 // pred_region
          _
        $region55: #{discriminator_forward.8} parent=50 // pred_fallthru
          _
        %s253 = sand.u32 %s43, 1
        %s254 = sand.u32 %s43, 1
        %s255 = smul.addr %s254, 128
        %s256 = scalar_lea.vmem [#allocation3], %s255
        %p257 = pneg %p56
        %p258 = pneg %p53
        %s259 = smul.u32 256, %s21
        %s260 = smul.u32 4, %s20
        %p261 = scmp.lt.s32.totalorder %s259, 511
        %s262 = scalar_select %p261, %s259, 511
        %p263 = scmp.lt.s32.totalorder %s260, 3
        %s264 = scalar_select %p263, %s260, 3
        %s265 = smul.addr %s262, 4
        %s266 = sadd.s32 %s264, %s265
        %s267 = smul.addr %s266, 4
        %s268 = scalar_lea.vmem %s1, %s267
        %p269 = pneg %p84
        %p270 = pneg %p81
        %s271 = smul.u32 4, %s20
        %p272 = scmp.lt.s32.totalorder %s271, 3
        %s273 = scalar_select %p272, %s271, 3
        %s274 = scalar_lea.vmem %s2, %s273
        %p275 = pneg %p110
        %p276 = pneg %p107
        %p277 = pneg %p138
        %p278 = pneg %p135
        %s279 = smul.u32 4, %s20
        %p280 = scmp.lt.s32.totalorder %s19, 1
        %s281 = scalar_select %p280, %s19, 1
        %p282 = scmp.lt.s32.totalorder %s279, 3
        %s283 = scalar_select %p282, %s279, 3
        %s284 = smul.addr %s281, 8
        %s285 = sadd.s32 %s283, %s284
        %s286 = smul.addr %s285, 4
        %s287 = scalar_lea.vmem %s3, %s286
        %s288 = smul.u32 16, %s21
        %s289 = smul.u32 256, %s21
        %s290 = smul.u32 4, %s20
        %p291 = scmp.lt.s32.totalorder %s289, 511
        %s292 = scalar_select %p291, %s289, 511
        %p293 = scmp.lt.s32.totalorder %s290, 3
        %s294 = scalar_select %p293, %s290, 3
        %s295 = smul.addr %s292, 4
        %s296 = sadd.s32 %s294, %s295
        %s297 = smul.addr %s296, 4
        %s298 = scalar_lea.vmem %s1, %s297
        %s299 = smul.u32 256, %s21
        %s300 = smul.u32 4, %s20
        %s301 = smul.u32 4, %s20
        %p302 = scmp.lt.s32.totalorder %s301, 3
        %s303 = scalar_select %p302, %s301, 3
        %s304 = scalar_lea.vmem %s2, %s303
        %s305 = smul.u32 4, %s20
        %s306 = smul.u32 4, %s20
        %p307 = scmp.lt.s32.totalorder %s19, 1
        %s308 = scalar_select %p307, %s19, 1
        %p309 = scmp.lt.s32.totalorder %s306, 3
        %s310 = scalar_select %p309, %s306, 3
        %s311 = smul.addr %s308, 8
        %s312 = sadd.s32 %s310, %s311
        %s313 = smul.addr %s312, 4
        %s314 = scalar_lea.vmem %s3, %s313
        %s315 = smul.u32 4, %s20
        %p316 = scmp.eq.s32.totalorder %s21, 0
        // Predicated region
        $region56: #{discriminator_forward.8} parent=50 // pred_check
          %p317 = pneg %p316
        $region57: #{discriminator_forward.8} parent=50 // pred_check_branch
          %319 = sbr.rel (%p317) target = $region59
        $region58: #{discriminator_forward.8} parent=50 // pred_region
          %320 = vst [vmem:[#allocation2] sm:$0xff] 0.0
          %321 = vst [vmem:[#allocation2 + $0x8] sm:$0xff] 0.0
          %322 = vst [vmem:[#allocation2 + $0x10] sm:$0xff] 0.0
          %323 = vst [vmem:[#allocation2 + $0x18] sm:$0xff] 0.0
          %324 = vst [vmem:[#allocation2 + $0x20] sm:$0x1] 0.0
          %325 = vst [vmem:[#allocation2 + $0x28] sm:$0x1] 0.0
          %326 = vst [vmem:[#allocation2 + $0x30] sm:$0x1] 0.0
          %327 = vst [vmem:[#allocation2 + $0x38] sm:$0x1] 0.0
        $region59: #{discriminator_forward.8} parent=50 // pred_fallthru
          _
        %v328 = vld [vmem:[#allocation2] sm:$0xff]
        %v329 = vld [vmem:[#allocation2 + $0x8] sm:$0xff]
        %v330 = vld [vmem:[#allocation2 + $0x10] sm:$0xff]
        %v331 = vld [vmem:[#allocation2 + $0x18] sm:$0xff]
        %v332 = vld [vmem:[#allocation2 + $0x20] sm:$0x1]
        %v333 = vld [vmem:[#allocation2 + $0x28] sm:$0x1]
        %v334 = vld [vmem:[#allocation2 + $0x30] sm:$0x1]
        %v335 = vld [vmem:[#allocation2 + $0x38] sm:$0x1]
        %v336 = vld [vmem:[%s249] sm:$0xff]
        %v337 = vld [vmem:[%s249 + $0x8] sm:$0xff]
        %v338 = vld [vmem:[%s249 + $0x10] sm:$0xff]
        %v339 = vld [vmem:[%s249 + $0x18] sm:$0xff]
        %v340 = vld [vmem:[%s249 + $0x20] sm:$0xff]
        %v341 = vld [vmem:[%s249 + $0x28] sm:$0xff]
        %v342 = vld [vmem:[%s249 + $0x30] sm:$0xff]
        %v343 = vld [vmem:[%s249 + $0x38] sm:$0xff]
        %v344 = vld [vmem:[%s249 + $0x40] sm:$0x11]
        %v345 = vld [vmem:[%s249 + $0x48] sm:$0x11]
        %v346 = vld [vmem:[%s249 + $0x50] sm:$0x11]
        %v347 = vld [vmem:[%s249 + $0x58] sm:$0x11]
        %v348 = vld [vmem:[%s249 + $0x60] sm:$0x11]
        %v349 = vld [vmem:[%s249 + $0x68] sm:$0x11]
        %v350 = vld [vmem:[%s249 + $0x70] sm:$0x11]
        %v351 = vld [vmem:[%s249 + $0x78] sm:$0x11]
        %v352 = vld [vmem:[%s298] sm:$0xff]
        %v353 = vld [vmem:[%s298 + $0x8] sm:$0xff]
        %v354 = vld [vmem:[%s298 + $0x10] sm:$0xff]
        %v355 = vld [vmem:[%s298 + $0x18] sm:$0xff]
        %v356 = vld [vmem:[%s298 + $0x20] sm:$0xff]
        %v357 = vld [vmem:[%s298 + $0x28] sm:$0xff]
        %v358 = vld [vmem:[%s298 + $0x30] sm:$0xff]
        %v359 = vld [vmem:[%s298 + $0x38] sm:$0xff]
        %v360 = vld [vmem:[%s298 + $0x40] sm:$0xff]
        %v361 = vld [vmem:[%s298 + $0x48] sm:$0xff]
        %v362 = vld [vmem:[%s298 + $0x50] sm:$0xff]
        %v363 = vld [vmem:[%s298 + $0x58] sm:$0xff]
        %v364 = vld [vmem:[%s298 + $0x60] sm:$0xff]
        %v365 = vld [vmem:[%s298 + $0x68] sm:$0xff]
        %v366 = vld [vmem:[%s298 + $0x70] sm:$0xff]
        %v367 = vld [vmem:[%s298 + $0x78] sm:$0xff]
        %v368 = vld [vmem:[%s298 + $0x80] sm:$0xff]
        %v369 = vld [vmem:[%s298 + $0x88] sm:$0xff]
        %v370 = vld [vmem:[%s298 + $0x90] sm:$0xff]
        %v371 = vld [vmem:[%s298 + $0x98] sm:$0xff]
        %v372 = vld [vmem:[%s298 + $0xa0] sm:$0xff]
        %v373 = vld [vmem:[%s298 + $0xa8] sm:$0xff]
        %v374 = vld [vmem:[%s298 + $0xb0] sm:$0xff]
        %v375 = vld [vmem:[%s298 + $0xb8] sm:$0xff]
        %v376 = vld [vmem:[%s298 + $0xc0] sm:$0xff]
        %v377 = vld [vmem:[%s298 + $0xc8] sm:$0xff]
        %v378 = vld [vmem:[%s298 + $0xd0] sm:$0xff]
        %v379 = vld [vmem:[%s298 + $0xd8] sm:$0xff]
        %v380 = vld [vmem:[%s298 + $0xe0] sm:$0xff]
        %v381 = vld [vmem:[%s298 + $0xe8] sm:$0xff]
        %v382 = vld [vmem:[%s298 + $0xf0] sm:$0xff]
        %v383 = vld [vmem:[%s298 + $0xf8] sm:$0xff]
        %v384 = vld [vmem:[%s298 + $0x100] sm:$0xff]
        %v385 = vld [vmem:[%s298 + $0x108] sm:$0xff]
        %v386 = vld [vmem:[%s298 + $0x110] sm:$0xff]
        %v387 = vld [vmem:[%s298 + $0x118] sm:$0xff]
        %v388 = vld [vmem:[%s298 + $0x120] sm:$0xff]
        %v389 = vld [vmem:[%s298 + $0x128] sm:$0xff]
        %v390 = vld [vmem:[%s298 + $0x130] sm:$0xff]
        %v391 = vld [vmem:[%s298 + $0x138] sm:$0xff]
        %v392 = vld [vmem:[%s298 + $0x140] sm:$0xff]
        %v393 = vld [vmem:[%s298 + $0x148] sm:$0xff]
        %v394 = vld [vmem:[%s298 + $0x150] sm:$0xff]
        %v395 = vld [vmem:[%s298 + $0x158] sm:$0xff]
        %v396 = vld [vmem:[%s298 + $0x160] sm:$0xff]
        %v397 = vld [vmem:[%s298 + $0x168] sm:$0xff]
        %v398 = vld [vmem:[%s298 + $0x170] sm:$0xff]
        %v399 = vld [vmem:[%s298 + $0x178] sm:$0xff]
        %v400 = vld [vmem:[%s298 + $0x180] sm:$0xff]
        %v401 = vld [vmem:[%s298 + $0x188] sm:$0xff]
        %v402 = vld [vmem:[%s298 + $0x190] sm:$0xff]
        %v403 = vld [vmem:[%s298 + $0x198] sm:$0xff]
        %v404 = vld [vmem:[%s298 + $0x1a0] sm:$0xff]
        %v405 = vld [vmem:[%s298 + $0x1a8] sm:$0xff]
        %v406 = vld [vmem:[%s298 + $0x1b0] sm:$0xff]
        %v407 = vld [vmem:[%s298 + $0x1b8] sm:$0xff]
        %v408 = vld [vmem:[%s298 + $0x1c0] sm:$0xff]
        %v409 = vld [vmem:[%s298 + $0x1c8] sm:$0xff]
        %v410 = vld [vmem:[%s298 + $0x1d0] sm:$0xff]
        %v411 = vld [vmem:[%s298 + $0x1d8] sm:$0xff]
        %v412 = vld [vmem:[%s298 + $0x1e0] sm:$0xff]
        %v413 = vld [vmem:[%s298 + $0x1e8] sm:$0xff]
        %v414 = vld [vmem:[%s298 + $0x1f0] sm:$0xff]
        %v415 = vld [vmem:[%s298 + $0x1f8] sm:$0xff]
        %v416 = vld [vmem:[%s298 + $0x200] sm:$0xff]
        %v417 = vld [vmem:[%s298 + $0x208] sm:$0xff]
        %v418 = vld [vmem:[%s298 + $0x210] sm:$0xff]
        %v419 = vld [vmem:[%s298 + $0x218] sm:$0xff]
        %v420 = vld [vmem:[%s298 + $0x220] sm:$0xff]
        %v421 = vld [vmem:[%s298 + $0x228] sm:$0xff]
        %v422 = vld [vmem:[%s298 + $0x230] sm:$0xff]
        %v423 = vld [vmem:[%s298 + $0x238] sm:$0xff]
        %v424 = vld [vmem:[%s298 + $0x240] sm:$0xff]
        %v425 = vld [vmem:[%s298 + $0x248] sm:$0xff]
        %v426 = vld [vmem:[%s298 + $0x250] sm:$0xff]
        %v427 = vld [vmem:[%s298 + $0x258] sm:$0xff]
        %v428 = vld [vmem:[%s298 + $0x260] sm:$0xff]
        %v429 = vld [vmem:[%s298 + $0x268] sm:$0xff]
        %v430 = vld [vmem:[%s298 + $0x270] sm:$0xff]
        %v431 = vld [vmem:[%s298 + $0x278] sm:$0xff]
        %v432 = vld [vmem:[%s298 + $0x280] sm:$0xff]
        %v433 = vld [vmem:[%s298 + $0x288] sm:$0xff]
        %v434 = vld [vmem:[%s298 + $0x290] sm:$0xff]
        %v435 = vld [vmem:[%s298 + $0x298] sm:$0xff]
        %v436 = vld [vmem:[%s298 + $0x2a0] sm:$0xff]
        %v437 = vld [vmem:[%s298 + $0x2a8] sm:$0xff]
        %v438 = vld [vmem:[%s298 + $0x2b0] sm:$0xff]
        %v439 = vld [vmem:[%s298 + $0x2b8] sm:$0xff]
        %v440 = vld [vmem:[%s298 + $0x2c0] sm:$0xff]
        %v441 = vld [vmem:[%s298 + $0x2c8] sm:$0xff]
        %v442 = vld [vmem:[%s298 + $0x2d0] sm:$0xff]
        %v443 = vld [vmem:[%s298 + $0x2d8] sm:$0xff]
        %v444 = vld [vmem:[%s298 + $0x2e0] sm:$0xff]
        %v445 = vld [vmem:[%s298 + $0x2e8] sm:$0xff]
        %v446 = vld [vmem:[%s298 + $0x2f0] sm:$0xff]
        %v447 = vld [vmem:[%s298 + $0x2f8] sm:$0xff]
        %v448 = vld [vmem:[%s298 + $0x300] sm:$0xff]
        %v449 = vld [vmem:[%s298 + $0x308] sm:$0xff]
        %v450 = vld [vmem:[%s298 + $0x310] sm:$0xff]
        %v451 = vld [vmem:[%s298 + $0x318] sm:$0xff]
        %v452 = vld [vmem:[%s298 + $0x320] sm:$0xff]
        %v453 = vld [vmem:[%s298 + $0x328] sm:$0xff]
        %v454 = vld [vmem:[%s298 + $0x330] sm:$0xff]
        %v455 = vld [vmem:[%s298 + $0x338] sm:$0xff]
        %v456 = vld [vmem:[%s298 + $0x340] sm:$0xff]
        %v457 = vld [vmem:[%s298 + $0x348] sm:$0xff]
        %v458 = vld [vmem:[%s298 + $0x350] sm:$0xff]
        %v459 = vld [vmem:[%s298 + $0x358] sm:$0xff]
        %v460 = vld [vmem:[%s298 + $0x360] sm:$0xff]
        %v461 = vld [vmem:[%s298 + $0x368] sm:$0xff]
        %v462 = vld [vmem:[%s298 + $0x370] sm:$0xff]
        %v463 = vld [vmem:[%s298 + $0x378] sm:$0xff]
        %v464 = vld [vmem:[%s298 + $0x380] sm:$0xff]
        %v465 = vld [vmem:[%s298 + $0x388] sm:$0xff]
        %v466 = vld [vmem:[%s298 + $0x390] sm:$0xff]
        %v467 = vld [vmem:[%s298 + $0x398] sm:$0xff]
        %v468 = vld [vmem:[%s298 + $0x3a0] sm:$0xff]
        %v469 = vld [vmem:[%s298 + $0x3a8] sm:$0xff]
        %v470 = vld [vmem:[%s298 + $0x3b0] sm:$0xff]
        %v471 = vld [vmem:[%s298 + $0x3b8] sm:$0xff]
        %v472 = vld [vmem:[%s298 + $0x3c0] sm:$0xff]
        %v473 = vld [vmem:[%s298 + $0x3c8] sm:$0xff]
        %v474 = vld [vmem:[%s298 + $0x3d0] sm:$0xff]
        %v475 = vld [vmem:[%s298 + $0x3d8] sm:$0xff]
        %v476 = vld [vmem:[%s298 + $0x3e0] sm:$0xff]
        %v477 = vld [vmem:[%s298 + $0x3e8] sm:$0xff]
        %v478 = vld [vmem:[%s298 + $0x3f0] sm:$0xff]
        %v479 = vld [vmem:[%s298 + $0x3f8] sm:$0xff]
        %v480 = vld [vmem:[%s298 + $0x400] sm:$0xff]
        %v481 = vld [vmem:[%s298 + $0x408] sm:$0xff]
        %v482 = vld [vmem:[%s298 + $0x410] sm:$0xff]
        %v483 = vld [vmem:[%s298 + $0x418] sm:$0xff]
        %v484 = vld [vmem:[%s298 + $0x420] sm:$0xff]
        %v485 = vld [vmem:[%s298 + $0x428] sm:$0xff]
        %v486 = vld [vmem:[%s298 + $0x430] sm:$0xff]
        %v487 = vld [vmem:[%s298 + $0x438] sm:$0xff]
        %v488 = vld [vmem:[%s298 + $0x440] sm:$0xff]
        %v489 = vld [vmem:[%s298 + $0x448] sm:$0xff]
        %v490 = vld [vmem:[%s298 + $0x450] sm:$0xff]
        %v491 = vld [vmem:[%s298 + $0x458] sm:$0xff]
        %v492 = vld [vmem:[%s298 + $0x460] sm:$0xff]
        %v493 = vld [vmem:[%s298 + $0x468] sm:$0xff]
        %v494 = vld [vmem:[%s298 + $0x470] sm:$0xff]
        %v495 = vld [vmem:[%s298 + $0x478] sm:$0xff]
        %v496 = vld [vmem:[%s298 + $0x480] sm:$0xff]
        %v497 = vld [vmem:[%s298 + $0x488] sm:$0xff]
        %v498 = vld [vmem:[%s298 + $0x490] sm:$0xff]
        %v499 = vld [vmem:[%s298 + $0x498] sm:$0xff]
        %v500 = vld [vmem:[%s298 + $0x4a0] sm:$0xff]
        %v501 = vld [vmem:[%s298 + $0x4a8] sm:$0xff]
        %v502 = vld [vmem:[%s298 + $0x4b0] sm:$0xff]
        %v503 = vld [vmem:[%s298 + $0x4b8] sm:$0xff]
        %v504 = vld [vmem:[%s298 + $0x4c0] sm:$0xff]
        %v505 = vld [vmem:[%s298 + $0x4c8] sm:$0xff]
        %v506 = vld [vmem:[%s298 + $0x4d0] sm:$0xff]
        %v507 = vld [vmem:[%s298 + $0x4d8] sm:$0xff]
        %v508 = vld [vmem:[%s298 + $0x4e0] sm:$0xff]
        %v509 = vld [vmem:[%s298 + $0x4e8] sm:$0xff]
        %v510 = vld [vmem:[%s298 + $0x4f0] sm:$0xff]
        %v511 = vld [vmem:[%s298 + $0x4f8] sm:$0xff]
        %v512 = vld [vmem:[%s298 + $0x500] sm:$0xff]
        %v513 = vld [vmem:[%s298 + $0x508] sm:$0xff]
        %v514 = vld [vmem:[%s298 + $0x510] sm:$0xff]
        %v515 = vld [vmem:[%s298 + $0x518] sm:$0xff]
        %v516 = vld [vmem:[%s298 + $0x520] sm:$0xff]
        %v517 = vld [vmem:[%s298 + $0x528] sm:$0xff]
        %v518 = vld [vmem:[%s298 + $0x530] sm:$0xff]
        %v519 = vld [vmem:[%s298 + $0x538] sm:$0xff]
        %v520 = vld [vmem:[%s298 + $0x540] sm:$0xff]
        %v521 = vld [vmem:[%s298 + $0x548] sm:$0xff]
        %v522 = vld [vmem:[%s298 + $0x550] sm:$0xff]
        %v523 = vld [vmem:[%s298 + $0x558] sm:$0xff]
        %v524 = vld [vmem:[%s298 + $0x560] sm:$0xff]
        %v525 = vld [vmem:[%s298 + $0x568] sm:$0xff]
        %v526 = vld [vmem:[%s298 + $0x570] sm:$0xff]
        %v527 = vld [vmem:[%s298 + $0x578] sm:$0xff]
        %v528 = vld [vmem:[%s298 + $0x580] sm:$0xff]
        %v529 = vld [vmem:[%s298 + $0x588] sm:$0xff]
        %v530 = vld [vmem:[%s298 + $0x590] sm:$0xff]
        %v531 = vld [vmem:[%s298 + $0x598] sm:$0xff]
        %v532 = vld [vmem:[%s298 + $0x5a0] sm:$0xff]
        %v533 = vld [vmem:[%s298 + $0x5a8] sm:$0xff]
        %v534 = vld [vmem:[%s298 + $0x5b0] sm:$0xff]
        %v535 = vld [vmem:[%s298 + $0x5b8] sm:$0xff]
        %v536 = vld [vmem:[%s298 + $0x5c0] sm:$0xff]
        %v537 = vld [vmem:[%s298 + $0x5c8] sm:$0xff]
        %v538 = vld [vmem:[%s298 + $0x5d0] sm:$0xff]
        %v539 = vld [vmem:[%s298 + $0x5d8] sm:$0xff]
        %v540 = vld [vmem:[%s298 + $0x5e0] sm:$0xff]
        %v541 = vld [vmem:[%s298 + $0x5e8] sm:$0xff]
        %v542 = vld [vmem:[%s298 + $0x5f0] sm:$0xff]
        %v543 = vld [vmem:[%s298 + $0x5f8] sm:$0xff]
        %v544 = vld [vmem:[%s298 + $0x600] sm:$0xff]
        %v545 = vld [vmem:[%s298 + $0x608] sm:$0xff]
        %v546 = vld [vmem:[%s298 + $0x610] sm:$0xff]
        %v547 = vld [vmem:[%s298 + $0x618] sm:$0xff]
        %v548 = vld [vmem:[%s298 + $0x620] sm:$0xff]
        %v549 = vld [vmem:[%s298 + $0x628] sm:$0xff]
        %v550 = vld [vmem:[%s298 + $0x630] sm:$0xff]
        %v551 = vld [vmem:[%s298 + $0x638] sm:$0xff]
        %v552 = vld [vmem:[%s298 + $0x640] sm:$0xff]
        %v553 = vld [vmem:[%s298 + $0x648] sm:$0xff]
        %v554 = vld [vmem:[%s298 + $0x650] sm:$0xff]
        %v555 = vld [vmem:[%s298 + $0x658] sm:$0xff]
        %v556 = vld [vmem:[%s298 + $0x660] sm:$0xff]
        %v557 = vld [vmem:[%s298 + $0x668] sm:$0xff]
        %v558 = vld [vmem:[%s298 + $0x670] sm:$0xff]
        %v559 = vld [vmem:[%s298 + $0x678] sm:$0xff]
        %v560 = vld [vmem:[%s298 + $0x680] sm:$0xff]
        %v561 = vld [vmem:[%s298 + $0x688] sm:$0xff]
        %v562 = vld [vmem:[%s298 + $0x690] sm:$0xff]
        %v563 = vld [vmem:[%s298 + $0x698] sm:$0xff]
        %v564 = vld [vmem:[%s298 + $0x6a0] sm:$0xff]
        %v565 = vld [vmem:[%s298 + $0x6a8] sm:$0xff]
        %v566 = vld [vmem:[%s298 + $0x6b0] sm:$0xff]
        %v567 = vld [vmem:[%s298 + $0x6b8] sm:$0xff]
        %v568 = vld [vmem:[%s298 + $0x6c0] sm:$0xff]
        %v569 = vld [vmem:[%s298 + $0x6c8] sm:$0xff]
        %v570 = vld [vmem:[%s298 + $0x6d0] sm:$0xff]
        %v571 = vld [vmem:[%s298 + $0x6d8] sm:$0xff]
        %v572 = vld [vmem:[%s298 + $0x6e0] sm:$0xff]
        %v573 = vld [vmem:[%s298 + $0x6e8] sm:$0xff]
        %v574 = vld [vmem:[%s298 + $0x6f0] sm:$0xff]
        %v575 = vld [vmem:[%s298 + $0x6f8] sm:$0xff]
        %v576 = vld [vmem:[%s298 + $0x700] sm:$0xff]
        %v577 = vld [vmem:[%s298 + $0x708] sm:$0xff]
        %v578 = vld [vmem:[%s298 + $0x710] sm:$0xff]
        %v579 = vld [vmem:[%s298 + $0x718] sm:$0xff]
        %v580 = vld [vmem:[%s298 + $0x720] sm:$0xff]
        %v581 = vld [vmem:[%s298 + $0x728] sm:$0xff]
        %v582 = vld [vmem:[%s298 + $0x730] sm:$0xff]
        %v583 = vld [vmem:[%s298 + $0x738] sm:$0xff]
        %v584 = vld [vmem:[%s298 + $0x740] sm:$0xff]
        %v585 = vld [vmem:[%s298 + $0x748] sm:$0xff]
        %v586 = vld [vmem:[%s298 + $0x750] sm:$0xff]
        %v587 = vld [vmem:[%s298 + $0x758] sm:$0xff]
        %v588 = vld [vmem:[%s298 + $0x760] sm:$0xff]
        %v589 = vld [vmem:[%s298 + $0x768] sm:$0xff]
        %v590 = vld [vmem:[%s298 + $0x770] sm:$0xff]
        %v591 = vld [vmem:[%s298 + $0x778] sm:$0xff]
        %v592 = vld [vmem:[%s298 + $0x780] sm:$0xff]
        %v593 = vld [vmem:[%s298 + $0x788] sm:$0xff]
        %v594 = vld [vmem:[%s298 + $0x790] sm:$0xff]
        %v595 = vld [vmem:[%s298 + $0x798] sm:$0xff]
        %v596 = vld [vmem:[%s298 + $0x7a0] sm:$0xff]
        %v597 = vld [vmem:[%s298 + $0x7a8] sm:$0xff]
        %v598 = vld [vmem:[%s298 + $0x7b0] sm:$0xff]
        %v599 = vld [vmem:[%s298 + $0x7b8] sm:$0xff]
        %v600 = vld [vmem:[%s298 + $0x7c0] sm:$0xff]
        %v601 = vld [vmem:[%s298 + $0x7c8] sm:$0xff]
        %v602 = vld [vmem:[%s298 + $0x7d0] sm:$0xff]
        %v603 = vld [vmem:[%s298 + $0x7d8] sm:$0xff]
        %v604 = vld [vmem:[%s298 + $0x7e0] sm:$0xff]
        %v605 = vld [vmem:[%s298 + $0x7e8] sm:$0xff]
        %v606 = vld [vmem:[%s298 + $0x7f0] sm:$0xff]
        %v607 = vld [vmem:[%s298 + $0x7f8] sm:$0xff]
        %v608 = vld [vmem:[%s298 + $0x800] sm:$0xff]
        %v609 = vld [vmem:[%s298 + $0x808] sm:$0xff]
        %v610 = vld [vmem:[%s298 + $0x810] sm:$0xff]
        %v611 = vld [vmem:[%s298 + $0x818] sm:$0xff]
        %v612 = vld [vmem:[%s298 + $0x820] sm:$0xff]
        %v613 = vld [vmem:[%s298 + $0x828] sm:$0xff]
        %v614 = vld [vmem:[%s298 + $0x830] sm:$0xff]
        %v615 = vld [vmem:[%s298 + $0x838] sm:$0xff]
        %v616 = vld [vmem:[%s298 + $0x840] sm:$0xff]
        %v617 = vld [vmem:[%s298 + $0x848] sm:$0xff]
        %v618 = vld [vmem:[%s298 + $0x850] sm:$0xff]
        %v619 = vld [vmem:[%s298 + $0x858] sm:$0xff]
        %v620 = vld [vmem:[%s298 + $0x860] sm:$0xff]
        %v621 = vld [vmem:[%s298 + $0x868] sm:$0xff]
        %v622 = vld [vmem:[%s298 + $0x870] sm:$0xff]
        %v623 = vld [vmem:[%s298 + $0x878] sm:$0xff]
        %v624 = vld [vmem:[%s298 + $0x880] sm:$0xff]
        %v625 = vld [vmem:[%s298 + $0x888] sm:$0xff]
        %v626 = vld [vmem:[%s298 + $0x890] sm:$0xff]
        %v627 = vld [vmem:[%s298 + $0x898] sm:$0xff]
        %v628 = vld [vmem:[%s298 + $0x8a0] sm:$0xff]
        %v629 = vld [vmem:[%s298 + $0x8a8] sm:$0xff]
        %v630 = vld [vmem:[%s298 + $0x8b0] sm:$0xff]
        %v631 = vld [vmem:[%s298 + $0x8b8] sm:$0xff]
        %v632 = vld [vmem:[%s298 + $0x8c0] sm:$0xff]
        %v633 = vld [vmem:[%s298 + $0x8c8] sm:$0xff]
        %v634 = vld [vmem:[%s298 + $0x8d0] sm:$0xff]
        %v635 = vld [vmem:[%s298 + $0x8d8] sm:$0xff]
        %v636 = vld [vmem:[%s298 + $0x8e0] sm:$0xff]
        %v637 = vld [vmem:[%s298 + $0x8e8] sm:$0xff]
        %v638 = vld [vmem:[%s298 + $0x8f0] sm:$0xff]
        %v639 = vld [vmem:[%s298 + $0x8f8] sm:$0xff]
        %v640 = vld [vmem:[%s298 + $0x900] sm:$0xff]
        %v641 = vld [vmem:[%s298 + $0x908] sm:$0xff]
        %v642 = vld [vmem:[%s298 + $0x910] sm:$0xff]
        %v643 = vld [vmem:[%s298 + $0x918] sm:$0xff]
        %v644 = vld [vmem:[%s298 + $0x920] sm:$0xff]
        %v645 = vld [vmem:[%s298 + $0x928] sm:$0xff]
        %v646 = vld [vmem:[%s298 + $0x930] sm:$0xff]
        %v647 = vld [vmem:[%s298 + $0x938] sm:$0xff]
        %v648 = vld [vmem:[%s298 + $0x940] sm:$0xff]
        %v649 = vld [vmem:[%s298 + $0x948] sm:$0xff]
        %v650 = vld [vmem:[%s298 + $0x950] sm:$0xff]
        %v651 = vld [vmem:[%s298 + $0x958] sm:$0xff]
        %v652 = vld [vmem:[%s298 + $0x960] sm:$0xff]
        %v653 = vld [vmem:[%s298 + $0x968] sm:$0xff]
        %v654 = vld [vmem:[%s298 + $0x970] sm:$0xff]
        %v655 = vld [vmem:[%s298 + $0x978] sm:$0xff]
        %v656 = vld [vmem:[%s298 + $0x980] sm:$0xff]
        %v657 = vld [vmem:[%s298 + $0x988] sm:$0xff]
        %v658 = vld [vmem:[%s298 + $0x990] sm:$0xff]
        %v659 = vld [vmem:[%s298 + $0x998] sm:$0xff]
        %v660 = vld [vmem:[%s298 + $0x9a0] sm:$0xff]
        %v661 = vld [vmem:[%s298 + $0x9a8] sm:$0xff]
        %v662 = vld [vmem:[%s298 + $0x9b0] sm:$0xff]
        %v663 = vld [vmem:[%s298 + $0x9b8] sm:$0xff]
        %v664 = vld [vmem:[%s298 + $0x9c0] sm:$0xff]
        %v665 = vld [vmem:[%s298 + $0x9c8] sm:$0xff]
        %v666 = vld [vmem:[%s298 + $0x9d0] sm:$0xff]
        %v667 = vld [vmem:[%s298 + $0x9d8] sm:$0xff]
        %v668 = vld [vmem:[%s298 + $0x9e0] sm:$0xff]
        %v669 = vld [vmem:[%s298 + $0x9e8] sm:$0xff]
        %v670 = vld [vmem:[%s298 + $0x9f0] sm:$0xff]
        %v671 = vld [vmem:[%s298 + $0x9f8] sm:$0xff]
        %v672 = vld [vmem:[%s298 + $0xa00] sm:$0xff]
        %v673 = vld [vmem:[%s298 + $0xa08] sm:$0xff]
        %v674 = vld [vmem:[%s298 + $0xa10] sm:$0xff]
        %v675 = vld [vmem:[%s298 + $0xa18] sm:$0xff]
        %v676 = vld [vmem:[%s298 + $0xa20] sm:$0xff]
        %v677 = vld [vmem:[%s298 + $0xa28] sm:$0xff]
        %v678 = vld [vmem:[%s298 + $0xa30] sm:$0xff]
        %v679 = vld [vmem:[%s298 + $0xa38] sm:$0xff]
        %v680 = vld [vmem:[%s298 + $0xa40] sm:$0xff]
        %v681 = vld [vmem:[%s298 + $0xa48] sm:$0xff]
        %v682 = vld [vmem:[%s298 + $0xa50] sm:$0xff]
        %v683 = vld [vmem:[%s298 + $0xa58] sm:$0xff]
        %v684 = vld [vmem:[%s298 + $0xa60] sm:$0xff]
        %v685 = vld [vmem:[%s298 + $0xa68] sm:$0xff]
        %v686 = vld [vmem:[%s298 + $0xa70] sm:$0xff]
        %v687 = vld [vmem:[%s298 + $0xa78] sm:$0xff]
        %v688 = vld [vmem:[%s298 + $0xa80] sm:$0xff]
        %v689 = vld [vmem:[%s298 + $0xa88] sm:$0xff]
        %v690 = vld [vmem:[%s298 + $0xa90] sm:$0xff]
        %v691 = vld [vmem:[%s298 + $0xa98] sm:$0xff]
        %v692 = vld [vmem:[%s298 + $0xaa0] sm:$0xff]
        %v693 = vld [vmem:[%s298 + $0xaa8] sm:$0xff]
        %v694 = vld [vmem:[%s298 + $0xab0] sm:$0xff]
        %v695 = vld [vmem:[%s298 + $0xab8] sm:$0xff]
        %v696 = vld [vmem:[%s298 + $0xac0] sm:$0xff]
        %v697 = vld [vmem:[%s298 + $0xac8] sm:$0xff]
        %v698 = vld [vmem:[%s298 + $0xad0] sm:$0xff]
        %v699 = vld [vmem:[%s298 + $0xad8] sm:$0xff]
        %v700 = vld [vmem:[%s298 + $0xae0] sm:$0xff]
        %v701 = vld [vmem:[%s298 + $0xae8] sm:$0xff]
        %v702 = vld [vmem:[%s298 + $0xaf0] sm:$0xff]
        %v703 = vld [vmem:[%s298 + $0xaf8] sm:$0xff]
        %v704 = vld [vmem:[%s298 + $0xb00] sm:$0xff]
        %v705 = vld [vmem:[%s298 + $0xb08] sm:$0xff]
        %v706 = vld [vmem:[%s298 + $0xb10] sm:$0xff]
        %v707 = vld [vmem:[%s298 + $0xb18] sm:$0xff]
        %v708 = vld [vmem:[%s298 + $0xb20] sm:$0xff]
        %v709 = vld [vmem:[%s298 + $0xb28] sm:$0xff]
        %v710 = vld [vmem:[%s298 + $0xb30] sm:$0xff]
        %v711 = vld [vmem:[%s298 + $0xb38] sm:$0xff]
        %v712 = vld [vmem:[%s298 + $0xb40] sm:$0xff]
        %v713 = vld [vmem:[%s298 + $0xb48] sm:$0xff]
        %v714 = vld [vmem:[%s298 + $0xb50] sm:$0xff]
        %v715 = vld [vmem:[%s298 + $0xb58] sm:$0xff]
        %v716 = vld [vmem:[%s298 + $0xb60] sm:$0xff]
        %v717 = vld [vmem:[%s298 + $0xb68] sm:$0xff]
        %v718 = vld [vmem:[%s298 + $0xb70] sm:$0xff]
        %v719 = vld [vmem:[%s298 + $0xb78] sm:$0xff]
        %v720 = vld [vmem:[%s298 + $0xb80] sm:$0xff]
        %v721 = vld [vmem:[%s298 + $0xb88] sm:$0xff]
        %v722 = vld [vmem:[%s298 + $0xb90] sm:$0xff]
        %v723 = vld [vmem:[%s298 + $0xb98] sm:$0xff]
        %v724 = vld [vmem:[%s298 + $0xba0] sm:$0xff]
        %v725 = vld [vmem:[%s298 + $0xba8] sm:$0xff]
        %v726 = vld [vmem:[%s298 + $0xbb0] sm:$0xff]
        %v727 = vld [vmem:[%s298 + $0xbb8] sm:$0xff]
        %v728 = vld [vmem:[%s298 + $0xbc0] sm:$0xff]
        %v729 = vld [vmem:[%s298 + $0xbc8] sm:$0xff]
        %v730 = vld [vmem:[%s298 + $0xbd0] sm:$0xff]
        %v731 = vld [vmem:[%s298 + $0xbd8] sm:$0xff]
        %v732 = vld [vmem:[%s298 + $0xbe0] sm:$0xff]
        %v733 = vld [vmem:[%s298 + $0xbe8] sm:$0xff]
        %v734 = vld [vmem:[%s298 + $0xbf0] sm:$0xff]
        %v735 = vld [vmem:[%s298 + $0xbf8] sm:$0xff]
        %v736 = vld [vmem:[%s298 + $0xc00] sm:$0xff]
        %v737 = vld [vmem:[%s298 + $0xc08] sm:$0xff]
        %v738 = vld [vmem:[%s298 + $0xc10] sm:$0xff]
        %v739 = vld [vmem:[%s298 + $0xc18] sm:$0xff]
        %v740 = vld [vmem:[%s298 + $0xc20] sm:$0xff]
        %v741 = vld [vmem:[%s298 + $0xc28] sm:$0xff]
        %v742 = vld [vmem:[%s298 + $0xc30] sm:$0xff]
        %v743 = vld [vmem:[%s298 + $0xc38] sm:$0xff]
        %v744 = vld [vmem:[%s298 + $0xc40] sm:$0xff]
        %v745 = vld [vmem:[%s298 + $0xc48] sm:$0xff]
        %v746 = vld [vmem:[%s298 + $0xc50] sm:$0xff]
        %v747 = vld [vmem:[%s298 + $0xc58] sm:$0xff]
        %v748 = vld [vmem:[%s298 + $0xc60] sm:$0xff]
        %v749 = vld [vmem:[%s298 + $0xc68] sm:$0xff]
        %v750 = vld [vmem:[%s298 + $0xc70] sm:$0xff]
        %v751 = vld [vmem:[%s298 + $0xc78] sm:$0xff]
        %v752 = vld [vmem:[%s298 + $0xc80] sm:$0xff]
        %v753 = vld [vmem:[%s298 + $0xc88] sm:$0xff]
        %v754 = vld [vmem:[%s298 + $0xc90] sm:$0xff]
        %v755 = vld [vmem:[%s298 + $0xc98] sm:$0xff]
        %v756 = vld [vmem:[%s298 + $0xca0] sm:$0xff]
        %v757 = vld [vmem:[%s298 + $0xca8] sm:$0xff]
        %v758 = vld [vmem:[%s298 + $0xcb0] sm:$0xff]
        %v759 = vld [vmem:[%s298 + $0xcb8] sm:$0xff]
        %v760 = vld [vmem:[%s298 + $0xcc0] sm:$0xff]
        %v761 = vld [vmem:[%s298 + $0xcc8] sm:$0xff]
        %v762 = vld [vmem:[%s298 + $0xcd0] sm:$0xff]
        %v763 = vld [vmem:[%s298 + $0xcd8] sm:$0xff]
        %v764 = vld [vmem:[%s298 + $0xce0] sm:$0xff]
        %v765 = vld [vmem:[%s298 + $0xce8] sm:$0xff]
        %v766 = vld [vmem:[%s298 + $0xcf0] sm:$0xff]
        %v767 = vld [vmem:[%s298 + $0xcf8] sm:$0xff]
        %v768 = vld [vmem:[%s298 + $0xd00] sm:$0xff]
        %v769 = vld [vmem:[%s298 + $0xd08] sm:$0xff]
        %v770 = vld [vmem:[%s298 + $0xd10] sm:$0xff]
        %v771 = vld [vmem:[%s298 + $0xd18] sm:$0xff]
        %v772 = vld [vmem:[%s298 + $0xd20] sm:$0xff]
        %v773 = vld [vmem:[%s298 + $0xd28] sm:$0xff]
        %v774 = vld [vmem:[%s298 + $0xd30] sm:$0xff]
        %v775 = vld [vmem:[%s298 + $0xd38] sm:$0xff]
        %v776 = vld [vmem:[%s298 + $0xd40] sm:$0xff]
        %v777 = vld [vmem:[%s298 + $0xd48] sm:$0xff]
        %v778 = vld [vmem:[%s298 + $0xd50] sm:$0xff]
        %v779 = vld [vmem:[%s298 + $0xd58] sm:$0xff]
        %v780 = vld [vmem:[%s298 + $0xd60] sm:$0xff]
        %v781 = vld [vmem:[%s298 + $0xd68] sm:$0xff]
        %v782 = vld [vmem:[%s298 + $0xd70] sm:$0xff]
        %v783 = vld [vmem:[%s298 + $0xd78] sm:$0xff]
        %v784 = vld [vmem:[%s298 + $0xd80] sm:$0xff]
        %v785 = vld [vmem:[%s298 + $0xd88] sm:$0xff]
        %v786 = vld [vmem:[%s298 + $0xd90] sm:$0xff]
        %v787 = vld [vmem:[%s298 + $0xd98] sm:$0xff]
        %v788 = vld [vmem:[%s298 + $0xda0] sm:$0xff]
        %v789 = vld [vmem:[%s298 + $0xda8] sm:$0xff]
        %v790 = vld [vmem:[%s298 + $0xdb0] sm:$0xff]
        %v791 = vld [vmem:[%s298 + $0xdb8] sm:$0xff]
        %v792 = vld [vmem:[%s298 + $0xdc0] sm:$0xff]
        %v793 = vld [vmem:[%s298 + $0xdc8] sm:$0xff]
        %v794 = vld [vmem:[%s298 + $0xdd0] sm:$0xff]
        %v795 = vld [vmem:[%s298 + $0xdd8] sm:$0xff]
        %v796 = vld [vmem:[%s298 + $0xde0] sm:$0xff]
        %v797 = vld [vmem:[%s298 + $0xde8] sm:$0xff]
        %v798 = vld [vmem:[%s298 + $0xdf0] sm:$0xff]
        %v799 = vld [vmem:[%s298 + $0xdf8] sm:$0xff]
        %v800 = vld [vmem:[%s298 + $0xe00] sm:$0xff]
        %v801 = vld [vmem:[%s298 + $0xe08] sm:$0xff]
        %v802 = vld [vmem:[%s298 + $0xe10] sm:$0xff]
        %v803 = vld [vmem:[%s298 + $0xe18] sm:$0xff]
        %v804 = vld [vmem:[%s298 + $0xe20] sm:$0xff]
        %v805 = vld [vmem:[%s298 + $0xe28] sm:$0xff]
        %v806 = vld [vmem:[%s298 + $0xe30] sm:$0xff]
        %v807 = vld [vmem:[%s298 + $0xe38] sm:$0xff]
        %v808 = vld [vmem:[%s298 + $0xe40] sm:$0xff]
        %v809 = vld [vmem:[%s298 + $0xe48] sm:$0xff]
        %v810 = vld [vmem:[%s298 + $0xe50] sm:$0xff]
        %v811 = vld [vmem:[%s298 + $0xe58] sm:$0xff]
        %v812 = vld [vmem:[%s298 + $0xe60] sm:$0xff]
        %v813 = vld [vmem:[%s298 + $0xe68] sm:$0xff]
        %v814 = vld [vmem:[%s298 + $0xe70] sm:$0xff]
        %v815 = vld [vmem:[%s298 + $0xe78] sm:$0xff]
        %v816 = vld [vmem:[%s298 + $0xe80] sm:$0xff]
        %v817 = vld [vmem:[%s298 + $0xe88] sm:$0xff]
        %v818 = vld [vmem:[%s298 + $0xe90] sm:$0xff]
        %v819 = vld [vmem:[%s298 + $0xe98] sm:$0xff]
        %v820 = vld [vmem:[%s298 + $0xea0] sm:$0xff]
        %v821 = vld [vmem:[%s298 + $0xea8] sm:$0xff]
        %v822 = vld [vmem:[%s298 + $0xeb0] sm:$0xff]
        %v823 = vld [vmem:[%s298 + $0xeb8] sm:$0xff]
        %v824 = vld [vmem:[%s298 + $0xec0] sm:$0xff]
        %v825 = vld [vmem:[%s298 + $0xec8] sm:$0xff]
        %v826 = vld [vmem:[%s298 + $0xed0] sm:$0xff]
        %v827 = vld [vmem:[%s298 + $0xed8] sm:$0xff]
        %v828 = vld [vmem:[%s298 + $0xee0] sm:$0xff]
        %v829 = vld [vmem:[%s298 + $0xee8] sm:$0xff]
        %v830 = vld [vmem:[%s298 + $0xef0] sm:$0xff]
        %v831 = vld [vmem:[%s298 + $0xef8] sm:$0xff]
        %v832 = vld [vmem:[%s298 + $0xf00] sm:$0xff]
        %v833 = vld [vmem:[%s298 + $0xf08] sm:$0xff]
        %v834 = vld [vmem:[%s298 + $0xf10] sm:$0xff]
        %v835 = vld [vmem:[%s298 + $0xf18] sm:$0xff]
        %v836 = vld [vmem:[%s298 + $0xf20] sm:$0xff]
        %v837 = vld [vmem:[%s298 + $0xf28] sm:$0xff]
        %v838 = vld [vmem:[%s298 + $0xf30] sm:$0xff]
        %v839 = vld [vmem:[%s298 + $0xf38] sm:$0xff]
        %v840 = vld [vmem:[%s298 + $0xf40] sm:$0xff]
        %v841 = vld [vmem:[%s298 + $0xf48] sm:$0xff]
        %v842 = vld [vmem:[%s298 + $0xf50] sm:$0xff]
        %v843 = vld [vmem:[%s298 + $0xf58] sm:$0xff]
        %v844 = vld [vmem:[%s298 + $0xf60] sm:$0xff]
        %v845 = vld [vmem:[%s298 + $0xf68] sm:$0xff]
        %v846 = vld [vmem:[%s298 + $0xf70] sm:$0xff]
        %v847 = vld [vmem:[%s298 + $0xf78] sm:$0xff]
        %v848 = vld [vmem:[%s298 + $0xf80] sm:$0xff]
        %v849 = vld [vmem:[%s298 + $0xf88] sm:$0xff]
        %v850 = vld [vmem:[%s298 + $0xf90] sm:$0xff]
        %v851 = vld [vmem:[%s298 + $0xf98] sm:$0xff]
        %v852 = vld [vmem:[%s298 + $0xfa0] sm:$0xff]
        %v853 = vld [vmem:[%s298 + $0xfa8] sm:$0xff]
        %v854 = vld [vmem:[%s298 + $0xfb0] sm:$0xff]
        %v855 = vld [vmem:[%s298 + $0xfb8] sm:$0xff]
        %v856 = vld [vmem:[%s298 + $0xfc0] sm:$0xff]
        %v857 = vld [vmem:[%s298 + $0xfc8] sm:$0xff]
        %v858 = vld [vmem:[%s298 + $0xfd0] sm:$0xff]
        %v859 = vld [vmem:[%s298 + $0xfd8] sm:$0xff]
        %v860 = vld [vmem:[%s298 + $0xfe0] sm:$0xff]
        %v861 = vld [vmem:[%s298 + $0xfe8] sm:$0xff]
        %v862 = vld [vmem:[%s298 + $0xff0] sm:$0xff]
        %v863 = vld [vmem:[%s298 + $0xff8] sm:$0xff]
        %v880 = vunpack.c.l.b16 %v336
        %v881 = vunpack.c.h.b16 %v336
        %v882 = vunpack.c.l.b16 %v337
        %v883 = vunpack.c.h.b16 %v337
        %v884 = vunpack.c.l.b16 %v338
        %v885 = vunpack.c.h.b16 %v338
        %v886 = vunpack.c.l.b16 %v339
        %v887 = vunpack.c.h.b16 %v339
        %v888 = vunpack.c.l.b16 %v340
        %v889 = vunpack.c.h.b16 %v340
        %v890 = vunpack.c.l.b16 %v341
        %v891 = vunpack.c.h.b16 %v341
        %v892 = vunpack.c.l.b16 %v342
        %v893 = vunpack.c.h.b16 %v342
        %v894 = vunpack.c.l.b16 %v343
        %v895 = vunpack.c.h.b16 %v343
        %v896 = vunpack.c.l.b16 %v344
        %v897 = vunpack.c.h.b16 %v344
        %v898 = vunpack.c.l.b16 %v345
        %v899 = vunpack.c.h.b16 %v345
        %v900 = vunpack.c.l.b16 %v346
        %v901 = vunpack.c.h.b16 %v346
        %v902 = vunpack.c.l.b16 %v347
        %v903 = vunpack.c.h.b16 %v347
        %v904 = vunpack.c.l.b16 %v348
        %v905 = vunpack.c.h.b16 %v348
        %v906 = vunpack.c.l.b16 %v349
        %v907 = vunpack.c.h.b16 %v349
        %v908 = vunpack.c.l.b16 %v350
        %v909 = vunpack.c.h.b16 %v350
        %v910 = vunpack.c.l.b16 %v351
        %v911 = vunpack.c.h.b16 %v351
        %v912 = vpack.c.b16 %v896, %v880
        %v913 = vpack.c.b16 %v897, %v881
        %v914 = vpack.c.b16 %v898, %v882
        %v915 = vpack.c.b16 %v899, %v883
        %v916 = vpack.c.b16 %v900, %v884
        %v917 = vpack.c.b16 %v901, %v885
        %v918 = vpack.c.b16 %v902, %v886
        %v919 = vpack.c.b16 %v903, %v887
        %v920 = vpack.c.b16 %v904, %v888
        %v921 = vpack.c.b16 %v905, %v889
        %v922 = vpack.c.b16 %v906, %v890
        %v923 = vpack.c.b16 %v907, %v891
        %v924 = vpack.c.b16 %v908, %v892
        %v925 = vpack.c.b16 %v909, %v893
        %v926 = vpack.c.b16 %v910, %v894
        %v927 = vpack.c.b16 %v911, %v895
        %v1456 = vunpack.c.l.b16 %v352
        %v1457 = vunpack.c.h.b16 %v352
        %v1458 = vunpack.c.l.b16 %v353
        %v1459 = vunpack.c.h.b16 %v353
        %v1460 = vunpack.c.l.b16 %v354
        %v1461 = vunpack.c.h.b16 %v354
        %v1462 = vunpack.c.l.b16 %v355
        %v1463 = vunpack.c.h.b16 %v355
        %v1464 = vunpack.c.l.b16 %v356
        %v1465 = vunpack.c.h.b16 %v356
        %v1466 = vunpack.c.l.b16 %v357
        %v1467 = vunpack.c.h.b16 %v357
        %v1468 = vunpack.c.l.b16 %v358
        %v1469 = vunpack.c.h.b16 %v358
        %v1470 = vunpack.c.l.b16 %v359
        %v1471 = vunpack.c.h.b16 %v359
        %v1472 = vunpack.c.l.b16 %v360
        %v1473 = vunpack.c.h.b16 %v360
        %v1474 = vunpack.c.l.b16 %v361
        %v1475 = vunpack.c.h.b16 %v361
        %v1476 = vunpack.c.l.b16 %v362
        %v1477 = vunpack.c.h.b16 %v362
        %v1478 = vunpack.c.l.b16 %v363
        %v1479 = vunpack.c.h.b16 %v363
        %v1480 = vunpack.c.l.b16 %v364
        %v1481 = vunpack.c.h.b16 %v364
        %v1482 = vunpack.c.l.b16 %v365
        %v1483 = vunpack.c.h.b16 %v365
        %v1484 = vunpack.c.l.b16 %v366
        %v1485 = vunpack.c.h.b16 %v366
        %v1486 = vunpack.c.l.b16 %v367
        %v1487 = vunpack.c.h.b16 %v367
        %v1488 = vunpack.c.l.b16 %v368
        %v1489 = vunpack.c.h.b16 %v368
        %v1490 = vunpack.c.l.b16 %v369
        %v1491 = vunpack.c.h.b16 %v369
        %v1492 = vunpack.c.l.b16 %v370
        %v1493 = vunpack.c.h.b16 %v370
        %v1494 = vunpack.c.l.b16 %v371
        %v1495 = vunpack.c.h.b16 %v371
        %v1496 = vunpack.c.l.b16 %v372
        %v1497 = vunpack.c.h.b16 %v372
        %v1498 = vunpack.c.l.b16 %v373
        %v1499 = vunpack.c.h.b16 %v373
        %v1500 = vunpack.c.l.b16 %v374
        %v1501 = vunpack.c.h.b16 %v374
        %v1502 = vunpack.c.l.b16 %v375
        %v1503 = vunpack.c.h.b16 %v375
        %v1504 = vunpack.c.l.b16 %v376
        %v1505 = vunpack.c.h.b16 %v376
        %v1506 = vunpack.c.l.b16 %v377
        %v1507 = vunpack.c.h.b16 %v377
        %v1508 = vunpack.c.l.b16 %v378
        %v1509 = vunpack.c.h.b16 %v378
        %v1510 = vunpack.c.l.b16 %v379
        %v1511 = vunpack.c.h.b16 %v379
        %v1512 = vunpack.c.l.b16 %v380
        %v1513 = vunpack.c.h.b16 %v380
        %v1514 = vunpack.c.l.b16 %v381
        %v1515 = vunpack.c.h.b16 %v381
        %v1516 = vunpack.c.l.b16 %v382
        %v1517 = vunpack.c.h.b16 %v382
        %v1518 = vunpack.c.l.b16 %v383
        %v1519 = vunpack.c.h.b16 %v383
        %v1520 = vunpack.c.l.b16 %v384
        %v1521 = vunpack.c.h.b16 %v384
        %v1522 = vunpack.c.l.b16 %v385
        %v1523 = vunpack.c.h.b16 %v385
        %v1524 = vunpack.c.l.b16 %v386
        %v1525 = vunpack.c.h.b16 %v386
        %v1526 = vunpack.c.l.b16 %v387
        %v1527 = vunpack.c.h.b16 %v387
        %v1528 = vunpack.c.l.b16 %v388
        %v1529 = vunpack.c.h.b16 %v388
        %v1530 = vunpack.c.l.b16 %v389
        %v1531 = vunpack.c.h.b16 %v389
        %v1532 = vunpack.c.l.b16 %v390
        %v1533 = vunpack.c.h.b16 %v390
        %v1534 = vunpack.c.l.b16 %v391
        %v1535 = vunpack.c.h.b16 %v391
        %v1536 = vunpack.c.l.b16 %v392
        %v1537 = vunpack.c.h.b16 %v392
        %v1538 = vunpack.c.l.b16 %v393
        %v1539 = vunpack.c.h.b16 %v393
        %v1540 = vunpack.c.l.b16 %v394
        %v1541 = vunpack.c.h.b16 %v394
        %v1542 = vunpack.c.l.b16 %v395
        %v1543 = vunpack.c.h.b16 %v395
        %v1544 = vunpack.c.l.b16 %v396
        %v1545 = vunpack.c.h.b16 %v396
        %v1546 = vunpack.c.l.b16 %v397
        %v1547 = vunpack.c.h.b16 %v397
        %v1548 = vunpack.c.l.b16 %v398
        %v1549 = vunpack.c.h.b16 %v398
        %v1550 = vunpack.c.l.b16 %v399
        %v1551 = vunpack.c.h.b16 %v399
        %v1552 = vunpack.c.l.b16 %v400
        %v1553 = vunpack.c.h.b16 %v400
        %v1554 = vunpack.c.l.b16 %v401
        %v1555 = vunpack.c.h.b16 %v401
        %v1556 = vunpack.c.l.b16 %v402
        %v1557 = vunpack.c.h.b16 %v402
        %v1558 = vunpack.c.l.b16 %v403
        %v1559 = vunpack.c.h.b16 %v403
        %v1560 = vunpack.c.l.b16 %v404
        %v1561 = vunpack.c.h.b16 %v404
        %v1562 = vunpack.c.l.b16 %v405
        %v1563 = vunpack.c.h.b16 %v405
        %v1564 = vunpack.c.l.b16 %v406
        %v1565 = vunpack.c.h.b16 %v406
        %v1566 = vunpack.c.l.b16 %v407
        %v1567 = vunpack.c.h.b16 %v407
        %v1568 = vunpack.c.l.b16 %v408
        %v1569 = vunpack.c.h.b16 %v408
        %v1570 = vunpack.c.l.b16 %v409
        %v1571 = vunpack.c.h.b16 %v409
        %v1572 = vunpack.c.l.b16 %v410
        %v1573 = vunpack.c.h.b16 %v410
        %v1574 = vunpack.c.l.b16 %v411
        %v1575 = vunpack.c.h.b16 %v411
        %v1576 = vunpack.c.l.b16 %v412
        %v1577 = vunpack.c.h.b16 %v412
        %v1578 = vunpack.c.l.b16 %v413
        %v1579 = vunpack.c.h.b16 %v413
        %v1580 = vunpack.c.l.b16 %v414
        %v1581 = vunpack.c.h.b16 %v414
        %v1582 = vunpack.c.l.b16 %v415
        %v1583 = vunpack.c.h.b16 %v415
        %v1584 = vunpack.c.l.b16 %v416
        %v1585 = vunpack.c.h.b16 %v416
        %v1586 = vunpack.c.l.b16 %v417
        %v1587 = vunpack.c.h.b16 %v417
        %v1588 = vunpack.c.l.b16 %v418
        %v1589 = vunpack.c.h.b16 %v418
        %v1590 = vunpack.c.l.b16 %v419
        %v1591 = vunpack.c.h.b16 %v419
        %v1592 = vunpack.c.l.b16 %v420
        %v1593 = vunpack.c.h.b16 %v420
        %v1594 = vunpack.c.l.b16 %v421
        %v1595 = vunpack.c.h.b16 %v421
        %v1596 = vunpack.c.l.b16 %v422
        %v1597 = vunpack.c.h.b16 %v422
        %v1598 = vunpack.c.l.b16 %v423
        %v1599 = vunpack.c.h.b16 %v423
        %v1600 = vunpack.c.l.b16 %v424
        %v1601 = vunpack.c.h.b16 %v424
        %v1602 = vunpack.c.l.b16 %v425
        %v1603 = vunpack.c.h.b16 %v425
        %v1604 = vunpack.c.l.b16 %v426
        %v1605 = vunpack.c.h.b16 %v426
        %v1606 = vunpack.c.l.b16 %v427
        %v1607 = vunpack.c.h.b16 %v427
        %v1608 = vunpack.c.l.b16 %v428
        %v1609 = vunpack.c.h.b16 %v428
        %v1610 = vunpack.c.l.b16 %v429
        %v1611 = vunpack.c.h.b16 %v429
        %v1612 = vunpack.c.l.b16 %v430
        %v1613 = vunpack.c.h.b16 %v430
        %v1614 = vunpack.c.l.b16 %v431
        %v1615 = vunpack.c.h.b16 %v431
        %v1616 = vunpack.c.l.b16 %v432
        %v1617 = vunpack.c.h.b16 %v432
        %v1618 = vunpack.c.l.b16 %v433
        %v1619 = vunpack.c.h.b16 %v433
        %v1620 = vunpack.c.l.b16 %v434
        %v1621 = vunpack.c.h.b16 %v434
        %v1622 = vunpack.c.l.b16 %v435
        %v1623 = vunpack.c.h.b16 %v435
        %v1624 = vunpack.c.l.b16 %v436
        %v1625 = vunpack.c.h.b16 %v436
        %v1626 = vunpack.c.l.b16 %v437
        %v1627 = vunpack.c.h.b16 %v437
        %v1628 = vunpack.c.l.b16 %v438
        %v1629 = vunpack.c.h.b16 %v438
        %v1630 = vunpack.c.l.b16 %v439
        %v1631 = vunpack.c.h.b16 %v439
        %v1632 = vunpack.c.l.b16 %v440
        %v1633 = vunpack.c.h.b16 %v440
        %v1634 = vunpack.c.l.b16 %v441
        %v1635 = vunpack.c.h.b16 %v441
        %v1636 = vunpack.c.l.b16 %v442
        %v1637 = vunpack.c.h.b16 %v442
        %v1638 = vunpack.c.l.b16 %v443
        %v1639 = vunpack.c.h.b16 %v443
        %v1640 = vunpack.c.l.b16 %v444
        %v1641 = vunpack.c.h.b16 %v444
        %v1642 = vunpack.c.l.b16 %v445
        %v1643 = vunpack.c.h.b16 %v445
        %v1644 = vunpack.c.l.b16 %v446
        %v1645 = vunpack.c.h.b16 %v446
        %v1646 = vunpack.c.l.b16 %v447
        %v1647 = vunpack.c.h.b16 %v447
        %v1648 = vunpack.c.l.b16 %v448
        %v1649 = vunpack.c.h.b16 %v448
        %v1650 = vunpack.c.l.b16 %v449
        %v1651 = vunpack.c.h.b16 %v449
        %v1652 = vunpack.c.l.b16 %v450
        %v1653 = vunpack.c.h.b16 %v450
        %v1654 = vunpack.c.l.b16 %v451
        %v1655 = vunpack.c.h.b16 %v451
        %v1656 = vunpack.c.l.b16 %v452
        %v1657 = vunpack.c.h.b16 %v452
        %v1658 = vunpack.c.l.b16 %v453
        %v1659 = vunpack.c.h.b16 %v453
        %v1660 = vunpack.c.l.b16 %v454
        %v1661 = vunpack.c.h.b16 %v454
        %v1662 = vunpack.c.l.b16 %v455
        %v1663 = vunpack.c.h.b16 %v455
        %v1664 = vunpack.c.l.b16 %v456
        %v1665 = vunpack.c.h.b16 %v456
        %v1666 = vunpack.c.l.b16 %v457
        %v1667 = vunpack.c.h.b16 %v457
        %v1668 = vunpack.c.l.b16 %v458
        %v1669 = vunpack.c.h.b16 %v458
        %v1670 = vunpack.c.l.b16 %v459
        %v1671 = vunpack.c.h.b16 %v459
        %v1672 = vunpack.c.l.b16 %v460
        %v1673 = vunpack.c.h.b16 %v460
        %v1674 = vunpack.c.l.b16 %v461
        %v1675 = vunpack.c.h.b16 %v461
        %v1676 = vunpack.c.l.b16 %v462
        %v1677 = vunpack.c.h.b16 %v462
        %v1678 = vunpack.c.l.b16 %v463
        %v1679 = vunpack.c.h.b16 %v463
        %v1680 = vunpack.c.l.b16 %v464
        %v1681 = vunpack.c.h.b16 %v464
        %v1682 = vunpack.c.l.b16 %v465
        %v1683 = vunpack.c.h.b16 %v465
        %v1684 = vunpack.c.l.b16 %v466
        %v1685 = vunpack.c.h.b16 %v466
        %v1686 = vunpack.c.l.b16 %v467
        %v1687 = vunpack.c.h.b16 %v467
        %v1688 = vunpack.c.l.b16 %v468
        %v1689 = vunpack.c.h.b16 %v468
        %v1690 = vunpack.c.l.b16 %v469
        %v1691 = vunpack.c.h.b16 %v469
        %v1692 = vunpack.c.l.b16 %v470
        %v1693 = vunpack.c.h.b16 %v470
        %v1694 = vunpack.c.l.b16 %v471
        %v1695 = vunpack.c.h.b16 %v471
        %v1696 = vunpack.c.l.b16 %v472
        %v1697 = vunpack.c.h.b16 %v472
        %v1698 = vunpack.c.l.b16 %v473
        %v1699 = vunpack.c.h.b16 %v473
        %v1700 = vunpack.c.l.b16 %v474
        %v1701 = vunpack.c.h.b16 %v474
        %v1702 = vunpack.c.l.b16 %v475
        %v1703 = vunpack.c.h.b16 %v475
        %v1704 = vunpack.c.l.b16 %v476
        %v1705 = vunpack.c.h.b16 %v476
        %v1706 = vunpack.c.l.b16 %v477
        %v1707 = vunpack.c.h.b16 %v477
        %v1708 = vunpack.c.l.b16 %v478
        %v1709 = vunpack.c.h.b16 %v478
        %v1710 = vunpack.c.l.b16 %v479
        %v1711 = vunpack.c.h.b16 %v479
        %v1712 = vunpack.c.l.b16 %v480
        %v1713 = vunpack.c.h.b16 %v480
        %v1714 = vunpack.c.l.b16 %v481
        %v1715 = vunpack.c.h.b16 %v481
        %v1716 = vunpack.c.l.b16 %v482
        %v1717 = vunpack.c.h.b16 %v482
        %v1718 = vunpack.c.l.b16 %v483
        %v1719 = vunpack.c.h.b16 %v483
        %v1720 = vunpack.c.l.b16 %v484
        %v1721 = vunpack.c.h.b16 %v484
        %v1722 = vunpack.c.l.b16 %v485
        %v1723 = vunpack.c.h.b16 %v485
        %v1724 = vunpack.c.l.b16 %v486
        %v1725 = vunpack.c.h.b16 %v486
        %v1726 = vunpack.c.l.b16 %v487
        %v1727 = vunpack.c.h.b16 %v487
        %v1728 = vunpack.c.l.b16 %v488
        %v1729 = vunpack.c.h.b16 %v488
        %v1730 = vunpack.c.l.b16 %v489
        %v1731 = vunpack.c.h.b16 %v489
        %v1732 = vunpack.c.l.b16 %v490
        %v1733 = vunpack.c.h.b16 %v490
        %v1734 = vunpack.c.l.b16 %v491
        %v1735 = vunpack.c.h.b16 %v491
        %v1736 = vunpack.c.l.b16 %v492
        %v1737 = vunpack.c.h.b16 %v492
        %v1738 = vunpack.c.l.b16 %v493
        %v1739 = vunpack.c.h.b16 %v493
        %v1740 = vunpack.c.l.b16 %v494
        %v1741 = vunpack.c.h.b16 %v494
        %v1742 = vunpack.c.l.b16 %v495
        %v1743 = vunpack.c.h.b16 %v495
        %v1744 = vunpack.c.l.b16 %v496
        %v1745 = vunpack.c.h.b16 %v496
        %v1746 = vunpack.c.l.b16 %v497
        %v1747 = vunpack.c.h.b16 %v497
        %v1748 = vunpack.c.l.b16 %v498
        %v1749 = vunpack.c.h.b16 %v498
        %v1750 = vunpack.c.l.b16 %v499
        %v1751 = vunpack.c.h.b16 %v499
        %v1752 = vunpack.c.l.b16 %v500
        %v1753 = vunpack.c.h.b16 %v500
        %v1754 = vunpack.c.l.b16 %v501
        %v1755 = vunpack.c.h.b16 %v501
        %v1756 = vunpack.c.l.b16 %v502
        %v1757 = vunpack.c.h.b16 %v502
        %v1758 = vunpack.c.l.b16 %v503
        %v1759 = vunpack.c.h.b16 %v503
        %v1760 = vunpack.c.l.b16 %v504
        %v1761 = vunpack.c.h.b16 %v504
        %v1762 = vunpack.c.l.b16 %v505
        %v1763 = vunpack.c.h.b16 %v505
        %v1764 = vunpack.c.l.b16 %v506
        %v1765 = vunpack.c.h.b16 %v506
        %v1766 = vunpack.c.l.b16 %v507
        %v1767 = vunpack.c.h.b16 %v507
        %v1768 = vunpack.c.l.b16 %v508
        %v1769 = vunpack.c.h.b16 %v508
        %v1770 = vunpack.c.l.b16 %v509
        %v1771 = vunpack.c.h.b16 %v509
        %v1772 = vunpack.c.l.b16 %v510
        %v1773 = vunpack.c.h.b16 %v510
        %v1774 = vunpack.c.l.b16 %v511
        %v1775 = vunpack.c.h.b16 %v511
        %v1776 = vunpack.c.l.b16 %v512
        %v1777 = vunpack.c.h.b16 %v512
        %v1778 = vunpack.c.l.b16 %v513
        %v1779 = vunpack.c.h.b16 %v513
        %v1780 = vunpack.c.l.b16 %v514
        %v1781 = vunpack.c.h.b16 %v514
        %v1782 = vunpack.c.l.b16 %v515
        %v1783 = vunpack.c.h.b16 %v515
        %v1784 = vunpack.c.l.b16 %v516
        %v1785 = vunpack.c.h.b16 %v516
        %v1786 = vunpack.c.l.b16 %v517
        %v1787 = vunpack.c.h.b16 %v517
        %v1788 = vunpack.c.l.b16 %v518
        %v1789 = vunpack.c.h.b16 %v518
        %v1790 = vunpack.c.l.b16 %v519
        %v1791 = vunpack.c.h.b16 %v519
        %v1792 = vunpack.c.l.b16 %v520
        %v1793 = vunpack.c.h.b16 %v520
        %v1794 = vunpack.c.l.b16 %v521
        %v1795 = vunpack.c.h.b16 %v521
        %v1796 = vunpack.c.l.b16 %v522
        %v1797 = vunpack.c.h.b16 %v522
        %v1798 = vunpack.c.l.b16 %v523
        %v1799 = vunpack.c.h.b16 %v523
        %v1800 = vunpack.c.l.b16 %v524
        %v1801 = vunpack.c.h.b16 %v524
        %v1802 = vunpack.c.l.b16 %v525
        %v1803 = vunpack.c.h.b16 %v525
        %v1804 = vunpack.c.l.b16 %v526
        %v1805 = vunpack.c.h.b16 %v526
        %v1806 = vunpack.c.l.b16 %v527
        %v1807 = vunpack.c.h.b16 %v527
        %v1808 = vunpack.c.l.b16 %v528
        %v1809 = vunpack.c.h.b16 %v528
        %v1810 = vunpack.c.l.b16 %v529
        %v1811 = vunpack.c.h.b16 %v529
        %v1812 = vunpack.c.l.b16 %v530
        %v1813 = vunpack.c.h.b16 %v530
        %v1814 = vunpack.c.l.b16 %v531
        %v1815 = vunpack.c.h.b16 %v531
        %v1816 = vunpack.c.l.b16 %v532
        %v1817 = vunpack.c.h.b16 %v532
        %v1818 = vunpack.c.l.b16 %v533
        %v1819 = vunpack.c.h.b16 %v533
        %v1820 = vunpack.c.l.b16 %v534
        %v1821 = vunpack.c.h.b16 %v534
        %v1822 = vunpack.c.l.b16 %v535
        %v1823 = vunpack.c.h.b16 %v535
        %v1824 = vunpack.c.l.b16 %v536
        %v1825 = vunpack.c.h.b16 %v536
        %v1826 = vunpack.c.l.b16 %v537
        %v1827 = vunpack.c.h.b16 %v537
        %v1828 = vunpack.c.l.b16 %v538
        %v1829 = vunpack.c.h.b16 %v538
        %v1830 = vunpack.c.l.b16 %v539
        %v1831 = vunpack.c.h.b16 %v539
        %v1832 = vunpack.c.l.b16 %v540
        %v1833 = vunpack.c.h.b16 %v540
        %v1834 = vunpack.c.l.b16 %v541
        %v1835 = vunpack.c.h.b16 %v541
        %v1836 = vunpack.c.l.b16 %v542
        %v1837 = vunpack.c.h.b16 %v542
        %v1838 = vunpack.c.l.b16 %v543
        %v1839 = vunpack.c.h.b16 %v543
        %v1840 = vunpack.c.l.b16 %v544
        %v1841 = vunpack.c.h.b16 %v544
        %v1842 = vunpack.c.l.b16 %v545
        %v1843 = vunpack.c.h.b16 %v545
        %v1844 = vunpack.c.l.b16 %v546
        %v1845 = vunpack.c.h.b16 %v546
        %v1846 = vunpack.c.l.b16 %v547
        %v1847 = vunpack.c.h.b16 %v547
        %v1848 = vunpack.c.l.b16 %v548
        %v1849 = vunpack.c.h.b16 %v548
        %v1850 = vunpack.c.l.b16 %v549
        %v1851 = vunpack.c.h.b16 %v549
        %v1852 = vunpack.c.l.b16 %v550
        %v1853 = vunpack.c.h.b16 %v550
        %v1854 = vunpack.c.l.b16 %v551
        %v1855 = vunpack.c.h.b16 %v551
        %v1856 = vunpack.c.l.b16 %v552
        %v1857 = vunpack.c.h.b16 %v552
        %v1858 = vunpack.c.l.b16 %v553
        %v1859 = vunpack.c.h.b16 %v553
        %v1860 = vunpack.c.l.b16 %v554
        %v1861 = vunpack.c.h.b16 %v554
        %v1862 = vunpack.c.l.b16 %v555
        %v1863 = vunpack.c.h.b16 %v555
        %v1864 = vunpack.c.l.b16 %v556
        %v1865 = vunpack.c.h.b16 %v556
        %v1866 = vunpack.c.l.b16 %v557
        %v1867 = vunpack.c.h.b16 %v557
        %v1868 = vunpack.c.l.b16 %v558
        %v1869 = vunpack.c.h.b16 %v558
        %v1870 = vunpack.c.l.b16 %v559
        %v1871 = vunpack.c.h.b16 %v559
        %v1872 = vunpack.c.l.b16 %v560
        %v1873 = vunpack.c.h.b16 %v560
        %v1874 = vunpack.c.l.b16 %v561
        %v1875 = vunpack.c.h.b16 %v561
        %v1876 = vunpack.c.l.b16 %v562
        %v1877 = vunpack.c.h.b16 %v562
        %v1878 = vunpack.c.l.b16 %v563
        %v1879 = vunpack.c.h.b16 %v563
        %v1880 = vunpack.c.l.b16 %v564
        %v1881 = vunpack.c.h.b16 %v564
        %v1882 = vunpack.c.l.b16 %v565
        %v1883 = vunpack.c.h.b16 %v565
        %v1884 = vunpack.c.l.b16 %v566
        %v1885 = vunpack.c.h.b16 %v566
        %v1886 = vunpack.c.l.b16 %v567
        %v1887 = vunpack.c.h.b16 %v567
        %v1888 = vunpack.c.l.b16 %v568
        %v1889 = vunpack.c.h.b16 %v568
        %v1890 = vunpack.c.l.b16 %v569
        %v1891 = vunpack.c.h.b16 %v569
        %v1892 = vunpack.c.l.b16 %v570
        %v1893 = vunpack.c.h.b16 %v570
        %v1894 = vunpack.c.l.b16 %v571
        %v1895 = vunpack.c.h.b16 %v571
        %v1896 = vunpack.c.l.b16 %v572
        %v1897 = vunpack.c.h.b16 %v572
        %v1898 = vunpack.c.l.b16 %v573
        %v1899 = vunpack.c.h.b16 %v573
        %v1900 = vunpack.c.l.b16 %v574
        %v1901 = vunpack.c.h.b16 %v574
        %v1902 = vunpack.c.l.b16 %v575
        %v1903 = vunpack.c.h.b16 %v575
        %v1904 = vunpack.c.l.b16 %v576
        %v1905 = vunpack.c.h.b16 %v576
        %v1906 = vunpack.c.l.b16 %v577
        %v1907 = vunpack.c.h.b16 %v577
        %v1908 = vunpack.c.l.b16 %v578
        %v1909 = vunpack.c.h.b16 %v578
        %v1910 = vunpack.c.l.b16 %v579
        %v1911 = vunpack.c.h.b16 %v579
        %v1912 = vunpack.c.l.b16 %v580
        %v1913 = vunpack.c.h.b16 %v580
        %v1914 = vunpack.c.l.b16 %v581
        %v1915 = vunpack.c.h.b16 %v581
        %v1916 = vunpack.c.l.b16 %v582
        %v1917 = vunpack.c.h.b16 %v582
        %v1918 = vunpack.c.l.b16 %v583
        %v1919 = vunpack.c.h.b16 %v583
        %v1920 = vunpack.c.l.b16 %v584
        %v1921 = vunpack.c.h.b16 %v584
        %v1922 = vunpack.c.l.b16 %v585
        %v1923 = vunpack.c.h.b16 %v585
        %v1924 = vunpack.c.l.b16 %v586
        %v1925 = vunpack.c.h.b16 %v586
        %v1926 = vunpack.c.l.b16 %v587
        %v1927 = vunpack.c.h.b16 %v587
        %v1928 = vunpack.c.l.b16 %v588
        %v1929 = vunpack.c.h.b16 %v588
        %v1930 = vunpack.c.l.b16 %v589
        %v1931 = vunpack.c.h.b16 %v589
        %v1932 = vunpack.c.l.b16 %v590
        %v1933 = vunpack.c.h.b16 %v590
        %v1934 = vunpack.c.l.b16 %v591
        %v1935 = vunpack.c.h.b16 %v591
        %v1936 = vunpack.c.l.b16 %v592
        %v1937 = vunpack.c.h.b16 %v592
        %v1938 = vunpack.c.l.b16 %v593
        %v1939 = vunpack.c.h.b16 %v593
        %v1940 = vunpack.c.l.b16 %v594
        %v1941 = vunpack.c.h.b16 %v594
        %v1942 = vunpack.c.l.b16 %v595
        %v1943 = vunpack.c.h.b16 %v595
        %v1944 = vunpack.c.l.b16 %v596
        %v1945 = vunpack.c.h.b16 %v596
        %v1946 = vunpack.c.l.b16 %v597
        %v1947 = vunpack.c.h.b16 %v597
        %v1948 = vunpack.c.l.b16 %v598
        %v1949 = vunpack.c.h.b16 %v598
        %v1950 = vunpack.c.l.b16 %v599
        %v1951 = vunpack.c.h.b16 %v599
        %v1952 = vunpack.c.l.b16 %v600
        %v1953 = vunpack.c.h.b16 %v600
        %v1954 = vunpack.c.l.b16 %v601
        %v1955 = vunpack.c.h.b16 %v601
        %v1956 = vunpack.c.l.b16 %v602
        %v1957 = vunpack.c.h.b16 %v602
        %v1958 = vunpack.c.l.b16 %v603
        %v1959 = vunpack.c.h.b16 %v603
        %v1960 = vunpack.c.l.b16 %v604
        %v1961 = vunpack.c.h.b16 %v604
        %v1962 = vunpack.c.l.b16 %v605
        %v1963 = vunpack.c.h.b16 %v605
        %v1964 = vunpack.c.l.b16 %v606
        %v1965 = vunpack.c.h.b16 %v606
        %v1966 = vunpack.c.l.b16 %v607
        %v1967 = vunpack.c.h.b16 %v607
        %v1968 = vunpack.c.l.b16 %v608
        %v1969 = vunpack.c.h.b16 %v608
        %v1970 = vunpack.c.l.b16 %v609
        %v1971 = vunpack.c.h.b16 %v609
        %v1972 = vunpack.c.l.b16 %v610
        %v1973 = vunpack.c.h.b16 %v610
        %v1974 = vunpack.c.l.b16 %v611
        %v1975 = vunpack.c.h.b16 %v611
        %v1976 = vunpack.c.l.b16 %v612
        %v1977 = vunpack.c.h.b16 %v612
        %v1978 = vunpack.c.l.b16 %v613
        %v1979 = vunpack.c.h.b16 %v613
        %v1980 = vunpack.c.l.b16 %v614
        %v1981 = vunpack.c.h.b16 %v614
        %v1982 = vunpack.c.l.b16 %v615
        %v1983 = vunpack.c.h.b16 %v615
        %v1984 = vunpack.c.l.b16 %v616
        %v1985 = vunpack.c.h.b16 %v616
        %v1986 = vunpack.c.l.b16 %v617
        %v1987 = vunpack.c.h.b16 %v617
        %v1988 = vunpack.c.l.b16 %v618
        %v1989 = vunpack.c.h.b16 %v618
        %v1990 = vunpack.c.l.b16 %v619
        %v1991 = vunpack.c.h.b16 %v619
        %v1992 = vunpack.c.l.b16 %v620
        %v1993 = vunpack.c.h.b16 %v620
        %v1994 = vunpack.c.l.b16 %v621
        %v1995 = vunpack.c.h.b16 %v621
        %v1996 = vunpack.c.l.b16 %v622
        %v1997 = vunpack.c.h.b16 %v622
        %v1998 = vunpack.c.l.b16 %v623
        %v1999 = vunpack.c.h.b16 %v623
        %v2000 = vunpack.c.l.b16 %v624
        %v2001 = vunpack.c.h.b16 %v624
        %v2002 = vunpack.c.l.b16 %v625
        %v2003 = vunpack.c.h.b16 %v625
        %v2004 = vunpack.c.l.b16 %v626
        %v2005 = vunpack.c.h.b16 %v626
        %v2006 = vunpack.c.l.b16 %v627
        %v2007 = vunpack.c.h.b16 %v627
        %v2008 = vunpack.c.l.b16 %v628
        %v2009 = vunpack.c.h.b16 %v628
        %v2010 = vunpack.c.l.b16 %v629
        %v2011 = vunpack.c.h.b16 %v629
        %v2012 = vunpack.c.l.b16 %v630
        %v2013 = vunpack.c.h.b16 %v630
        %v2014 = vunpack.c.l.b16 %v631
        %v2015 = vunpack.c.h.b16 %v631
        %v2016 = vunpack.c.l.b16 %v632
        %v2017 = vunpack.c.h.b16 %v632
        %v2018 = vunpack.c.l.b16 %v633
        %v2019 = vunpack.c.h.b16 %v633
        %v2020 = vunpack.c.l.b16 %v634
        %v2021 = vunpack.c.h.b16 %v634
        %v2022 = vunpack.c.l.b16 %v635
        %v2023 = vunpack.c.h.b16 %v635
        %v2024 = vunpack.c.l.b16 %v636
        %v2025 = vunpack.c.h.b16 %v636
        %v2026 = vunpack.c.l.b16 %v637
        %v2027 = vunpack.c.h.b16 %v637
        %v2028 = vunpack.c.l.b16 %v638
        %v2029 = vunpack.c.h.b16 %v638
        %v2030 = vunpack.c.l.b16 %v639
        %v2031 = vunpack.c.h.b16 %v639
        %v2032 = vunpack.c.l.b16 %v640
        %v2033 = vunpack.c.h.b16 %v640
        %v2034 = vunpack.c.l.b16 %v641
        %v2035 = vunpack.c.h.b16 %v641
        %v2036 = vunpack.c.l.b16 %v642
        %v2037 = vunpack.c.h.b16 %v642
        %v2038 = vunpack.c.l.b16 %v643
        %v2039 = vunpack.c.h.b16 %v643
        %v2040 = vunpack.c.l.b16 %v644
        %v2041 = vunpack.c.h.b16 %v644
        %v2042 = vunpack.c.l.b16 %v645
        %v2043 = vunpack.c.h.b16 %v645
        %v2044 = vunpack.c.l.b16 %v646
        %v2045 = vunpack.c.h.b16 %v646
        %v2046 = vunpack.c.l.b16 %v647
        %v2047 = vunpack.c.h.b16 %v647
        %v2048 = vunpack.c.l.b16 %v648
        %v2049 = vunpack.c.h.b16 %v648
        %v2050 = vunpack.c.l.b16 %v649
        %v2051 = vunpack.c.h.b16 %v649
        %v2052 = vunpack.c.l.b16 %v650
        %v2053 = vunpack.c.h.b16 %v650
        %v2054 = vunpack.c.l.b16 %v651
        %v2055 = vunpack.c.h.b16 %v651
        %v2056 = vunpack.c.l.b16 %v652
        %v2057 = vunpack.c.h.b16 %v652
        %v2058 = vunpack.c.l.b16 %v653
        %v2059 = vunpack.c.h.b16 %v653
        %v2060 = vunpack.c.l.b16 %v654
        %v2061 = vunpack.c.h.b16 %v654
        %v2062 = vunpack.c.l.b16 %v655
        %v2063 = vunpack.c.h.b16 %v655
        %v2064 = vunpack.c.l.b16 %v656
        %v2065 = vunpack.c.h.b16 %v656
        %v2066 = vunpack.c.l.b16 %v657
        %v2067 = vunpack.c.h.b16 %v657
        %v2068 = vunpack.c.l.b16 %v658
        %v2069 = vunpack.c.h.b16 %v658
        %v2070 = vunpack.c.l.b16 %v659
        %v2071 = vunpack.c.h.b16 %v659
        %v2072 = vunpack.c.l.b16 %v660
        %v2073 = vunpack.c.h.b16 %v660
        %v2074 = vunpack.c.l.b16 %v661
        %v2075 = vunpack.c.h.b16 %v661
        %v2076 = vunpack.c.l.b16 %v662
        %v2077 = vunpack.c.h.b16 %v662
        %v2078 = vunpack.c.l.b16 %v663
        %v2079 = vunpack.c.h.b16 %v663
        %v2080 = vunpack.c.l.b16 %v664
        %v2081 = vunpack.c.h.b16 %v664
        %v2082 = vunpack.c.l.b16 %v665
        %v2083 = vunpack.c.h.b16 %v665
        %v2084 = vunpack.c.l.b16 %v666
        %v2085 = vunpack.c.h.b16 %v666
        %v2086 = vunpack.c.l.b16 %v667
        %v2087 = vunpack.c.h.b16 %v667
        %v2088 = vunpack.c.l.b16 %v668
        %v2089 = vunpack.c.h.b16 %v668
        %v2090 = vunpack.c.l.b16 %v669
        %v2091 = vunpack.c.h.b16 %v669
        %v2092 = vunpack.c.l.b16 %v670
        %v2093 = vunpack.c.h.b16 %v670
        %v2094 = vunpack.c.l.b16 %v671
        %v2095 = vunpack.c.h.b16 %v671
        %v2096 = vunpack.c.l.b16 %v672
        %v2097 = vunpack.c.h.b16 %v672
        %v2098 = vunpack.c.l.b16 %v673
        %v2099 = vunpack.c.h.b16 %v673
        %v2100 = vunpack.c.l.b16 %v674
        %v2101 = vunpack.c.h.b16 %v674
        %v2102 = vunpack.c.l.b16 %v675
        %v2103 = vunpack.c.h.b16 %v675
        %v2104 = vunpack.c.l.b16 %v676
        %v2105 = vunpack.c.h.b16 %v676
        %v2106 = vunpack.c.l.b16 %v677
        %v2107 = vunpack.c.h.b16 %v677
        %v2108 = vunpack.c.l.b16 %v678
        %v2109 = vunpack.c.h.b16 %v678
        %v2110 = vunpack.c.l.b16 %v679
        %v2111 = vunpack.c.h.b16 %v679
        %v2112 = vunpack.c.l.b16 %v680
        %v2113 = vunpack.c.h.b16 %v680
        %v2114 = vunpack.c.l.b16 %v681
        %v2115 = vunpack.c.h.b16 %v681
        %v2116 = vunpack.c.l.b16 %v682
        %v2117 = vunpack.c.h.b16 %v682
        %v2118 = vunpack.c.l.b16 %v683
        %v2119 = vunpack.c.h.b16 %v683
        %v2120 = vunpack.c.l.b16 %v684
        %v2121 = vunpack.c.h.b16 %v684
        %v2122 = vunpack.c.l.b16 %v685
        %v2123 = vunpack.c.h.b16 %v685
        %v2124 = vunpack.c.l.b16 %v686
        %v2125 = vunpack.c.h.b16 %v686
        %v2126 = vunpack.c.l.b16 %v687
        %v2127 = vunpack.c.h.b16 %v687
        %v2128 = vunpack.c.l.b16 %v688
        %v2129 = vunpack.c.h.b16 %v688
        %v2130 = vunpack.c.l.b16 %v689
        %v2131 = vunpack.c.h.b16 %v689
        %v2132 = vunpack.c.l.b16 %v690
        %v2133 = vunpack.c.h.b16 %v690
        %v2134 = vunpack.c.l.b16 %v691
        %v2135 = vunpack.c.h.b16 %v691
        %v2136 = vunpack.c.l.b16 %v692
        %v2137 = vunpack.c.h.b16 %v692
        %v2138 = vunpack.c.l.b16 %v693
        %v2139 = vunpack.c.h.b16 %v693
        %v2140 = vunpack.c.l.b16 %v694
        %v2141 = vunpack.c.h.b16 %v694
        %v2142 = vunpack.c.l.b16 %v695
        %v2143 = vunpack.c.h.b16 %v695
        %v2144 = vunpack.c.l.b16 %v696
        %v2145 = vunpack.c.h.b16 %v696
        %v2146 = vunpack.c.l.b16 %v697
        %v2147 = vunpack.c.h.b16 %v697
        %v2148 = vunpack.c.l.b16 %v698
        %v2149 = vunpack.c.h.b16 %v698
        %v2150 = vunpack.c.l.b16 %v699
        %v2151 = vunpack.c.h.b16 %v699
        %v2152 = vunpack.c.l.b16 %v700
        %v2153 = vunpack.c.h.b16 %v700
        %v2154 = vunpack.c.l.b16 %v701
        %v2155 = vunpack.c.h.b16 %v701
        %v2156 = vunpack.c.l.b16 %v702
        %v2157 = vunpack.c.h.b16 %v702
        %v2158 = vunpack.c.l.b16 %v703
        %v2159 = vunpack.c.h.b16 %v703
        %v2160 = vunpack.c.l.b16 %v704
        %v2161 = vunpack.c.h.b16 %v704
        %v2162 = vunpack.c.l.b16 %v705
        %v2163 = vunpack.c.h.b16 %v705
        %v2164 = vunpack.c.l.b16 %v706
        %v2165 = vunpack.c.h.b16 %v706
        %v2166 = vunpack.c.l.b16 %v707
        %v2167 = vunpack.c.h.b16 %v707
        %v2168 = vunpack.c.l.b16 %v708
        %v2169 = vunpack.c.h.b16 %v708
        %v2170 = vunpack.c.l.b16 %v709
        %v2171 = vunpack.c.h.b16 %v709
        %v2172 = vunpack.c.l.b16 %v710
        %v2173 = vunpack.c.h.b16 %v710
        %v2174 = vunpack.c.l.b16 %v711
        %v2175 = vunpack.c.h.b16 %v711
        %v2176 = vunpack.c.l.b16 %v712
        %v2177 = vunpack.c.h.b16 %v712
        %v2178 = vunpack.c.l.b16 %v713
        %v2179 = vunpack.c.h.b16 %v713
        %v2180 = vunpack.c.l.b16 %v714
        %v2181 = vunpack.c.h.b16 %v714
        %v2182 = vunpack.c.l.b16 %v715
        %v2183 = vunpack.c.h.b16 %v715
        %v2184 = vunpack.c.l.b16 %v716
        %v2185 = vunpack.c.h.b16 %v716
        %v2186 = vunpack.c.l.b16 %v717
        %v2187 = vunpack.c.h.b16 %v717
        %v2188 = vunpack.c.l.b16 %v718
        %v2189 = vunpack.c.h.b16 %v718
        %v2190 = vunpack.c.l.b16 %v719
        %v2191 = vunpack.c.h.b16 %v719
        %v2192 = vunpack.c.l.b16 %v720
        %v2193 = vunpack.c.h.b16 %v720
        %v2194 = vunpack.c.l.b16 %v721
        %v2195 = vunpack.c.h.b16 %v721
        %v2196 = vunpack.c.l.b16 %v722
        %v2197 = vunpack.c.h.b16 %v722
        %v2198 = vunpack.c.l.b16 %v723
        %v2199 = vunpack.c.h.b16 %v723
        %v2200 = vunpack.c.l.b16 %v724
        %v2201 = vunpack.c.h.b16 %v724
        %v2202 = vunpack.c.l.b16 %v725
        %v2203 = vunpack.c.h.b16 %v725
        %v2204 = vunpack.c.l.b16 %v726
        %v2205 = vunpack.c.h.b16 %v726
        %v2206 = vunpack.c.l.b16 %v727
        %v2207 = vunpack.c.h.b16 %v727
        %v2208 = vunpack.c.l.b16 %v728
        %v2209 = vunpack.c.h.b16 %v728
        %v2210 = vunpack.c.l.b16 %v729
        %v2211 = vunpack.c.h.b16 %v729
        %v2212 = vunpack.c.l.b16 %v730
        %v2213 = vunpack.c.h.b16 %v730
        %v2214 = vunpack.c.l.b16 %v731
        %v2215 = vunpack.c.h.b16 %v731
        %v2216 = vunpack.c.l.b16 %v732
        %v2217 = vunpack.c.h.b16 %v732
        %v2218 = vunpack.c.l.b16 %v733
        %v2219 = vunpack.c.h.b16 %v733
        %v2220 = vunpack.c.l.b16 %v734
        %v2221 = vunpack.c.h.b16 %v734
        %v2222 = vunpack.c.l.b16 %v735
        %v2223 = vunpack.c.h.b16 %v735
        %v2224 = vunpack.c.l.b16 %v736
        %v2225 = vunpack.c.h.b16 %v736
        %v2226 = vunpack.c.l.b16 %v737
        %v2227 = vunpack.c.h.b16 %v737
        %v2228 = vunpack.c.l.b16 %v738
        %v2229 = vunpack.c.h.b16 %v738
        %v2230 = vunpack.c.l.b16 %v739
        %v2231 = vunpack.c.h.b16 %v739
        %v2232 = vunpack.c.l.b16 %v740
        %v2233 = vunpack.c.h.b16 %v740
        %v2234 = vunpack.c.l.b16 %v741
        %v2235 = vunpack.c.h.b16 %v741
        %v2236 = vunpack.c.l.b16 %v742
        %v2237 = vunpack.c.h.b16 %v742
        %v2238 = vunpack.c.l.b16 %v743
        %v2239 = vunpack.c.h.b16 %v743
        %v2240 = vunpack.c.l.b16 %v744
        %v2241 = vunpack.c.h.b16 %v744
        %v2242 = vunpack.c.l.b16 %v745
        %v2243 = vunpack.c.h.b16 %v745
        %v2244 = vunpack.c.l.b16 %v746
        %v2245 = vunpack.c.h.b16 %v746
        %v2246 = vunpack.c.l.b16 %v747
        %v2247 = vunpack.c.h.b16 %v747
        %v2248 = vunpack.c.l.b16 %v748
        %v2249 = vunpack.c.h.b16 %v748
        %v2250 = vunpack.c.l.b16 %v749
        %v2251 = vunpack.c.h.b16 %v749
        %v2252 = vunpack.c.l.b16 %v750
        %v2253 = vunpack.c.h.b16 %v750
        %v2254 = vunpack.c.l.b16 %v751
        %v2255 = vunpack.c.h.b16 %v751
        %v2256 = vunpack.c.l.b16 %v752
        %v2257 = vunpack.c.h.b16 %v752
        %v2258 = vunpack.c.l.b16 %v753
        %v2259 = vunpack.c.h.b16 %v753
        %v2260 = vunpack.c.l.b16 %v754
        %v2261 = vunpack.c.h.b16 %v754
        %v2262 = vunpack.c.l.b16 %v755
        %v2263 = vunpack.c.h.b16 %v755
        %v2264 = vunpack.c.l.b16 %v756
        %v2265 = vunpack.c.h.b16 %v756
        %v2266 = vunpack.c.l.b16 %v757
        %v2267 = vunpack.c.h.b16 %v757
        %v2268 = vunpack.c.l.b16 %v758
        %v2269 = vunpack.c.h.b16 %v758
        %v2270 = vunpack.c.l.b16 %v759
        %v2271 = vunpack.c.h.b16 %v759
        %v2272 = vunpack.c.l.b16 %v760
        %v2273 = vunpack.c.h.b16 %v760
        %v2274 = vunpack.c.l.b16 %v761
        %v2275 = vunpack.c.h.b16 %v761
        %v2276 = vunpack.c.l.b16 %v762
        %v2277 = vunpack.c.h.b16 %v762
        %v2278 = vunpack.c.l.b16 %v763
        %v2279 = vunpack.c.h.b16 %v763
        %v2280 = vunpack.c.l.b16 %v764
        %v2281 = vunpack.c.h.b16 %v764
        %v2282 = vunpack.c.l.b16 %v765
        %v2283 = vunpack.c.h.b16 %v765
        %v2284 = vunpack.c.l.b16 %v766
        %v2285 = vunpack.c.h.b16 %v766
        %v2286 = vunpack.c.l.b16 %v767
        %v2287 = vunpack.c.h.b16 %v767
        %v2288 = vunpack.c.l.b16 %v768
        %v2289 = vunpack.c.h.b16 %v768
        %v2290 = vunpack.c.l.b16 %v769
        %v2291 = vunpack.c.h.b16 %v769
        %v2292 = vunpack.c.l.b16 %v770
        %v2293 = vunpack.c.h.b16 %v770
        %v2294 = vunpack.c.l.b16 %v771
        %v2295 = vunpack.c.h.b16 %v771
        %v2296 = vunpack.c.l.b16 %v772
        %v2297 = vunpack.c.h.b16 %v772
        %v2298 = vunpack.c.l.b16 %v773
        %v2299 = vunpack.c.h.b16 %v773
        %v2300 = vunpack.c.l.b16 %v774
        %v2301 = vunpack.c.h.b16 %v774
        %v2302 = vunpack.c.l.b16 %v775
        %v2303 = vunpack.c.h.b16 %v775
        %v2304 = vunpack.c.l.b16 %v776
        %v2305 = vunpack.c.h.b16 %v776
        %v2306 = vunpack.c.l.b16 %v777
        %v2307 = vunpack.c.h.b16 %v777
        %v2308 = vunpack.c.l.b16 %v778
        %v2309 = vunpack.c.h.b16 %v778
        %v2310 = vunpack.c.l.b16 %v779
        %v2311 = vunpack.c.h.b16 %v779
        %v2312 = vunpack.c.l.b16 %v780
        %v2313 = vunpack.c.h.b16 %v780
        %v2314 = vunpack.c.l.b16 %v781
        %v2315 = vunpack.c.h.b16 %v781
        %v2316 = vunpack.c.l.b16 %v782
        %v2317 = vunpack.c.h.b16 %v782
        %v2318 = vunpack.c.l.b16 %v783
        %v2319 = vunpack.c.h.b16 %v783
        %v2320 = vunpack.c.l.b16 %v784
        %v2321 = vunpack.c.h.b16 %v784
        %v2322 = vunpack.c.l.b16 %v785
        %v2323 = vunpack.c.h.b16 %v785
        %v2324 = vunpack.c.l.b16 %v786
        %v2325 = vunpack.c.h.b16 %v786
        %v2326 = vunpack.c.l.b16 %v787
        %v2327 = vunpack.c.h.b16 %v787
        %v2328 = vunpack.c.l.b16 %v788
        %v2329 = vunpack.c.h.b16 %v788
        %v2330 = vunpack.c.l.b16 %v789
        %v2331 = vunpack.c.h.b16 %v789
        %v2332 = vunpack.c.l.b16 %v790
        %v2333 = vunpack.c.h.b16 %v790
        %v2334 = vunpack.c.l.b16 %v791
        %v2335 = vunpack.c.h.b16 %v791
        %v2336 = vunpack.c.l.b16 %v792
        %v2337 = vunpack.c.h.b16 %v792
        %v2338 = vunpack.c.l.b16 %v793
        %v2339 = vunpack.c.h.b16 %v793
        %v2340 = vunpack.c.l.b16 %v794
        %v2341 = vunpack.c.h.b16 %v794
        %v2342 = vunpack.c.l.b16 %v795
        %v2343 = vunpack.c.h.b16 %v795
        %v2344 = vunpack.c.l.b16 %v796
        %v2345 = vunpack.c.h.b16 %v796
        %v2346 = vunpack.c.l.b16 %v797
        %v2347 = vunpack.c.h.b16 %v797
        %v2348 = vunpack.c.l.b16 %v798
        %v2349 = vunpack.c.h.b16 %v798
        %v2350 = vunpack.c.l.b16 %v799
        %v2351 = vunpack.c.h.b16 %v799
        %v2352 = vunpack.c.l.b16 %v800
        %v2353 = vunpack.c.h.b16 %v800
        %v2354 = vunpack.c.l.b16 %v801
        %v2355 = vunpack.c.h.b16 %v801
        %v2356 = vunpack.c.l.b16 %v802
        %v2357 = vunpack.c.h.b16 %v802
        %v2358 = vunpack.c.l.b16 %v803
        %v2359 = vunpack.c.h.b16 %v803
        %v2360 = vunpack.c.l.b16 %v804
        %v2361 = vunpack.c.h.b16 %v804
        %v2362 = vunpack.c.l.b16 %v805
        %v2363 = vunpack.c.h.b16 %v805
        %v2364 = vunpack.c.l.b16 %v806
        %v2365 = vunpack.c.h.b16 %v806
        %v2366 = vunpack.c.l.b16 %v807
        %v2367 = vunpack.c.h.b16 %v807
        %v2368 = vunpack.c.l.b16 %v808
        %v2369 = vunpack.c.h.b16 %v808
        %v2370 = vunpack.c.l.b16 %v809
        %v2371 = vunpack.c.h.b16 %v809
        %v2372 = vunpack.c.l.b16 %v810
        %v2373 = vunpack.c.h.b16 %v810
        %v2374 = vunpack.c.l.b16 %v811
        %v2375 = vunpack.c.h.b16 %v811
        %v2376 = vunpack.c.l.b16 %v812
        %v2377 = vunpack.c.h.b16 %v812
        %v2378 = vunpack.c.l.b16 %v813
        %v2379 = vunpack.c.h.b16 %v813
        %v2380 = vunpack.c.l.b16 %v814
        %v2381 = vunpack.c.h.b16 %v814
        %v2382 = vunpack.c.l.b16 %v815
        %v2383 = vunpack.c.h.b16 %v815
        %v2384 = vunpack.c.l.b16 %v816
        %v2385 = vunpack.c.h.b16 %v816
        %v2386 = vunpack.c.l.b16 %v817
        %v2387 = vunpack.c.h.b16 %v817
        %v2388 = vunpack.c.l.b16 %v818
        %v2389 = vunpack.c.h.b16 %v818
        %v2390 = vunpack.c.l.b16 %v819
        %v2391 = vunpack.c.h.b16 %v819
        %v2392 = vunpack.c.l.b16 %v820
        %v2393 = vunpack.c.h.b16 %v820
        %v2394 = vunpack.c.l.b16 %v821
        %v2395 = vunpack.c.h.b16 %v821
        %v2396 = vunpack.c.l.b16 %v822
        %v2397 = vunpack.c.h.b16 %v822
        %v2398 = vunpack.c.l.b16 %v823
        %v2399 = vunpack.c.h.b16 %v823
        %v2400 = vunpack.c.l.b16 %v824
        %v2401 = vunpack.c.h.b16 %v824
        %v2402 = vunpack.c.l.b16 %v825
        %v2403 = vunpack.c.h.b16 %v825
        %v2404 = vunpack.c.l.b16 %v826
        %v2405 = vunpack.c.h.b16 %v826
        %v2406 = vunpack.c.l.b16 %v827
        %v2407 = vunpack.c.h.b16 %v827
        %v2408 = vunpack.c.l.b16 %v828
        %v2409 = vunpack.c.h.b16 %v828
        %v2410 = vunpack.c.l.b16 %v829
        %v2411 = vunpack.c.h.b16 %v829
        %v2412 = vunpack.c.l.b16 %v830
        %v2413 = vunpack.c.h.b16 %v830
        %v2414 = vunpack.c.l.b16 %v831
        %v2415 = vunpack.c.h.b16 %v831
        %v2416 = vunpack.c.l.b16 %v832
        %v2417 = vunpack.c.h.b16 %v832
        %v2418 = vunpack.c.l.b16 %v833
        %v2419 = vunpack.c.h.b16 %v833
        %v2420 = vunpack.c.l.b16 %v834
        %v2421 = vunpack.c.h.b16 %v834
        %v2422 = vunpack.c.l.b16 %v835
        %v2423 = vunpack.c.h.b16 %v835
        %v2424 = vunpack.c.l.b16 %v836
        %v2425 = vunpack.c.h.b16 %v836
        %v2426 = vunpack.c.l.b16 %v837
        %v2427 = vunpack.c.h.b16 %v837
        %v2428 = vunpack.c.l.b16 %v838
        %v2429 = vunpack.c.h.b16 %v838
        %v2430 = vunpack.c.l.b16 %v839
        %v2431 = vunpack.c.h.b16 %v839
        %v2432 = vunpack.c.l.b16 %v840
        %v2433 = vunpack.c.h.b16 %v840
        %v2434 = vunpack.c.l.b16 %v841
        %v2435 = vunpack.c.h.b16 %v841
        %v2436 = vunpack.c.l.b16 %v842
        %v2437 = vunpack.c.h.b16 %v842
        %v2438 = vunpack.c.l.b16 %v843
        %v2439 = vunpack.c.h.b16 %v843
        %v2440 = vunpack.c.l.b16 %v844
        %v2441 = vunpack.c.h.b16 %v844
        %v2442 = vunpack.c.l.b16 %v845
        %v2443 = vunpack.c.h.b16 %v845
        %v2444 = vunpack.c.l.b16 %v846
        %v2445 = vunpack.c.h.b16 %v846
        %v2446 = vunpack.c.l.b16 %v847
        %v2447 = vunpack.c.h.b16 %v847
        %v2448 = vunpack.c.l.b16 %v848
        %v2449 = vunpack.c.h.b16 %v848
        %v2450 = vunpack.c.l.b16 %v849
        %v2451 = vunpack.c.h.b16 %v849
        %v2452 = vunpack.c.l.b16 %v850
        %v2453 = vunpack.c.h.b16 %v850
        %v2454 = vunpack.c.l.b16 %v851
        %v2455 = vunpack.c.h.b16 %v851
        %v2456 = vunpack.c.l.b16 %v852
        %v2457 = vunpack.c.h.b16 %v852
        %v2458 = vunpack.c.l.b16 %v853
        %v2459 = vunpack.c.h.b16 %v853
        %v2460 = vunpack.c.l.b16 %v854
        %v2461 = vunpack.c.h.b16 %v854
        %v2462 = vunpack.c.l.b16 %v855
        %v2463 = vunpack.c.h.b16 %v855
        %v2464 = vunpack.c.l.b16 %v856
        %v2465 = vunpack.c.h.b16 %v856
        %v2466 = vunpack.c.l.b16 %v857
        %v2467 = vunpack.c.h.b16 %v857
        %v2468 = vunpack.c.l.b16 %v858
        %v2469 = vunpack.c.h.b16 %v858
        %v2470 = vunpack.c.l.b16 %v859
        %v2471 = vunpack.c.h.b16 %v859
        %v2472 = vunpack.c.l.b16 %v860
        %v2473 = vunpack.c.h.b16 %v860
        %v2474 = vunpack.c.l.b16 %v861
        %v2475 = vunpack.c.h.b16 %v861
        %v2476 = vunpack.c.l.b16 %v862
        %v2477 = vunpack.c.h.b16 %v862
        %v2478 = vunpack.c.l.b16 %v863
        %v2479 = vunpack.c.h.b16 %v863
        %v2480 = vpack.c.b16 %v1460, %v1456
        %v2481 = vpack.c.b16 %v1461, %v1457
        %v2482 = vpack.c.b16 %v1462, %v1458
        %v2483 = vpack.c.b16 %v1463, %v1459
        %v2484 = vpack.c.b16 %v1468, %v1464
        %v2485 = vpack.c.b16 %v1469, %v1465
        %v2486 = vpack.c.b16 %v1470, %v1466
        %v2487 = vpack.c.b16 %v1471, %v1467
        %v2488 = vpack.c.b16 %v1476, %v1472
        %v2489 = vpack.c.b16 %v1477, %v1473
        %v2490 = vpack.c.b16 %v1478, %v1474
        %v2491 = vpack.c.b16 %v1479, %v1475
        %v2492 = vpack.c.b16 %v1484, %v1480
        %v2493 = vpack.c.b16 %v1485, %v1481
        %v2494 = vpack.c.b16 %v1486, %v1482
        %v2495 = vpack.c.b16 %v1487, %v1483
        %v2496 = vpack.c.b16 %v1492, %v1488
        %v2497 = vpack.c.b16 %v1493, %v1489
        %v2498 = vpack.c.b16 %v1494, %v1490
        %v2499 = vpack.c.b16 %v1495, %v1491
        %v2500 = vpack.c.b16 %v1500, %v1496
        %v2501 = vpack.c.b16 %v1501, %v1497
        %v2502 = vpack.c.b16 %v1502, %v1498
        %v2503 = vpack.c.b16 %v1503, %v1499
        %v2504 = vpack.c.b16 %v1508, %v1504
        %v2505 = vpack.c.b16 %v1509, %v1505
        %v2506 = vpack.c.b16 %v1510, %v1506
        %v2507 = vpack.c.b16 %v1511, %v1507
        %v2508 = vpack.c.b16 %v1516, %v1512
        %v2509 = vpack.c.b16 %v1517, %v1513
        %v2510 = vpack.c.b16 %v1518, %v1514
        %v2511 = vpack.c.b16 %v1519, %v1515
        %v2512 = vpack.c.b16 %v1524, %v1520
        %v2513 = vpack.c.b16 %v1525, %v1521
        %v2514 = vpack.c.b16 %v1526, %v1522
        %v2515 = vpack.c.b16 %v1527, %v1523
        %v2516 = vpack.c.b16 %v1532, %v1528
        %v2517 = vpack.c.b16 %v1533, %v1529
        %v2518 = vpack.c.b16 %v1534, %v1530
        %v2519 = vpack.c.b16 %v1535, %v1531
        %v2520 = vpack.c.b16 %v1540, %v1536
        %v2521 = vpack.c.b16 %v1541, %v1537
        %v2522 = vpack.c.b16 %v1542, %v1538
        %v2523 = vpack.c.b16 %v1543, %v1539
        %v2524 = vpack.c.b16 %v1548, %v1544
        %v2525 = vpack.c.b16 %v1549, %v1545
        %v2526 = vpack.c.b16 %v1550, %v1546
        %v2527 = vpack.c.b16 %v1551, %v1547
        %v2528 = vpack.c.b16 %v1556, %v1552
        %v2529 = vpack.c.b16 %v1557, %v1553
        %v2530 = vpack.c.b16 %v1558, %v1554
        %v2531 = vpack.c.b16 %v1559, %v1555
        %v2532 = vpack.c.b16 %v1564, %v1560
        %v2533 = vpack.c.b16 %v1565, %v1561
        %v2534 = vpack.c.b16 %v1566, %v1562
        %v2535 = vpack.c.b16 %v1567, %v1563
        %v2536 = vpack.c.b16 %v1572, %v1568
        %v2537 = vpack.c.b16 %v1573, %v1569
        %v2538 = vpack.c.b16 %v1574, %v1570
        %v2539 = vpack.c.b16 %v1575, %v1571
        %v2540 = vpack.c.b16 %v1580, %v1576
        %v2541 = vpack.c.b16 %v1581, %v1577
        %v2542 = vpack.c.b16 %v1582, %v1578
        %v2543 = vpack.c.b16 %v1583, %v1579
        %v2544 = vpack.c.b16 %v1588, %v1584
        %v2545 = vpack.c.b16 %v1589, %v1585
        %v2546 = vpack.c.b16 %v1590, %v1586
        %v2547 = vpack.c.b16 %v1591, %v1587
        %v2548 = vpack.c.b16 %v1596, %v1592
        %v2549 = vpack.c.b16 %v1597, %v1593
        %v2550 = vpack.c.b16 %v1598, %v1594
        %v2551 = vpack.c.b16 %v1599, %v1595
        %v2552 = vpack.c.b16 %v1604, %v1600
        %v2553 = vpack.c.b16 %v1605, %v1601
        %v2554 = vpack.c.b16 %v1606, %v1602
        %v2555 = vpack.c.b16 %v1607, %v1603
        %v2556 = vpack.c.b16 %v1612, %v1608
        %v2557 = vpack.c.b16 %v1613, %v1609
        %v2558 = vpack.c.b16 %v1614, %v1610
        %v2559 = vpack.c.b16 %v1615, %v1611
        %v2560 = vpack.c.b16 %v1620, %v1616
        %v2561 = vpack.c.b16 %v1621, %v1617
        %v2562 = vpack.c.b16 %v1622, %v1618
        %v2563 = vpack.c.b16 %v1623, %v1619
        %v2564 = vpack.c.b16 %v1628, %v1624
        %v2565 = vpack.c.b16 %v1629, %v1625
        %v2566 = vpack.c.b16 %v1630, %v1626
        %v2567 = vpack.c.b16 %v1631, %v1627
        %v2568 = vpack.c.b16 %v1636, %v1632
        %v2569 = vpack.c.b16 %v1637, %v1633
        %v2570 = vpack.c.b16 %v1638, %v1634
        %v2571 = vpack.c.b16 %v1639, %v1635
        %v2572 = vpack.c.b16 %v1644, %v1640
        %v2573 = vpack.c.b16 %v1645, %v1641
        %v2574 = vpack.c.b16 %v1646, %v1642
        %v2575 = vpack.c.b16 %v1647, %v1643
        %v2576 = vpack.c.b16 %v1652, %v1648
        %v2577 = vpack.c.b16 %v1653, %v1649
        %v2578 = vpack.c.b16 %v1654, %v1650
        %v2579 = vpack.c.b16 %v1655, %v1651
        %v2580 = vpack.c.b16 %v1660, %v1656
        %v2581 = vpack.c.b16 %v1661, %v1657
        %v2582 = vpack.c.b16 %v1662, %v1658
        %v2583 = vpack.c.b16 %v1663, %v1659
        %v2584 = vpack.c.b16 %v1668, %v1664
        %v2585 = vpack.c.b16 %v1669, %v1665
        %v2586 = vpack.c.b16 %v1670, %v1666
        %v2587 = vpack.c.b16 %v1671, %v1667
        %v2588 = vpack.c.b16 %v1676, %v1672
        %v2589 = vpack.c.b16 %v1677, %v1673
        %v2590 = vpack.c.b16 %v1678, %v1674
        %v2591 = vpack.c.b16 %v1679, %v1675
        %v2592 = vpack.c.b16 %v1684, %v1680
        %v2593 = vpack.c.b16 %v1685, %v1681
        %v2594 = vpack.c.b16 %v1686, %v1682
        %v2595 = vpack.c.b16 %v1687, %v1683
        %v2596 = vpack.c.b16 %v1692, %v1688
        %v2597 = vpack.c.b16 %v1693, %v1689
        %v2598 = vpack.c.b16 %v1694, %v1690
        %v2599 = vpack.c.b16 %v1695, %v1691
        %v2600 = vpack.c.b16 %v1700, %v1696
        %v2601 = vpack.c.b16 %v1701, %v1697
        %v2602 = vpack.c.b16 %v1702, %v1698
        %v2603 = vpack.c.b16 %v1703, %v1699
        %v2604 = vpack.c.b16 %v1708, %v1704
        %v2605 = vpack.c.b16 %v1709, %v1705
        %v2606 = vpack.c.b16 %v1710, %v1706
        %v2607 = vpack.c.b16 %v1711, %v1707
        %v2608 = vpack.c.b16 %v1716, %v1712
        %v2609 = vpack.c.b16 %v1717, %v1713
        %v2610 = vpack.c.b16 %v1718, %v1714
        %v2611 = vpack.c.b16 %v1719, %v1715
        %v2612 = vpack.c.b16 %v1724, %v1720
        %v2613 = vpack.c.b16 %v1725, %v1721
        %v2614 = vpack.c.b16 %v1726, %v1722
        %v2615 = vpack.c.b16 %v1727, %v1723
        %v2616 = vpack.c.b16 %v1732, %v1728
        %v2617 = vpack.c.b16 %v1733, %v1729
        %v2618 = vpack.c.b16 %v1734, %v1730
        %v2619 = vpack.c.b16 %v1735, %v1731
        %v2620 = vpack.c.b16 %v1740, %v1736
        %v2621 = vpack.c.b16 %v1741, %v1737
        %v2622 = vpack.c.b16 %v1742, %v1738
        %v2623 = vpack.c.b16 %v1743, %v1739
        %v2624 = vpack.c.b16 %v1748, %v1744
        %v2625 = vpack.c.b16 %v1749, %v1745
        %v2626 = vpack.c.b16 %v1750, %v1746
        %v2627 = vpack.c.b16 %v1751, %v1747
        %v2628 = vpack.c.b16 %v1756, %v1752
        %v2629 = vpack.c.b16 %v1757, %v1753
        %v2630 = vpack.c.b16 %v1758, %v1754
        %v2631 = vpack.c.b16 %v1759, %v1755
        %v2632 = vpack.c.b16 %v1764, %v1760
        %v2633 = vpack.c.b16 %v1765, %v1761
        %v2634 = vpack.c.b16 %v1766, %v1762
        %v2635 = vpack.c.b16 %v1767, %v1763
        %v2636 = vpack.c.b16 %v1772, %v1768
        %v2637 = vpack.c.b16 %v1773, %v1769
        %v2638 = vpack.c.b16 %v1774, %v1770
        %v2639 = vpack.c.b16 %v1775, %v1771
        %v2640 = vpack.c.b16 %v1780, %v1776
        %v2641 = vpack.c.b16 %v1781, %v1777
        %v2642 = vpack.c.b16 %v1782, %v1778
        %v2643 = vpack.c.b16 %v1783, %v1779
        %v2644 = vpack.c.b16 %v1788, %v1784
        %v2645 = vpack.c.b16 %v1789, %v1785
        %v2646 = vpack.c.b16 %v1790, %v1786
        %v2647 = vpack.c.b16 %v1791, %v1787
        %v2648 = vpack.c.b16 %v1796, %v1792
        %v2649 = vpack.c.b16 %v1797, %v1793
        %v2650 = vpack.c.b16 %v1798, %v1794
        %v2651 = vpack.c.b16 %v1799, %v1795
        %v2652 = vpack.c.b16 %v1804, %v1800
        %v2653 = vpack.c.b16 %v1805, %v1801
        %v2654 = vpack.c.b16 %v1806, %v1802
        %v2655 = vpack.c.b16 %v1807, %v1803
        %v2656 = vpack.c.b16 %v1812, %v1808
        %v2657 = vpack.c.b16 %v1813, %v1809
        %v2658 = vpack.c.b16 %v1814, %v1810
        %v2659 = vpack.c.b16 %v1815, %v1811
        %v2660 = vpack.c.b16 %v1820, %v1816
        %v2661 = vpack.c.b16 %v1821, %v1817
        %v2662 = vpack.c.b16 %v1822, %v1818
        %v2663 = vpack.c.b16 %v1823, %v1819
        %v2664 = vpack.c.b16 %v1828, %v1824
        %v2665 = vpack.c.b16 %v1829, %v1825
        %v2666 = vpack.c.b16 %v1830, %v1826
        %v2667 = vpack.c.b16 %v1831, %v1827
        %v2668 = vpack.c.b16 %v1836, %v1832
        %v2669 = vpack.c.b16 %v1837, %v1833
        %v2670 = vpack.c.b16 %v1838, %v1834
        %v2671 = vpack.c.b16 %v1839, %v1835
        %v2672 = vpack.c.b16 %v1844, %v1840
        %v2673 = vpack.c.b16 %v1845, %v1841
        %v2674 = vpack.c.b16 %v1846, %v1842
        %v2675 = vpack.c.b16 %v1847, %v1843
        %v2676 = vpack.c.b16 %v1852, %v1848
        %v2677 = vpack.c.b16 %v1853, %v1849
        %v2678 = vpack.c.b16 %v1854, %v1850
        %v2679 = vpack.c.b16 %v1855, %v1851
        %v2680 = vpack.c.b16 %v1860, %v1856
        %v2681 = vpack.c.b16 %v1861, %v1857
        %v2682 = vpack.c.b16 %v1862, %v1858
        %v2683 = vpack.c.b16 %v1863, %v1859
        %v2684 = vpack.c.b16 %v1868, %v1864
        %v2685 = vpack.c.b16 %v1869, %v1865
        %v2686 = vpack.c.b16 %v1870, %v1866
        %v2687 = vpack.c.b16 %v1871, %v1867
        %v2688 = vpack.c.b16 %v1876, %v1872
        %v2689 = vpack.c.b16 %v1877, %v1873
        %v2690 = vpack.c.b16 %v1878, %v1874
        %v2691 = vpack.c.b16 %v1879, %v1875
        %v2692 = vpack.c.b16 %v1884, %v1880
        %v2693 = vpack.c.b16 %v1885, %v1881
        %v2694 = vpack.c.b16 %v1886, %v1882
        %v2695 = vpack.c.b16 %v1887, %v1883
        %v2696 = vpack.c.b16 %v1892, %v1888
        %v2697 = vpack.c.b16 %v1893, %v1889
        %v2698 = vpack.c.b16 %v1894, %v1890
        %v2699 = vpack.c.b16 %v1895, %v1891
        %v2700 = vpack.c.b16 %v1900, %v1896
        %v2701 = vpack.c.b16 %v1901, %v1897
        %v2702 = vpack.c.b16 %v1902, %v1898
        %v2703 = vpack.c.b16 %v1903, %v1899
        %v2704 = vpack.c.b16 %v1908, %v1904
        %v2705 = vpack.c.b16 %v1909, %v1905
        %v2706 = vpack.c.b16 %v1910, %v1906
        %v2707 = vpack.c.b16 %v1911, %v1907
        %v2708 = vpack.c.b16 %v1916, %v1912
        %v2709 = vpack.c.b16 %v1917, %v1913
        %v2710 = vpack.c.b16 %v1918, %v1914
        %v2711 = vpack.c.b16 %v1919, %v1915
        %v2712 = vpack.c.b16 %v1924, %v1920
        %v2713 = vpack.c.b16 %v1925, %v1921
        %v2714 = vpack.c.b16 %v1926, %v1922
        %v2715 = vpack.c.b16 %v1927, %v1923
        %v2716 = vpack.c.b16 %v1932, %v1928
        %v2717 = vpack.c.b16 %v1933, %v1929
        %v2718 = vpack.c.b16 %v1934, %v1930
        %v2719 = vpack.c.b16 %v1935, %v1931
        %v2720 = vpack.c.b16 %v1940, %v1936
        %v2721 = vpack.c.b16 %v1941, %v1937
        %v2722 = vpack.c.b16 %v1942, %v1938
        %v2723 = vpack.c.b16 %v1943, %v1939
        %v2724 = vpack.c.b16 %v1948, %v1944
        %v2725 = vpack.c.b16 %v1949, %v1945
        %v2726 = vpack.c.b16 %v1950, %v1946
        %v2727 = vpack.c.b16 %v1951, %v1947
        %v2728 = vpack.c.b16 %v1956, %v1952
        %v2729 = vpack.c.b16 %v1957, %v1953
        %v2730 = vpack.c.b16 %v1958, %v1954
        %v2731 = vpack.c.b16 %v1959, %v1955
        %v2732 = vpack.c.b16 %v1964, %v1960
        %v2733 = vpack.c.b16 %v1965, %v1961
        %v2734 = vpack.c.b16 %v1966, %v1962
        %v2735 = vpack.c.b16 %v1967, %v1963
        %v2736 = vpack.c.b16 %v1972, %v1968
        %v2737 = vpack.c.b16 %v1973, %v1969
        %v2738 = vpack.c.b16 %v1974, %v1970
        %v2739 = vpack.c.b16 %v1975, %v1971
        %v2740 = vpack.c.b16 %v1980, %v1976
        %v2741 = vpack.c.b16 %v1981, %v1977
        %v2742 = vpack.c.b16 %v1982, %v1978
        %v2743 = vpack.c.b16 %v1983, %v1979
        %v2744 = vpack.c.b16 %v1988, %v1984
        %v2745 = vpack.c.b16 %v1989, %v1985
        %v2746 = vpack.c.b16 %v1990, %v1986
        %v2747 = vpack.c.b16 %v1991, %v1987
        %v2748 = vpack.c.b16 %v1996, %v1992
        %v2749 = vpack.c.b16 %v1997, %v1993
        %v2750 = vpack.c.b16 %v1998, %v1994
        %v2751 = vpack.c.b16 %v1999, %v1995
        %v2752 = vpack.c.b16 %v2004, %v2000
        %v2753 = vpack.c.b16 %v2005, %v2001
        %v2754 = vpack.c.b16 %v2006, %v2002
        %v2755 = vpack.c.b16 %v2007, %v2003
        %v2756 = vpack.c.b16 %v2012, %v2008
        %v2757 = vpack.c.b16 %v2013, %v2009
        %v2758 = vpack.c.b16 %v2014, %v2010
        %v2759 = vpack.c.b16 %v2015, %v2011
        %v2760 = vpack.c.b16 %v2020, %v2016
        %v2761 = vpack.c.b16 %v2021, %v2017
        %v2762 = vpack.c.b16 %v2022, %v2018
        %v2763 = vpack.c.b16 %v2023, %v2019
        %v2764 = vpack.c.b16 %v2028, %v2024
        %v2765 = vpack.c.b16 %v2029, %v2025
        %v2766 = vpack.c.b16 %v2030, %v2026
        %v2767 = vpack.c.b16 %v2031, %v2027
        %v2768 = vpack.c.b16 %v2036, %v2032
        %v2769 = vpack.c.b16 %v2037, %v2033
        %v2770 = vpack.c.b16 %v2038, %v2034
        %v2771 = vpack.c.b16 %v2039, %v2035
        %v2772 = vpack.c.b16 %v2044, %v2040
        %v2773 = vpack.c.b16 %v2045, %v2041
        %v2774 = vpack.c.b16 %v2046, %v2042
        %v2775 = vpack.c.b16 %v2047, %v2043
        %v2776 = vpack.c.b16 %v2052, %v2048
        %v2777 = vpack.c.b16 %v2053, %v2049
        %v2778 = vpack.c.b16 %v2054, %v2050
        %v2779 = vpack.c.b16 %v2055, %v2051
        %v2780 = vpack.c.b16 %v2060, %v2056
        %v2781 = vpack.c.b16 %v2061, %v2057
        %v2782 = vpack.c.b16 %v2062, %v2058
        %v2783 = vpack.c.b16 %v2063, %v2059
        %v2784 = vpack.c.b16 %v2068, %v2064
        %v2785 = vpack.c.b16 %v2069, %v2065
        %v2786 = vpack.c.b16 %v2070, %v2066
        %v2787 = vpack.c.b16 %v2071, %v2067
        %v2788 = vpack.c.b16 %v2076, %v2072
        %v2789 = vpack.c.b16 %v2077, %v2073
        %v2790 = vpack.c.b16 %v2078, %v2074
        %v2791 = vpack.c.b16 %v2079, %v2075
        %v2792 = vpack.c.b16 %v2084, %v2080
        %v2793 = vpack.c.b16 %v2085, %v2081
        %v2794 = vpack.c.b16 %v2086, %v2082
        %v2795 = vpack.c.b16 %v2087, %v2083
        %v2796 = vpack.c.b16 %v2092, %v2088
        %v2797 = vpack.c.b16 %v2093, %v2089
        %v2798 = vpack.c.b16 %v2094, %v2090
        %v2799 = vpack.c.b16 %v2095, %v2091
        %v2800 = vpack.c.b16 %v2100, %v2096
        %v2801 = vpack.c.b16 %v2101, %v2097
        %v2802 = vpack.c.b16 %v2102, %v2098
        %v2803 = vpack.c.b16 %v2103, %v2099
        %v2804 = vpack.c.b16 %v2108, %v2104
        %v2805 = vpack.c.b16 %v2109, %v2105
        %v2806 = vpack.c.b16 %v2110, %v2106
        %v2807 = vpack.c.b16 %v2111, %v2107
        %v2808 = vpack.c.b16 %v2116, %v2112
        %v2809 = vpack.c.b16 %v2117, %v2113
        %v2810 = vpack.c.b16 %v2118, %v2114
        %v2811 = vpack.c.b16 %v2119, %v2115
        %v2812 = vpack.c.b16 %v2124, %v2120
        %v2813 = vpack.c.b16 %v2125, %v2121
        %v2814 = vpack.c.b16 %v2126, %v2122
        %v2815 = vpack.c.b16 %v2127, %v2123
        %v2816 = vpack.c.b16 %v2132, %v2128
        %v2817 = vpack.c.b16 %v2133, %v2129
        %v2818 = vpack.c.b16 %v2134, %v2130
        %v2819 = vpack.c.b16 %v2135, %v2131
        %v2820 = vpack.c.b16 %v2140, %v2136
        %v2821 = vpack.c.b16 %v2141, %v2137
        %v2822 = vpack.c.b16 %v2142, %v2138
        %v2823 = vpack.c.b16 %v2143, %v2139
        %v2824 = vpack.c.b16 %v2148, %v2144
        %v2825 = vpack.c.b16 %v2149, %v2145
        %v2826 = vpack.c.b16 %v2150, %v2146
        %v2827 = vpack.c.b16 %v2151, %v2147
        %v2828 = vpack.c.b16 %v2156, %v2152
        %v2829 = vpack.c.b16 %v2157, %v2153
        %v2830 = vpack.c.b16 %v2158, %v2154
        %v2831 = vpack.c.b16 %v2159, %v2155
        %v2832 = vpack.c.b16 %v2164, %v2160
        %v2833 = vpack.c.b16 %v2165, %v2161
        %v2834 = vpack.c.b16 %v2166, %v2162
        %v2835 = vpack.c.b16 %v2167, %v2163
        %v2836 = vpack.c.b16 %v2172, %v2168
        %v2837 = vpack.c.b16 %v2173, %v2169
        %v2838 = vpack.c.b16 %v2174, %v2170
        %v2839 = vpack.c.b16 %v2175, %v2171
        %v2840 = vpack.c.b16 %v2180, %v2176
        %v2841 = vpack.c.b16 %v2181, %v2177
        %v2842 = vpack.c.b16 %v2182, %v2178
        %v2843 = vpack.c.b16 %v2183, %v2179
        %v2844 = vpack.c.b16 %v2188, %v2184
        %v2845 = vpack.c.b16 %v2189, %v2185
        %v2846 = vpack.c.b16 %v2190, %v2186
        %v2847 = vpack.c.b16 %v2191, %v2187
        %v2848 = vpack.c.b16 %v2196, %v2192
        %v2849 = vpack.c.b16 %v2197, %v2193
        %v2850 = vpack.c.b16 %v2198, %v2194
        %v2851 = vpack.c.b16 %v2199, %v2195
        %v2852 = vpack.c.b16 %v2204, %v2200
        %v2853 = vpack.c.b16 %v2205, %v2201
        %v2854 = vpack.c.b16 %v2206, %v2202
        %v2855 = vpack.c.b16 %v2207, %v2203
        %v2856 = vpack.c.b16 %v2212, %v2208
        %v2857 = vpack.c.b16 %v2213, %v2209
        %v2858 = vpack.c.b16 %v2214, %v2210
        %v2859 = vpack.c.b16 %v2215, %v2211
        %v2860 = vpack.c.b16 %v2220, %v2216
        %v2861 = vpack.c.b16 %v2221, %v2217
        %v2862 = vpack.c.b16 %v2222, %v2218
        %v2863 = vpack.c.b16 %v2223, %v2219
        %v2864 = vpack.c.b16 %v2228, %v2224
        %v2865 = vpack.c.b16 %v2229, %v2225
        %v2866 = vpack.c.b16 %v2230, %v2226
        %v2867 = vpack.c.b16 %v2231, %v2227
        %v2868 = vpack.c.b16 %v2236, %v2232
        %v2869 = vpack.c.b16 %v2237, %v2233
        %v2870 = vpack.c.b16 %v2238, %v2234
        %v2871 = vpack.c.b16 %v2239, %v2235
        %v2872 = vpack.c.b16 %v2244, %v2240
        %v2873 = vpack.c.b16 %v2245, %v2241
        %v2874 = vpack.c.b16 %v2246, %v2242
        %v2875 = vpack.c.b16 %v2247, %v2243
        %v2876 = vpack.c.b16 %v2252, %v2248
        %v2877 = vpack.c.b16 %v2253, %v2249
        %v2878 = vpack.c.b16 %v2254, %v2250
        %v2879 = vpack.c.b16 %v2255, %v2251
        %v2880 = vpack.c.b16 %v2260, %v2256
        %v2881 = vpack.c.b16 %v2261, %v2257
        %v2882 = vpack.c.b16 %v2262, %v2258
        %v2883 = vpack.c.b16 %v2263, %v2259
        %v2884 = vpack.c.b16 %v2268, %v2264
        %v2885 = vpack.c.b16 %v2269, %v2265
        %v2886 = vpack.c.b16 %v2270, %v2266
        %v2887 = vpack.c.b16 %v2271, %v2267
        %v2888 = vpack.c.b16 %v2276, %v2272
        %v2889 = vpack.c.b16 %v2277, %v2273
        %v2890 = vpack.c.b16 %v2278, %v2274
        %v2891 = vpack.c.b16 %v2279, %v2275
        %v2892 = vpack.c.b16 %v2284, %v2280
        %v2893 = vpack.c.b16 %v2285, %v2281
        %v2894 = vpack.c.b16 %v2286, %v2282
        %v2895 = vpack.c.b16 %v2287, %v2283
        %v2896 = vpack.c.b16 %v2292, %v2288
        %v2897 = vpack.c.b16 %v2293, %v2289
        %v2898 = vpack.c.b16 %v2294, %v2290
        %v2899 = vpack.c.b16 %v2295, %v2291
        %v2900 = vpack.c.b16 %v2300, %v2296
        %v2901 = vpack.c.b16 %v2301, %v2297
        %v2902 = vpack.c.b16 %v2302, %v2298
        %v2903 = vpack.c.b16 %v2303, %v2299
        %v2904 = vpack.c.b16 %v2308, %v2304
        %v2905 = vpack.c.b16 %v2309, %v2305
        %v2906 = vpack.c.b16 %v2310, %v2306
        %v2907 = vpack.c.b16 %v2311, %v2307
        %v2908 = vpack.c.b16 %v2316, %v2312
        %v2909 = vpack.c.b16 %v2317, %v2313
        %v2910 = vpack.c.b16 %v2318, %v2314
        %v2911 = vpack.c.b16 %v2319, %v2315
        %v2912 = vpack.c.b16 %v2324, %v2320
        %v2913 = vpack.c.b16 %v2325, %v2321
        %v2914 = vpack.c.b16 %v2326, %v2322
        %v2915 = vpack.c.b16 %v2327, %v2323
        %v2916 = vpack.c.b16 %v2332, %v2328
        %v2917 = vpack.c.b16 %v2333, %v2329
        %v2918 = vpack.c.b16 %v2334, %v2330
        %v2919 = vpack.c.b16 %v2335, %v2331
        %v2920 = vpack.c.b16 %v2340, %v2336
        %v2921 = vpack.c.b16 %v2341, %v2337
        %v2922 = vpack.c.b16 %v2342, %v2338
        %v2923 = vpack.c.b16 %v2343, %v2339
        %v2924 = vpack.c.b16 %v2348, %v2344
        %v2925 = vpack.c.b16 %v2349, %v2345
        %v2926 = vpack.c.b16 %v2350, %v2346
        %v2927 = vpack.c.b16 %v2351, %v2347
        %v2928 = vpack.c.b16 %v2356, %v2352
        %v2929 = vpack.c.b16 %v2357, %v2353
        %v2930 = vpack.c.b16 %v2358, %v2354
        %v2931 = vpack.c.b16 %v2359, %v2355
        %v2932 = vpack.c.b16 %v2364, %v2360
        %v2933 = vpack.c.b16 %v2365, %v2361
        %v2934 = vpack.c.b16 %v2366, %v2362
        %v2935 = vpack.c.b16 %v2367, %v2363
        %v2936 = vpack.c.b16 %v2372, %v2368
        %v2937 = vpack.c.b16 %v2373, %v2369
        %v2938 = vpack.c.b16 %v2374, %v2370
        %v2939 = vpack.c.b16 %v2375, %v2371
        %v2940 = vpack.c.b16 %v2380, %v2376
        %v2941 = vpack.c.b16 %v2381, %v2377
        %v2942 = vpack.c.b16 %v2382, %v2378
        %v2943 = vpack.c.b16 %v2383, %v2379
        %v2944 = vpack.c.b16 %v2388, %v2384
        %v2945 = vpack.c.b16 %v2389, %v2385
        %v2946 = vpack.c.b16 %v2390, %v2386
        %v2947 = vpack.c.b16 %v2391, %v2387
        %v2948 = vpack.c.b16 %v2396, %v2392
        %v2949 = vpack.c.b16 %v2397, %v2393
        %v2950 = vpack.c.b16 %v2398, %v2394
        %v2951 = vpack.c.b16 %v2399, %v2395
        %v2952 = vpack.c.b16 %v2404, %v2400
        %v2953 = vpack.c.b16 %v2405, %v2401
        %v2954 = vpack.c.b16 %v2406, %v2402
        %v2955 = vpack.c.b16 %v2407, %v2403
        %v2956 = vpack.c.b16 %v2412, %v2408
        %v2957 = vpack.c.b16 %v2413, %v2409
        %v2958 = vpack.c.b16 %v2414, %v2410
        %v2959 = vpack.c.b16 %v2415, %v2411
        %v2960 = vpack.c.b16 %v2420, %v2416
        %v2961 = vpack.c.b16 %v2421, %v2417
        %v2962 = vpack.c.b16 %v2422, %v2418
        %v2963 = vpack.c.b16 %v2423, %v2419
        %v2964 = vpack.c.b16 %v2428, %v2424
        %v2965 = vpack.c.b16 %v2429, %v2425
        %v2966 = vpack.c.b16 %v2430, %v2426
        %v2967 = vpack.c.b16 %v2431, %v2427
        %v2968 = vpack.c.b16 %v2436, %v2432
        %v2969 = vpack.c.b16 %v2437, %v2433
        %v2970 = vpack.c.b16 %v2438, %v2434
        %v2971 = vpack.c.b16 %v2439, %v2435
        %v2972 = vpack.c.b16 %v2444, %v2440
        %v2973 = vpack.c.b16 %v2445, %v2441
        %v2974 = vpack.c.b16 %v2446, %v2442
        %v2975 = vpack.c.b16 %v2447, %v2443
        %v2976 = vpack.c.b16 %v2452, %v2448
        %v2977 = vpack.c.b16 %v2453, %v2449
        %v2978 = vpack.c.b16 %v2454, %v2450
        %v2979 = vpack.c.b16 %v2455, %v2451
        %v2980 = vpack.c.b16 %v2460, %v2456
        %v2981 = vpack.c.b16 %v2461, %v2457
        %v2982 = vpack.c.b16 %v2462, %v2458
        %v2983 = vpack.c.b16 %v2463, %v2459
        %v2984 = vpack.c.b16 %v2468, %v2464
        %v2985 = vpack.c.b16 %v2469, %v2465
        %v2986 = vpack.c.b16 %v2470, %v2466
        %v2987 = vpack.c.b16 %v2471, %v2467
        %v2988 = vpack.c.b16 %v2476, %v2472
        %v2989 = vpack.c.b16 %v2477, %v2473
        %v2990 = vpack.c.b16 %v2478, %v2474
        %v2991 = vpack.c.b16 %v2479, %v2475
        %3504 = vmatpush.bf16.msra.mxu0 %v2508
        %3505 = vmatpush.bf16.msra.mxu0 %v2504
        %3506 = vmatpush.bf16.msra.mxu0 %v2500
        %3507 = vmatpush.bf16.msra.mxu0 %v2496
        %3508 = vmatpush.bf16.msra.mxu0 %v2492
        %3509 = vmatpush.bf16.msra.mxu0 %v2488
        %3510 = vmatpush.bf16.msra.mxu0 %v2484
        %3511 = vmatpush.bf16.msra.mxu0 %v2480
        %3512 = vmatmul.bf16.gmra.mxu0 %v912
        %v3513 = vpop.f32.mrf.mxu0
        %v3514 = vadd.f32 0.0, %v3513
        %v3515 = vpop.f32.mrf.mxu0
        %v3516 = vadd.f32 0.0, %v3515
        %3517 = vdwg.mxu0
        %3518 = vmatpush.bf16.msra.mxu0 %v2540
        %3519 = vmatpush.bf16.msra.mxu0 %v2536
        %3520 = vmatpush.bf16.msra.mxu0 %v2532
        %3521 = vmatpush.bf16.msra.mxu0 %v2528
        %3522 = vmatpush.bf16.msra.mxu0 %v2524
        %3523 = vmatpush.bf16.msra.mxu0 %v2520
        %3524 = vmatpush.bf16.msra.mxu0 %v2516
        %3525 = vmatpush.bf16.msra.mxu0 %v2512
        %3526 = vmatmul.bf16.gmra.mxu0 %v913
        %v3527 = vpop.f32.mrf.mxu0
        %v3528 = vadd.f32 %v3514, %v3527
        %v3529 = vpop.f32.mrf.mxu0
        %v3530 = vadd.f32 %v3516, %v3529
        %3531 = vdwg.mxu0
        %3532 = vmatpush.bf16.msra.mxu0 %v2572
        %3533 = vmatpush.bf16.msra.mxu0 %v2568
        %3534 = vmatpush.bf16.msra.mxu0 %v2564
        %3535 = vmatpush.bf16.msra.mxu0 %v2560
        %3536 = vmatpush.bf16.msra.mxu0 %v2556
        %3537 = vmatpush.bf16.msra.mxu0 %v2552
        %3538 = vmatpush.bf16.msra.mxu0 %v2548
        %3539 = vmatpush.bf16.msra.mxu0 %v2544
        %3540 = vmatmul.bf16.gmra.mxu0 %v914
        %v3541 = vpop.f32.mrf.mxu0
        %v3542 = vadd.f32 %v3528, %v3541
        %v3543 = vpop.f32.mrf.mxu0
        %v3544 = vadd.f32 %v3530, %v3543
        %3545 = vdwg.mxu0
        %3546 = vmatpush.bf16.msra.mxu0 %v2604
        %3547 = vmatpush.bf16.msra.mxu0 %v2600
        %3548 = vmatpush.bf16.msra.mxu0 %v2596
        %3549 = vmatpush.bf16.msra.mxu0 %v2592
        %3550 = vmatpush.bf16.msra.mxu0 %v2588
        %3551 = vmatpush.bf16.msra.mxu0 %v2584
        %3552 = vmatpush.bf16.msra.mxu0 %v2580
        %3553 = vmatpush.bf16.msra.mxu0 %v2576
        %3554 = vmatmul.bf16.gmra.mxu0 %v915
        %v3555 = vpop.f32.mrf.mxu0
        %v3556 = vadd.f32 %v3542, %v3555
        %v3557 = vpop.f32.mrf.mxu0
        %v3558 = vadd.f32 %v3544, %v3557
        %3559 = vdwg.mxu0
        %3560 = vmatpush.bf16.msra.mxu0 %v2636
        %3561 = vmatpush.bf16.msra.mxu0 %v2632
        %3562 = vmatpush.bf16.msra.mxu0 %v2628
        %3563 = vmatpush.bf16.msra.mxu0 %v2624
        %3564 = vmatpush.bf16.msra.mxu0 %v2620
        %3565 = vmatpush.bf16.msra.mxu0 %v2616
        %3566 = vmatpush.bf16.msra.mxu0 %v2612
        %3567 = vmatpush.bf16.msra.mxu0 %v2608
        %3568 = vmatmul.bf16.gmra.mxu0 %v916
        %v3569 = vpop.f32.mrf.mxu0
        %v3570 = vadd.f32 %v3556, %v3569
        %v3571 = vpop.f32.mrf.mxu0
        %v3572 = vadd.f32 %v3558, %v3571
        %3573 = vdwg.mxu0
        %3574 = vmatpush.bf16.msra.mxu0 %v2668
        %3575 = vmatpush.bf16.msra.mxu0 %v2664
        %3576 = vmatpush.bf16.msra.mxu0 %v2660
        %3577 = vmatpush.bf16.msra.mxu0 %v2656
        %3578 = vmatpush.bf16.msra.mxu0 %v2652
        %3579 = vmatpush.bf16.msra.mxu0 %v2648
        %3580 = vmatpush.bf16.msra.mxu0 %v2644
        %3581 = vmatpush.bf16.msra.mxu0 %v2640
        %3582 = vmatmul.bf16.gmra.mxu0 %v917
        %v3583 = vpop.f32.mrf.mxu0
        %v3584 = vadd.f32 %v3570, %v3583
        %v3585 = vpop.f32.mrf.mxu0
        %v3586 = vadd.f32 %v3572, %v3585
        %3587 = vdwg.mxu0
        %3588 = vmatpush.bf16.msra.mxu0 %v2700
        %3589 = vmatpush.bf16.msra.mxu0 %v2696
        %3590 = vmatpush.bf16.msra.mxu0 %v2692
        %3591 = vmatpush.bf16.msra.mxu0 %v2688
        %3592 = vmatpush.bf16.msra.mxu0 %v2684
        %3593 = vmatpush.bf16.msra.mxu0 %v2680
        %3594 = vmatpush.bf16.msra.mxu0 %v2676
        %3595 = vmatpush.bf16.msra.mxu0 %v2672
        %3596 = vmatmul.bf16.gmra.mxu0 %v918
        %v3597 = vpop.f32.mrf.mxu0
        %v3598 = vadd.f32 %v3584, %v3597
        %v3599 = vpop.f32.mrf.mxu0
        %v3600 = vadd.f32 %v3586, %v3599
        %3601 = vdwg.mxu0
        %3602 = vmatpush.bf16.msra.mxu0 %v2732
        %3603 = vmatpush.bf16.msra.mxu0 %v2728
        %3604 = vmatpush.bf16.msra.mxu0 %v2724
        %3605 = vmatpush.bf16.msra.mxu0 %v2720
        %3606 = vmatpush.bf16.msra.mxu0 %v2716
        %3607 = vmatpush.bf16.msra.mxu0 %v2712
        %3608 = vmatpush.bf16.msra.mxu0 %v2708
        %3609 = vmatpush.bf16.msra.mxu0 %v2704
        %3610 = vmatmul.bf16.gmra.mxu0 %v919
        %v3611 = vpop.f32.mrf.mxu0
        %v3612 = vadd.f32 %v3598, %v3611
        %v3613 = vpop.f32.mrf.mxu0
        %v3614 = vadd.f32 %v3600, %v3613
        %3615 = vdwg.mxu0
        %3616 = vmatpush.bf16.msra.mxu0 %v2764
        %3617 = vmatpush.bf16.msra.mxu0 %v2760
        %3618 = vmatpush.bf16.msra.mxu0 %v2756
        %3619 = vmatpush.bf16.msra.mxu0 %v2752
        %3620 = vmatpush.bf16.msra.mxu0 %v2748
        %3621 = vmatpush.bf16.msra.mxu0 %v2744
        %3622 = vmatpush.bf16.msra.mxu0 %v2740
        %3623 = vmatpush.bf16.msra.mxu0 %v2736
        %3624 = vmatmul.bf16.gmra.mxu0 %v920
        %v3625 = vpop.f32.mrf.mxu0
        %v3626 = vadd.f32 %v3612, %v3625
        %v3627 = vpop.f32.mrf.mxu0
        %v3628 = vadd.f32 %v3614, %v3627
        %3629 = vdwg.mxu0
        %3630 = vmatpush.bf16.msra.mxu0 %v2796
        %3631 = vmatpush.bf16.msra.mxu0 %v2792
        %3632 = vmatpush.bf16.msra.mxu0 %v2788
        %3633 = vmatpush.bf16.msra.mxu0 %v2784
        %3634 = vmatpush.bf16.msra.mxu0 %v2780
        %3635 = vmatpush.bf16.msra.mxu0 %v2776
        %3636 = vmatpush.bf16.msra.mxu0 %v2772
        %3637 = vmatpush.bf16.msra.mxu0 %v2768
        %3638 = vmatmul.bf16.gmra.mxu0 %v921
        %v3639 = vpop.f32.mrf.mxu0
        %v3640 = vadd.f32 %v3626, %v3639
        %v3641 = vpop.f32.mrf.mxu0
        %v3642 = vadd.f32 %v3628, %v3641
        %3643 = vdwg.mxu0
        %3644 = vmatpush.bf16.msra.mxu0 %v2828
        %3645 = vmatpush.bf16.msra.mxu0 %v2824
        %3646 = vmatpush.bf16.msra.mxu0 %v2820
        %3647 = vmatpush.bf16.msra.mxu0 %v2816
        %3648 = vmatpush.bf16.msra.mxu0 %v2812
        %3649 = vmatpush.bf16.msra.mxu0 %v2808
        %3650 = vmatpush.bf16.msra.mxu0 %v2804
        %3651 = vmatpush.bf16.msra.mxu0 %v2800
        %3652 = vmatmul.bf16.gmra.mxu0 %v922
        %v3653 = vpop.f32.mrf.mxu0
        %v3654 = vadd.f32 %v3640, %v3653
        %v3655 = vpop.f32.mrf.mxu0
        %v3656 = vadd.f32 %v3642, %v3655
        %3657 = vdwg.mxu0
        %3658 = vmatpush.bf16.msra.mxu0 %v2860
        %3659 = vmatpush.bf16.msra.mxu0 %v2856
        %3660 = vmatpush.bf16.msra.mxu0 %v2852
        %3661 = vmatpush.bf16.msra.mxu0 %v2848
        %3662 = vmatpush.bf16.msra.mxu0 %v2844
        %3663 = vmatpush.bf16.msra.mxu0 %v2840
        %3664 = vmatpush.bf16.msra.mxu0 %v2836
        %3665 = vmatpush.bf16.msra.mxu0 %v2832
        %3666 = vmatmul.bf16.gmra.mxu0 %v923
        %v3667 = vpop.f32.mrf.mxu0
        %v3668 = vadd.f32 %v3654, %v3667
        %v3669 = vpop.f32.mrf.mxu0
        %v3670 = vadd.f32 %v3656, %v3669
        %3671 = vdwg.mxu0
        %3672 = vmatpush.bf16.msra.mxu0 %v2892
        %3673 = vmatpush.bf16.msra.mxu0 %v2888
        %3674 = vmatpush.bf16.msra.mxu0 %v2884
        %3675 = vmatpush.bf16.msra.mxu0 %v2880
        %3676 = vmatpush.bf16.msra.mxu0 %v2876
        %3677 = vmatpush.bf16.msra.mxu0 %v2872
        %3678 = vmatpush.bf16.msra.mxu0 %v2868
        %3679 = vmatpush.bf16.msra.mxu0 %v2864
        %3680 = vmatmul.bf16.gmra.mxu0 %v924
        %v3681 = vpop.f32.mrf.mxu0
        %v3682 = vadd.f32 %v3668, %v3681
        %v3683 = vpop.f32.mrf.mxu0
        %v3684 = vadd.f32 %v3670, %v3683
        %3685 = vdwg.mxu0
        %3686 = vmatpush.bf16.msra.mxu0 %v2924
        %3687 = vmatpush.bf16.msra.mxu0 %v2920
        %3688 = vmatpush.bf16.msra.mxu0 %v2916
        %3689 = vmatpush.bf16.msra.mxu0 %v2912
        %3690 = vmatpush.bf16.msra.mxu0 %v2908
        %3691 = vmatpush.bf16.msra.mxu0 %v2904
        %3692 = vmatpush.bf16.msra.mxu0 %v2900
        %3693 = vmatpush.bf16.msra.mxu0 %v2896
        %3694 = vmatmul.bf16.gmra.mxu0 %v925
        %v3695 = vpop.f32.mrf.mxu0
        %v3696 = vadd.f32 %v3682, %v3695
        %v3697 = vpop.f32.mrf.mxu0
        %v3698 = vadd.f32 %v3684, %v3697
        %3699 = vdwg.mxu0
        %3700 = vmatpush.bf16.msra.mxu0 %v2956
        %3701 = vmatpush.bf16.msra.mxu0 %v2952
        %3702 = vmatpush.bf16.msra.mxu0 %v2948
        %3703 = vmatpush.bf16.msra.mxu0 %v2944
        %3704 = vmatpush.bf16.msra.mxu0 %v2940
        %3705 = vmatpush.bf16.msra.mxu0 %v2936
        %3706 = vmatpush.bf16.msra.mxu0 %v2932
        %3707 = vmatpush.bf16.msra.mxu0 %v2928
        %3708 = vmatmul.bf16.gmra.mxu0 %v926
        %v3709 = vpop.f32.mrf.mxu0
        %v3710 = vadd.f32 %v3696, %v3709
        %v3711 = vpop.f32.mrf.mxu0
        %v3712 = vadd.f32 %v3698, %v3711
        %3713 = vdwg.mxu0
        %3714 = vmatpush.bf16.msra.mxu0 %v2988
        %3715 = vmatpush.bf16.msra.mxu0 %v2984
        %3716 = vmatpush.bf16.msra.mxu0 %v2980
        %3717 = vmatpush.bf16.msra.mxu0 %v2976
        %3718 = vmatpush.bf16.msra.mxu0 %v2972
        %3719 = vmatpush.bf16.msra.mxu0 %v2968
        %3720 = vmatpush.bf16.msra.mxu0 %v2964
        %3721 = vmatpush.bf16.msra.mxu0 %v2960
        %3722 = vmatmul.bf16.gmra.mxu0 %v927
        %v3723 = vpop.f32.mrf.mxu0
        %v3724 = vadd.f32 %v3710, %v3723
        %v3725 = vpop.f32.mrf.mxu0
        %v3726 = vadd.f32 %v3712, %v3725
        %3727 = vdwg.mxu0
        %3728 = vmatpush.bf16.msra.mxu0 %v2509
        %3729 = vmatpush.bf16.msra.mxu0 %v2505
        %3730 = vmatpush.bf16.msra.mxu0 %v2501
        %3731 = vmatpush.bf16.msra.mxu0 %v2497
        %3732 = vmatpush.bf16.msra.mxu0 %v2493
        %3733 = vmatpush.bf16.msra.mxu0 %v2489
        %3734 = vmatpush.bf16.msra.mxu0 %v2485
        %3735 = vmatpush.bf16.msra.mxu0 %v2481
        %3736 = vmatmul.bf16.gmra.mxu0 %v912
        %v3737 = vpop.f32.mrf.mxu0
        %v3738 = vadd.f32 0.0, %v3737
        %v3739 = vpop.f32.mrf.mxu0
        %v3740 = vadd.f32 0.0, %v3739
        %3741 = vdwg.mxu0
        %3742 = vmatpush.bf16.msra.mxu0 %v2541
        %3743 = vmatpush.bf16.msra.mxu0 %v2537
        %3744 = vmatpush.bf16.msra.mxu0 %v2533
        %3745 = vmatpush.bf16.msra.mxu0 %v2529
        %3746 = vmatpush.bf16.msra.mxu0 %v2525
        %3747 = vmatpush.bf16.msra.mxu0 %v2521
        %3748 = vmatpush.bf16.msra.mxu0 %v2517
        %3749 = vmatpush.bf16.msra.mxu0 %v2513
        %3750 = vmatmul.bf16.gmra.mxu0 %v913
        %v3751 = vpop.f32.mrf.mxu0
        %v3752 = vadd.f32 %v3738, %v3751
        %v3753 = vpop.f32.mrf.mxu0
        %v3754 = vadd.f32 %v3740, %v3753
        %3755 = vdwg.mxu0
        %3756 = vmatpush.bf16.msra.mxu0 %v2573
        %3757 = vmatpush.bf16.msra.mxu0 %v2569
        %3758 = vmatpush.bf16.msra.mxu0 %v2565
        %3759 = vmatpush.bf16.msra.mxu0 %v2561
        %3760 = vmatpush.bf16.msra.mxu0 %v2557
        %3761 = vmatpush.bf16.msra.mxu0 %v2553
        %3762 = vmatpush.bf16.msra.mxu0 %v2549
        %3763 = vmatpush.bf16.msra.mxu0 %v2545
        %3764 = vmatmul.bf16.gmra.mxu0 %v914
        %v3765 = vpop.f32.mrf.mxu0
        %v3766 = vadd.f32 %v3752, %v3765
        %v3767 = vpop.f32.mrf.mxu0
        %v3768 = vadd.f32 %v3754, %v3767
        %3769 = vdwg.mxu0
        %3770 = vmatpush.bf16.msra.mxu0 %v2605
        %3771 = vmatpush.bf16.msra.mxu0 %v2601
        %3772 = vmatpush.bf16.msra.mxu0 %v2597
        %3773 = vmatpush.bf16.msra.mxu0 %v2593
        %3774 = vmatpush.bf16.msra.mxu0 %v2589
        %3775 = vmatpush.bf16.msra.mxu0 %v2585
        %3776 = vmatpush.bf16.msra.mxu0 %v2581
        %3777 = vmatpush.bf16.msra.mxu0 %v2577
        %3778 = vmatmul.bf16.gmra.mxu0 %v915
        %v3779 = vpop.f32.mrf.mxu0
        %v3780 = vadd.f32 %v3766, %v3779
        %v3781 = vpop.f32.mrf.mxu0
        %v3782 = vadd.f32 %v3768, %v3781
        %3783 = vdwg.mxu0
        %3784 = vmatpush.bf16.msra.mxu0 %v2637
        %3785 = vmatpush.bf16.msra.mxu0 %v2633
        %3786 = vmatpush.bf16.msra.mxu0 %v2629
        %3787 = vmatpush.bf16.msra.mxu0 %v2625
        %3788 = vmatpush.bf16.msra.mxu0 %v2621
        %3789 = vmatpush.bf16.msra.mxu0 %v2617
        %3790 = vmatpush.bf16.msra.mxu0 %v2613
        %3791 = vmatpush.bf16.msra.mxu0 %v2609
        %3792 = vmatmul.bf16.gmra.mxu0 %v916
        %v3793 = vpop.f32.mrf.mxu0
        %v3794 = vadd.f32 %v3780, %v3793
        %v3795 = vpop.f32.mrf.mxu0
        %v3796 = vadd.f32 %v3782, %v3795
        %3797 = vdwg.mxu0
        %3798 = vmatpush.bf16.msra.mxu0 %v2669
        %3799 = vmatpush.bf16.msra.mxu0 %v2665
        %3800 = vmatpush.bf16.msra.mxu0 %v2661
        %3801 = vmatpush.bf16.msra.mxu0 %v2657
        %3802 = vmatpush.bf16.msra.mxu0 %v2653
        %3803 = vmatpush.bf16.msra.mxu0 %v2649
        %3804 = vmatpush.bf16.msra.mxu0 %v2645
        %3805 = vmatpush.bf16.msra.mxu0 %v2641
        %3806 = vmatmul.bf16.gmra.mxu0 %v917
        %v3807 = vpop.f32.mrf.mxu0
        %v3808 = vadd.f32 %v3794, %v3807
        %v3809 = vpop.f32.mrf.mxu0
        %v3810 = vadd.f32 %v3796, %v3809
        %3811 = vdwg.mxu0
        %3812 = vmatpush.bf16.msra.mxu0 %v2701
        %3813 = vmatpush.bf16.msra.mxu0 %v2697
        %3814 = vmatpush.bf16.msra.mxu0 %v2693
        %3815 = vmatpush.bf16.msra.mxu0 %v2689
        %3816 = vmatpush.bf16.msra.mxu0 %v2685
        %3817 = vmatpush.bf16.msra.mxu0 %v2681
        %3818 = vmatpush.bf16.msra.mxu0 %v2677
        %3819 = vmatpush.bf16.msra.mxu0 %v2673
        %3820 = vmatmul.bf16.gmra.mxu0 %v918
        %v3821 = vpop.f32.mrf.mxu0
        %v3822 = vadd.f32 %v3808, %v3821
        %v3823 = vpop.f32.mrf.mxu0
        %v3824 = vadd.f32 %v3810, %v3823
        %3825 = vdwg.mxu0
        %3826 = vmatpush.bf16.msra.mxu0 %v2733
        %3827 = vmatpush.bf16.msra.mxu0 %v2729
        %3828 = vmatpush.bf16.msra.mxu0 %v2725
        %3829 = vmatpush.bf16.msra.mxu0 %v2721
        %3830 = vmatpush.bf16.msra.mxu0 %v2717
        %3831 = vmatpush.bf16.msra.mxu0 %v2713
        %3832 = vmatpush.bf16.msra.mxu0 %v2709
        %3833 = vmatpush.bf16.msra.mxu0 %v2705
        %3834 = vmatmul.bf16.gmra.mxu0 %v919
        %v3835 = vpop.f32.mrf.mxu0
        %v3836 = vadd.f32 %v3822, %v3835
        %v3837 = vpop.f32.mrf.mxu0
        %v3838 = vadd.f32 %v3824, %v3837
        %3839 = vdwg.mxu0
        %3840 = vmatpush.bf16.msra.mxu0 %v2765
        %3841 = vmatpush.bf16.msra.mxu0 %v2761
        %3842 = vmatpush.bf16.msra.mxu0 %v2757
        %3843 = vmatpush.bf16.msra.mxu0 %v2753
        %3844 = vmatpush.bf16.msra.mxu0 %v2749
        %3845 = vmatpush.bf16.msra.mxu0 %v2745
        %3846 = vmatpush.bf16.msra.mxu0 %v2741
        %3847 = vmatpush.bf16.msra.mxu0 %v2737
        %3848 = vmatmul.bf16.gmra.mxu0 %v920
        %v3849 = vpop.f32.mrf.mxu0
        %v3850 = vadd.f32 %v3836, %v3849
        %v3851 = vpop.f32.mrf.mxu0
        %v3852 = vadd.f32 %v3838, %v3851
        %3853 = vdwg.mxu0
        %3854 = vmatpush.bf16.msra.mxu0 %v2797
        %3855 = vmatpush.bf16.msra.mxu0 %v2793
        %3856 = vmatpush.bf16.msra.mxu0 %v2789
        %3857 = vmatpush.bf16.msra.mxu0 %v2785
        %3858 = vmatpush.bf16.msra.mxu0 %v2781
        %3859 = vmatpush.bf16.msra.mxu0 %v2777
        %3860 = vmatpush.bf16.msra.mxu0 %v2773
        %3861 = vmatpush.bf16.msra.mxu0 %v2769
        %3862 = vmatmul.bf16.gmra.mxu0 %v921
        %v3863 = vpop.f32.mrf.mxu0
        %v3864 = vadd.f32 %v3850, %v3863
        %v3865 = vpop.f32.mrf.mxu0
        %v3866 = vadd.f32 %v3852, %v3865
        %3867 = vdwg.mxu0
        %3868 = vmatpush.bf16.msra.mxu0 %v2829
        %3869 = vmatpush.bf16.msra.mxu0 %v2825
        %3870 = vmatpush.bf16.msra.mxu0 %v2821
        %3871 = vmatpush.bf16.msra.mxu0 %v2817
        %3872 = vmatpush.bf16.msra.mxu0 %v2813
        %3873 = vmatpush.bf16.msra.mxu0 %v2809
        %3874 = vmatpush.bf16.msra.mxu0 %v2805
        %3875 = vmatpush.bf16.msra.mxu0 %v2801
        %3876 = vmatmul.bf16.gmra.mxu0 %v922
        %v3877 = vpop.f32.mrf.mxu0
        %v3878 = vadd.f32 %v3864, %v3877
        %v3879 = vpop.f32.mrf.mxu0
        %v3880 = vadd.f32 %v3866, %v3879
        %3881 = vdwg.mxu0
        %3882 = vmatpush.bf16.msra.mxu0 %v2861
        %3883 = vmatpush.bf16.msra.mxu0 %v2857
        %3884 = vmatpush.bf16.msra.mxu0 %v2853
        %3885 = vmatpush.bf16.msra.mxu0 %v2849
        %3886 = vmatpush.bf16.msra.mxu0 %v2845
        %3887 = vmatpush.bf16.msra.mxu0 %v2841
        %3888 = vmatpush.bf16.msra.mxu0 %v2837
        %3889 = vmatpush.bf16.msra.mxu0 %v2833
        %3890 = vmatmul.bf16.gmra.mxu0 %v923
        %v3891 = vpop.f32.mrf.mxu0
        %v3892 = vadd.f32 %v3878, %v3891
        %v3893 = vpop.f32.mrf.mxu0
        %v3894 = vadd.f32 %v3880, %v3893
        %3895 = vdwg.mxu0
        %3896 = vmatpush.bf16.msra.mxu0 %v2893
        %3897 = vmatpush.bf16.msra.mxu0 %v2889
        %3898 = vmatpush.bf16.msra.mxu0 %v2885
        %3899 = vmatpush.bf16.msra.mxu0 %v2881
        %3900 = vmatpush.bf16.msra.mxu0 %v2877
        %3901 = vmatpush.bf16.msra.mxu0 %v2873
        %3902 = vmatpush.bf16.msra.mxu0 %v2869
        %3903 = vmatpush.bf16.msra.mxu0 %v2865
        %3904 = vmatmul.bf16.gmra.mxu0 %v924
        %v3905 = vpop.f32.mrf.mxu0
        %v3906 = vadd.f32 %v3892, %v3905
        %v3907 = vpop.f32.mrf.mxu0
        %v3908 = vadd.f32 %v3894, %v3907
        %3909 = vdwg.mxu0
        %3910 = vmatpush.bf16.msra.mxu0 %v2925
        %3911 = vmatpush.bf16.msra.mxu0 %v2921
        %3912 = vmatpush.bf16.msra.mxu0 %v2917
        %3913 = vmatpush.bf16.msra.mxu0 %v2913
        %3914 = vmatpush.bf16.msra.mxu0 %v2909
        %3915 = vmatpush.bf16.msra.mxu0 %v2905
        %3916 = vmatpush.bf16.msra.mxu0 %v2901
        %3917 = vmatpush.bf16.msra.mxu0 %v2897
        %3918 = vmatmul.bf16.gmra.mxu0 %v925
        %v3919 = vpop.f32.mrf.mxu0
        %v3920 = vadd.f32 %v3906, %v3919
        %v3921 = vpop.f32.mrf.mxu0
        %v3922 = vadd.f32 %v3908, %v3921
        %3923 = vdwg.mxu0
        %3924 = vmatpush.bf16.msra.mxu0 %v2957
        %3925 = vmatpush.bf16.msra.mxu0 %v2953
        %3926 = vmatpush.bf16.msra.mxu0 %v2949
        %3927 = vmatpush.bf16.msra.mxu0 %v2945
        %3928 = vmatpush.bf16.msra.mxu0 %v2941
        %3929 = vmatpush.bf16.msra.mxu0 %v2937
        %3930 = vmatpush.bf16.msra.mxu0 %v2933
        %3931 = vmatpush.bf16.msra.mxu0 %v2929
        %3932 = vmatmul.bf16.gmra.mxu0 %v926
        %v3933 = vpop.f32.mrf.mxu0
        %v3934 = vadd.f32 %v3920, %v3933
        %v3935 = vpop.f32.mrf.mxu0
        %v3936 = vadd.f32 %v3922, %v3935
        %3937 = vdwg.mxu0
        %3938 = vmatpush.bf16.msra.mxu0 %v2989
        %3939 = vmatpush.bf16.msra.mxu0 %v2985
        %3940 = vmatpush.bf16.msra.mxu0 %v2981
        %3941 = vmatpush.bf16.msra.mxu0 %v2977
        %3942 = vmatpush.bf16.msra.mxu0 %v2973
        %3943 = vmatpush.bf16.msra.mxu0 %v2969
        %3944 = vmatpush.bf16.msra.mxu0 %v2965
        %3945 = vmatpush.bf16.msra.mxu0 %v2961
        %3946 = vmatmul.bf16.gmra.mxu0 %v927
        %v3947 = vpop.f32.mrf.mxu0
        %v3948 = vadd.f32 %v3934, %v3947
        %v3949 = vpop.f32.mrf.mxu0
        %v3950 = vadd.f32 %v3936, %v3949
        %3951 = vdwg.mxu0
        %3952 = vmatpush.bf16.msra.mxu0 %v2510
        %3953 = vmatpush.bf16.msra.mxu0 %v2506
        %3954 = vmatpush.bf16.msra.mxu0 %v2502
        %3955 = vmatpush.bf16.msra.mxu0 %v2498
        %3956 = vmatpush.bf16.msra.mxu0 %v2494
        %3957 = vmatpush.bf16.msra.mxu0 %v2490
        %3958 = vmatpush.bf16.msra.mxu0 %v2486
        %3959 = vmatpush.bf16.msra.mxu0 %v2482
        %3960 = vmatmul.bf16.gmra.mxu0 %v912
        %v3961 = vpop.f32.mrf.mxu0
        %v3962 = vadd.f32 0.0, %v3961
        %v3963 = vpop.f32.mrf.mxu0
        %v3964 = vadd.f32 0.0, %v3963
        %3965 = vdwg.mxu0
        %3966 = vmatpush.bf16.msra.mxu0 %v2542
        %3967 = vmatpush.bf16.msra.mxu0 %v2538
        %3968 = vmatpush.bf16.msra.mxu0 %v2534
        %3969 = vmatpush.bf16.msra.mxu0 %v2530
        %3970 = vmatpush.bf16.msra.mxu0 %v2526
        %3971 = vmatpush.bf16.msra.mxu0 %v2522
        %3972 = vmatpush.bf16.msra.mxu0 %v2518
        %3973 = vmatpush.bf16.msra.mxu0 %v2514
        %3974 = vmatmul.bf16.gmra.mxu0 %v913
        %v3975 = vpop.f32.mrf.mxu0
        %v3976 = vadd.f32 %v3962, %v3975
        %v3977 = vpop.f32.mrf.mxu0
        %v3978 = vadd.f32 %v3964, %v3977
        %3979 = vdwg.mxu0
        %3980 = vmatpush.bf16.msra.mxu0 %v2574
        %3981 = vmatpush.bf16.msra.mxu0 %v2570
        %3982 = vmatpush.bf16.msra.mxu0 %v2566
        %3983 = vmatpush.bf16.msra.mxu0 %v2562
        %3984 = vmatpush.bf16.msra.mxu0 %v2558
        %3985 = vmatpush.bf16.msra.mxu0 %v2554
        %3986 = vmatpush.bf16.msra.mxu0 %v2550
        %3987 = vmatpush.bf16.msra.mxu0 %v2546
        %3988 = vmatmul.bf16.gmra.mxu0 %v914
        %v3989 = vpop.f32.mrf.mxu0
        %v3990 = vadd.f32 %v3976, %v3989
        %v3991 = vpop.f32.mrf.mxu0
        %v3992 = vadd.f32 %v3978, %v3991
        %3993 = vdwg.mxu0
        %3994 = vmatpush.bf16.msra.mxu0 %v2606
        %3995 = vmatpush.bf16.msra.mxu0 %v2602
        %3996 = vmatpush.bf16.msra.mxu0 %v2598
        %3997 = vmatpush.bf16.msra.mxu0 %v2594
        %3998 = vmatpush.bf16.msra.mxu0 %v2590
        %3999 = vmatpush.bf16.msra.mxu0 %v2586
        %4000 = vmatpush.bf16.msra.mxu0 %v2582
        %4001 = vmatpush.bf16.msra.mxu0 %v2578
        %4002 = vmatmul.bf16.gmra.mxu0 %v915
        %v4003 = vpop.f32.mrf.mxu0
        %v4004 = vadd.f32 %v3990, %v4003
        %v4005 = vpop.f32.mrf.mxu0
        %v4006 = vadd.f32 %v3992, %v4005
        %4007 = vdwg.mxu0
        %4008 = vmatpush.bf16.msra.mxu0 %v2638
        %4009 = vmatpush.bf16.msra.mxu0 %v2634
        %4010 = vmatpush.bf16.msra.mxu0 %v2630
        %4011 = vmatpush.bf16.msra.mxu0 %v2626
        %4012 = vmatpush.bf16.msra.mxu0 %v2622
        %4013 = vmatpush.bf16.msra.mxu0 %v2618
        %4014 = vmatpush.bf16.msra.mxu0 %v2614
        %4015 = vmatpush.bf16.msra.mxu0 %v2610
        %4016 = vmatmul.bf16.gmra.mxu0 %v916
        %v4017 = vpop.f32.mrf.mxu0
        %v4018 = vadd.f32 %v4004, %v4017
        %v4019 = vpop.f32.mrf.mxu0
        %v4020 = vadd.f32 %v4006, %v4019
        %4021 = vdwg.mxu0
        %4022 = vmatpush.bf16.msra.mxu0 %v2670
        %4023 = vmatpush.bf16.msra.mxu0 %v2666
        %4024 = vmatpush.bf16.msra.mxu0 %v2662
        %4025 = vmatpush.bf16.msra.mxu0 %v2658
        %4026 = vmatpush.bf16.msra.mxu0 %v2654
        %4027 = vmatpush.bf16.msra.mxu0 %v2650
        %4028 = vmatpush.bf16.msra.mxu0 %v2646
        %4029 = vmatpush.bf16.msra.mxu0 %v2642
        %4030 = vmatmul.bf16.gmra.mxu0 %v917
        %v4031 = vpop.f32.mrf.mxu0
        %v4032 = vadd.f32 %v4018, %v4031
        %v4033 = vpop.f32.mrf.mxu0
        %v4034 = vadd.f32 %v4020, %v4033
        %4035 = vdwg.mxu0
        %4036 = vmatpush.bf16.msra.mxu0 %v2702
        %4037 = vmatpush.bf16.msra.mxu0 %v2698
        %4038 = vmatpush.bf16.msra.mxu0 %v2694
        %4039 = vmatpush.bf16.msra.mxu0 %v2690
        %4040 = vmatpush.bf16.msra.mxu0 %v2686
        %4041 = vmatpush.bf16.msra.mxu0 %v2682
        %4042 = vmatpush.bf16.msra.mxu0 %v2678
        %4043 = vmatpush.bf16.msra.mxu0 %v2674
        %4044 = vmatmul.bf16.gmra.mxu0 %v918
        %v4045 = vpop.f32.mrf.mxu0
        %v4046 = vadd.f32 %v4032, %v4045
        %v4047 = vpop.f32.mrf.mxu0
        %v4048 = vadd.f32 %v4034, %v4047
        %4049 = vdwg.mxu0
        %4050 = vmatpush.bf16.msra.mxu0 %v2734
        %4051 = vmatpush.bf16.msra.mxu0 %v2730
        %4052 = vmatpush.bf16.msra.mxu0 %v2726
        %4053 = vmatpush.bf16.msra.mxu0 %v2722
        %4054 = vmatpush.bf16.msra.mxu0 %v2718
        %4055 = vmatpush.bf16.msra.mxu0 %v2714
        %4056 = vmatpush.bf16.msra.mxu0 %v2710
        %4057 = vmatpush.bf16.msra.mxu0 %v2706
        %4058 = vmatmul.bf16.gmra.mxu0 %v919
        %v4059 = vpop.f32.mrf.mxu0
        %v4060 = vadd.f32 %v4046, %v4059
        %v4061 = vpop.f32.mrf.mxu0
        %v4062 = vadd.f32 %v4048, %v4061
        %4063 = vdwg.mxu0
        %4064 = vmatpush.bf16.msra.mxu0 %v2766
        %4065 = vmatpush.bf16.msra.mxu0 %v2762
        %4066 = vmatpush.bf16.msra.mxu0 %v2758
        %4067 = vmatpush.bf16.msra.mxu0 %v2754
        %4068 = vmatpush.bf16.msra.mxu0 %v2750
        %4069 = vmatpush.bf16.msra.mxu0 %v2746
        %4070 = vmatpush.bf16.msra.mxu0 %v2742
        %4071 = vmatpush.bf16.msra.mxu0 %v2738
        %4072 = vmatmul.bf16.gmra.mxu0 %v920
        %v4073 = vpop.f32.mrf.mxu0
        %v4074 = vadd.f32 %v4060, %v4073
        %v4075 = vpop.f32.mrf.mxu0
        %v4076 = vadd.f32 %v4062, %v4075
        %4077 = vdwg.mxu0
        %4078 = vmatpush.bf16.msra.mxu0 %v2798
        %4079 = vmatpush.bf16.msra.mxu0 %v2794
        %4080 = vmatpush.bf16.msra.mxu0 %v2790
        %4081 = vmatpush.bf16.msra.mxu0 %v2786
        %4082 = vmatpush.bf16.msra.mxu0 %v2782
        %4083 = vmatpush.bf16.msra.mxu0 %v2778
        %4084 = vmatpush.bf16.msra.mxu0 %v2774
        %4085 = vmatpush.bf16.msra.mxu0 %v2770
        %4086 = vmatmul.bf16.gmra.mxu0 %v921
        %v4087 = vpop.f32.mrf.mxu0
        %v4088 = vadd.f32 %v4074, %v4087
        %v4089 = vpop.f32.mrf.mxu0
        %v4090 = vadd.f32 %v4076, %v4089
        %4091 = vdwg.mxu0
        %4092 = vmatpush.bf16.msra.mxu0 %v2830
        %4093 = vmatpush.bf16.msra.mxu0 %v2826
        %4094 = vmatpush.bf16.msra.mxu0 %v2822
        %4095 = vmatpush.bf16.msra.mxu0 %v2818
        %4096 = vmatpush.bf16.msra.mxu0 %v2814
        %4097 = vmatpush.bf16.msra.mxu0 %v2810
        %4098 = vmatpush.bf16.msra.mxu0 %v2806
        %4099 = vmatpush.bf16.msra.mxu0 %v2802
        %4100 = vmatmul.bf16.gmra.mxu0 %v922
        %v4101 = vpop.f32.mrf.mxu0
        %v4102 = vadd.f32 %v4088, %v4101
        %v4103 = vpop.f32.mrf.mxu0
        %v4104 = vadd.f32 %v4090, %v4103
        %4105 = vdwg.mxu0
        %4106 = vmatpush.bf16.msra.mxu0 %v2862
        %4107 = vmatpush.bf16.msra.mxu0 %v2858
        %4108 = vmatpush.bf16.msra.mxu0 %v2854
        %4109 = vmatpush.bf16.msra.mxu0 %v2850
        %4110 = vmatpush.bf16.msra.mxu0 %v2846
        %4111 = vmatpush.bf16.msra.mxu0 %v2842
        %4112 = vmatpush.bf16.msra.mxu0 %v2838
        %4113 = vmatpush.bf16.msra.mxu0 %v2834
        %4114 = vmatmul.bf16.gmra.mxu0 %v923
        %v4115 = vpop.f32.mrf.mxu0
        %v4116 = vadd.f32 %v4102, %v4115
        %v4117 = vpop.f32.mrf.mxu0
        %v4118 = vadd.f32 %v4104, %v4117
        %4119 = vdwg.mxu0
        %4120 = vmatpush.bf16.msra.mxu0 %v2894
        %4121 = vmatpush.bf16.msra.mxu0 %v2890
        %4122 = vmatpush.bf16.msra.mxu0 %v2886
        %4123 = vmatpush.bf16.msra.mxu0 %v2882
        %4124 = vmatpush.bf16.msra.mxu0 %v2878
        %4125 = vmatpush.bf16.msra.mxu0 %v2874
        %4126 = vmatpush.bf16.msra.mxu0 %v2870
        %4127 = vmatpush.bf16.msra.mxu0 %v2866
        %4128 = vmatmul.bf16.gmra.mxu0 %v924
        %v4129 = vpop.f32.mrf.mxu0
        %v4130 = vadd.f32 %v4116, %v4129
        %v4131 = vpop.f32.mrf.mxu0
        %v4132 = vadd.f32 %v4118, %v4131
        %4133 = vdwg.mxu0
        %4134 = vmatpush.bf16.msra.mxu0 %v2926
        %4135 = vmatpush.bf16.msra.mxu0 %v2922
        %4136 = vmatpush.bf16.msra.mxu0 %v2918
        %4137 = vmatpush.bf16.msra.mxu0 %v2914
        %4138 = vmatpush.bf16.msra.mxu0 %v2910
        %4139 = vmatpush.bf16.msra.mxu0 %v2906
        %4140 = vmatpush.bf16.msra.mxu0 %v2902
        %4141 = vmatpush.bf16.msra.mxu0 %v2898
        %4142 = vmatmul.bf16.gmra.mxu0 %v925
        %v4143 = vpop.f32.mrf.mxu0
        %v4144 = vadd.f32 %v4130, %v4143
        %v4145 = vpop.f32.mrf.mxu0
        %v4146 = vadd.f32 %v4132, %v4145
        %4147 = vdwg.mxu0
        %4148 = vmatpush.bf16.msra.mxu0 %v2958
        %4149 = vmatpush.bf16.msra.mxu0 %v2954
        %4150 = vmatpush.bf16.msra.mxu0 %v2950
        %4151 = vmatpush.bf16.msra.mxu0 %v2946
        %4152 = vmatpush.bf16.msra.mxu0 %v2942
        %4153 = vmatpush.bf16.msra.mxu0 %v2938
        %4154 = vmatpush.bf16.msra.mxu0 %v2934
        %4155 = vmatpush.bf16.msra.mxu0 %v2930
        %4156 = vmatmul.bf16.gmra.mxu0 %v926
        %v4157 = vpop.f32.mrf.mxu0
        %v4158 = vadd.f32 %v4144, %v4157
        %v4159 = vpop.f32.mrf.mxu0
        %v4160 = vadd.f32 %v4146, %v4159
        %4161 = vdwg.mxu0
        %4162 = vmatpush.bf16.msra.mxu0 %v2990
        %4163 = vmatpush.bf16.msra.mxu0 %v2986
        %4164 = vmatpush.bf16.msra.mxu0 %v2982
        %4165 = vmatpush.bf16.msra.mxu0 %v2978
        %4166 = vmatpush.bf16.msra.mxu0 %v2974
        %4167 = vmatpush.bf16.msra.mxu0 %v2970
        %4168 = vmatpush.bf16.msra.mxu0 %v2966
        %4169 = vmatpush.bf16.msra.mxu0 %v2962
        %4170 = vmatmul.bf16.gmra.mxu0 %v927
        %v4171 = vpop.f32.mrf.mxu0
        %v4172 = vadd.f32 %v4158, %v4171
        %v4173 = vpop.f32.mrf.mxu0
        %v4174 = vadd.f32 %v4160, %v4173
        %4175 = vdwg.mxu0
        %4176 = vmatpush.bf16.msra.mxu0 %v2511
        %4177 = vmatpush.bf16.msra.mxu0 %v2507
        %4178 = vmatpush.bf16.msra.mxu0 %v2503
        %4179 = vmatpush.bf16.msra.mxu0 %v2499
        %4180 = vmatpush.bf16.msra.mxu0 %v2495
        %4181 = vmatpush.bf16.msra.mxu0 %v2491
        %4182 = vmatpush.bf16.msra.mxu0 %v2487
        %4183 = vmatpush.bf16.msra.mxu0 %v2483
        %4184 = vmatmul.bf16.gmra.mxu0 %v912
        %v4185 = vpop.f32.mrf.mxu0
        %v4186 = vadd.f32 0.0, %v4185
        %v4187 = vpop.f32.mrf.mxu0
        %v4188 = vadd.f32 0.0, %v4187
        %4189 = vdwg.mxu0
        %4190 = vmatpush.bf16.msra.mxu0 %v2543
        %4191 = vmatpush.bf16.msra.mxu0 %v2539
        %4192 = vmatpush.bf16.msra.mxu0 %v2535
        %4193 = vmatpush.bf16.msra.mxu0 %v2531
        %4194 = vmatpush.bf16.msra.mxu0 %v2527
        %4195 = vmatpush.bf16.msra.mxu0 %v2523
        %4196 = vmatpush.bf16.msra.mxu0 %v2519
        %4197 = vmatpush.bf16.msra.mxu0 %v2515
        %4198 = vmatmul.bf16.gmra.mxu0 %v913
        %v4199 = vpop.f32.mrf.mxu0
        %v4200 = vadd.f32 %v4186, %v4199
        %v4201 = vpop.f32.mrf.mxu0
        %v4202 = vadd.f32 %v4188, %v4201
        %4203 = vdwg.mxu0
        %4204 = vmatpush.bf16.msra.mxu0 %v2575
        %4205 = vmatpush.bf16.msra.mxu0 %v2571
        %4206 = vmatpush.bf16.msra.mxu0 %v2567
        %4207 = vmatpush.bf16.msra.mxu0 %v2563
        %4208 = vmatpush.bf16.msra.mxu0 %v2559
        %4209 = vmatpush.bf16.msra.mxu0 %v2555
        %4210 = vmatpush.bf16.msra.mxu0 %v2551
        %4211 = vmatpush.bf16.msra.mxu0 %v2547
        %4212 = vmatmul.bf16.gmra.mxu0 %v914
        %v4213 = vpop.f32.mrf.mxu0
        %v4214 = vadd.f32 %v4200, %v4213
        %v4215 = vpop.f32.mrf.mxu0
        %v4216 = vadd.f32 %v4202, %v4215
        %4217 = vdwg.mxu0
        %4218 = vmatpush.bf16.msra.mxu0 %v2607
        %4219 = vmatpush.bf16.msra.mxu0 %v2603
        %4220 = vmatpush.bf16.msra.mxu0 %v2599
        %4221 = vmatpush.bf16.msra.mxu0 %v2595
        %4222 = vmatpush.bf16.msra.mxu0 %v2591
        %4223 = vmatpush.bf16.msra.mxu0 %v2587
        %4224 = vmatpush.bf16.msra.mxu0 %v2583
        %4225 = vmatpush.bf16.msra.mxu0 %v2579
        %4226 = vmatmul.bf16.gmra.mxu0 %v915
        %v4227 = vpop.f32.mrf.mxu0
        %v4228 = vadd.f32 %v4214, %v4227
        %v4229 = vpop.f32.mrf.mxu0
        %v4230 = vadd.f32 %v4216, %v4229
        %4231 = vdwg.mxu0
        %4232 = vmatpush.bf16.msra.mxu0 %v2639
        %4233 = vmatpush.bf16.msra.mxu0 %v2635
        %4234 = vmatpush.bf16.msra.mxu0 %v2631
        %4235 = vmatpush.bf16.msra.mxu0 %v2627
        %4236 = vmatpush.bf16.msra.mxu0 %v2623
        %4237 = vmatpush.bf16.msra.mxu0 %v2619
        %4238 = vmatpush.bf16.msra.mxu0 %v2615
        %4239 = vmatpush.bf16.msra.mxu0 %v2611
        %4240 = vmatmul.bf16.gmra.mxu0 %v916
        %v4241 = vpop.f32.mrf.mxu0
        %v4242 = vadd.f32 %v4228, %v4241
        %v4243 = vpop.f32.mrf.mxu0
        %v4244 = vadd.f32 %v4230, %v4243
        %4245 = vdwg.mxu0
        %4246 = vmatpush.bf16.msra.mxu0 %v2671
        %4247 = vmatpush.bf16.msra.mxu0 %v2667
        %4248 = vmatpush.bf16.msra.mxu0 %v2663
        %4249 = vmatpush.bf16.msra.mxu0 %v2659
        %4250 = vmatpush.bf16.msra.mxu0 %v2655
        %4251 = vmatpush.bf16.msra.mxu0 %v2651
        %4252 = vmatpush.bf16.msra.mxu0 %v2647
        %4253 = vmatpush.bf16.msra.mxu0 %v2643
        %4254 = vmatmul.bf16.gmra.mxu0 %v917
        %v4255 = vpop.f32.mrf.mxu0
        %v4256 = vadd.f32 %v4242, %v4255
        %v4257 = vpop.f32.mrf.mxu0
        %v4258 = vadd.f32 %v4244, %v4257
        %4259 = vdwg.mxu0
        %4260 = vmatpush.bf16.msra.mxu0 %v2703
        %4261 = vmatpush.bf16.msra.mxu0 %v2699
        %4262 = vmatpush.bf16.msra.mxu0 %v2695
        %4263 = vmatpush.bf16.msra.mxu0 %v2691
        %4264 = vmatpush.bf16.msra.mxu0 %v2687
        %4265 = vmatpush.bf16.msra.mxu0 %v2683
        %4266 = vmatpush.bf16.msra.mxu0 %v2679
        %4267 = vmatpush.bf16.msra.mxu0 %v2675
        %4268 = vmatmul.bf16.gmra.mxu0 %v918
        %v4269 = vpop.f32.mrf.mxu0
        %v4270 = vadd.f32 %v4256, %v4269
        %v4271 = vpop.f32.mrf.mxu0
        %v4272 = vadd.f32 %v4258, %v4271
        %4273 = vdwg.mxu0
        %4274 = vmatpush.bf16.msra.mxu0 %v2735
        %4275 = vmatpush.bf16.msra.mxu0 %v2731
        %4276 = vmatpush.bf16.msra.mxu0 %v2727
        %4277 = vmatpush.bf16.msra.mxu0 %v2723
        %4278 = vmatpush.bf16.msra.mxu0 %v2719
        %4279 = vmatpush.bf16.msra.mxu0 %v2715
        %4280 = vmatpush.bf16.msra.mxu0 %v2711
        %4281 = vmatpush.bf16.msra.mxu0 %v2707
        %4282 = vmatmul.bf16.gmra.mxu0 %v919
        %v4283 = vpop.f32.mrf.mxu0
        %v4284 = vadd.f32 %v4270, %v4283
        %v4285 = vpop.f32.mrf.mxu0
        %v4286 = vadd.f32 %v4272, %v4285
        %4287 = vdwg.mxu0
        %4288 = vmatpush.bf16.msra.mxu0 %v2767
        %4289 = vmatpush.bf16.msra.mxu0 %v2763
        %4290 = vmatpush.bf16.msra.mxu0 %v2759
        %4291 = vmatpush.bf16.msra.mxu0 %v2755
        %4292 = vmatpush.bf16.msra.mxu0 %v2751
        %4293 = vmatpush.bf16.msra.mxu0 %v2747
        %4294 = vmatpush.bf16.msra.mxu0 %v2743
        %4295 = vmatpush.bf16.msra.mxu0 %v2739
        %4296 = vmatmul.bf16.gmra.mxu0 %v920
        %v4297 = vpop.f32.mrf.mxu0
        %v4298 = vadd.f32 %v4284, %v4297
        %v4299 = vpop.f32.mrf.mxu0
        %v4300 = vadd.f32 %v4286, %v4299
        %4301 = vdwg.mxu0
        %4302 = vmatpush.bf16.msra.mxu0 %v2799
        %4303 = vmatpush.bf16.msra.mxu0 %v2795
        %4304 = vmatpush.bf16.msra.mxu0 %v2791
        %4305 = vmatpush.bf16.msra.mxu0 %v2787
        %4306 = vmatpush.bf16.msra.mxu0 %v2783
        %4307 = vmatpush.bf16.msra.mxu0 %v2779
        %4308 = vmatpush.bf16.msra.mxu0 %v2775
        %4309 = vmatpush.bf16.msra.mxu0 %v2771
        %4310 = vmatmul.bf16.gmra.mxu0 %v921
        %v4311 = vpop.f32.mrf.mxu0
        %v4312 = vadd.f32 %v4298, %v4311
        %v4313 = vpop.f32.mrf.mxu0
        %v4314 = vadd.f32 %v4300, %v4313
        %4315 = vdwg.mxu0
        %4316 = vmatpush.bf16.msra.mxu0 %v2831
        %4317 = vmatpush.bf16.msra.mxu0 %v2827
        %4318 = vmatpush.bf16.msra.mxu0 %v2823
        %4319 = vmatpush.bf16.msra.mxu0 %v2819
        %4320 = vmatpush.bf16.msra.mxu0 %v2815
        %4321 = vmatpush.bf16.msra.mxu0 %v2811
        %4322 = vmatpush.bf16.msra.mxu0 %v2807
        %4323 = vmatpush.bf16.msra.mxu0 %v2803
        %4324 = vmatmul.bf16.gmra.mxu0 %v922
        %v4325 = vpop.f32.mrf.mxu0
        %v4326 = vadd.f32 %v4312, %v4325
        %v4327 = vpop.f32.mrf.mxu0
        %v4328 = vadd.f32 %v4314, %v4327
        %4329 = vdwg.mxu0
        %4330 = vmatpush.bf16.msra.mxu0 %v2863
        %4331 = vmatpush.bf16.msra.mxu0 %v2859
        %4332 = vmatpush.bf16.msra.mxu0 %v2855
        %4333 = vmatpush.bf16.msra.mxu0 %v2851
        %4334 = vmatpush.bf16.msra.mxu0 %v2847
        %4335 = vmatpush.bf16.msra.mxu0 %v2843
        %4336 = vmatpush.bf16.msra.mxu0 %v2839
        %4337 = vmatpush.bf16.msra.mxu0 %v2835
        %4338 = vmatmul.bf16.gmra.mxu0 %v923
        %v4339 = vpop.f32.mrf.mxu0
        %v4340 = vadd.f32 %v4326, %v4339
        %v4341 = vpop.f32.mrf.mxu0
        %v4342 = vadd.f32 %v4328, %v4341
        %4343 = vdwg.mxu0
        %4344 = vmatpush.bf16.msra.mxu0 %v2895
        %4345 = vmatpush.bf16.msra.mxu0 %v2891
        %4346 = vmatpush.bf16.msra.mxu0 %v2887
        %4347 = vmatpush.bf16.msra.mxu0 %v2883
        %4348 = vmatpush.bf16.msra.mxu0 %v2879
        %4349 = vmatpush.bf16.msra.mxu0 %v2875
        %4350 = vmatpush.bf16.msra.mxu0 %v2871
        %4351 = vmatpush.bf16.msra.mxu0 %v2867
        %4352 = vmatmul.bf16.gmra.mxu0 %v924
        %v4353 = vpop.f32.mrf.mxu0
        %v4354 = vadd.f32 %v4340, %v4353
        %v4355 = vpop.f32.mrf.mxu0
        %v4356 = vadd.f32 %v4342, %v4355
        %4357 = vdwg.mxu0
        %4358 = vmatpush.bf16.msra.mxu0 %v2927
        %4359 = vmatpush.bf16.msra.mxu0 %v2923
        %4360 = vmatpush.bf16.msra.mxu0 %v2919
        %4361 = vmatpush.bf16.msra.mxu0 %v2915
        %4362 = vmatpush.bf16.msra.mxu0 %v2911
        %4363 = vmatpush.bf16.msra.mxu0 %v2907
        %4364 = vmatpush.bf16.msra.mxu0 %v2903
        %4365 = vmatpush.bf16.msra.mxu0 %v2899
        %4366 = vmatmul.bf16.gmra.mxu0 %v925
        %v4367 = vpop.f32.mrf.mxu0
        %v4368 = vadd.f32 %v4354, %v4367
        %v4369 = vpop.f32.mrf.mxu0
        %v4370 = vadd.f32 %v4356, %v4369
        %4371 = vdwg.mxu0
        %4372 = vmatpush.bf16.msra.mxu0 %v2959
        %4373 = vmatpush.bf16.msra.mxu0 %v2955
        %4374 = vmatpush.bf16.msra.mxu0 %v2951
        %4375 = vmatpush.bf16.msra.mxu0 %v2947
        %4376 = vmatpush.bf16.msra.mxu0 %v2943
        %4377 = vmatpush.bf16.msra.mxu0 %v2939
        %4378 = vmatpush.bf16.msra.mxu0 %v2935
        %4379 = vmatpush.bf16.msra.mxu0 %v2931
        %4380 = vmatmul.bf16.gmra.mxu0 %v926
        %v4381 = vpop.f32.mrf.mxu0
        %v4382 = vadd.f32 %v4368, %v4381
        %v4383 = vpop.f32.mrf.mxu0
        %v4384 = vadd.f32 %v4370, %v4383
        %4385 = vdwg.mxu0
        %4386 = vmatpush.bf16.msra.mxu0 %v2991
        %4387 = vmatpush.bf16.msra.mxu0 %v2987
        %4388 = vmatpush.bf16.msra.mxu0 %v2983
        %4389 = vmatpush.bf16.msra.mxu0 %v2979
        %4390 = vmatpush.bf16.msra.mxu0 %v2975
        %4391 = vmatpush.bf16.msra.mxu0 %v2971
        %4392 = vmatpush.bf16.msra.mxu0 %v2967
        %4393 = vmatpush.bf16.msra.mxu0 %v2963
        %4394 = vmatmul.bf16.gmra.mxu0 %v927
        %v4395 = vpop.f32.mrf.mxu0
        %v4396 = vadd.f32 %v4382, %v4395
        %v4397 = vpop.f32.mrf.mxu0
        %v4398 = vadd.f32 %v4384, %v4397
        %4399 = vdwg.mxu0
        %v4400 = vadd.f32 %v328, %v3724
        %v4401 = vadd.f32 %v329, %v3948
        %v4402 = vadd.f32 %v330, %v4172
        %v4403 = vadd.f32 %v331, %v4396
        %v4404 = vadd.f32 %v332, %v3726
        %v4405 = vadd.f32 %v333, %v3950
        %v4406 = vadd.f32 %v334, %v4174
        %v4407 = vadd.f32 %v335, %v4398
        %4408 = vst [vmem:[#allocation2] sm:$0xff] %v4400
        %4409 = vst [vmem:[#allocation2 + $0x8] sm:$0xff] %v4401
        %4410 = vst [vmem:[#allocation2 + $0x10] sm:$0xff] %v4402
        %4411 = vst [vmem:[#allocation2 + $0x18] sm:$0xff] %v4403
        %4412 = vst [vmem:[#allocation2 + $0x20] sm:$0x1] %v4404
        %4413 = vst [vmem:[#allocation2 + $0x28] sm:$0x1] %v4405
        %4414 = vst [vmem:[#allocation2 + $0x30] sm:$0x1] %v4406
        %4415 = vst [vmem:[#allocation2 + $0x38] sm:$0x1] %v4407
        %p4416 = scmp.eq.s32.totalorder %s21, 1
        // Predicated region
        $region60: #{discriminator_forward.8} parent=50 // pred_check
          %p4417 = pneg %p4416
        $region61: #{discriminator_forward.8} parent=50 // pred_check_branch
          %4419 = sbr.rel (%p4417) target = $region63
        $region62: #{discriminator_forward.8} parent=50 // pred_region
          %v4420 = vld [vmem:[#allocation2] sm:$0xff]
          %v4421 = vld [vmem:[#allocation2 + $0x8] sm:$0xff]
          %v4422 = vld [vmem:[#allocation2 + $0x10] sm:$0xff]
          %v4423 = vld [vmem:[#allocation2 + $0x18] sm:$0xff]
          %v4424 = vld [vmem:[#allocation2 + $0x20] sm:$0x1]
          %v4425 = vld [vmem:[#allocation2 + $0x28] sm:$0x1]
          %v4426 = vld [vmem:[#allocation2 + $0x30] sm:$0x1]
          %v4427 = vld [vmem:[#allocation2 + $0x38] sm:$0x1]
          %v4428 = vld [vmem:[%s304] sm:$0xf]
          %v4430 = vperm.slane %v4428, 0
          %v4431 = vperm.slane %v4428, 1
          %v4432 = vperm.slane %v4428, 2
          %v4433 = vperm.slane %v4428, 3
          %v4438 = vadd.f32 %v4420, %v4430
          %v4439 = vadd.f32 %v4421, %v4431
          %v4440 = vadd.f32 %v4422, %v4432
          %v4441 = vadd.f32 %v4423, %v4433
          %v4442 = vadd.f32 %v4424, %v4430
          %v4443 = vadd.f32 %v4425, %v4431
          %v4444 = vadd.f32 %v4426, %v4432
          %v4445 = vadd.f32 %v4427, %v4433
          %vm4446 = vcmask 1040384
          %v4447 = vsel %vm4446, %v4442, 0.0
          %v4448 = vadd.f32 %v4438, %v4447
          %v4449 = vrot.slane %v4448, 4
          %v4450 = vadd.f32 %v4448, %v4449
          %v4451 = vrot.slane %v4450, 2
          %v4452 = vadd.f32 %v4450, %v4451
          %v4453 = vrot.slane %v4452, 1
          %v4454 = vadd.f32 %v4452, %v4453
          %v4455 = vsel %vm4446, %v4443, 0.0
          %v4456 = vadd.f32 %v4439, %v4455
          %v4457 = vrot.slane %v4456, 4
          %v4458 = vadd.f32 %v4456, %v4457
          %v4459 = vrot.slane %v4458, 2
          %v4460 = vadd.f32 %v4458, %v4459
          %v4461 = vrot.slane %v4460, 1
          %v4462 = vadd.f32 %v4460, %v4461
          %v4463 = vsel %vm4446, %v4444, 0.0
          %v4464 = vadd.f32 %v4440, %v4463
          %v4465 = vrot.slane %v4464, 4
          %v4466 = vadd.f32 %v4464, %v4465
          %v4467 = vrot.slane %v4466, 2
          %v4468 = vadd.f32 %v4466, %v4467
          %v4469 = vrot.slane %v4468, 1
          %v4470 = vadd.f32 %v4468, %v4469
          %v4471 = vsel %vm4446, %v4445, 0.0
          %v4472 = vadd.f32 %v4441, %v4471
          %v4473 = vrot.slane %v4472, 4
          %v4474 = vadd.f32 %v4472, %v4473
          %v4475 = vrot.slane %v4474, 2
          %v4476 = vadd.f32 %v4474, %v4475
          %v4477 = vrot.slane %v4476, 1
          %v4478 = vadd.f32 %v4476, %v4477
          %v4479 = vrcp.pop 9.0
          %v4480 = vmul.f32 9.0, %v4479
          %v4481 = vsub.f32 1.0, %v4480
          %v4482 = vmul.f32 %v4479, %v4481
          %v4483 = vadd.f32 %v4479, %v4482
          %vm4484 = vweird.f32 %v4479
          %v4485 = vsel %vm4484, %v4479, %v4483
          %v4486 = vmul.f32 %v4454, %v4485
          %v4487 = vmul.f32 %v4462, %v4485
          %v4488 = vmul.f32 %v4470, %v4485
          %v4489 = vmul.f32 %v4478, %v4485
          %v4490 = vsub.f32 %v4438, %v4486
          %v4491 = vsub.f32 %v4439, %v4487
          %v4492 = vsub.f32 %v4440, %v4488
          %v4493 = vsub.f32 %v4441, %v4489
          %v4494 = vsub.f32 %v4442, %v4486
          %v4495 = vsub.f32 %v4443, %v4487
          %v4496 = vsub.f32 %v4444, %v4488
          %v4497 = vsub.f32 %v4445, %v4489
          %v4498 = vmul.f32 %v4490, %v4490
          %v4499 = vmul.f32 %v4491, %v4491
          %v4500 = vmul.f32 %v4492, %v4492
          %v4501 = vmul.f32 %v4493, %v4493
          %v4502 = vmul.f32 %v4494, %v4494
          %v4503 = vmul.f32 %v4495, %v4495
          %v4504 = vmul.f32 %v4496, %v4496
          %v4505 = vmul.f32 %v4497, %v4497
          %v4506 = vsel %vm4446, %v4502, 0.0
          %v4507 = vadd.f32 %v4498, %v4506
          %v4508 = vrot.slane %v4507, 4
          %v4509 = vadd.f32 %v4507, %v4508
          %v4510 = vrot.slane %v4509, 2
          %v4511 = vadd.f32 %v4509, %v4510
          %v4512 = vrot.slane %v4511, 1
          %v4513 = vadd.f32 %v4511, %v4512
          %v4514 = vsel %vm4446, %v4503, 0.0
          %v4515 = vadd.f32 %v4499, %v4514
          %v4516 = vrot.slane %v4515, 4
          %v4517 = vadd.f32 %v4515, %v4516
          %v4518 = vrot.slane %v4517, 2
          %v4519 = vadd.f32 %v4517, %v4518
          %v4520 = vrot.slane %v4519, 1
          %v4521 = vadd.f32 %v4519, %v4520
          %v4522 = vsel %vm4446, %v4504, 0.0
          %v4523 = vadd.f32 %v4500, %v4522
          %v4524 = vrot.slane %v4523, 4
          %v4525 = vadd.f32 %v4523, %v4524
          %v4526 = vrot.slane %v4525, 2
          %v4527 = vadd.f32 %v4525, %v4526
          %v4528 = vrot.slane %v4527, 1
          %v4529 = vadd.f32 %v4527, %v4528
          %v4530 = vsel %vm4446, %v4505, 0.0
          %v4531 = vadd.f32 %v4501, %v4530
          %v4532 = vrot.slane %v4531, 4
          %v4533 = vadd.f32 %v4531, %v4532
          %v4534 = vrot.slane %v4533, 2
          %v4535 = vadd.f32 %v4533, %v4534
          %v4536 = vrot.slane %v4535, 1
          %v4537 = vadd.f32 %v4535, %v4536
          %v4538 = vmul.f32 %v4513, %v4485
          %v4539 = vmul.f32 %v4521, %v4485
          %v4540 = vmul.f32 %v4529, %v4485
          %v4541 = vmul.f32 %v4537, %v4485
          %v4542 = vadd.f32 %v4538, 1e-05
          %v4543 = vadd.f32 %v4539, 1e-05
          %v4544 = vadd.f32 %v4540, 1e-05
          %v4545 = vadd.f32 %v4541, 1e-05
          %v4546 = vrsqrt.pop %v4542
          %v4547 = vmul.f32 %v4546, %v4542
          %v4548 = vmul.f32 %v4547, %v4546
          %v4549 = vmul.f32 0.5, %v4548
          %v4550 = vsub.f32 1.5, %v4549
          %v4551 = vmul.f32 %v4546, %v4550
          %vm4552 = vweird.f32 %v4542
          %vm4553 = vweird.f32 %v4546
          %vm4554 = vmor %vm4552, %vm4553
          %v4555 = vsel %vm4554, %v4546, %v4551
          %v4556 = vrsqrt.pop %v4543
          %v4557 = vmul.f32 %v4556, %v4543
          %v4558 = vmul.f32 %v4557, %v4556
          %v4559 = vmul.f32 0.5, %v4558
          %v4560 = vsub.f32 1.5, %v4559
          %v4561 = vmul.f32 %v4556, %v4560
          %vm4562 = vweird.f32 %v4543
          %vm4563 = vweird.f32 %v4556
          %vm4564 = vmor %vm4562, %vm4563
          %v4565 = vsel %vm4564, %v4556, %v4561
          %v4566 = vrsqrt.pop %v4544
          %v4567 = vmul.f32 %v4566, %v4544
          %v4568 = vmul.f32 %v4567, %v4566
          %v4569 = vmul.f32 0.5, %v4568
          %v4570 = vsub.f32 1.5, %v4569
          %v4571 = vmul.f32 %v4566, %v4570
          %vm4572 = vweird.f32 %v4544
          %vm4573 = vweird.f32 %v4566
          %vm4574 = vmor %vm4572, %vm4573
          %v4575 = vsel %vm4574, %v4566, %v4571
          %v4576 = vrsqrt.pop %v4545
          %v4577 = vmul.f32 %v4576, %v4545
          %v4578 = vmul.f32 %v4577, %v4576
          %v4579 = vmul.f32 0.5, %v4578
          %v4580 = vsub.f32 1.5, %v4579
          %v4581 = vmul.f32 %v4576, %v4580
          %vm4582 = vweird.f32 %v4545
          %vm4583 = vweird.f32 %v4576
          %vm4584 = vmor %vm4582, %vm4583
          %v4585 = vsel %vm4584, %v4576, %v4581
          %v4586 = vmul.f32 %v4490, %v4555
          %v4587 = vmul.f32 %v4491, %v4565
          %v4588 = vmul.f32 %v4492, %v4575
          %v4589 = vmul.f32 %v4493, %v4585
          %v4590 = vmul.f32 %v4494, %v4555
          %v4591 = vmul.f32 %v4495, %v4565
          %v4592 = vmul.f32 %v4496, %v4575
          %v4593 = vmul.f32 %v4497, %v4585
          %vm4594 = vcmp.ge.f32.partialorder %v4586, 0.0
          %vm4595 = vcmp.ge.f32.partialorder %v4587, 0.0
          %vm4596 = vcmp.ge.f32.partialorder %v4588, 0.0
          %vm4597 = vcmp.ge.f32.partialorder %v4589, 0.0
          %vm4598 = vcmp.ge.f32.partialorder %v4590, 0.0
          %vm4599 = vcmp.ge.f32.partialorder %v4591, 0.0
          %vm4600 = vcmp.ge.f32.partialorder %v4592, 0.0
          %vm4601 = vcmp.ge.f32.partialorder %v4593, 0.0
          %v4602 = vmul.f32 %v4586, 0.2
          %v4603 = vmul.f32 %v4587, 0.2
          %v4604 = vmul.f32 %v4588, 0.2
          %v4605 = vmul.f32 %v4589, 0.2
          %v4606 = vmul.f32 %v4590, 0.2
          %v4607 = vmul.f32 %v4591, 0.2
          %v4608 = vmul.f32 %v4592, 0.2
          %v4609 = vmul.f32 %v4593, 0.2
          %v4610 = vsel %vm4594, %v4586, %v4602
          %v4611 = vsel %vm4595, %v4587, %v4603
          %v4612 = vsel %vm4596, %v4588, %v4604
          %v4613 = vsel %vm4597, %v4589, %v4605
          %v4614 = vsel %vm4598, %v4590, %v4606
          %v4615 = vsel %vm4599, %v4591, %v4607
          %v4616 = vsel %vm4600, %v4592, %v4608
          %v4617 = vsel %vm4601, %v4593, %v4609
          %v4618 = vpack.c.bf16 %v4611, %v4610
          %v4619 = vpack.c.bf16 %v4613, %v4612
          %v4620 = vpack.c.bf16 %v4615, %v4614
          %v4621 = vpack.c.bf16 %v4617, %v4616
          %4622 = vst [vmem:[%s314] sm:$0xff] %v4618
          %4623 = vst [vmem:[%s314 + $0x8] sm:$0xff] %v4619
          %vm4624 = vcmask 1040384
          %vm4625 = vsmask.f32 256
          %vm4626 = vmand %vm4624, %vm4625
          %vm4627 = vcmask 1044484
          %vm4628 = vsmask.f32 4352
          %vm4629 = vmand %vm4627, %vm4628
          %vm4630 = vmor %vm4629, %vm4626
          %v4631 = vld [vmem:[%s314 + $0x10] sm:$0x11]
          %v4632 = vsel %vm4630, %v4620, %v4631
          %4633 = vst [vmem:[%s314 + $0x10] sm:$0x11] %v4632
          %v4634 = vld [vmem:[%s314 + $0x18] sm:$0x11]
          %v4635 = vsel %vm4630, %v4621, %v4634
          %4636 = vst [vmem:[%s314 + $0x18] sm:$0x11] %v4635
        $region63: #{discriminator_forward.8} parent=50 // pred_fallthru
          _
        %s4637 = smul.u32 4, %s20
        %p4638 = scmp.lt.s32.totalorder %s19, 1
        %s4639 = scalar_select %p4638, %s19, 1
        %p4640 = scmp.lt.s32.totalorder %s4637, 3
        %s4641 = scalar_select %p4640, %s4637, 3
        %s4642 = smul.addr %s4639, 8
        %s4643 = sadd.s32 %s4641, %s4642
        %s4644 = smul.addr %s4643, 4
        %s4645 = scalar_lea.vmem %s3, %s4644
        // Predicated region
        $region64: #{discriminator_forward.8} parent=50 // pred_check
          %p4646 = pneg %p135
        $region65: #{discriminator_forward.8} parent=50 // pred_check_branch
          %4648 = sbr.rel (%p4646) target = $region67
        $region66: #{discriminator_forward.8} parent=50 // pred_region
          %s4649 = smul.u32 4, %s20
        $region67: #{discriminator_forward.8} parent=50 // pred_fallthru
          _
      $region51: #{discriminator_forward.8} parent=5 // pred_fallthru
        _
      %p4650 = scmp.le.s32.totalorder 2, %s9
      // Predicated region
      $region68: #{discriminator_forward.8} parent=5 // pred_check
        %p4651 = pneg %p4650
      $region69: #{discriminator_forward.8} parent=5 // pred_check_branch
        %4653 = sbr.rel (%p4651) target = $region71
      $region70: #{discriminator_forward.8} parent=5 // pred_region
        %s4654 = ssub.s32 %s9, 2
        // Predicated region
        $region72: #{discriminator_forward.8} parent=70 // pred_check
          %p4655 = pneg %p141
        $region73: #{discriminator_forward.8} parent=70 // pred_check_branch
          %4657 = sbr.rel (%p4655) target = $region75
        $region74: #{discriminator_forward.8} parent=70 // pred_region
          %s4658 = smul.u32 4, %s23
          %p4659 = scmp.lt.s32.totalorder %s22, 1
          %s4660 = scalar_select %p4659, %s22, 1
          %p4661 = scmp.lt.s32.totalorder %s4658, 3
          %s4662 = scalar_select %p4661, %s4658, 3
          %s4663 = smul.addr %s4660, 8
          %s4664 = sadd.s32 %s4662, %s4663
          %s4665 = smul.addr %s4664, 4
          %s4666 = scalar_lea.vmem %s3, %s4665
        $region75: #{discriminator_forward.8} parent=70 // pred_fallthru
          _
      $region71: #{discriminator_forward.8} parent=5 // pred_fallthru
        _
    $region6: #{discriminator_forward.8} parent=1 // loop_footer
      %s13 = sadd.s32 1, %s9
    $region7: #{discriminator_forward.8} parent=1 // loop_footer_branch
      %8 = sbr.rel target = $region3
    $region8: #{discriminator_forward.8} parent=1 // loop_exit
      _

// kernel: discriminator_forward.9
$region0: #{discriminator_forward.9}
  #allocation0 [shape = 'u32[]', space=smem, size = 0x4, offset = 0x4, fixed_abs, tag = 'smem constant byte address 0x4 - core index']
  #allocation1 [shape = 'u32[72,128]{1,0:T(1,128)}', space=vmem, size = 0x9000, scoped, tag = 'internal scratch']
  #allocation2 [shape = 'f32[4,128]{1,0:T(4,128)}', space=vmem, size = 0x800, scoped, tag = 'scratch operand']
  %s0 = inlined_call_operand.vmem [shape: bf16[2,4,8192], index: 0, kind: input, shape index: {}]
  %s1 = inlined_call_operand.vmem [shape: bf16[8192,128], index: 1, kind: input, shape index: {}]
  %s2 = inlined_call_operand.vmem [shape: f32[1,128], index: 2, kind: input, shape index: {}]
  %s3 = inlined_call_operand.vmem [shape: f32[2,4,128], index: 3, kind: output, shape index: {}]
  %s4 = sld [smem:[#allocation0]]
  $region53: #{discriminator_forward.9} parent=0
    _
  %s6 = ssub.s32 1, %s4
  %s7 = scalar_select 0, %s6, %s4
  loop: start=0, step=1, limit=10
  $region2: #{discriminator_forward.9} parent=0 // loop_pre_header
    _
  $region3: #{discriminator_forward.9} parent=0 // loop_header
    %s9 = sphi 0, %s13
    %p10 = scmp.ge.s32.totalorder %s9, 10
    %s16 = sphi 0, %s35
    %s17 = sphi 0, %s31
    %s18 = sphi 0, %s27
    %s19 = sphi 0, %s16
    %s20 = sphi 0, %s17
    %s21 = sphi 0, %s18
    %s22 = sphi 0, %s19
    %s23 = sphi 0, %s20
    %s24 = sphi 0, %s21
    %s40 = sphi 0, %s42
    %s43 = sphi 0, %s40
    %s44 = sphi 0, %s43
    %s60 = sphi 0, %s44
    %s68 = sphi 0, %s70
    %s71 = sphi 0, %s68
    %s72 = sphi 0, %s71
    %s88 = sphi 0, %s72
    %s94 = sphi 0, %s96
    %s97 = sphi 0, %s94
    %s98 = sphi 0, %s97
    %s114 = sphi 0, %s98
    %s122 = sphi 0, %s124
    %s125 = sphi 0, %s122
    %s126 = sphi 0, %s125
    %s142 = sphi 0, %s126
  $region4: #{discriminator_forward.9} parent=0 // loop_header_branch
    %12 = sbr.rel (%p10) target = $region8
  $region5: #{discriminator_forward.9} parent=0 // loop_body
    %s14 = ssub.s32 %s9, 1
    %s15 = ssub.s32 %s9, 2
    %s25 = sadd.s32 1, %s18
    %p26 = scmp.ge.s32.totalorder %s25, 4
    %s27 = scalar_select %p26, 0, %s25
    %s28 = sadd.s32 1, %s17
    %s29 = scalar_select %p26, %s28, %s17
    %p30 = scmp.ge.s32.totalorder %s29, 1
    %s31 = scalar_select %p30, 0, %s29
    %s32 = sadd.s32 1, %s16
    %s33 = scalar_select %p30, %s32, %s16
    %p34 = scmp.ge.s32.totalorder %s33, 2
    %s35 = scalar_select %p34, 0, %s33
    %s36 = ssub.s32 %s16, %s35
    %s37 = ssub.s32 %s18, %s27
    %s38 = sor.u32 %s36, %s37
    %p39 = scmp.eq.s32.totalorder %s38, 0
    %s41 = sadd.s32 %s40, 1
    %s42 = scalar_select %p39, %s40, %s41
    %p45 = pneg %p39
    %p46 = scmp.eq.s32.totalorder %s9, 7
    %p47 = por %p45, %p46
    %p48 = scmp.ne.s32.totalorder %s40, %s43
    %p49 = scmp.eq.s32.totalorder %s9, 0
    %p50 = por %p48, %p49
    %p51 = scmp.ne.s32.totalorder %s40, %s43
    %p52 = scmp.eq.s32.totalorder %s14, 7
    %p53 = por %p51, %p52
    %p54 = scmp.ne.s32.totalorder %s43, %s44
    %p55 = scmp.eq.s32.totalorder %s14, 0
    %p56 = por %p54, %p55
    %p57 = scmp.ne.s32.totalorder %s43, %s44
    %p58 = scmp.eq.s32.totalorder %s15, 7
    %p59 = por %p57, %p58
    %p61 = scmp.ne.s32.totalorder %s44, %s60
    %p62 = scmp.eq.s32.totalorder %s15, 0
    %p63 = por %p61, %p62
    %s64 = ssub.s32 %s18, %s27
    %s65 = ssub.s32 %s17, %s31
    %s66 = sor.u32 %s64, %s65
    %p67 = scmp.eq.s32.totalorder %s66, 0
    %s69 = sadd.s32 %s68, 1
    %s70 = scalar_select %p67, %s68, %s69
    %p73 = pneg %p67
    %p74 = scmp.eq.s32.totalorder %s9, 7
    %p75 = por %p73, %p74
    %p76 = scmp.ne.s32.totalorder %s68, %s71
    %p77 = scmp.eq.s32.totalorder %s9, 0
    %p78 = por %p76, %p77
    %p79 = scmp.ne.s32.totalorder %s68, %s71
    %p80 = scmp.eq.s32.totalorder %s14, 7
    %p81 = por %p79, %p80
    %p82 = scmp.ne.s32.totalorder %s71, %s72
    %p83 = scmp.eq.s32.totalorder %s14, 0
    %p84 = por %p82, %p83
    %p85 = scmp.ne.s32.totalorder %s71, %s72
    %p86 = scmp.eq.s32.totalorder %s15, 7
    %p87 = por %p85, %p86
    %p89 = scmp.ne.s32.totalorder %s72, %s88
    %p90 = scmp.eq.s32.totalorder %s15, 0
    %p91 = por %p89, %p90
    %s92 = ssub.s32 %s17, %s31
    %p93 = scmp.eq.s32.totalorder %s92, 0
    %s95 = sadd.s32 %s94, 1
    %s96 = scalar_select %p93, %s94, %s95
    %p99 = pneg %p93
    %p100 = scmp.eq.s32.totalorder %s9, 7
    %p101 = por %p99, %p100
    %p102 = scmp.ne.s32.totalorder %s94, %s97
    %p103 = scmp.eq.s32.totalorder %s9, 0
    %p104 = por %p102, %p103
    %p105 = scmp.ne.s32.totalorder %s94, %s97
    %p106 = scmp.eq.s32.totalorder %s14, 7
    %p107 = por %p105, %p106
    %p108 = scmp.ne.s32.totalorder %s97, %s98
    %p109 = scmp.eq.s32.totalorder %s14, 0
    %p110 = por %p108, %p109
    %p111 = scmp.ne.s32.totalorder %s97, %s98
    %p112 = scmp.eq.s32.totalorder %s15, 7
    %p113 = por %p111, %p112
    %p115 = scmp.ne.s32.totalorder %s98, %s114
    %p116 = scmp.eq.s32.totalorder %s15, 0
    %p117 = por %p115, %p116
    %s118 = ssub.s32 %s16, %s35
    %s119 = ssub.s32 %s17, %s31
    %s120 = sor.u32 %s118, %s119
    %p121 = scmp.eq.s32.totalorder %s120, 0
    %s123 = sadd.s32 %s122, 1
    %s124 = scalar_select %p121, %s122, %s123
    %p127 = pneg %p121
    %p128 = scmp.eq.s32.totalorder %s9, 7
    %p129 = por %p127, %p128
    %p130 = scmp.ne.s32.totalorder %s122, %s125
    %p131 = scmp.eq.s32.totalorder %s9, 0
    %p132 = por %p130, %p131
    %p133 = scmp.ne.s32.totalorder %s122, %s125
    %p134 = scmp.eq.s32.totalorder %s14, 7
    %p135 = por %p133, %p134
    %p136 = scmp.ne.s32.totalorder %s125, %s126
    %p137 = scmp.eq.s32.totalorder %s14, 0
    %p138 = por %p136, %p137
    %p139 = scmp.ne.s32.totalorder %s125, %s126
    %p140 = scmp.eq.s32.totalorder %s15, 7
    %p141 = por %p139, %p140
    %p143 = scmp.ne.s32.totalorder %s126, %s142
    %p144 = scmp.eq.s32.totalorder %s15, 0
    %p145 = por %p143, %p144
    %p146 = scmp.le.s32.totalorder 1, %s9
    %p147 = scmp.lt.s32.totalorder %s9, 9
    %p148 = pnand %p146, %p147
    %p149 = pneg %p148
    // Predicated region
    $region9: #{discriminator_forward.9} parent=5 // pred_check
      _
    $region10: #{discriminator_forward.9} parent=5 // pred_check_branch
      %151 = sbr.rel (%p148) target = $region12
    $region11: #{discriminator_forward.9} parent=5 // pred_region
      %s152 = ssub.s32 %s9, 1
      // Predicated region
      $region13: #{discriminator_forward.9} parent=11 // pred_check
        %p153 = pneg %p110
      $region14: #{discriminator_forward.9} parent=11 // pred_check_branch
        %155 = sbr.rel (%p153) target = $region16
      $region15: #{discriminator_forward.9} parent=11 // pred_region
        %p156 = scmp.lt.s32.totalorder %s20, 0
        %s157 = scalar_select %p156, %s20, 0
        %s158 = scalar_lea.vmem %s2, %s157
      $region16: #{discriminator_forward.9} parent=11 // pred_fallthru
        _
    $region12: #{discriminator_forward.9} parent=5 // pred_fallthru
      _
    %p159 = scmp.lt.s32.totalorder %s9, 8
    // Predicated region
    $region17: #{discriminator_forward.9} parent=5 // pred_check
      %p160 = pneg %p159
    $region18: #{discriminator_forward.9} parent=5 // pred_check_branch
      %162 = sbr.rel (%p160) target = $region20
    $region19: #{discriminator_forward.9} parent=5 // pred_region
      // Predicated region
      $region21: #{discriminator_forward.9} parent=19 // pred_check
        %p163 = pneg %p50
      $region22: #{discriminator_forward.9} parent=19 // pred_check_branch
        %165 = sbr.rel (%p163) target = $region24
      $region23: #{discriminator_forward.9} parent=19 // pred_region
        %s166 = smul.u32 16, %s18
        %p167 = scmp.lt.s32.totalorder %s16, 1
        %s168 = scalar_select %p167, %s16, 1
        %p169 = scmp.lt.s32.totalorder %s166, 63
        %s170 = scalar_select %p169, %s166, 63
        %s171 = smul.addr %s168, 64
        %s172 = sadd.s32 %s170, %s171
        %s173 = smul.addr %s172, 2
        %s174 = scalar_lea.vmem %s0, %s173
        %s175 = smul.u32 16, %s18
      $region24: #{discriminator_forward.9} parent=19 // pred_fallthru
        _
      // Predicated region
      $region25: #{discriminator_forward.9} parent=19 // pred_check
        %p176 = pneg %p78
      $region26: #{discriminator_forward.9} parent=19 // pred_check_branch
        %178 = sbr.rel (%p176) target = $region28
      $region27: #{discriminator_forward.9} parent=19 // pred_region
        %s179 = smul.u32 256, %s18
        %p180 = scmp.lt.s32.totalorder %s179, 1023
        %s181 = scalar_select %p180, %s179, 1023
        %p182 = scmp.lt.s32.totalorder %s17, 0
        %s183 = scalar_select %p182, %s17, 0
        %s184 = sadd.s32 %s183, %s181
        %s185 = smul.addr %s184, 4
        %s186 = scalar_lea.vmem %s1, %s185
        %s187 = smul.u32 256, %s18
      $region28: #{discriminator_forward.9} parent=19 // pred_fallthru
        _
    $region20: #{discriminator_forward.9} parent=5 // pred_fallthru
      _
    %p188 = scmp.le.s32.totalorder 1, %s9
    %p189 = scmp.lt.s32.totalorder %s9, 9
    %p190 = pnand %p188, %p189
    %p191 = pneg %p190
    // Predicated region
    $region29: #{discriminator_forward.9} parent=5 // pred_check
      _
    $region30: #{discriminator_forward.9} parent=5 // pred_check_branch
      %193 = sbr.rel (%p190) target = $region32
    $region31: #{discriminator_forward.9} parent=5 // pred_region
      %s194 = ssub.s32 %s9, 1
      %s195 = smul.u32 16, %s21
      %p196 = scmp.lt.s32.totalorder %s19, 1
      %s197 = scalar_select %p196, %s19, 1
      %p198 = scmp.lt.s32.totalorder %s195, 63
      %s199 = scalar_select %p198, %s195, 63
      %s200 = smul.addr %s197, 64
      %s201 = sadd.s32 %s199, %s200
      %s202 = smul.addr %s201, 2
      %s203 = scalar_lea.vmem %s0, %s202
      %p204 = pneg %p56
      %p205 = pneg %p53
      %s206 = smul.u32 256, %s21
      %p207 = scmp.lt.s32.totalorder %s206, 1023
      %s208 = scalar_select %p207, %s206, 1023
      %p209 = scmp.lt.s32.totalorder %s20, 0
      %s210 = scalar_select %p209, %s20, 0
      %s211 = sadd.s32 %s210, %s208
      %s212 = smul.addr %s211, 4
      %s213 = scalar_lea.vmem %s1, %s212
      %p214 = pneg %p84
      %p215 = pneg %p81
      %p216 = scmp.lt.s32.totalorder %s20, 0
      %s217 = scalar_select %p216, %s20, 0
      %s218 = scalar_lea.vmem %s2, %s217
      %p219 = pneg %p110
      %p220 = pneg %p107
      %p221 = pneg %p138
      %p222 = pneg %p135
      %p223 = scmp.lt.s32.totalorder %s19, 1
      %s224 = scalar_select %p223, %s19, 1
      %p225 = scmp.lt.s32.totalorder %s20, 0
      %s226 = scalar_select %p225, %s20, 0
      %s227 = sadd.s32 %s226, %s224
      %s228 = smul.addr %s227, 4
      %s229 = scalar_lea.vmem %s3, %s228
      %s230 = smul.u32 16, %s21
      %p231 = scmp.lt.s32.totalorder %s19, 1
      %s232 = scalar_select %p231, %s19, 1
      %p233 = scmp.lt.s32.totalorder %s230, 63
      %s234 = scalar_select %p233, %s230, 63
      %s235 = smul.addr %s232, 64
      %s236 = sadd.s32 %s234, %s235
      %s237 = smul.addr %s236, 2
      %s238 = scalar_lea.vmem %s0, %s237
      %s239 = smul.u32 16, %s21
      %s240 = smul.u32 256, %s21
      %p241 = scmp.lt.s32.totalorder %s240, 1023
      %s242 = scalar_select %p241, %s240, 1023
      %p243 = scmp.lt.s32.totalorder %s20, 0
      %s244 = scalar_select %p243, %s20, 0
      %s245 = sadd.s32 %s244, %s242
      %s246 = smul.addr %s245, 4
      %s247 = scalar_lea.vmem %s1, %s246
      %s248 = smul.u32 256, %s21
      %p249 = scmp.lt.s32.totalorder %s20, 0
      %s250 = scalar_select %p249, %s20, 0
      %s251 = scalar_lea.vmem %s2, %s250
      %p252 = scmp.lt.s32.totalorder %s19, 1
      %s253 = scalar_select %p252, %s19, 1
      %p254 = scmp.lt.s32.totalorder %s20, 0
      %s255 = scalar_select %p254, %s20, 0
      %s256 = sadd.s32 %s255, %s253
      %s257 = smul.addr %s256, 4
      %s258 = scalar_lea.vmem %s3, %s257
      %p259 = scmp.eq.s32.totalorder %s21, 0
      // Predicated region
      $region33: #{discriminator_forward.9} parent=31 // pred_check
        %p260 = pneg %p259
      $region34: #{discriminator_forward.9} parent=31 // pred_check_branch
        %262 = sbr.rel (%p260) target = $region36
      $region35: #{discriminator_forward.9} parent=31 // pred_region
        %263 = vst [vmem:[#allocation2] sm:$0xf] 0.0
      $region36: #{discriminator_forward.9} parent=31 // pred_fallthru
        _
      %v264 = vld [vmem:[#allocation2] sm:$0xf]
      %v265 = vld [vmem:[%s238] sm:$0xff]
      %v266 = vld [vmem:[%s238 + $0x8] sm:$0xff]
      %v267 = vld [vmem:[%s238 + $0x10] sm:$0xff]
      %v268 = vld [vmem:[%s238 + $0x18] sm:$0xff]
      %v269 = vld [vmem:[%s247] sm:$0xf]
      %v270 = vld [vmem:[%s247 + $0x4] sm:$0xf]
      %v271 = vld [vmem:[%s247 + $0x8] sm:$0xf]
      %v272 = vld [vmem:[%s247 + $0xc] sm:$0xf]
      %v273 = vld [vmem:[%s247 + $0x10] sm:$0xf]
      %v274 = vld [vmem:[%s247 + $0x14] sm:$0xf]
      %v275 = vld [vmem:[%s247 + $0x18] sm:$0xf]
      %v276 = vld [vmem:[%s247 + $0x1c] sm:$0xf]
      %v277 = vld [vmem:[%s247 + $0x20] sm:$0xf]
      %v278 = vld [vmem:[%s247 + $0x24] sm:$0xf]
      %v279 = vld [vmem:[%s247 + $0x28] sm:$0xf]
      %v280 = vld [vmem:[%s247 + $0x2c] sm:$0xf]
      %v281 = vld [vmem:[%s247 + $0x30] sm:$0xf]
      %v282 = vld [vmem:[%s247 + $0x34] sm:$0xf]
      %v283 = vld [vmem:[%s247 + $0x38] sm:$0xf]
      %v284 = vld [vmem:[%s247 + $0x3c] sm:$0xf]
      %v285 = vld [vmem:[%s247 + $0x40] sm:$0xf]
      %v286 = vld [vmem:[%s247 + $0x44] sm:$0xf]
      %v287 = vld [vmem:[%s247 + $0x48] sm:$0xf]
      %v288 = vld [vmem:[%s247 + $0x4c] sm:$0xf]
      %v289 = vld [vmem:[%s247 + $0x50] sm:$0xf]
      %v290 = vld [vmem:[%s247 + $0x54] sm:$0xf]
      %v291 = vld [vmem:[%s247 + $0x58] sm:$0xf]
      %v292 = vld [vmem:[%s247 + $0x5c] sm:$0xf]
      %v293 = vld [vmem:[%s247 + $0x60] sm:$0xf]
      %v294 = vld [vmem:[%s247 + $0x64] sm:$0xf]
      %v295 = vld [vmem:[%s247 + $0x68] sm:$0xf]
      %v296 = vld [vmem:[%s247 + $0x6c] sm:$0xf]
      %v297 = vld [vmem:[%s247 + $0x70] sm:$0xf]
      %v298 = vld [vmem:[%s247 + $0x74] sm:$0xf]
      %v299 = vld [vmem:[%s247 + $0x78] sm:$0xf]
      %v300 = vld [vmem:[%s247 + $0x7c] sm:$0xf]
      %v301 = vld [vmem:[%s247 + $0x80] sm:$0xf]
      %v302 = vld [vmem:[%s247 + $0x84] sm:$0xf]
      %v303 = vld [vmem:[%s247 + $0x88] sm:$0xf]
      %v304 = vld [vmem:[%s247 + $0x8c] sm:$0xf]
      %v305 = vld [vmem:[%s247 + $0x90] sm:$0xf]
      %v306 = vld [vmem:[%s247 + $0x94] sm:$0xf]
      %v307 = vld [vmem:[%s247 + $0x98] sm:$0xf]
      %v308 = vld [vmem:[%s247 + $0x9c] sm:$0xf]
      %v309 = vld [vmem:[%s247 + $0xa0] sm:$0xf]
      %v310 = vld [vmem:[%s247 + $0xa4] sm:$0xf]
      %v311 = vld [vmem:[%s247 + $0xa8] sm:$0xf]
      %v312 = vld [vmem:[%s247 + $0xac] sm:$0xf]
      %v313 = vld [vmem:[%s247 + $0xb0] sm:$0xf]
      %v314 = vld [vmem:[%s247 + $0xb4] sm:$0xf]
      %v315 = vld [vmem:[%s247 + $0xb8] sm:$0xf]
      %v316 = vld [vmem:[%s247 + $0xbc] sm:$0xf]
      %v317 = vld [vmem:[%s247 + $0xc0] sm:$0xf]
      %v318 = vld [vmem:[%s247 + $0xc4] sm:$0xf]
      %v319 = vld [vmem:[%s247 + $0xc8] sm:$0xf]
      %v320 = vld [vmem:[%s247 + $0xcc] sm:$0xf]
      %v321 = vld [vmem:[%s247 + $0xd0] sm:$0xf]
      %v322 = vld [vmem:[%s247 + $0xd4] sm:$0xf]
      %v323 = vld [vmem:[%s247 + $0xd8] sm:$0xf]
      %v324 = vld [vmem:[%s247 + $0xdc] sm:$0xf]
      %v325 = vld [vmem:[%s247 + $0xe0] sm:$0xf]
      %v326 = vld [vmem:[%s247 + $0xe4] sm:$0xf]
      %v327 = vld [vmem:[%s247 + $0xe8] sm:$0xf]
      %v328 = vld [vmem:[%s247 + $0xec] sm:$0xf]
      %v329 = vld [vmem:[%s247 + $0xf0] sm:$0xf]
      %v330 = vld [vmem:[%s247 + $0xf4] sm:$0xf]
      %v331 = vld [vmem:[%s247 + $0xf8] sm:$0xf]
      %v332 = vld [vmem:[%s247 + $0xfc] sm:$0xf]
      %v333 = vld [vmem:[%s247 + $0x100] sm:$0xf]
      %v334 = vld [vmem:[%s247 + $0x104] sm:$0xf]
      %v335 = vld [vmem:[%s247 + $0x108] sm:$0xf]
      %v336 = vld [vmem:[%s247 + $0x10c] sm:$0xf]
      %v337 = vld [vmem:[%s247 + $0x110] sm:$0xf]
      %v338 = vld [vmem:[%s247 + $0x114] sm:$0xf]
      %v339 = vld [vmem:[%s247 + $0x118] sm:$0xf]
      %v340 = vld [vmem:[%s247 + $0x11c] sm:$0xf]
      %v341 = vld [vmem:[%s247 + $0x120] sm:$0xf]
      %v342 = vld [vmem:[%s247 + $0x124] sm:$0xf]
      %v343 = vld [vmem:[%s247 + $0x128] sm:$0xf]
      %v344 = vld [vmem:[%s247 + $0x12c] sm:$0xf]
      %v345 = vld [vmem:[%s247 + $0x130] sm:$0xf]
      %v346 = vld [vmem:[%s247 + $0x134] sm:$0xf]
      %v347 = vld [vmem:[%s247 + $0x138] sm:$0xf]
      %v348 = vld [vmem:[%s247 + $0x13c] sm:$0xf]
      %v349 = vld [vmem:[%s247 + $0x140] sm:$0xf]
      %v350 = vld [vmem:[%s247 + $0x144] sm:$0xf]
      %v351 = vld [vmem:[%s247 + $0x148] sm:$0xf]
      %v352 = vld [vmem:[%s247 + $0x14c] sm:$0xf]
      %v353 = vld [vmem:[%s247 + $0x150] sm:$0xf]
      %v354 = vld [vmem:[%s247 + $0x154] sm:$0xf]
      %v355 = vld [vmem:[%s247 + $0x158] sm:$0xf]
      %v356 = vld [vmem:[%s247 + $0x15c] sm:$0xf]
      %v357 = vld [vmem:[%s247 + $0x160] sm:$0xf]
      %v358 = vld [vmem:[%s247 + $0x164] sm:$0xf]
      %v359 = vld [vmem:[%s247 + $0x168] sm:$0xf]
      %v360 = vld [vmem:[%s247 + $0x16c] sm:$0xf]
      %v361 = vld [vmem:[%s247 + $0x170] sm:$0xf]
      %v362 = vld [vmem:[%s247 + $0x174] sm:$0xf]
      %v363 = vld [vmem:[%s247 + $0x178] sm:$0xf]
      %v364 = vld [vmem:[%s247 + $0x17c] sm:$0xf]
      %v365 = vld [vmem:[%s247 + $0x180] sm:$0xf]
      %v366 = vld [vmem:[%s247 + $0x184] sm:$0xf]
      %v367 = vld [vmem:[%s247 + $0x188] sm:$0xf]
      %v368 = vld [vmem:[%s247 + $0x18c] sm:$0xf]
      %v369 = vld [vmem:[%s247 + $0x190] sm:$0xf]
      %v370 = vld [vmem:[%s247 + $0x194] sm:$0xf]
      %v371 = vld [vmem:[%s247 + $0x198] sm:$0xf]
      %v372 = vld [vmem:[%s247 + $0x19c] sm:$0xf]
      %v373 = vld [vmem:[%s247 + $0x1a0] sm:$0xf]
      %v374 = vld [vmem:[%s247 + $0x1a4] sm:$0xf]
      %v375 = vld [vmem:[%s247 + $0x1a8] sm:$0xf]
      %v376 = vld [vmem:[%s247 + $0x1ac] sm:$0xf]
      %v377 = vld [vmem:[%s247 + $0x1b0] sm:$0xf]
      %v378 = vld [vmem:[%s247 + $0x1b4] sm:$0xf]
      %v379 = vld [vmem:[%s247 + $0x1b8] sm:$0xf]
      %v380 = vld [vmem:[%s247 + $0x1bc] sm:$0xf]
      %v381 = vld [vmem:[%s247 + $0x1c0] sm:$0xf]
      %v382 = vld [vmem:[%s247 + $0x1c4] sm:$0xf]
      %v383 = vld [vmem:[%s247 + $0x1c8] sm:$0xf]
      %v384 = vld [vmem:[%s247 + $0x1cc] sm:$0xf]
      %v385 = vld [vmem:[%s247 + $0x1d0] sm:$0xf]
      %v386 = vld [vmem:[%s247 + $0x1d4] sm:$0xf]
      %v387 = vld [vmem:[%s247 + $0x1d8] sm:$0xf]
      %v388 = vld [vmem:[%s247 + $0x1dc] sm:$0xf]
      %v389 = vld [vmem:[%s247 + $0x1e0] sm:$0xf]
      %v390 = vld [vmem:[%s247 + $0x1e4] sm:$0xf]
      %v391 = vld [vmem:[%s247 + $0x1e8] sm:$0xf]
      %v392 = vld [vmem:[%s247 + $0x1ec] sm:$0xf]
      %v393 = vld [vmem:[%s247 + $0x1f0] sm:$0xf]
      %v394 = vld [vmem:[%s247 + $0x1f4] sm:$0xf]
      %v395 = vld [vmem:[%s247 + $0x1f8] sm:$0xf]
      %v396 = vld [vmem:[%s247 + $0x1fc] sm:$0xf]
      %v397 = vld [vmem:[%s247 + $0x200] sm:$0xf]
      %v398 = vld [vmem:[%s247 + $0x204] sm:$0xf]
      %v399 = vld [vmem:[%s247 + $0x208] sm:$0xf]
      %v400 = vld [vmem:[%s247 + $0x20c] sm:$0xf]
      %v401 = vld [vmem:[%s247 + $0x210] sm:$0xf]
      %v402 = vld [vmem:[%s247 + $0x214] sm:$0xf]
      %v403 = vld [vmem:[%s247 + $0x218] sm:$0xf]
      %v404 = vld [vmem:[%s247 + $0x21c] sm:$0xf]
      %v405 = vld [vmem:[%s247 + $0x220] sm:$0xf]
      %v406 = vld [vmem:[%s247 + $0x224] sm:$0xf]
      %v407 = vld [vmem:[%s247 + $0x228] sm:$0xf]
      %v408 = vld [vmem:[%s247 + $0x22c] sm:$0xf]
      %v409 = vld [vmem:[%s247 + $0x230] sm:$0xf]
      %v410 = vld [vmem:[%s247 + $0x234] sm:$0xf]
      %v411 = vld [vmem:[%s247 + $0x238] sm:$0xf]
      %v412 = vld [vmem:[%s247 + $0x23c] sm:$0xf]
      %v413 = vld [vmem:[%s247 + $0x240] sm:$0xf]
      %v414 = vld [vmem:[%s247 + $0x244] sm:$0xf]
      %v415 = vld [vmem:[%s247 + $0x248] sm:$0xf]
      %v416 = vld [vmem:[%s247 + $0x24c] sm:$0xf]
      %v417 = vld [vmem:[%s247 + $0x250] sm:$0xf]
      %v418 = vld [vmem:[%s247 + $0x254] sm:$0xf]
      %v419 = vld [vmem:[%s247 + $0x258] sm:$0xf]
      %v420 = vld [vmem:[%s247 + $0x25c] sm:$0xf]
      %v421 = vld [vmem:[%s247 + $0x260] sm:$0xf]
      %v422 = vld [vmem:[%s247 + $0x264] sm:$0xf]
      %v423 = vld [vmem:[%s247 + $0x268] sm:$0xf]
      %v424 = vld [vmem:[%s247 + $0x26c] sm:$0xf]
      %v425 = vld [vmem:[%s247 + $0x270] sm:$0xf]
      %v426 = vld [vmem:[%s247 + $0x274] sm:$0xf]
      %v427 = vld [vmem:[%s247 + $0x278] sm:$0xf]
      %v428 = vld [vmem:[%s247 + $0x27c] sm:$0xf]
      %v429 = vld [vmem:[%s247 + $0x280] sm:$0xf]
      %v430 = vld [vmem:[%s247 + $0x284] sm:$0xf]
      %v431 = vld [vmem:[%s247 + $0x288] sm:$0xf]
      %v432 = vld [vmem:[%s247 + $0x28c] sm:$0xf]
      %v433 = vld [vmem:[%s247 + $0x290] sm:$0xf]
      %v434 = vld [vmem:[%s247 + $0x294] sm:$0xf]
      %v435 = vld [vmem:[%s247 + $0x298] sm:$0xf]
      %v436 = vld [vmem:[%s247 + $0x29c] sm:$0xf]
      %v437 = vld [vmem:[%s247 + $0x2a0] sm:$0xf]
      %v438 = vld [vmem:[%s247 + $0x2a4] sm:$0xf]
      %v439 = vld [vmem:[%s247 + $0x2a8] sm:$0xf]
      %v440 = vld [vmem:[%s247 + $0x2ac] sm:$0xf]
      %v441 = vld [vmem:[%s247 + $0x2b0] sm:$0xf]
      %v442 = vld [vmem:[%s247 + $0x2b4] sm:$0xf]
      %v443 = vld [vmem:[%s247 + $0x2b8] sm:$0xf]
      %v444 = vld [vmem:[%s247 + $0x2bc] sm:$0xf]
      %v445 = vld [vmem:[%s247 + $0x2c0] sm:$0xf]
      %v446 = vld [vmem:[%s247 + $0x2c4] sm:$0xf]
      %v447 = vld [vmem:[%s247 + $0x2c8] sm:$0xf]
      %v448 = vld [vmem:[%s247 + $0x2cc] sm:$0xf]
      %v449 = vld [vmem:[%s247 + $0x2d0] sm:$0xf]
      %v450 = vld [vmem:[%s247 + $0x2d4] sm:$0xf]
      %v451 = vld [vmem:[%s247 + $0x2d8] sm:$0xf]
      %v452 = vld [vmem:[%s247 + $0x2dc] sm:$0xf]
      %v453 = vld [vmem:[%s247 + $0x2e0] sm:$0xf]
      %v454 = vld [vmem:[%s247 + $0x2e4] sm:$0xf]
      %v455 = vld [vmem:[%s247 + $0x2e8] sm:$0xf]
      %v456 = vld [vmem:[%s247 + $0x2ec] sm:$0xf]
      %v457 = vld [vmem:[%s247 + $0x2f0] sm:$0xf]
      %v458 = vld [vmem:[%s247 + $0x2f4] sm:$0xf]
      %v459 = vld [vmem:[%s247 + $0x2f8] sm:$0xf]
      %v460 = vld [vmem:[%s247 + $0x2fc] sm:$0xf]
      %v461 = vld [vmem:[%s247 + $0x300] sm:$0xf]
      %v462 = vld [vmem:[%s247 + $0x304] sm:$0xf]
      %v463 = vld [vmem:[%s247 + $0x308] sm:$0xf]
      %v464 = vld [vmem:[%s247 + $0x30c] sm:$0xf]
      %v465 = vld [vmem:[%s247 + $0x310] sm:$0xf]
      %v466 = vld [vmem:[%s247 + $0x314] sm:$0xf]
      %v467 = vld [vmem:[%s247 + $0x318] sm:$0xf]
      %v468 = vld [vmem:[%s247 + $0x31c] sm:$0xf]
      %v469 = vld [vmem:[%s247 + $0x320] sm:$0xf]
      %v470 = vld [vmem:[%s247 + $0x324] sm:$0xf]
      %v471 = vld [vmem:[%s247 + $0x328] sm:$0xf]
      %v472 = vld [vmem:[%s247 + $0x32c] sm:$0xf]
      %v473 = vld [vmem:[%s247 + $0x330] sm:$0xf]
      %v474 = vld [vmem:[%s247 + $0x334] sm:$0xf]
      %v475 = vld [vmem:[%s247 + $0x338] sm:$0xf]
      %v476 = vld [vmem:[%s247 + $0x33c] sm:$0xf]
      %v477 = vld [vmem:[%s247 + $0x340] sm:$0xf]
      %v478 = vld [vmem:[%s247 + $0x344] sm:$0xf]
      %v479 = vld [vmem:[%s247 + $0x348] sm:$0xf]
      %v480 = vld [vmem:[%s247 + $0x34c] sm:$0xf]
      %v481 = vld [vmem:[%s247 + $0x350] sm:$0xf]
      %v482 = vld [vmem:[%s247 + $0x354] sm:$0xf]
      %v483 = vld [vmem:[%s247 + $0x358] sm:$0xf]
      %v484 = vld [vmem:[%s247 + $0x35c] sm:$0xf]
      %v485 = vld [vmem:[%s247 + $0x360] sm:$0xf]
      %v486 = vld [vmem:[%s247 + $0x364] sm:$0xf]
      %v487 = vld [vmem:[%s247 + $0x368] sm:$0xf]
      %v488 = vld [vmem:[%s247 + $0x36c] sm:$0xf]
      %v489 = vld [vmem:[%s247 + $0x370] sm:$0xf]
      %v490 = vld [vmem:[%s247 + $0x374] sm:$0xf]
      %v491 = vld [vmem:[%s247 + $0x378] sm:$0xf]
      %v492 = vld [vmem:[%s247 + $0x37c] sm:$0xf]
      %v493 = vld [vmem:[%s247 + $0x380] sm:$0xf]
      %v494 = vld [vmem:[%s247 + $0x384] sm:$0xf]
      %v495 = vld [vmem:[%s247 + $0x388] sm:$0xf]
      %v496 = vld [vmem:[%s247 + $0x38c] sm:$0xf]
      %v497 = vld [vmem:[%s247 + $0x390] sm:$0xf]
      %v498 = vld [vmem:[%s247 + $0x394] sm:$0xf]
      %v499 = vld [vmem:[%s247 + $0x398] sm:$0xf]
      %v500 = vld [vmem:[%s247 + $0x39c] sm:$0xf]
      %v501 = vld [vmem:[%s247 + $0x3a0] sm:$0xf]
      %v502 = vld [vmem:[%s247 + $0x3a4] sm:$0xf]
      %v503 = vld [vmem:[%s247 + $0x3a8] sm:$0xf]
      %v504 = vld [vmem:[%s247 + $0x3ac] sm:$0xf]
      %v505 = vld [vmem:[%s247 + $0x3b0] sm:$0xf]
      %v506 = vld [vmem:[%s247 + $0x3b4] sm:$0xf]
      %v507 = vld [vmem:[%s247 + $0x3b8] sm:$0xf]
      %v508 = vld [vmem:[%s247 + $0x3bc] sm:$0xf]
      %v509 = vld [vmem:[%s247 + $0x3c0] sm:$0xf]
      %v510 = vld [vmem:[%s247 + $0x3c4] sm:$0xf]
      %v511 = vld [vmem:[%s247 + $0x3c8] sm:$0xf]
      %v512 = vld [vmem:[%s247 + $0x3cc] sm:$0xf]
      %v513 = vld [vmem:[%s247 + $0x3d0] sm:$0xf]
      %v514 = vld [vmem:[%s247 + $0x3d4] sm:$0xf]
      %v515 = vld [vmem:[%s247 + $0x3d8] sm:$0xf]
      %v516 = vld [vmem:[%s247 + $0x3dc] sm:$0xf]
      %v517 = vld [vmem:[%s247 + $0x3e0] sm:$0xf]
      %v518 = vld [vmem:[%s247 + $0x3e4] sm:$0xf]
      %v519 = vld [vmem:[%s247 + $0x3e8] sm:$0xf]
      %v520 = vld [vmem:[%s247 + $0x3ec] sm:$0xf]
      %v521 = vld [vmem:[%s247 + $0x3f0] sm:$0xf]
      %v522 = vld [vmem:[%s247 + $0x3f4] sm:$0xf]
      %v523 = vld [vmem:[%s247 + $0x3f8] sm:$0xf]
      %v524 = vld [vmem:[%s247 + $0x3fc] sm:$0xf]
      %526 = vst [vmem:[#allocation1] ss:$4 sm:$0xff] %v265
      %s528 = scalar_lea.vmem [#allocation1], 32
      %529 = vst [vmem:[%s528] ss:$4 sm:$0xff] %v266
      %v530 = vld.sshfl [vmem:[#allocation1] sm:$0xff pattern:$0x73625140]
      %v531 = vld.sshfl [vmem:[#allocation1 + $0x8] sm:$0xff pattern:$0x73625140]
      %v532 = vld.sshfl [vmem:[#allocation1 + $0x10] sm:$0xff pattern:$0x73625140]
      %v533 = vld.sshfl [vmem:[#allocation1 + $0x18] sm:$0xff pattern:$0x73625140]
      %v534 = vld.sshfl [vmem:[#allocation1 + $0x20] sm:$0xff pattern:$0x73625140]
      %v535 = vld.sshfl [vmem:[#allocation1 + $0x28] sm:$0xff pattern:$0x73625140]
      %v536 = vld.sshfl [vmem:[#allocation1 + $0x30] sm:$0xff pattern:$0x73625140]
      %v537 = vld.sshfl [vmem:[#allocation1 + $0x38] sm:$0xff pattern:$0x73625140]
      %539 = vst [vmem:[#allocation1] ss:$4 sm:$0xff] %v267
      %541 = vst [vmem:[%s528] ss:$4 sm:$0xff] %v268
      %v542 = vld.sshfl [vmem:[#allocation1] sm:$0xff pattern:$0x73625140]
      %v543 = vld.sshfl [vmem:[#allocation1 + $0x8] sm:$0xff pattern:$0x73625140]
      %v544 = vld.sshfl [vmem:[#allocation1 + $0x10] sm:$0xff pattern:$0x73625140]
      %v545 = vld.sshfl [vmem:[#allocation1 + $0x18] sm:$0xff pattern:$0x73625140]
      %v546 = vld.sshfl [vmem:[#allocation1 + $0x20] sm:$0xff pattern:$0x73625140]
      %v547 = vld.sshfl [vmem:[#allocation1 + $0x28] sm:$0xff pattern:$0x73625140]
      %v548 = vld.sshfl [vmem:[#allocation1 + $0x30] sm:$0xff pattern:$0x73625140]
      %v549 = vld.sshfl [vmem:[#allocation1 + $0x38] sm:$0xff pattern:$0x73625140]
      %v822 = vunpack.c.l.b16 %v269
      %v823 = vunpack.c.l.b16 %v270
      %v824 = vunpack.c.l.b16 %v271
      %v825 = vunpack.c.l.b16 %v272
      %v826 = vunpack.c.l.b16 %v273
      %v827 = vunpack.c.l.b16 %v274
      %v828 = vunpack.c.l.b16 %v275
      %v829 = vunpack.c.l.b16 %v276
      %v830 = vunpack.c.l.b16 %v277
      %v831 = vunpack.c.l.b16 %v278
      %v832 = vunpack.c.l.b16 %v279
      %v833 = vunpack.c.l.b16 %v280
      %v834 = vunpack.c.l.b16 %v281
      %v835 = vunpack.c.l.b16 %v282
      %v836 = vunpack.c.l.b16 %v283
      %v837 = vunpack.c.l.b16 %v284
      %v838 = vunpack.c.l.b16 %v285
      %v839 = vunpack.c.l.b16 %v286
      %v840 = vunpack.c.l.b16 %v287
      %v841 = vunpack.c.l.b16 %v288
      %v842 = vunpack.c.l.b16 %v289
      %v843 = vunpack.c.l.b16 %v290
      %v844 = vunpack.c.l.b16 %v291
      %v845 = vunpack.c.l.b16 %v292
      %v846 = vunpack.c.l.b16 %v293
      %v847 = vunpack.c.l.b16 %v294
      %v848 = vunpack.c.l.b16 %v295
      %v849 = vunpack.c.l.b16 %v296
      %v850 = vunpack.c.l.b16 %v297
      %v851 = vunpack.c.l.b16 %v298
      %v852 = vunpack.c.l.b16 %v299
      %v853 = vunpack.c.l.b16 %v300
      %v854 = vunpack.c.l.b16 %v301
      %v855 = vunpack.c.l.b16 %v302
      %v856 = vunpack.c.l.b16 %v303
      %v857 = vunpack.c.l.b16 %v304
      %v858 = vunpack.c.l.b16 %v305
      %v859 = vunpack.c.l.b16 %v306
      %v860 = vunpack.c.l.b16 %v307
      %v861 = vunpack.c.l.b16 %v308
      %v862 = vunpack.c.l.b16 %v309
      %v863 = vunpack.c.l.b16 %v310
      %v864 = vunpack.c.l.b16 %v311
      %v865 = vunpack.c.l.b16 %v312
      %v866 = vunpack.c.l.b16 %v313
      %v867 = vunpack.c.l.b16 %v314
      %v868 = vunpack.c.l.b16 %v315
      %v869 = vunpack.c.l.b16 %v316
      %v870 = vunpack.c.l.b16 %v317
      %v871 = vunpack.c.l.b16 %v318
      %v872 = vunpack.c.l.b16 %v319
      %v873 = vunpack.c.l.b16 %v320
      %v874 = vunpack.c.l.b16 %v321
      %v875 = vunpack.c.l.b16 %v322
      %v876 = vunpack.c.l.b16 %v323
      %v877 = vunpack.c.l.b16 %v324
      %v878 = vunpack.c.l.b16 %v325
      %v879 = vunpack.c.l.b16 %v326
      %v880 = vunpack.c.l.b16 %v327
      %v881 = vunpack.c.l.b16 %v328
      %v882 = vunpack.c.l.b16 %v329
      %v883 = vunpack.c.l.b16 %v330
      %v884 = vunpack.c.l.b16 %v331
      %v885 = vunpack.c.l.b16 %v332
      %v886 = vunpack.c.l.b16 %v333
      %v887 = vunpack.c.l.b16 %v334
      %v888 = vunpack.c.l.b16 %v335
      %v889 = vunpack.c.l.b16 %v336
      %v890 = vunpack.c.l.b16 %v337
      %v891 = vunpack.c.l.b16 %v338
      %v892 = vunpack.c.l.b16 %v339
      %v893 = vunpack.c.l.b16 %v340
      %v894 = vunpack.c.l.b16 %v341
      %v895 = vunpack.c.l.b16 %v342
      %v896 = vunpack.c.l.b16 %v343
      %v897 = vunpack.c.l.b16 %v344
      %v898 = vunpack.c.l.b16 %v345
      %v899 = vunpack.c.l.b16 %v346
      %v900 = vunpack.c.l.b16 %v347
      %v901 = vunpack.c.l.b16 %v348
      %v902 = vunpack.c.l.b16 %v349
      %v903 = vunpack.c.l.b16 %v350
      %v904 = vunpack.c.l.b16 %v351
      %v905 = vunpack.c.l.b16 %v352
      %v906 = vunpack.c.l.b16 %v353
      %v907 = vunpack.c.l.b16 %v354
      %v908 = vunpack.c.l.b16 %v355
      %v909 = vunpack.c.l.b16 %v356
      %v910 = vunpack.c.l.b16 %v357
      %v911 = vunpack.c.l.b16 %v358
      %v912 = vunpack.c.l.b16 %v359
      %v913 = vunpack.c.l.b16 %v360
      %v914 = vunpack.c.l.b16 %v361
      %v915 = vunpack.c.l.b16 %v362
      %v916 = vunpack.c.l.b16 %v363
      %v917 = vunpack.c.l.b16 %v364
      %v918 = vunpack.c.l.b16 %v365
      %v919 = vunpack.c.l.b16 %v366
      %v920 = vunpack.c.l.b16 %v367
      %v921 = vunpack.c.l.b16 %v368
      %v922 = vunpack.c.l.b16 %v369
      %v923 = vunpack.c.l.b16 %v370
      %v924 = vunpack.c.l.b16 %v371
      %v925 = vunpack.c.l.b16 %v372
      %v926 = vunpack.c.l.b16 %v373
      %v927 = vunpack.c.l.b16 %v374
      %v928 = vunpack.c.l.b16 %v375
      %v929 = vunpack.c.l.b16 %v376
      %v930 = vunpack.c.l.b16 %v377
      %v931 = vunpack.c.l.b16 %v378
      %v932 = vunpack.c.l.b16 %v379
      %v933 = vunpack.c.l.b16 %v380
      %v934 = vunpack.c.l.b16 %v381
      %v935 = vunpack.c.l.b16 %v382
      %v936 = vunpack.c.l.b16 %v383
      %v937 = vunpack.c.l.b16 %v384
      %v938 = vunpack.c.l.b16 %v385
      %v939 = vunpack.c.l.b16 %v386
      %v940 = vunpack.c.l.b16 %v387
      %v941 = vunpack.c.l.b16 %v388
      %v942 = vunpack.c.l.b16 %v389
      %v943 = vunpack.c.l.b16 %v390
      %v944 = vunpack.c.l.b16 %v391
      %v945 = vunpack.c.l.b16 %v392
      %v946 = vunpack.c.l.b16 %v393
      %v947 = vunpack.c.l.b16 %v394
      %v948 = vunpack.c.l.b16 %v395
      %v949 = vunpack.c.l.b16 %v396
      %v950 = vunpack.c.l.b16 %v397
      %v951 = vunpack.c.l.b16 %v398
      %v952 = vunpack.c.l.b16 %v399
      %v953 = vunpack.c.l.b16 %v400
      %v954 = vunpack.c.l.b16 %v401
      %v955 = vunpack.c.l.b16 %v402
      %v956 = vunpack.c.l.b16 %v403
      %v957 = vunpack.c.l.b16 %v404
      %v958 = vunpack.c.l.b16 %v405
      %v959 = vunpack.c.l.b16 %v406
      %v960 = vunpack.c.l.b16 %v407
      %v961 = vunpack.c.l.b16 %v408
      %v962 = vunpack.c.l.b16 %v409
      %v963 = vunpack.c.l.b16 %v410
      %v964 = vunpack.c.l.b16 %v411
      %v965 = vunpack.c.l.b16 %v412
      %v966 = vunpack.c.l.b16 %v413
      %v967 = vunpack.c.l.b16 %v414
      %v968 = vunpack.c.l.b16 %v415
      %v969 = vunpack.c.l.b16 %v416
      %v970 = vunpack.c.l.b16 %v417
      %v971 = vunpack.c.l.b16 %v418
      %v972 = vunpack.c.l.b16 %v419
      %v973 = vunpack.c.l.b16 %v420
      %v974 = vunpack.c.l.b16 %v421
      %v975 = vunpack.c.l.b16 %v422
      %v976 = vunpack.c.l.b16 %v423
      %v977 = vunpack.c.l.b16 %v424
      %v978 = vunpack.c.l.b16 %v425
      %v979 = vunpack.c.l.b16 %v426
      %v980 = vunpack.c.l.b16 %v427
      %v981 = vunpack.c.l.b16 %v428
      %v982 = vunpack.c.l.b16 %v429
      %v983 = vunpack.c.l.b16 %v430
      %v984 = vunpack.c.l.b16 %v431
      %v985 = vunpack.c.l.b16 %v432
      %v986 = vunpack.c.l.b16 %v433
      %v987 = vunpack.c.l.b16 %v434
      %v988 = vunpack.c.l.b16 %v435
      %v989 = vunpack.c.l.b16 %v436
      %v990 = vunpack.c.l.b16 %v437
      %v991 = vunpack.c.l.b16 %v438
      %v992 = vunpack.c.l.b16 %v439
      %v993 = vunpack.c.l.b16 %v440
      %v994 = vunpack.c.l.b16 %v441
      %v995 = vunpack.c.l.b16 %v442
      %v996 = vunpack.c.l.b16 %v443
      %v997 = vunpack.c.l.b16 %v444
      %v998 = vunpack.c.l.b16 %v445
      %v999 = vunpack.c.l.b16 %v446
      %v1000 = vunpack.c.l.b16 %v447
      %v1001 = vunpack.c.l.b16 %v448
      %v1002 = vunpack.c.l.b16 %v449
      %v1003 = vunpack.c.l.b16 %v450
      %v1004 = vunpack.c.l.b16 %v451
      %v1005 = vunpack.c.l.b16 %v452
      %v1006 = vunpack.c.l.b16 %v453
      %v1007 = vunpack.c.l.b16 %v454
      %v1008 = vunpack.c.l.b16 %v455
      %v1009 = vunpack.c.l.b16 %v456
      %v1010 = vunpack.c.l.b16 %v457
      %v1011 = vunpack.c.l.b16 %v458
      %v1012 = vunpack.c.l.b16 %v459
      %v1013 = vunpack.c.l.b16 %v460
      %v1014 = vunpack.c.l.b16 %v461
      %v1015 = vunpack.c.l.b16 %v462
      %v1016 = vunpack.c.l.b16 %v463
      %v1017 = vunpack.c.l.b16 %v464
      %v1018 = vunpack.c.l.b16 %v465
      %v1019 = vunpack.c.l.b16 %v466
      %v1020 = vunpack.c.l.b16 %v467
      %v1021 = vunpack.c.l.b16 %v468
      %v1022 = vunpack.c.l.b16 %v469
      %v1023 = vunpack.c.l.b16 %v470
      %v1024 = vunpack.c.l.b16 %v471
      %v1025 = vunpack.c.l.b16 %v472
      %v1026 = vunpack.c.l.b16 %v473
      %v1027 = vunpack.c.l.b16 %v474
      %v1028 = vunpack.c.l.b16 %v475
      %v1029 = vunpack.c.l.b16 %v476
      %v1030 = vunpack.c.l.b16 %v477
      %v1031 = vunpack.c.l.b16 %v478
      %v1032 = vunpack.c.l.b16 %v479
      %v1033 = vunpack.c.l.b16 %v480
      %v1034 = vunpack.c.l.b16 %v481
      %v1035 = vunpack.c.l.b16 %v482
      %v1036 = vunpack.c.l.b16 %v483
      %v1037 = vunpack.c.l.b16 %v484
      %v1038 = vunpack.c.l.b16 %v485
      %v1039 = vunpack.c.l.b16 %v486
      %v1040 = vunpack.c.l.b16 %v487
      %v1041 = vunpack.c.l.b16 %v488
      %v1042 = vunpack.c.l.b16 %v489
      %v1043 = vunpack.c.l.b16 %v490
      %v1044 = vunpack.c.l.b16 %v491
      %v1045 = vunpack.c.l.b16 %v492
      %v1046 = vunpack.c.l.b16 %v493
      %v1047 = vunpack.c.l.b16 %v494
      %v1048 = vunpack.c.l.b16 %v495
      %v1049 = vunpack.c.l.b16 %v496
      %v1050 = vunpack.c.l.b16 %v497
      %v1051 = vunpack.c.l.b16 %v498
      %v1052 = vunpack.c.l.b16 %v499
      %v1053 = vunpack.c.l.b16 %v500
      %v1054 = vunpack.c.l.b16 %v501
      %v1055 = vunpack.c.l.b16 %v502
      %v1056 = vunpack.c.l.b16 %v503
      %v1057 = vunpack.c.l.b16 %v504
      %v1058 = vunpack.c.l.b16 %v505
      %v1059 = vunpack.c.l.b16 %v506
      %v1060 = vunpack.c.l.b16 %v507
      %v1061 = vunpack.c.l.b16 %v508
      %v1062 = vunpack.c.l.b16 %v509
      %v1063 = vunpack.c.l.b16 %v510
      %v1064 = vunpack.c.l.b16 %v511
      %v1065 = vunpack.c.l.b16 %v512
      %v1066 = vunpack.c.l.b16 %v513
      %v1067 = vunpack.c.l.b16 %v514
      %v1068 = vunpack.c.l.b16 %v515
      %v1069 = vunpack.c.l.b16 %v516
      %v1070 = vunpack.c.l.b16 %v517
      %v1071 = vunpack.c.l.b16 %v518
      %v1072 = vunpack.c.l.b16 %v519
      %v1073 = vunpack.c.l.b16 %v520
      %v1074 = vunpack.c.l.b16 %v521
      %v1075 = vunpack.c.l.b16 %v522
      %v1076 = vunpack.c.l.b16 %v523
      %v1077 = vunpack.c.l.b16 %v524
      %v1078 = vpack.c.b16 %v823, %v822
      %v1079 = vpack.c.b16 %v825, %v824
      %v1080 = vpack.c.b16 %v827, %v826
      %v1081 = vpack.c.b16 %v829, %v828
      %v1082 = vpack.c.b16 %v831, %v830
      %v1083 = vpack.c.b16 %v833, %v832
      %v1084 = vpack.c.b16 %v835, %v834
      %v1085 = vpack.c.b16 %v837, %v836
      %v1086 = vpack.c.b16 %v839, %v838
      %v1087 = vpack.c.b16 %v841, %v840
      %v1088 = vpack.c.b16 %v843, %v842
      %v1089 = vpack.c.b16 %v845, %v844
      %v1090 = vpack.c.b16 %v847, %v846
      %v1091 = vpack.c.b16 %v849, %v848
      %v1092 = vpack.c.b16 %v851, %v850
      %v1093 = vpack.c.b16 %v853, %v852
      %v1094 = vpack.c.b16 %v855, %v854
      %v1095 = vpack.c.b16 %v857, %v856
      %v1096 = vpack.c.b16 %v859, %v858
      %v1097 = vpack.c.b16 %v861, %v860
      %v1098 = vpack.c.b16 %v863, %v862
      %v1099 = vpack.c.b16 %v865, %v864
      %v1100 = vpack.c.b16 %v867, %v866
      %v1101 = vpack.c.b16 %v869, %v868
      %v1102 = vpack.c.b16 %v871, %v870
      %v1103 = vpack.c.b16 %v873, %v872
      %v1104 = vpack.c.b16 %v875, %v874
      %v1105 = vpack.c.b16 %v877, %v876
      %v1106 = vpack.c.b16 %v879, %v878
      %v1107 = vpack.c.b16 %v881, %v880
      %v1108 = vpack.c.b16 %v883, %v882
      %v1109 = vpack.c.b16 %v885, %v884
      %v1110 = vpack.c.b16 %v887, %v886
      %v1111 = vpack.c.b16 %v889, %v888
      %v1112 = vpack.c.b16 %v891, %v890
      %v1113 = vpack.c.b16 %v893, %v892
      %v1114 = vpack.c.b16 %v895, %v894
      %v1115 = vpack.c.b16 %v897, %v896
      %v1116 = vpack.c.b16 %v899, %v898
      %v1117 = vpack.c.b16 %v901, %v900
      %v1118 = vpack.c.b16 %v903, %v902
      %v1119 = vpack.c.b16 %v905, %v904
      %v1120 = vpack.c.b16 %v907, %v906
      %v1121 = vpack.c.b16 %v909, %v908
      %v1122 = vpack.c.b16 %v911, %v910
      %v1123 = vpack.c.b16 %v913, %v912
      %v1124 = vpack.c.b16 %v915, %v914
      %v1125 = vpack.c.b16 %v917, %v916
      %v1126 = vpack.c.b16 %v919, %v918
      %v1127 = vpack.c.b16 %v921, %v920
      %v1128 = vpack.c.b16 %v923, %v922
      %v1129 = vpack.c.b16 %v925, %v924
      %v1130 = vpack.c.b16 %v927, %v926
      %v1131 = vpack.c.b16 %v929, %v928
      %v1132 = vpack.c.b16 %v931, %v930
      %v1133 = vpack.c.b16 %v933, %v932
      %v1134 = vpack.c.b16 %v935, %v934
      %v1135 = vpack.c.b16 %v937, %v936
      %v1136 = vpack.c.b16 %v939, %v938
      %v1137 = vpack.c.b16 %v941, %v940
      %v1138 = vpack.c.b16 %v943, %v942
      %v1139 = vpack.c.b16 %v945, %v944
      %v1140 = vpack.c.b16 %v947, %v946
      %v1141 = vpack.c.b16 %v949, %v948
      %v1142 = vpack.c.b16 %v951, %v950
      %v1143 = vpack.c.b16 %v953, %v952
      %v1144 = vpack.c.b16 %v955, %v954
      %v1145 = vpack.c.b16 %v957, %v956
      %v1146 = vpack.c.b16 %v959, %v958
      %v1147 = vpack.c.b16 %v961, %v960
      %v1148 = vpack.c.b16 %v963, %v962
      %v1149 = vpack.c.b16 %v965, %v964
      %v1150 = vpack.c.b16 %v967, %v966
      %v1151 = vpack.c.b16 %v969, %v968
      %v1152 = vpack.c.b16 %v971, %v970
      %v1153 = vpack.c.b16 %v973, %v972
      %v1154 = vpack.c.b16 %v975, %v974
      %v1155 = vpack.c.b16 %v977, %v976
      %v1156 = vpack.c.b16 %v979, %v978
      %v1157 = vpack.c.b16 %v981, %v980
      %v1158 = vpack.c.b16 %v983, %v982
      %v1159 = vpack.c.b16 %v985, %v984
      %v1160 = vpack.c.b16 %v987, %v986
      %v1161 = vpack.c.b16 %v989, %v988
      %v1162 = vpack.c.b16 %v991, %v990
      %v1163 = vpack.c.b16 %v993, %v992
      %v1164 = vpack.c.b16 %v995, %v994
      %v1165 = vpack.c.b16 %v997, %v996
      %v1166 = vpack.c.b16 %v999, %v998
      %v1167 = vpack.c.b16 %v1001, %v1000
      %v1168 = vpack.c.b16 %v1003, %v1002
      %v1169 = vpack.c.b16 %v1005, %v1004
      %v1170 = vpack.c.b16 %v1007, %v1006
      %v1171 = vpack.c.b16 %v1009, %v1008
      %v1172 = vpack.c.b16 %v1011, %v1010
      %v1173 = vpack.c.b16 %v1013, %v1012
      %v1174 = vpack.c.b16 %v1015, %v1014
      %v1175 = vpack.c.b16 %v1017, %v1016
      %v1176 = vpack.c.b16 %v1019, %v1018
      %v1177 = vpack.c.b16 %v1021, %v1020
      %v1178 = vpack.c.b16 %v1023, %v1022
      %v1179 = vpack.c.b16 %v1025, %v1024
      %v1180 = vpack.c.b16 %v1027, %v1026
      %v1181 = vpack.c.b16 %v1029, %v1028
      %v1182 = vpack.c.b16 %v1031, %v1030
      %v1183 = vpack.c.b16 %v1033, %v1032
      %v1184 = vpack.c.b16 %v1035, %v1034
      %v1185 = vpack.c.b16 %v1037, %v1036
      %v1186 = vpack.c.b16 %v1039, %v1038
      %v1187 = vpack.c.b16 %v1041, %v1040
      %v1188 = vpack.c.b16 %v1043, %v1042
      %v1189 = vpack.c.b16 %v1045, %v1044
      %v1190 = vpack.c.b16 %v1047, %v1046
      %v1191 = vpack.c.b16 %v1049, %v1048
      %v1192 = vpack.c.b16 %v1051, %v1050
      %v1193 = vpack.c.b16 %v1053, %v1052
      %v1194 = vpack.c.b16 %v1055, %v1054
      %v1195 = vpack.c.b16 %v1057, %v1056
      %v1196 = vpack.c.b16 %v1059, %v1058
      %v1197 = vpack.c.b16 %v1061, %v1060
      %v1198 = vpack.c.b16 %v1063, %v1062
      %v1199 = vpack.c.b16 %v1065, %v1064
      %v1200 = vpack.c.b16 %v1067, %v1066
      %v1201 = vpack.c.b16 %v1069, %v1068
      %v1202 = vpack.c.b16 %v1071, %v1070
      %v1203 = vpack.c.b16 %v1073, %v1072
      %v1204 = vpack.c.b16 %v1075, %v1074
      %v1205 = vpack.c.b16 %v1077, %v1076
      %1334 = vmatpush.bf16.msra.mxu0 %v1085
      %1335 = vmatpush.bf16.msra.mxu0 %v1084
      %1336 = vmatpush.bf16.msra.mxu0 %v1083
      %1337 = vmatpush.bf16.msra.mxu0 %v1082
      %1338 = vmatpush.bf16.msra.mxu0 %v1081
      %1339 = vmatpush.bf16.msra.mxu0 %v1080
      %1340 = vmatpush.bf16.msra.mxu0 %v1079
      %1341 = vmatpush.bf16.msra.mxu0 %v1078
      %1342 = vmatmul.bf16.gmra.mxu0 %v530
      %v1343 = vpop.f32.mrf.mxu0
      %v1344 = vadd.f32 0.0, %v1343
      %v1345 = vpop.f32.mrf.mxu0
      %1346 = vdwg.mxu0
      %1347 = vmatpush.bf16.msra.mxu0 %v1093
      %1348 = vmatpush.bf16.msra.mxu0 %v1092
      %1349 = vmatpush.bf16.msra.mxu0 %v1091
      %1350 = vmatpush.bf16.msra.mxu0 %v1090
      %1351 = vmatpush.bf16.msra.mxu0 %v1089
      %1352 = vmatpush.bf16.msra.mxu0 %v1088
      %1353 = vmatpush.bf16.msra.mxu0 %v1087
      %1354 = vmatpush.bf16.msra.mxu0 %v1086
      %1355 = vmatmul.bf16.gmra.mxu0 %v531
      %v1356 = vpop.f32.mrf.mxu0
      %v1357 = vadd.f32 %v1344, %v1356
      %v1358 = vpop.f32.mrf.mxu0
      %1359 = vdwg.mxu0
      %1360 = vmatpush.bf16.msra.mxu0 %v1101
      %1361 = vmatpush.bf16.msra.mxu0 %v1100
      %1362 = vmatpush.bf16.msra.mxu0 %v1099
      %1363 = vmatpush.bf16.msra.mxu0 %v1098
      %1364 = vmatpush.bf16.msra.mxu0 %v1097
      %1365 = vmatpush.bf16.msra.mxu0 %v1096
      %1366 = vmatpush.bf16.msra.mxu0 %v1095
      %1367 = vmatpush.bf16.msra.mxu0 %v1094
      %1368 = vmatmul.bf16.gmra.mxu0 %v532
      %v1369 = vpop.f32.mrf.mxu0
      %v1370 = vadd.f32 %v1357, %v1369
      %v1371 = vpop.f32.mrf.mxu0
      %1372 = vdwg.mxu0
      %1373 = vmatpush.bf16.msra.mxu0 %v1109
      %1374 = vmatpush.bf16.msra.mxu0 %v1108
      %1375 = vmatpush.bf16.msra.mxu0 %v1107
      %1376 = vmatpush.bf16.msra.mxu0 %v1106
      %1377 = vmatpush.bf16.msra.mxu0 %v1105
      %1378 = vmatpush.bf16.msra.mxu0 %v1104
      %1379 = vmatpush.bf16.msra.mxu0 %v1103
      %1380 = vmatpush.bf16.msra.mxu0 %v1102
      %1381 = vmatmul.bf16.gmra.mxu0 %v533
      %v1382 = vpop.f32.mrf.mxu0
      %v1383 = vadd.f32 %v1370, %v1382
      %v1384 = vpop.f32.mrf.mxu0
      %1385 = vdwg.mxu0
      %1386 = vmatpush.bf16.msra.mxu0 %v1117
      %1387 = vmatpush.bf16.msra.mxu0 %v1116
      %1388 = vmatpush.bf16.msra.mxu0 %v1115
      %1389 = vmatpush.bf16.msra.mxu0 %v1114
      %1390 = vmatpush.bf16.msra.mxu0 %v1113
      %1391 = vmatpush.bf16.msra.mxu0 %v1112
      %1392 = vmatpush.bf16.msra.mxu0 %v1111
      %1393 = vmatpush.bf16.msra.mxu0 %v1110
      %1394 = vmatmul.bf16.gmra.mxu0 %v534
      %v1395 = vpop.f32.mrf.mxu0
      %v1396 = vadd.f32 %v1383, %v1395
      %v1397 = vpop.f32.mrf.mxu0
      %1398 = vdwg.mxu0
      %1399 = vmatpush.bf16.msra.mxu0 %v1125
      %1400 = vmatpush.bf16.msra.mxu0 %v1124
      %1401 = vmatpush.bf16.msra.mxu0 %v1123
      %1402 = vmatpush.bf16.msra.mxu0 %v1122
      %1403 = vmatpush.bf16.msra.mxu0 %v1121
      %1404 = vmatpush.bf16.msra.mxu0 %v1120
      %1405 = vmatpush.bf16.msra.mxu0 %v1119
      %1406 = vmatpush.bf16.msra.mxu0 %v1118
      %1407 = vmatmul.bf16.gmra.mxu0 %v535
      %v1408 = vpop.f32.mrf.mxu0
      %v1409 = vadd.f32 %v1396, %v1408
      %v1410 = vpop.f32.mrf.mxu0
      %1411 = vdwg.mxu0
      %1412 = vmatpush.bf16.msra.mxu0 %v1133
      %1413 = vmatpush.bf16.msra.mxu0 %v1132
      %1414 = vmatpush.bf16.msra.mxu0 %v1131
      %1415 = vmatpush.bf16.msra.mxu0 %v1130
      %1416 = vmatpush.bf16.msra.mxu0 %v1129
      %1417 = vmatpush.bf16.msra.mxu0 %v1128
      %1418 = vmatpush.bf16.msra.mxu0 %v1127
      %1419 = vmatpush.bf16.msra.mxu0 %v1126
      %1420 = vmatmul.bf16.gmra.mxu0 %v536
      %v1421 = vpop.f32.mrf.mxu0
      %v1422 = vadd.f32 %v1409, %v1421
      %v1423 = vpop.f32.mrf.mxu0
      %1424 = vdwg.mxu0
      %1425 = vmatpush.bf16.msra.mxu0 %v1141
      %1426 = vmatpush.bf16.msra.mxu0 %v1140
      %1427 = vmatpush.bf16.msra.mxu0 %v1139
      %1428 = vmatpush.bf16.msra.mxu0 %v1138
      %1429 = vmatpush.bf16.msra.mxu0 %v1137
      %1430 = vmatpush.bf16.msra.mxu0 %v1136
      %1431 = vmatpush.bf16.msra.mxu0 %v1135
      %1432 = vmatpush.bf16.msra.mxu0 %v1134
      %1433 = vmatmul.bf16.gmra.mxu0 %v537
      %v1434 = vpop.f32.mrf.mxu0
      %v1435 = vadd.f32 %v1422, %v1434
      %v1436 = vpop.f32.mrf.mxu0
      %1437 = vdwg.mxu0
      %1438 = vmatpush.bf16.msra.mxu0 %v1149
      %1439 = vmatpush.bf16.msra.mxu0 %v1148
      %1440 = vmatpush.bf16.msra.mxu0 %v1147
      %1441 = vmatpush.bf16.msra.mxu0 %v1146
      %1442 = vmatpush.bf16.msra.mxu0 %v1145
      %1443 = vmatpush.bf16.msra.mxu0 %v1144
      %1444 = vmatpush.bf16.msra.mxu0 %v1143
      %1445 = vmatpush.bf16.msra.mxu0 %v1142
      %1446 = vmatmul.bf16.gmra.mxu0 %v542
      %v1447 = vpop.f32.mrf.mxu0
      %v1448 = vadd.f32 %v1435, %v1447
      %v1449 = vpop.f32.mrf.mxu0
      %1450 = vdwg.mxu0
      %1451 = vmatpush.bf16.msra.mxu0 %v1157
      %1452 = vmatpush.bf16.msra.mxu0 %v1156
      %1453 = vmatpush.bf16.msra.mxu0 %v1155
      %1454 = vmatpush.bf16.msra.mxu0 %v1154
      %1455 = vmatpush.bf16.msra.mxu0 %v1153
      %1456 = vmatpush.bf16.msra.mxu0 %v1152
      %1457 = vmatpush.bf16.msra.mxu0 %v1151
      %1458 = vmatpush.bf16.msra.mxu0 %v1150
      %1459 = vmatmul.bf16.gmra.mxu0 %v543
      %v1460 = vpop.f32.mrf.mxu0
      %v1461 = vadd.f32 %v1448, %v1460
      %v1462 = vpop.f32.mrf.mxu0
      %1463 = vdwg.mxu0
      %1464 = vmatpush.bf16.msra.mxu0 %v1165
      %1465 = vmatpush.bf16.msra.mxu0 %v1164
      %1466 = vmatpush.bf16.msra.mxu0 %v1163
      %1467 = vmatpush.bf16.msra.mxu0 %v1162
      %1468 = vmatpush.bf16.msra.mxu0 %v1161
      %1469 = vmatpush.bf16.msra.mxu0 %v1160
      %1470 = vmatpush.bf16.msra.mxu0 %v1159
      %1471 = vmatpush.bf16.msra.mxu0 %v1158
      %1472 = vmatmul.bf16.gmra.mxu0 %v544
      %v1473 = vpop.f32.mrf.mxu0
      %v1474 = vadd.f32 %v1461, %v1473
      %v1475 = vpop.f32.mrf.mxu0
      %1476 = vdwg.mxu0
      %1477 = vmatpush.bf16.msra.mxu0 %v1173
      %1478 = vmatpush.bf16.msra.mxu0 %v1172
      %1479 = vmatpush.bf16.msra.mxu0 %v1171
      %1480 = vmatpush.bf16.msra.mxu0 %v1170
      %1481 = vmatpush.bf16.msra.mxu0 %v1169
      %1482 = vmatpush.bf16.msra.mxu0 %v1168
      %1483 = vmatpush.bf16.msra.mxu0 %v1167
      %1484 = vmatpush.bf16.msra.mxu0 %v1166
      %1485 = vmatmul.bf16.gmra.mxu0 %v545
      %v1486 = vpop.f32.mrf.mxu0
      %v1487 = vadd.f32 %v1474, %v1486
      %v1488 = vpop.f32.mrf.mxu0
      %1489 = vdwg.mxu0
      %1490 = vmatpush.bf16.msra.mxu0 %v1181
      %1491 = vmatpush.bf16.msra.mxu0 %v1180
      %1492 = vmatpush.bf16.msra.mxu0 %v1179
      %1493 = vmatpush.bf16.msra.mxu0 %v1178
      %1494 = vmatpush.bf16.msra.mxu0 %v1177
      %1495 = vmatpush.bf16.msra.mxu0 %v1176
      %1496 = vmatpush.bf16.msra.mxu0 %v1175
      %1497 = vmatpush.bf16.msra.mxu0 %v1174
      %1498 = vmatmul.bf16.gmra.mxu0 %v546
      %v1499 = vpop.f32.mrf.mxu0
      %v1500 = vadd.f32 %v1487, %v1499
      %v1501 = vpop.f32.mrf.mxu0
      %1502 = vdwg.mxu0
      %1503 = vmatpush.bf16.msra.mxu0 %v1189
      %1504 = vmatpush.bf16.msra.mxu0 %v1188
      %1505 = vmatpush.bf16.msra.mxu0 %v1187
      %1506 = vmatpush.bf16.msra.mxu0 %v1186
      %1507 = vmatpush.bf16.msra.mxu0 %v1185
      %1508 = vmatpush.bf16.msra.mxu0 %v1184
      %1509 = vmatpush.bf16.msra.mxu0 %v1183
      %1510 = vmatpush.bf16.msra.mxu0 %v1182
      %1511 = vmatmul.bf16.gmra.mxu0 %v547
      %v1512 = vpop.f32.mrf.mxu0
      %v1513 = vadd.f32 %v1500, %v1512
      %v1514 = vpop.f32.mrf.mxu0
      %1515 = vdwg.mxu0
      %1516 = vmatpush.bf16.msra.mxu0 %v1197
      %1517 = vmatpush.bf16.msra.mxu0 %v1196
      %1518 = vmatpush.bf16.msra.mxu0 %v1195
      %1519 = vmatpush.bf16.msra.mxu0 %v1194
      %1520 = vmatpush.bf16.msra.mxu0 %v1193
      %1521 = vmatpush.bf16.msra.mxu0 %v1192
      %1522 = vmatpush.bf16.msra.mxu0 %v1191
      %1523 = vmatpush.bf16.msra.mxu0 %v1190
      %1524 = vmatmul.bf16.gmra.mxu0 %v548
      %v1525 = vpop.f32.mrf.mxu0
      %v1526 = vadd.f32 %v1513, %v1525
      %v1527 = vpop.f32.mrf.mxu0
      %1528 = vdwg.mxu0
      %1529 = vmatpush.bf16.msra.mxu0 %v1205
      %1530 = vmatpush.bf16.msra.mxu0 %v1204
      %1531 = vmatpush.bf16.msra.mxu0 %v1203
      %1532 = vmatpush.bf16.msra.mxu0 %v1202
      %1533 = vmatpush.bf16.msra.mxu0 %v1201
      %1534 = vmatpush.bf16.msra.mxu0 %v1200
      %1535 = vmatpush.bf16.msra.mxu0 %v1199
      %1536 = vmatpush.bf16.msra.mxu0 %v1198
      %1537 = vmatmul.bf16.gmra.mxu0 %v549
      %v1538 = vpop.f32.mrf.mxu0
      %v1539 = vadd.f32 %v1526, %v1538
      %v1540 = vpop.f32.mrf.mxu0
      %1541 = vdwg.mxu0
      %v1542 = vadd.f32 %v264, %v1539
      %1543 = vst [vmem:[#allocation2] sm:$0xf] %v1542
      %p1544 = scmp.eq.s32.totalorder %s21, 3
      // Predicated region
      $region37: #{discriminator_forward.9} parent=31 // pred_check
        %p1545 = pneg %p1544
      $region38: #{discriminator_forward.9} parent=31 // pred_check_branch
        %1547 = sbr.rel (%p1545) target = $region40
      $region39: #{discriminator_forward.9} parent=31 // pred_region
        %v1548 = vld [vmem:[#allocation2] sm:$0xf]
        %v1549 = vld [vmem:[%s251] sm:$0x1]
        %v1551 = vperm.slane %v1549, 0
        %v1553 = vadd.f32 %v1548, %v1551
        %1554 = vst [vmem:[%s258] sm:$0xf] %v1553
      $region40: #{discriminator_forward.9} parent=31 // pred_fallthru
        _
      %p1555 = scmp.lt.s32.totalorder %s19, 1
      %s1556 = scalar_select %p1555, %s19, 1
      %p1557 = scmp.lt.s32.totalorder %s20, 0
      %s1558 = scalar_select %p1557, %s20, 0
      %s1559 = sadd.s32 %s1558, %s1556
      %s1560 = smul.addr %s1559, 4
      %s1561 = scalar_lea.vmem %s3, %s1560
      // Predicated region
      $region41: #{discriminator_forward.9} parent=31 // pred_check
        %p1562 = pneg %p135
      $region42: #{discriminator_forward.9} parent=31 // pred_check_branch
        %1564 = sbr.rel (%p1562) target = $region44
      $region43: #{discriminator_forward.9} parent=31 // pred_region
        _
      $region44: #{discriminator_forward.9} parent=31 // pred_fallthru
        _
    $region32: #{discriminator_forward.9} parent=5 // pred_fallthru
      _
    %p1565 = scmp.le.s32.totalorder 2, %s9
    // Predicated region
    $region45: #{discriminator_forward.9} parent=5 // pred_check
      %p1566 = pneg %p1565
    $region46: #{discriminator_forward.9} parent=5 // pred_check_branch
      %1568 = sbr.rel (%p1566) target = $region48
    $region47: #{discriminator_forward.9} parent=5 // pred_region
      %s1569 = ssub.s32 %s9, 2
      // Predicated region
      $region49: #{discriminator_forward.9} parent=47 // pred_check
        %p1570 = pneg %p141
      $region50: #{discriminator_forward.9} parent=47 // pred_check_branch
        %1572 = sbr.rel (%p1570) target = $region52
      $region51: #{discriminator_forward.9} parent=47 // pred_region
        %p1573 = scmp.lt.s32.totalorder %s22, 1
        %s1574 = scalar_select %p1573, %s22, 1
        %p1575 = scmp.lt.s32.totalorder %s23, 0
        %s1576 = scalar_select %p1575, %s23, 0
        %s1577 = sadd.s32 %s1576, %s1574
        %s1578 = smul.addr %s1577, 4
        %s1579 = scalar_lea.vmem %s3, %s1578
      $region52: #{discriminator_forward.9} parent=47 // pred_fallthru
        _
    $region48: #{discriminator_forward.9} parent=5 // pred_fallthru
      _
  $region6: #{discriminator_forward.9} parent=0 // loop_footer
    %s13 = sadd.s32 1, %s9
  $region7: #{discriminator_forward.9} parent=0 // loop_footer_branch
    %8 = sbr.rel target = $region3
  $region8: #{discriminator_forward.9} parent=0 // loop_exit
    _

</llo_original>
